<compile_context>
chip_gen: v5e
topology: v5e:2x2
jax: 0.10.0
libtpu: 0.0.40
codegen_flags: <defaults>
</compile_context>

<pallas_src>
import functools

import jax
import jax.numpy as jnp
from jax.experimental import pallas as pl
from jax.experimental.pallas import tpu as pltpu

# --------------------------------------------------------------------------
# Model hyper-parameters (small but structurally consistent with MainModel)
# --------------------------------------------------------------------------
BATTLE_OBS_DIM = 10
OTHERS_OBS_DIM = 6
TOTAL_POKE_OBS_DIM = 112                 # >= MOVES_OBS_DIM + 23*4
MOVES_OBS_DIM = 16                       # 4 moves x 4 features
MOVE_DIM = MOVES_OBS_DIM // 4            # 4
DMAX_MOVE_OBS_DIM = 23
DMAX_TOTAL = DMAX_MOVE_OBS_DIM * 4       # 92
PLAYER_OBS_DIM = 6 * TOTAL_POKE_OBS_DIM + OTHERS_OBS_DIM   # 678 ; (678-1)//6 == 112
OPPO_OBS_DIM = PLAYER_OBS_DIM
TOTAL_OBS_DIM = BATTLE_OBS_DIM + PLAYER_OBS_DIM + OPPO_OBS_DIM
ACTION_SIZE = 14
HIDDEN_SIZES = (150, 300, 200)
H0, H1, H2 = HIDDEN_SIZES
LSTM_HIDDEN = 120
LSTM_HIDDEN_PAD = 128                    # lane-aligned hidden size
LSTM_INPUT = H2 * 2 + BATTLE_OBS_DIM + ACTION_SIZE   # 424
OBS_FEATURE = ACTION_SIZE + TOTAL_OBS_DIM            # 1380
HEAD_PAD = 128                           # lane-dense combined head output width

# offsets inside one *original* flattened obs row
BATTLE_OFF = ACTION_SIZE                              # 14
P_POKE_OFF = ACTION_SIZE + BATTLE_OBS_DIM             # 24
P_OTH_OFF = P_POKE_OFF + 6 * TOTAL_POKE_OBS_DIM       # 696
O_POKE_OFF = P_OTH_OFF + OTHERS_OBS_DIM               # 702
O_OTH_OFF = O_POKE_OFF + 6 * TOTAL_POKE_OBS_DIM       # 1374
MOVE_OFF = TOTAL_POKE_OBS_DIM - (MOVES_OBS_DIM + DMAX_TOTAL)    # 4  (in active poke)
DMAX_OFF = TOTAL_POKE_OBS_DIM - DMAX_TOTAL                      # 20 (in active poke)

# --------------------------------------------------------------------------
# Packed, 128-lane-aligned obs layout used by the kernel
#   [ 6 player poke blocks x 128 | 6 oppo poke blocks x 128 | tail slab x 128 ]
# tail slab: [mask(14) | battle(10) | p_others(6) | o_others(6) | prev(14) | 0]
# --------------------------------------------------------------------------
POKE_PAD = 128
P_POKES_W = 6 * POKE_PAD                 # 768
TAIL_PAD = 128
TAIL_MASK_OFF = 0
TAIL_BATTLE_OFF = ACTION_SIZE            # 14
TAIL_P_OTH_OFF = TAIL_BATTLE_OFF + BATTLE_OBS_DIM      # 24
TAIL_O_OTH_OFF = TAIL_P_OTH_OFF + OTHERS_OBS_DIM       # 30
TAIL_PREV_OFF = TAIL_O_OTH_OFF + OTHERS_OBS_DIM        # 36
TAIL_USED = TAIL_PREV_OFF + ACTION_SIZE                # 50
F_PACK = 2 * P_POKES_W + TAIL_PAD        # 1664


def _const_spec(shape):
    n = len(shape)
    return pl.BlockSpec(shape, lambda j, _n=n: (0,) * _n)


def _pick_bt(batch):
    # 8 rows (one f32 sublane tile) when the whole batch fits; otherwise 16
    # (keeps bf16 input blocks tile-exact when the batch axis is actually split).
    # TODO(synk): tune Bt per generation (v7x 64MiB VMEM vs v5e/v6e 128MiB).
    return 8 if batch <= 8 else 16


# --------------------------------------------------------------------------
# Fused kernel: premodels + LSTM + postmodel in one body (one batch tile)
# --------------------------------------------------------------------------
def _fused_kernel(obs_ref,
                  wpk_p, bpk_p, wres_p, bres_p, wact_p, wrs_p, wtl_p, ball_p,
                  wpk_o, bpk_o, wres_o, bres_o, wact_o, wrs_o, wtl_o, ball_o,
                  wih_p, wih_o, wih_t, whh_ref, blstm_ref,
                  winfo_ref, wlh_ref, wvd_ref, bvd_ref, wv2_ref, bhead_ref,
                  heads_ref, state_ref, ih_scr, h_scr, *, seq_len, bt):
    f32 = jnp.float32
    bf16 = jnp.bfloat16
    HP = LSTM_HIDDEN_PAD
    rows = seq_len * bt

    obs = obs_ref[...].reshape(rows, F_PACK)            # (rows, 1664) bf16, t-major
    p_pokes = obs[:, 0:P_POKES_W]                        # (rows, 768)  lane-aligned
    o_pokes = obs[:, P_POKES_W:2 * P_POKES_W]            # (rows, 768)
    tail = obs[:, 2 * P_POKES_W:]                        # (rows, 128)

    # ---------------- BasePreModel (split-K, no concats) --------------------
    def premodel(pokes, wpk, bpk, wres, bres, wact, wrs, wtl, ball):
        act_h = None
        res_acc = None
        for p in range(6):                               # 6 unrolled MXU dots, K=128
            xp = pokes[:, p * POKE_PAD:(p + 1) * POKE_PAD]
            h = jnp.maximum(
                jnp.dot(xp, wpk[p], preferred_element_type=f32) + bpk[p], 0.0)
            if p == 0:
                act_h = h
            else:                                        # split-K reserved_pokes_dense
                d = jnp.dot(h.astype(bf16), wres[p - 1], preferred_element_type=f32)
                res_acc = d if res_acc is None else res_acc + d
        res_h = jnp.maximum(res_acc + bres[...], 0.0)
        # all_dense as 3 K-blocks (others folded into the 128-lane tail slab dot)
        out = (jnp.dot(act_h.astype(bf16), wact[...], preferred_element_type=f32)
               + jnp.dot(res_h.astype(bf16), wrs[...], preferred_element_type=f32)
               + jnp.dot(tail, wtl[...], preferred_element_type=f32)
               + ball[...])
        return jnp.maximum(out, 0.0)

    player_out = premodel(p_pokes, wpk_p, bpk_p, wres_p, bres_p,
                          wact_p, wrs_p, wtl_p, ball_p)
    oppo_out = premodel(o_pokes, wpk_o, bpk_o, wres_o, bres_o,
                        wact_o, wrs_o, wtl_o, ball_o)

    # ---------------- LSTM: hoisted input projection + short serial chain ---
    # battle + prev_action contributions come from the tail slab (K=128 aligned).
    ih_scr[...] = (jnp.dot(player_out.astype(bf16), wih_p[...], preferred_element_type=f32)
                   + jnp.dot(oppo_out.astype(bf16), wih_o[...], preferred_element_type=f32)
                   + jnp.dot(tail, wih_t[...], preferred_element_type=f32)
                   + blstm_ref[...])                     # (rows, 512) f32

    w_hh = whh_ref[...]
    h = jnp.zeros((bt, HP), f32)
    c = jnp.zeros((bt, HP), f32)
    for t in range(seq_len):                             # small static T, unrolled
        r0 = t * bt
        gates = (ih_scr[pl.ds(r0, bt), :]
                 + jnp.dot(h.astype(bf16), w_hh, preferred_element_type=f32))
        i_g = jax.nn.sigmoid(gates[:, 0:HP])             # 128-lane aligned gate slices
        f_g = jax.nn.sigmoid(gates[:, HP:2 * HP])
        g_g = jnp.tanh(gates[:, 2 * HP:3 * HP])
        o_g = jax.nn.sigmoid(gates[:, 3 * HP:4 * HP])
        c = f_g * c + i_g * g_g                          # padded lanes provably stay 0
        h = o_g * jnp.tanh(c)
        h_scr[pl.ds(r0, bt), :] = h
    state_ref[0] = h                                     # final hidden (padded)
    state_ref[1] = c                                     # final cell   (padded)

    # ---------------- BasePostModel (lane-dense 128-wide combined output) ---
    lstm_bf = h_scr[...].astype(bf16)                    # (rows, 128)
    vd = jnp.maximum(
        jnp.dot(lstm_bf, wvd_ref[...], preferred_element_type=f32) + bvd_ref[...], 0.0)
    # cols 0..13: policy logits; col 14: value; col 15: int_value; rest 0.
    head_pre = (jnp.dot(p_pokes, winfo_ref[...], preferred_element_type=f32)
                + jnp.dot(lstm_bf, wlh_ref[...], preferred_element_type=f32)
                + jnp.dot(vd.astype(bf16), wv2_ref[...], preferred_element_type=f32)
                + bhead_ref[...])                        # (rows, 128)
    cols = jax.lax.broadcasted_iota(jnp.int32, head_pre.shape, 1)
    # action mask lives at lanes 0..13 of the tail slab -> no extra mask input.
    heads = jnp.where(cols < ACTION_SIZE,
                      jnp.maximum(head_pre, 0.0) * tail.astype(f32),
                      head_pre)
    heads_ref[...] = heads.reshape(seq_len, bt, HEAD_PAD)


# --------------------------------------------------------------------------
# Wrapper: repack obs to the aligned layout, single pallas_call, slice outputs
# --------------------------------------------------------------------------
def main_model_forward(params, obs, prev_action, recurrent_state=None):
    # recurrent_state is accepted but (as in the PyTorch code) never passed to
    # the LSTM -- the LSTM always starts from zeros.
    T, B, F = obs.shape
    assert F == OBS_FEATURE
    bt = _pick_bt(B)
    b_pad = ((B + bt - 1) // bt) * bt

    obs_f = obs.astype(jnp.float32)
    prev_f = prev_action.astype(jnp.float32)

    mask = obs_f[..., :ACTION_SIZE]
    battle = obs_f[..., BATTLE_OFF:BATTLE_OFF + BATTLE_OBS_DIM]
    p_pokes = obs_f[..., P_POKE_OFF:P_POKE_OFF + 6 * TOTAL_POKE_OBS_DIM]
    p_oth = obs_f[..., P_OTH_OFF:P_OTH_OFF + OTHERS_OBS_DIM]
    o_pokes = obs_f[..., O_POKE_OFF:O_POKE_OFF + 6 * TOTAL_POKE_OBS_DIM]
    o_oth = obs_f[..., O_OTH_OFF:O_OTH_OFF + OTHERS_OBS_DIM]

    poke_pad = jnp.zeros((T, B, 6, POKE_PAD - TOTAL_POKE_OBS_DIM), jnp.float32)
    p_blk = jnp.concatenate(
        [p_pokes.reshape(T, B, 6, TOTAL_POKE_OBS_DIM), poke_pad], -1).reshape(T, B, P_POKES_W)
    o_blk = jnp.concatenate(
        [o_pokes.reshape(T, B, 6, TOTAL_POKE_OBS_DIM), poke_pad], -1).reshape(T, B, P_POKES_W)
    tail = jnp.concatenate(
        [mask, battle, p_oth, o_oth, prev_f,
         jnp.zeros((T, B, TAIL_PAD - TAIL_USED), jnp.float32)], -1)
    # bf16 input: every matmul operand was going to be cast to bf16 anyway.
    packed = jnp.concatenate([p_blk, o_blk, tail], -1).astype(jnp.bfloat16)  # (T,B,1664)
    if b_pad > B:
        packed = jnp.pad(packed, ((0, 0), (0, b_pad - B), (0, 0)))
    # TODO(synk): produce obs directly in this packed bf16 layout upstream to
    # remove the wrapper-side relayout entirely.

    pp, op, lp, po = params["player_pre"], params["oppo_pre"], params["lstm"], params["post"]
    args = (packed,
            pp["w_poke"], pp["b_poke"], pp["w_res"], pp["b_res"],
            pp["w_all_act"], pp["w_all_res"], pp["w_all_tail"], pp["b_all"],
            op["w_poke"], op["b_poke"], op["w_res"], op["b_res"],
            op["w_all_act"], op["w_all_res"], op["w_all_tail"], op["b_all"],
            lp["w_ih_p"], lp["w_ih_o"], lp["w_ih_tail"], lp["w_hh"], lp["b"],
            po["w_info"], po["w_lh"], po["w_vd"], po["b_vd"], po["w_v2"], po["b_head"])

    in_specs = [pl.BlockSpec((T, bt, F_PACK), lambda j: (0, j, 0))]
    in_specs += [_const_spec(a.shape) for a in args[1:]]   # weights load once

    kernel = functools.partial(_fused_kernel, seq_len=T, bt=bt)
    heads, state = pl.pallas_call(
        kernel,
        out_shape=(jax.ShapeDtypeStruct((T, b_pad, HEAD_PAD), jnp.float32),
                   jax.ShapeDtypeStruct((2, b_pad, LSTM_HIDDEN_PAD), jnp.float32)),
        grid_spec=pltpu.PrefetchScalarGridSpec(
            num_scalar_prefetch=0,
            grid=(b_pad // bt,),
            in_specs=in_specs,
            out_specs=(pl.BlockSpec((T, bt, HEAD_PAD), lambda j: (0, j, 0)),
                       pl.BlockSpec((2, bt, LSTM_HIDDEN_PAD), lambda j: (0, j, 0))),
            scratch_shapes=[pltpu.VMEM((T * bt, 4 * LSTM_HIDDEN_PAD), jnp.float32),
                            pltpu.VMEM((T * bt, LSTM_HIDDEN_PAD), jnp.float32)]),
        compiler_params=pltpu.CompilerParams(dimension_semantics=("parallel",)),
    )(*args)

    policy = heads[:, :B, :ACTION_SIZE]
    value = heads[:, :B, ACTION_SIZE:ACTION_SIZE + 1]
    int_value = heads[:, :B, ACTION_SIZE + 1:ACTION_SIZE + 2]
    h = state[0, :B, :LSTM_HIDDEN][None]          # (1, B, 120), like PyTorch nn.LSTM
    c = state[1, :B, :LSTM_HIDDEN][None]
    return (policy, value, int_value), (h, c)


# --------------------------------------------------------------------------
# Deterministic parameter initialization (weights laid out for the kernel)
# --------------------------------------------------------------------------
def init_params(key):
    keys = iter(jax.random.split(key, 80))

    def w(shape, scale=0.05):
        return jax.random.normal(next(keys), shape, jnp.float32) * scale

    def premodel_params(tail_oth_off):
        w_poke_raw = w((6, TOTAL_POKE_OBS_DIM, H0))                  # (6,112,150)
        w_poke = jnp.pad(w_poke_raw, ((0, 0), (0, POKE_PAD - TOTAL_POKE_OBS_DIM), (0, 0)))
        b_poke = w((6, 1, H0), 0.01)
        w_res = w((5, H0, H1))                                       # split-K blocks
        b_res = w((1, H1), 0.01)
        w_all_act = w((H0, H2))
        w_all_res = w((H1, H2))
        w_all_oth = w((OTHERS_OBS_DIM, H2))
        w_all_tail = (jnp.zeros((TAIL_PAD, H2), jnp.float32)
                      .at[tail_oth_off:tail_oth_off + OTHERS_OBS_DIM].set(w_all_oth))
        b_all = w((1, H2), 0.01)
        return dict(
            w_poke=w_poke.astype(jnp.bfloat16),
            b_poke=b_poke,
            w_res=w_res.astype(jnp.bfloat16),
            b_res=b_res,
            w_all_act=w_all_act.astype(jnp.bfloat16),
            w_all_res=w_all_res.astype(jnp.bfloat16),
            w_all_tail=w_all_tail.astype(jnp.bfloat16),
            b_all=b_all,
        )

    player_pre = premodel_params(TAIL_P_OTH_OFF)
    oppo_pre = premodel_params(TAIL_O_OTH_OFF)

    # --- LSTM: pad hidden 120 -> 128 (gate columns placed at k*128) ---------
    H, HP = LSTM_HIDDEN, LSTM_HIDDEN_PAD
    w_ih_raw = w((LSTM_INPUT, 4 * H))
    w_hh_raw = w((H, 4 * H))
    b_raw = w((1, 4 * H), 0.01)                   # b_ih + b_hh combined

    def pad_gate_cols(m):                         # (..., 4H) -> (..., 4*HP), zero pads
        parts = []
        for k in range(4):
            g = m[..., k * H:(k + 1) * H]
            g = jnp.pad(g, [(0, 0)] * (m.ndim - 1) + [(0, HP - H)])
            parts.append(g)
        return jnp.concatenate(parts, axis=-1)

    w_ih_pad = pad_gate_cols(w_ih_raw)                                      # (424, 512)
    w_ih_tail = (jnp.zeros((TAIL_PAD, 4 * HP), jnp.float32)
                 .at[TAIL_BATTLE_OFF:TAIL_BATTLE_OFF + BATTLE_OBS_DIM]
                 .set(w_ih_pad[2 * H2:2 * H2 + BATTLE_OBS_DIM])
                 .at[TAIL_PREV_OFF:TAIL_PREV_OFF + ACTION_SIZE]
                 .set(w_ih_pad[2 * H2 + BATTLE_OBS_DIM:]))
    lstm = dict(
        w_ih_p=w_ih_pad[:H2].astype(jnp.bfloat16),                          # (200, 512)
        w_ih_o=w_ih_pad[H2:2 * H2].astype(jnp.bfloat16),                    # (200, 512)
        w_ih_tail=w_ih_tail.astype(jnp.bfloat16),                           # (128, 512)
        w_hh=jnp.pad(pad_gate_cols(w_hh_raw), ((0, HP - H), (0, 0))
                     ).astype(jnp.bfloat16),                                # (128, 512)
        b=pad_gate_cols(b_raw),                                             # (1, 512) f32
    )

    # --- post-model: heads packed into zero-padded lane-dense weight mats ---
    w_info = jnp.zeros((6 * POKE_PAD, HEAD_PAD), jnp.float32)   # (768, 128)
    w_lh = jnp.zeros((HP, HEAD_PAD), jnp.float32)               # (128, 128)
    b_head = jnp.zeros((1, HEAD_PAD), jnp.float32)

    # move heads 0..3 (info = move_j slice of the active poke = block 0)
    for j in range(4):
        full = w((MOVE_DIM + H,))
        bias = w((), 0.01)
        r0 = MOVE_OFF + j * MOVE_DIM
        w_info = w_info.at[r0:r0 + MOVE_DIM, j].set(full[:MOVE_DIM])
        w_lh = w_lh.at[:H, j].set(full[MOVE_DIM:])
        b_head = b_head.at[0, j].set(bias)
    # dmax heads 4..7 -- ALL reuse out_dmaxmove1 (faithful to the PyTorch code)
    dmax_full = w((DMAX_MOVE_OBS_DIM + H,))
    dmax_bias = w((), 0.01)
    for j in range(4):
        r0 = DMAX_OFF + j * DMAX_MOVE_OBS_DIM
        w_info = w_info.at[r0:r0 + DMAX_MOVE_OBS_DIM, 4 + j].set(dmax_full[:DMAX_MOVE_OBS_DIM])
        w_lh = w_lh.at[:H, 4 + j].set(dmax_full[DMAX_MOVE_OBS_DIM:])
        b_head = b_head.at[0, 4 + j].set(dmax_bias)
    # reserved-poke heads 8..13 (info = player poke j, j = 0..5; padded blocks)
    for j in range(6):
        full = w((TOTAL_POKE_OBS_DIM + H,))
        bias = w((), 0.01)
        r0 = j * POKE_PAD
        w_info = w_info.at[r0:r0 + TOTAL_POKE_OBS_DIM, 8 + j].set(full[:TOTAL_POKE_OBS_DIM])
        w_lh = w_lh.at[:H, 8 + j].set(full[TOTAL_POKE_OBS_DIM:])
        b_head = b_head.at[0, 8 + j].set(bias)

    # value / int_value path folded into columns 14 / 15
    w_vd_raw = w((H, 64))
    b_vd = w((1, 64), 0.01)
    w_vl = w((64,))
    b_vl = w((), 0.01)
    w_iv = w((64,))
    b_iv = w((), 0.01)
    w_vd = jnp.pad(w_vd_raw, ((0, HP - H), (0, 0)))              # (128, 64)
    w_v2 = (jnp.zeros((64, HEAD_PAD), jnp.float32)
            .at[:, ACTION_SIZE].set(w_vl)
            .at[:, ACTION_SIZE + 1].set(w_iv))
    b_head = b_head.at[0, ACTION_SIZE].set(b_vl).at[0, ACTION_SIZE + 1].set(b_iv)

    post = dict(
        w_info=w_info.astype(jnp.bfloat16),
        w_lh=w_lh.astype(jnp.bfloat16),
        w_vd=w_vd.astype(jnp.bfloat16),
        b_vd=b_vd,
        w_v2=w_v2.astype(jnp.bfloat16),
        b_head=b_head,
    )
    return dict(player_pre=player_pre, oppo_pre=oppo_pre, lstm=lstm, post=post)


# --------------------------------------------------------------------------
if __name__ == "__main__":
    key = jax.random.PRNGKey(0)
    pkey, dkey = jax.random.split(key)
    params = init_params(pkey)

    T, B = 4, 2
    k1, k2 = jax.random.split(dkey)
    obs = jax.random.normal(k1, (T, B, OBS_FEATURE), jnp.float32)
    # first 14 features are the action mask slice, make them {0,1}
    mask_bits = (jax.random.uniform(k2, (T, B, ACTION_SIZE)) > 0.3).astype(jnp.float32)
    obs = obs.at[:, :, :ACTION_SIZE].set(mask_bits)
    prev_action = jnp.zeros((T, B, ACTION_SIZE), jnp.float32).at[:, :, 0].set(1.0)
    recurrent_state = (jnp.zeros((1, B, LSTM_HIDDEN), jnp.float32),
                       jnp.zeros((1, B, LSTM_HIDDEN), jnp.float32))

    fwd = jax.jit(main_model_forward)
    (policy, value, int_value), (h, c) = fwd(params, obs, prev_action, recurrent_state)
    jax.block_until_ready((policy, value, int_value, h, c))

    assert policy.shape == (T, B, ACTION_SIZE)
    assert value.shape == (T, B, 1) and int_value.shape == (T, B, 1)
    assert h.shape == (1, B, LSTM_HIDDEN) and c.shape == (1, B, LSTM_HIDDEN)
    assert bool(jnp.all(jnp.isfinite(policy)))
    assert bool(jnp.all(jnp.isfinite(value))) and bool(jnp.all(jnp.isfinite(int_value)))
    print("KERNEL_OK")
</pallas_src>

<mosaic_0001>
module attributes {stable_mosaic.version = 11 : i64} {
  func.func @_fused_kernel(%arg0: i32, %arg1: memref<4x8x1664xbf16, #tpu.memory_space<vmem>>, %arg2: memref<6x128x150xbf16, #tpu.memory_space<vmem>>, %arg3: memref<6x1x150xf32, #tpu.memory_space<vmem>>, %arg4: memref<5x150x300xbf16, #tpu.memory_space<vmem>>, %arg5: memref<1x300xf32, #tpu.memory_space<vmem>>, %arg6: memref<150x200xbf16, #tpu.memory_space<vmem>>, %arg7: memref<300x200xbf16, #tpu.memory_space<vmem>>, %arg8: memref<128x200xbf16, #tpu.memory_space<vmem>>, %arg9: memref<1x200xf32, #tpu.memory_space<vmem>>, %arg10: memref<6x128x150xbf16, #tpu.memory_space<vmem>>, %arg11: memref<6x1x150xf32, #tpu.memory_space<vmem>>, %arg12: memref<5x150x300xbf16, #tpu.memory_space<vmem>>, %arg13: memref<1x300xf32, #tpu.memory_space<vmem>>, %arg14: memref<150x200xbf16, #tpu.memory_space<vmem>>, %arg15: memref<300x200xbf16, #tpu.memory_space<vmem>>, %arg16: memref<128x200xbf16, #tpu.memory_space<vmem>>, %arg17: memref<1x200xf32, #tpu.memory_space<vmem>>, %arg18: memref<200x512xbf16, #tpu.memory_space<vmem>>, %arg19: memref<200x512xbf16, #tpu.memory_space<vmem>>, %arg20: memref<128x512xbf16, #tpu.memory_space<vmem>>, %arg21: memref<128x512xbf16, #tpu.memory_space<vmem>>, %arg22: memref<1x512xf32, #tpu.memory_space<vmem>>, %arg23: memref<768x128xbf16, #tpu.memory_space<vmem>>, %arg24: memref<128x128xbf16, #tpu.memory_space<vmem>>, %arg25: memref<128x64xbf16, #tpu.memory_space<vmem>>, %arg26: memref<1x64xf32, #tpu.memory_space<vmem>>, %arg27: memref<64x128xbf16, #tpu.memory_space<vmem>>, %arg28: memref<1x128xf32, #tpu.memory_space<vmem>>, %arg29: memref<4x8x128xf32, #tpu.memory_space<vmem>>, %arg30: memref<2x8x128xf32, #tpu.memory_space<vmem>>, %arg31: memref<32x512xf32, #tpu.memory_space<vmem>>, %arg32: memref<32x128xf32, #tpu.memory_space<vmem>>) attributes {dimension_semantics = [#tpu.dimension_semantics<parallel>], iteration_bounds = array<i64: 1>, scalar_prefetch = 0 : i64, scratch_operands = 2 : i64, tpu.core_type = #tpu.core_type<tc>, window_params = [{transform_indices = @transform_0, window_bounds = array<i64: 4, 8, 1664>}, {pipeline_mode = #tpu.pipeline_mode<synchronous>, transform_indices = @transform_1, window_bounds = array<i64: 6, 128, 150>}, {pipeline_mode = #tpu.pipeline_mode<synchronous>, transform_indices = @transform_2, window_bounds = array<i64: 6, 1, 150>}, {pipeline_mode = #tpu.pipeline_mode<synchronous>, transform_indices = @transform_3, window_bounds = array<i64: 5, 150, 300>}, {pipeline_mode = #tpu.pipeline_mode<synchronous>, transform_indices = @transform_4, window_bounds = array<i64: 1, 300>}, {pipeline_mode = #tpu.pipeline_mode<synchronous>, transform_indices = @transform_5, window_bounds = array<i64: 150, 200>}, {pipeline_mode = #tpu.pipeline_mode<synchronous>, transform_indices = @transform_6, window_bounds = array<i64: 300, 200>}, {pipeline_mode = #tpu.pipeline_mode<synchronous>, transform_indices = @transform_7, window_bounds = array<i64: 128, 200>}, {pipeline_mode = #tpu.pipeline_mode<synchronous>, transform_indices = @transform_8, window_bounds = array<i64: 1, 200>}, {pipeline_mode = #tpu.pipeline_mode<synchronous>, transform_indices = @transform_9, window_bounds = array<i64: 6, 128, 150>}, {pipeline_mode = #tpu.pipeline_mode<synchronous>, transform_indices = @transform_10, window_bounds = array<i64: 6, 1, 150>}, {pipeline_mode = #tpu.pipeline_mode<synchronous>, transform_indices = @transform_11, window_bounds = array<i64: 5, 150, 300>}, {pipeline_mode = #tpu.pipeline_mode<synchronous>, transform_indices = @transform_12, window_bounds = array<i64: 1, 300>}, {pipeline_mode = #tpu.pipeline_mode<synchronous>, transform_indices = @transform_13, window_bounds = array<i64: 150, 200>}, {pipeline_mode = #tpu.pipeline_mode<synchronous>, transform_indices = @transform_14, window_bounds = array<i64: 300, 200>}, {pipeline_mode = #tpu.pipeline_mode<synchronous>, transform_indices = @transform_15, window_bounds = array<i64: 128, 200>}, {pipeline_mode = #tpu.pipeline_mode<synchronous>, transform_indices = @transform_16, window_bounds = array<i64: 1, 200>}, {pipeline_mode = #tpu.pipeline_mode<synchronous>, transform_indices = @transform_17, window_bounds = array<i64: 200, 512>}, {pipeline_mode = #tpu.pipeline_mode<synchronous>, transform_indices = @transform_18, window_bounds = array<i64: 200, 512>}, {pipeline_mode = #tpu.pipeline_mode<synchronous>, transform_indices = @transform_19, window_bounds = array<i64: 128, 512>}, {pipeline_mode = #tpu.pipeline_mode<synchronous>, transform_indices = @transform_20, window_bounds = array<i64: 128, 512>}, {pipeline_mode = #tpu.pipeline_mode<synchronous>, transform_indices = @transform_21, window_bounds = array<i64: 1, 512>}, {pipeline_mode = #tpu.pipeline_mode<synchronous>, transform_indices = @transform_22, window_bounds = array<i64: 768, 128>}, {pipeline_mode = #tpu.pipeline_mode<synchronous>, transform_indices = @transform_23, window_bounds = array<i64: 128, 128>}, {pipeline_mode = #tpu.pipeline_mode<synchronous>, transform_indices = @transform_24, window_bounds = array<i64: 128, 64>}, {pipeline_mode = #tpu.pipeline_mode<synchronous>, transform_indices = @transform_25, window_bounds = array<i64: 1, 64>}, {pipeline_mode = #tpu.pipeline_mode<synchronous>, transform_indices = @transform_26, window_bounds = array<i64: 64, 128>}, {pipeline_mode = #tpu.pipeline_mode<synchronous>, transform_indices = @transform_27, window_bounds = array<i64: 1, 128>}, {transform_indices = @transform_28, window_bounds = array<i64: 4, 8, 128>}, {transform_indices = @transform_29, window_bounds = array<i64: 2, 8, 128>}]} {
    %c0 = arith.constant 0 : index
    %c0_0 = arith.constant 0 : index
    %c0_1 = arith.constant 0 : index
    %0 = vector.load %arg1[%c0, %c0_0, %c0_1] : memref<4x8x1664xbf16, #tpu.memory_space<vmem>>, vector<4x8x1664xbf16>
    %1 = vector.shape_cast %0 : vector<4x8x1664xbf16> to vector<32x1664xbf16>
    %2 = vector.extract_strided_slice %1 {offsets = [0, 0], sizes = [32, 768], strides = [1, 1]} : vector<32x1664xbf16> to vector<32x768xbf16>
    %3 = vector.extract_strided_slice %1 {offsets = [0, 768], sizes = [32, 768], strides = [1, 1]} : vector<32x1664xbf16> to vector<32x768xbf16>
    %4 = vector.extract_strided_slice %1 {offsets = [0, 1536], sizes = [32, 128], strides = [1, 1]} : vector<32x1664xbf16> to vector<32x128xbf16>
    %5 = vector.extract_strided_slice %2 {offsets = [0, 0], sizes = [32, 128], strides = [1, 1]} : vector<32x768xbf16> to vector<32x128xbf16>
    %c0_2 = arith.constant 0 : index
    %c0_3 = arith.constant 0 : index
    %c0_4 = arith.constant 0 : index
    %6 = vector.load %arg2[%c0_2, %c0_3, %c0_4] : memref<6x128x150xbf16, #tpu.memory_space<vmem>>, vector<1x128x150xbf16>
    %7 = vector.shape_cast %6 : vector<1x128x150xbf16> to vector<128x150xbf16>
    %cst = arith.constant dense<0.000000e+00> : vector<32x150xf32>
    %8 = tpu.matmul %5, %7, %cst {dimension_numbers = #tpu.dot_dimension_numbers<[1], [0], [0], [1], [0, 0, 1, 1], [], []>} : vector<32x128xbf16>, vector<128x150xbf16>, vector<32x150xf32> -> vector<32x150xf32>
    %c0_5 = arith.constant 0 : index
    %c0_6 = arith.constant 0 : index
    %c0_7 = arith.constant 0 : index
    %9 = vector.load %arg3[%c0_5, %c0_6, %c0_7] : memref<6x1x150xf32, #tpu.memory_space<vmem>>, vector<1x1x150xf32>
    %10 = vector.shape_cast %9 : vector<1x1x150xf32> to vector<1x150xf32>
    %11 = vector.broadcast %10 : vector<1x150xf32> to vector<32x150xf32>
    %12 = arith.addf %8, %11 : vector<32x150xf32>
    %cst_8 = arith.constant 0.000000e+00 : f32
    %13 = vector.broadcast %cst_8 : f32 to vector<32x150xf32>
    %14 = arith.maximumf %12, %13 : vector<32x150xf32>
    %15 = vector.extract_strided_slice %2 {offsets = [0, 128], sizes = [32, 128], strides = [1, 1]} : vector<32x768xbf16> to vector<32x128xbf16>
    %c1 = arith.constant 1 : index
    %c0_9 = arith.constant 0 : index
    %c0_10 = arith.constant 0 : index
    %16 = vector.load %arg2[%c1, %c0_9, %c0_10] : memref<6x128x150xbf16, #tpu.memory_space<vmem>>, vector<1x128x150xbf16>
    %17 = vector.shape_cast %16 : vector<1x128x150xbf16> to vector<128x150xbf16>
    %cst_11 = arith.constant dense<0.000000e+00> : vector<32x150xf32>
    %18 = tpu.matmul %15, %17, %cst_11 {dimension_numbers = #tpu.dot_dimension_numbers<[1], [0], [0], [1], [0, 0, 1, 1], [], []>} : vector<32x128xbf16>, vector<128x150xbf16>, vector<32x150xf32> -> vector<32x150xf32>
    %c1_12 = arith.constant 1 : index
    %c0_13 = arith.constant 0 : index
    %c0_14 = arith.constant 0 : index
    %19 = vector.load %arg3[%c1_12, %c0_13, %c0_14] : memref<6x1x150xf32, #tpu.memory_space<vmem>>, vector<1x1x150xf32>
    %20 = vector.shape_cast %19 : vector<1x1x150xf32> to vector<1x150xf32>
    %21 = vector.broadcast %20 : vector<1x150xf32> to vector<32x150xf32>
    %22 = arith.addf %18, %21 : vector<32x150xf32>
    %cst_15 = arith.constant 0.000000e+00 : f32
    %23 = vector.broadcast %cst_15 : f32 to vector<32x150xf32>
    %24 = arith.maximumf %22, %23 : vector<32x150xf32>
    %25 = arith.truncf %24 : vector<32x150xf32> to vector<32x150xbf16>
    %c0_16 = arith.constant 0 : index
    %c0_17 = arith.constant 0 : index
    %c0_18 = arith.constant 0 : index
    %26 = vector.load %arg4[%c0_16, %c0_17, %c0_18] : memref<5x150x300xbf16, #tpu.memory_space<vmem>>, vector<1x150x300xbf16>
    %27 = vector.shape_cast %26 : vector<1x150x300xbf16> to vector<150x300xbf16>
    %cst_19 = arith.constant dense<0.000000e+00> : vector<32x300xf32>
    %28 = tpu.matmul %25, %27, %cst_19 {dimension_numbers = #tpu.dot_dimension_numbers<[1], [0], [0], [1], [0, 0, 1, 1], [], []>} : vector<32x150xbf16>, vector<150x300xbf16>, vector<32x300xf32> -> vector<32x300xf32>
    %29 = vector.extract_strided_slice %2 {offsets = [0, 256], sizes = [32, 128], strides = [1, 1]} : vector<32x768xbf16> to vector<32x128xbf16>
    %c2 = arith.constant 2 : index
    %c0_20 = arith.constant 0 : index
    %c0_21 = arith.constant 0 : index
    %30 = vector.load %arg2[%c2, %c0_20, %c0_21] : memref<6x128x150xbf16, #tpu.memory_space<vmem>>, vector<1x128x150xbf16>
    %31 = vector.shape_cast %30 : vector<1x128x150xbf16> to vector<128x150xbf16>
    %cst_22 = arith.constant dense<0.000000e+00> : vector<32x150xf32>
    %32 = tpu.matmul %29, %31, %cst_22 {dimension_numbers = #tpu.dot_dimension_numbers<[1], [0], [0], [1], [0, 0, 1, 1], [], []>} : vector<32x128xbf16>, vector<128x150xbf16>, vector<32x150xf32> -> vector<32x150xf32>
    %c2_23 = arith.constant 2 : index
    %c0_24 = arith.constant 0 : index
    %c0_25 = arith.constant 0 : index
    %33 = vector.load %arg3[%c2_23, %c0_24, %c0_25] : memref<6x1x150xf32, #tpu.memory_space<vmem>>, vector<1x1x150xf32>
    %34 = vector.shape_cast %33 : vector<1x1x150xf32> to vector<1x150xf32>
    %35 = vector.broadcast %34 : vector<1x150xf32> to vector<32x150xf32>
    %36 = arith.addf %32, %35 : vector<32x150xf32>
    %cst_26 = arith.constant 0.000000e+00 : f32
    %37 = vector.broadcast %cst_26 : f32 to vector<32x150xf32>
    %38 = arith.maximumf %36, %37 : vector<32x150xf32>
    %39 = arith.truncf %38 : vector<32x150xf32> to vector<32x150xbf16>
    %c1_27 = arith.constant 1 : index
    %c0_28 = arith.constant 0 : index
    %c0_29 = arith.constant 0 : index
    %40 = vector.load %arg4[%c1_27, %c0_28, %c0_29] : memref<5x150x300xbf16, #tpu.memory_space<vmem>>, vector<1x150x300xbf16>
    %41 = vector.shape_cast %40 : vector<1x150x300xbf16> to vector<150x300xbf16>
    %cst_30 = arith.constant dense<0.000000e+00> : vector<32x300xf32>
    %42 = tpu.matmul %39, %41, %cst_30 {dimension_numbers = #tpu.dot_dimension_numbers<[1], [0], [0], [1], [0, 0, 1, 1], [], []>} : vector<32x150xbf16>, vector<150x300xbf16>, vector<32x300xf32> -> vector<32x300xf32>
    %43 = arith.addf %28, %42 : vector<32x300xf32>
    %44 = vector.extract_strided_slice %2 {offsets = [0, 384], sizes = [32, 128], strides = [1, 1]} : vector<32x768xbf16> to vector<32x128xbf16>
    %c3 = arith.constant 3 : index
    %c0_31 = arith.constant 0 : index
    %c0_32 = arith.constant 0 : index
    %45 = vector.load %arg2[%c3, %c0_31, %c0_32] : memref<6x128x150xbf16, #tpu.memory_space<vmem>>, vector<1x128x150xbf16>
    %46 = vector.shape_cast %45 : vector<1x128x150xbf16> to vector<128x150xbf16>
    %cst_33 = arith.constant dense<0.000000e+00> : vector<32x150xf32>
    %47 = tpu.matmul %44, %46, %cst_33 {dimension_numbers = #tpu.dot_dimension_numbers<[1], [0], [0], [1], [0, 0, 1, 1], [], []>} : vector<32x128xbf16>, vector<128x150xbf16>, vector<32x150xf32> -> vector<32x150xf32>
    %c3_34 = arith.constant 3 : index
    %c0_35 = arith.constant 0 : index
    %c0_36 = arith.constant 0 : index
    %48 = vector.load %arg3[%c3_34, %c0_35, %c0_36] : memref<6x1x150xf32, #tpu.memory_space<vmem>>, vector<1x1x150xf32>
    %49 = vector.shape_cast %48 : vector<1x1x150xf32> to vector<1x150xf32>
    %50 = vector.broadcast %49 : vector<1x150xf32> to vector<32x150xf32>
    %51 = arith.addf %47, %50 : vector<32x150xf32>
    %cst_37 = arith.constant 0.000000e+00 : f32
    %52 = vector.broadcast %cst_37 : f32 to vector<32x150xf32>
    %53 = arith.maximumf %51, %52 : vector<32x150xf32>
    %54 = arith.truncf %53 : vector<32x150xf32> to vector<32x150xbf16>
    %c2_38 = arith.constant 2 : index
    %c0_39 = arith.constant 0 : index
    %c0_40 = arith.constant 0 : index
    %55 = vector.load %arg4[%c2_38, %c0_39, %c0_40] : memref<5x150x300xbf16, #tpu.memory_space<vmem>>, vector<1x150x300xbf16>
    %56 = vector.shape_cast %55 : vector<1x150x300xbf16> to vector<150x300xbf16>
    %cst_41 = arith.constant dense<0.000000e+00> : vector<32x300xf32>
    %57 = tpu.matmul %54, %56, %cst_41 {dimension_numbers = #tpu.dot_dimension_numbers<[1], [0], [0], [1], [0, 0, 1, 1], [], []>} : vector<32x150xbf16>, vector<150x300xbf16>, vector<32x300xf32> -> vector<32x300xf32>
    %58 = arith.addf %43, %57 : vector<32x300xf32>
    %59 = vector.extract_strided_slice %2 {offsets = [0, 512], sizes = [32, 128], strides = [1, 1]} : vector<32x768xbf16> to vector<32x128xbf16>
    %c4 = arith.constant 4 : index
    %c0_42 = arith.constant 0 : index
    %c0_43 = arith.constant 0 : index
    %60 = vector.load %arg2[%c4, %c0_42, %c0_43] : memref<6x128x150xbf16, #tpu.memory_space<vmem>>, vector<1x128x150xbf16>
    %61 = vector.shape_cast %60 : vector<1x128x150xbf16> to vector<128x150xbf16>
    %cst_44 = arith.constant dense<0.000000e+00> : vector<32x150xf32>
    %62 = tpu.matmul %59, %61, %cst_44 {dimension_numbers = #tpu.dot_dimension_numbers<[1], [0], [0], [1], [0, 0, 1, 1], [], []>} : vector<32x128xbf16>, vector<128x150xbf16>, vector<32x150xf32> -> vector<32x150xf32>
    %c4_45 = arith.constant 4 : index
    %c0_46 = arith.constant 0 : index
    %c0_47 = arith.constant 0 : index
    %63 = vector.load %arg3[%c4_45, %c0_46, %c0_47] : memref<6x1x150xf32, #tpu.memory_space<vmem>>, vector<1x1x150xf32>
    %64 = vector.shape_cast %63 : vector<1x1x150xf32> to vector<1x150xf32>
    %65 = vector.broadcast %64 : vector<1x150xf32> to vector<32x150xf32>
    %66 = arith.addf %62, %65 : vector<32x150xf32>
    %cst_48 = arith.constant 0.000000e+00 : f32
    %67 = vector.broadcast %cst_48 : f32 to vector<32x150xf32>
    %68 = arith.maximumf %66, %67 : vector<32x150xf32>
    %69 = arith.truncf %68 : vector<32x150xf32> to vector<32x150xbf16>
    %c3_49 = arith.constant 3 : index
    %c0_50 = arith.constant 0 : index
    %c0_51 = arith.constant 0 : index
    %70 = vector.load %arg4[%c3_49, %c0_50, %c0_51] : memref<5x150x300xbf16, #tpu.memory_space<vmem>>, vector<1x150x300xbf16>
    %71 = vector.shape_cast %70 : vector<1x150x300xbf16> to vector<150x300xbf16>
    %cst_52 = arith.constant dense<0.000000e+00> : vector<32x300xf32>
    %72 = tpu.matmul %69, %71, %cst_52 {dimension_numbers = #tpu.dot_dimension_numbers<[1], [0], [0], [1], [0, 0, 1, 1], [], []>} : vector<32x150xbf16>, vector<150x300xbf16>, vector<32x300xf32> -> vector<32x300xf32>
    %73 = arith.addf %58, %72 : vector<32x300xf32>
    %74 = vector.extract_strided_slice %2 {offsets = [0, 640], sizes = [32, 128], strides = [1, 1]} : vector<32x768xbf16> to vector<32x128xbf16>
    %c5 = arith.constant 5 : index
    %c0_53 = arith.constant 0 : index
    %c0_54 = arith.constant 0 : index
    %75 = vector.load %arg2[%c5, %c0_53, %c0_54] : memref<6x128x150xbf16, #tpu.memory_space<vmem>>, vector<1x128x150xbf16>
    %76 = vector.shape_cast %75 : vector<1x128x150xbf16> to vector<128x150xbf16>
    %cst_55 = arith.constant dense<0.000000e+00> : vector<32x150xf32>
    %77 = tpu.matmul %74, %76, %cst_55 {dimension_numbers = #tpu.dot_dimension_numbers<[1], [0], [0], [1], [0, 0, 1, 1], [], []>} : vector<32x128xbf16>, vector<128x150xbf16>, vector<32x150xf32> -> vector<32x150xf32>
    %c5_56 = arith.constant 5 : index
    %c0_57 = arith.constant 0 : index
    %c0_58 = arith.constant 0 : index
    %78 = vector.load %arg3[%c5_56, %c0_57, %c0_58] : memref<6x1x150xf32, #tpu.memory_space<vmem>>, vector<1x1x150xf32>
    %79 = vector.shape_cast %78 : vector<1x1x150xf32> to vector<1x150xf32>
    %80 = vector.broadcast %79 : vector<1x150xf32> to vector<32x150xf32>
    %81 = arith.addf %77, %80 : vector<32x150xf32>
    %cst_59 = arith.constant 0.000000e+00 : f32
    %82 = vector.broadcast %cst_59 : f32 to vector<32x150xf32>
    %83 = arith.maximumf %81, %82 : vector<32x150xf32>
    %84 = arith.truncf %83 : vector<32x150xf32> to vector<32x150xbf16>
    %c4_60 = arith.constant 4 : index
    %c0_61 = arith.constant 0 : index
    %c0_62 = arith.constant 0 : index
    %85 = vector.load %arg4[%c4_60, %c0_61, %c0_62] : memref<5x150x300xbf16, #tpu.memory_space<vmem>>, vector<1x150x300xbf16>
    %86 = vector.shape_cast %85 : vector<1x150x300xbf16> to vector<150x300xbf16>
    %cst_63 = arith.constant dense<0.000000e+00> : vector<32x300xf32>
    %87 = tpu.matmul %84, %86, %cst_63 {dimension_numbers = #tpu.dot_dimension_numbers<[1], [0], [0], [1], [0, 0, 1, 1], [], []>} : vector<32x150xbf16>, vector<150x300xbf16>, vector<32x300xf32> -> vector<32x300xf32>
    %88 = arith.addf %73, %87 : vector<32x300xf32>
    %c0_64 = arith.constant 0 : index
    %c0_65 = arith.constant 0 : index
    %89 = vector.load %arg5[%c0_64, %c0_65] : memref<1x300xf32, #tpu.memory_space<vmem>>, vector<1x300xf32>
    %90 = vector.broadcast %89 : vector<1x300xf32> to vector<32x300xf32>
    %91 = arith.addf %88, %90 : vector<32x300xf32>
    %cst_66 = arith.constant 0.000000e+00 : f32
    %92 = vector.broadcast %cst_66 : f32 to vector<32x300xf32>
    %93 = arith.maximumf %91, %92 : vector<32x300xf32>
    %94 = arith.truncf %14 : vector<32x150xf32> to vector<32x150xbf16>
    %c0_67 = arith.constant 0 : index
    %c0_68 = arith.constant 0 : index
    %95 = vector.load %arg6[%c0_67, %c0_68] : memref<150x200xbf16, #tpu.memory_space<vmem>>, vector<150x200xbf16>
    %cst_69 = arith.constant dense<0.000000e+00> : vector<32x200xf32>
    %96 = tpu.matmul %94, %95, %cst_69 {dimension_numbers = #tpu.dot_dimension_numbers<[1], [0], [0], [1], [0, 0, 1, 1], [], []>} : vector<32x150xbf16>, vector<150x200xbf16>, vector<32x200xf32> -> vector<32x200xf32>
    %97 = arith.truncf %93 : vector<32x300xf32> to vector<32x300xbf16>
    %c0_70 = arith.constant 0 : index
    %c0_71 = arith.constant 0 : index
    %98 = vector.load %arg7[%c0_70, %c0_71] : memref<300x200xbf16, #tpu.memory_space<vmem>>, vector<300x200xbf16>
    %cst_72 = arith.constant dense<0.000000e+00> : vector<32x200xf32>
    %99 = tpu.matmul %97, %98, %cst_72 {dimension_numbers = #tpu.dot_dimension_numbers<[1], [0], [0], [1], [0, 0, 1, 1], [], []>} : vector<32x300xbf16>, vector<300x200xbf16>, vector<32x200xf32> -> vector<32x200xf32>
    %100 = arith.addf %96, %99 : vector<32x200xf32>
    %c0_73 = arith.constant 0 : index
    %c0_74 = arith.constant 0 : index
    %101 = vector.load %arg8[%c0_73, %c0_74] : memref<128x200xbf16, #tpu.memory_space<vmem>>, vector<128x200xbf16>
    %cst_75 = arith.constant dense<0.000000e+00> : vector<32x200xf32>
    %102 = tpu.matmul %4, %101, %cst_75 {dimension_numbers = #tpu.dot_dimension_numbers<[1], [0], [0], [1], [0, 0, 1, 1], [], []>} : vector<32x128xbf16>, vector<128x200xbf16>, vector<32x200xf32> -> vector<32x200xf32>
    %103 = arith.addf %100, %102 : vector<32x200xf32>
    %c0_76 = arith.constant 0 : index
    %c0_77 = arith.constant 0 : index
    %104 = vector.load %arg9[%c0_76, %c0_77] : memref<1x200xf32, #tpu.memory_space<vmem>>, vector<1x200xf32>
    %105 = vector.broadcast %104 : vector<1x200xf32> to vector<32x200xf32>
    %106 = arith.addf %103, %105 : vector<32x200xf32>
    %cst_78 = arith.constant 0.000000e+00 : f32
    %107 = vector.broadcast %cst_78 : f32 to vector<32x200xf32>
    %108 = arith.maximumf %106, %107 : vector<32x200xf32>
    %109 = vector.extract_strided_slice %3 {offsets = [0, 0], sizes = [32, 128], strides = [1, 1]} : vector<32x768xbf16> to vector<32x128xbf16>
    %c0_79 = arith.constant 0 : index
    %c0_80 = arith.constant 0 : index
    %c0_81 = arith.constant 0 : index
    %110 = vector.load %arg10[%c0_79, %c0_80, %c0_81] : memref<6x128x150xbf16, #tpu.memory_space<vmem>>, vector<1x128x150xbf16>
    %111 = vector.shape_cast %110 : vector<1x128x150xbf16> to vector<128x150xbf16>
    %cst_82 = arith.constant dense<0.000000e+00> : vector<32x150xf32>
    %112 = tpu.matmul %109, %111, %cst_82 {dimension_numbers = #tpu.dot_dimension_numbers<[1], [0], [0], [1], [0, 0, 1, 1], [], []>} : vector<32x128xbf16>, vector<128x150xbf16>, vector<32x150xf32> -> vector<32x150xf32>
    %c0_83 = arith.constant 0 : index
    %c0_84 = arith.constant 0 : index
    %c0_85 = arith.constant 0 : index
    %113 = vector.load %arg11[%c0_83, %c0_84, %c0_85] : memref<6x1x150xf32, #tpu.memory_space<vmem>>, vector<1x1x150xf32>
    %114 = vector.shape_cast %113 : vector<1x1x150xf32> to vector<1x150xf32>
    %115 = vector.broadcast %114 : vector<1x150xf32> to vector<32x150xf32>
    %116 = arith.addf %112, %115 : vector<32x150xf32>
    %cst_86 = arith.constant 0.000000e+00 : f32
    %117 = vector.broadcast %cst_86 : f32 to vector<32x150xf32>
    %118 = arith.maximumf %116, %117 : vector<32x150xf32>
    %119 = vector.extract_strided_slice %3 {offsets = [0, 128], sizes = [32, 128], strides = [1, 1]} : vector<32x768xbf16> to vector<32x128xbf16>
    %c1_87 = arith.constant 1 : index
    %c0_88 = arith.constant 0 : index
    %c0_89 = arith.constant 0 : index
    %120 = vector.load %arg10[%c1_87, %c0_88, %c0_89] : memref<6x128x150xbf16, #tpu.memory_space<vmem>>, vector<1x128x150xbf16>
    %121 = vector.shape_cast %120 : vector<1x128x150xbf16> to vector<128x150xbf16>
    %cst_90 = arith.constant dense<0.000000e+00> : vector<32x150xf32>
    %122 = tpu.matmul %119, %121, %cst_90 {dimension_numbers = #tpu.dot_dimension_numbers<[1], [0], [0], [1], [0, 0, 1, 1], [], []>} : vector<32x128xbf16>, vector<128x150xbf16>, vector<32x150xf32> -> vector<32x150xf32>
    %c1_91 = arith.constant 1 : index
    %c0_92 = arith.constant 0 : index
    %c0_93 = arith.constant 0 : index
    %123 = vector.load %arg11[%c1_91, %c0_92, %c0_93] : memref<6x1x150xf32, #tpu.memory_space<vmem>>, vector<1x1x150xf32>
    %124 = vector.shape_cast %123 : vector<1x1x150xf32> to vector<1x150xf32>
    %125 = vector.broadcast %124 : vector<1x150xf32> to vector<32x150xf32>
    %126 = arith.addf %122, %125 : vector<32x150xf32>
    %cst_94 = arith.constant 0.000000e+00 : f32
    %127 = vector.broadcast %cst_94 : f32 to vector<32x150xf32>
    %128 = arith.maximumf %126, %127 : vector<32x150xf32>
    %129 = arith.truncf %128 : vector<32x150xf32> to vector<32x150xbf16>
    %c0_95 = arith.constant 0 : index
    %c0_96 = arith.constant 0 : index
    %c0_97 = arith.constant 0 : index
    %130 = vector.load %arg12[%c0_95, %c0_96, %c0_97] : memref<5x150x300xbf16, #tpu.memory_space<vmem>>, vector<1x150x300xbf16>
    %131 = vector.shape_cast %130 : vector<1x150x300xbf16> to vector<150x300xbf16>
    %cst_98 = arith.constant dense<0.000000e+00> : vector<32x300xf32>
    %132 = tpu.matmul %129, %131, %cst_98 {dimension_numbers = #tpu.dot_dimension_numbers<[1], [0], [0], [1], [0, 0, 1, 1], [], []>} : vector<32x150xbf16>, vector<150x300xbf16>, vector<32x300xf32> -> vector<32x300xf32>
    %133 = vector.extract_strided_slice %3 {offsets = [0, 256], sizes = [32, 128], strides = [1, 1]} : vector<32x768xbf16> to vector<32x128xbf16>
    %c2_99 = arith.constant 2 : index
    %c0_100 = arith.constant 0 : index
    %c0_101 = arith.constant 0 : index
    %134 = vector.load %arg10[%c2_99, %c0_100, %c0_101] : memref<6x128x150xbf16, #tpu.memory_space<vmem>>, vector<1x128x150xbf16>
    %135 = vector.shape_cast %134 : vector<1x128x150xbf16> to vector<128x150xbf16>
    %cst_102 = arith.constant dense<0.000000e+00> : vector<32x150xf32>
    %136 = tpu.matmul %133, %135, %cst_102 {dimension_numbers = #tpu.dot_dimension_numbers<[1], [0], [0], [1], [0, 0, 1, 1], [], []>} : vector<32x128xbf16>, vector<128x150xbf16>, vector<32x150xf32> -> vector<32x150xf32>
    %c2_103 = arith.constant 2 : index
    %c0_104 = arith.constant 0 : index
    %c0_105 = arith.constant 0 : index
    %137 = vector.load %arg11[%c2_103, %c0_104, %c0_105] : memref<6x1x150xf32, #tpu.memory_space<vmem>>, vector<1x1x150xf32>
    %138 = vector.shape_cast %137 : vector<1x1x150xf32> to vector<1x150xf32>
    %139 = vector.broadcast %138 : vector<1x150xf32> to vector<32x150xf32>
    %140 = arith.addf %136, %139 : vector<32x150xf32>
    %cst_106 = arith.constant 0.000000e+00 : f32
    %141 = vector.broadcast %cst_106 : f32 to vector<32x150xf32>
    %142 = arith.maximumf %140, %141 : vector<32x150xf32>
    %143 = arith.truncf %142 : vector<32x150xf32> to vector<32x150xbf16>
    %c1_107 = arith.constant 1 : index
    %c0_108 = arith.constant 0 : index
    %c0_109 = arith.constant 0 : index
    %144 = vector.load %arg12[%c1_107, %c0_108, %c0_109] : memref<5x150x300xbf16, #tpu.memory_space<vmem>>, vector<1x150x300xbf16>
    %145 = vector.shape_cast %144 : vector<1x150x300xbf16> to vector<150x300xbf16>
    %cst_110 = arith.constant dense<0.000000e+00> : vector<32x300xf32>
    %146 = tpu.matmul %143, %145, %cst_110 {dimension_numbers = #tpu.dot_dimension_numbers<[1], [0], [0], [1], [0, 0, 1, 1], [], []>} : vector<32x150xbf16>, vector<150x300xbf16>, vector<32x300xf32> -> vector<32x300xf32>
    %147 = arith.addf %132, %146 : vector<32x300xf32>
    %148 = vector.extract_strided_slice %3 {offsets = [0, 384], sizes = [32, 128], strides = [1, 1]} : vector<32x768xbf16> to vector<32x128xbf16>
    %c3_111 = arith.constant 3 : index
    %c0_112 = arith.constant 0 : index
    %c0_113 = arith.constant 0 : index
    %149 = vector.load %arg10[%c3_111, %c0_112, %c0_113] : memref<6x128x150xbf16, #tpu.memory_space<vmem>>, vector<1x128x150xbf16>
    %150 = vector.shape_cast %149 : vector<1x128x150xbf16> to vector<128x150xbf16>
    %cst_114 = arith.constant dense<0.000000e+00> : vector<32x150xf32>
    %151 = tpu.matmul %148, %150, %cst_114 {dimension_numbers = #tpu.dot_dimension_numbers<[1], [0], [0], [1], [0, 0, 1, 1], [], []>} : vector<32x128xbf16>, vector<128x150xbf16>, vector<32x150xf32> -> vector<32x150xf32>
    %c3_115 = arith.constant 3 : index
    %c0_116 = arith.constant 0 : index
    %c0_117 = arith.constant 0 : index
    %152 = vector.load %arg11[%c3_115, %c0_116, %c0_117] : memref<6x1x150xf32, #tpu.memory_space<vmem>>, vector<1x1x150xf32>
    %153 = vector.shape_cast %152 : vector<1x1x150xf32> to vector<1x150xf32>
    %154 = vector.broadcast %153 : vector<1x150xf32> to vector<32x150xf32>
    %155 = arith.addf %151, %154 : vector<32x150xf32>
    %cst_118 = arith.constant 0.000000e+00 : f32
    %156 = vector.broadcast %cst_118 : f32 to vector<32x150xf32>
    %157 = arith.maximumf %155, %156 : vector<32x150xf32>
    %158 = arith.truncf %157 : vector<32x150xf32> to vector<32x150xbf16>
    %c2_119 = arith.constant 2 : index
    %c0_120 = arith.constant 0 : index
    %c0_121 = arith.constant 0 : index
    %159 = vector.load %arg12[%c2_119, %c0_120, %c0_121] : memref<5x150x300xbf16, #tpu.memory_space<vmem>>, vector<1x150x300xbf16>
    %160 = vector.shape_cast %159 : vector<1x150x300xbf16> to vector<150x300xbf16>
    %cst_122 = arith.constant dense<0.000000e+00> : vector<32x300xf32>
    %161 = tpu.matmul %158, %160, %cst_122 {dimension_numbers = #tpu.dot_dimension_numbers<[1], [0], [0], [1], [0, 0, 1, 1], [], []>} : vector<32x150xbf16>, vector<150x300xbf16>, vector<32x300xf32> -> vector<32x300xf32>
    %162 = arith.addf %147, %161 : vector<32x300xf32>
    %163 = vector.extract_strided_slice %3 {offsets = [0, 512], sizes = [32, 128], strides = [1, 1]} : vector<32x768xbf16> to vector<32x128xbf16>
    %c4_123 = arith.constant 4 : index
    %c0_124 = arith.constant 0 : index
    %c0_125 = arith.constant 0 : index
    %164 = vector.load %arg10[%c4_123, %c0_124, %c0_125] : memref<6x128x150xbf16, #tpu.memory_space<vmem>>, vector<1x128x150xbf16>
    %165 = vector.shape_cast %164 : vector<1x128x150xbf16> to vector<128x150xbf16>
    %cst_126 = arith.constant dense<0.000000e+00> : vector<32x150xf32>
    %166 = tpu.matmul %163, %165, %cst_126 {dimension_numbers = #tpu.dot_dimension_numbers<[1], [0], [0], [1], [0, 0, 1, 1], [], []>} : vector<32x128xbf16>, vector<128x150xbf16>, vector<32x150xf32> -> vector<32x150xf32>
    %c4_127 = arith.constant 4 : index
    %c0_128 = arith.constant 0 : index
    %c0_129 = arith.constant 0 : index
    %167 = vector.load %arg11[%c4_127, %c0_128, %c0_129] : memref<6x1x150xf32, #tpu.memory_space<vmem>>, vector<1x1x150xf32>
    %168 = vector.shape_cast %167 : vector<1x1x150xf32> to vector<1x150xf32>
    %169 = vector.broadcast %168 : vector<1x150xf32> to vector<32x150xf32>
    %170 = arith.addf %166, %169 : vector<32x150xf32>
    %cst_130 = arith.constant 0.000000e+00 : f32
    %171 = vector.broadcast %cst_130 : f32 to vector<32x150xf32>
    %172 = arith.maximumf %170, %171 : vector<32x150xf32>
    %173 = arith.truncf %172 : vector<32x150xf32> to vector<32x150xbf16>
    %c3_131 = arith.constant 3 : index
    %c0_132 = arith.constant 0 : index
    %c0_133 = arith.constant 0 : index
    %174 = vector.load %arg12[%c3_131, %c0_132, %c0_133] : memref<5x150x300xbf16, #tpu.memory_space<vmem>>, vector<1x150x300xbf16>
    %175 = vector.shape_cast %174 : vector<1x150x300xbf16> to vector<150x300xbf16>
    %cst_134 = arith.constant dense<0.000000e+00> : vector<32x300xf32>
    %176 = tpu.matmul %173, %175, %cst_134 {dimension_numbers = #tpu.dot_dimension_numbers<[1], [0], [0], [1], [0, 0, 1, 1], [], []>} : vector<32x150xbf16>, vector<150x300xbf16>, vector<32x300xf32> -> vector<32x300xf32>
    %177 = arith.addf %162, %176 : vector<32x300xf32>
    %178 = vector.extract_strided_slice %3 {offsets = [0, 640], sizes = [32, 128], strides = [1, 1]} : vector<32x768xbf16> to vector<32x128xbf16>
    %c5_135 = arith.constant 5 : index
    %c0_136 = arith.constant 0 : index
    %c0_137 = arith.constant 0 : index
    %179 = vector.load %arg10[%c5_135, %c0_136, %c0_137] : memref<6x128x150xbf16, #tpu.memory_space<vmem>>, vector<1x128x150xbf16>
    %180 = vector.shape_cast %179 : vector<1x128x150xbf16> to vector<128x150xbf16>
    %cst_138 = arith.constant dense<0.000000e+00> : vector<32x150xf32>
    %181 = tpu.matmul %178, %180, %cst_138 {dimension_numbers = #tpu.dot_dimension_numbers<[1], [0], [0], [1], [0, 0, 1, 1], [], []>} : vector<32x128xbf16>, vector<128x150xbf16>, vector<32x150xf32> -> vector<32x150xf32>
    %c5_139 = arith.constant 5 : index
    %c0_140 = arith.constant 0 : index
    %c0_141 = arith.constant 0 : index
    %182 = vector.load %arg11[%c5_139, %c0_140, %c0_141] : memref<6x1x150xf32, #tpu.memory_space<vmem>>, vector<1x1x150xf32>
    %183 = vector.shape_cast %182 : vector<1x1x150xf32> to vector<1x150xf32>
    %184 = vector.broadcast %183 : vector<1x150xf32> to vector<32x150xf32>
    %185 = arith.addf %181, %184 : vector<32x150xf32>
    %cst_142 = arith.constant 0.000000e+00 : f32
    %186 = vector.broadcast %cst_142 : f32 to vector<32x150xf32>
    %187 = arith.maximumf %185, %186 : vector<32x150xf32>
    %188 = arith.truncf %187 : vector<32x150xf32> to vector<32x150xbf16>
    %c4_143 = arith.constant 4 : index
    %c0_144 = arith.constant 0 : index
    %c0_145 = arith.constant 0 : index
    %189 = vector.load %arg12[%c4_143, %c0_144, %c0_145] : memref<5x150x300xbf16, #tpu.memory_space<vmem>>, vector<1x150x300xbf16>
    %190 = vector.shape_cast %189 : vector<1x150x300xbf16> to vector<150x300xbf16>
    %cst_146 = arith.constant dense<0.000000e+00> : vector<32x300xf32>
    %191 = tpu.matmul %188, %190, %cst_146 {dimension_numbers = #tpu.dot_dimension_numbers<[1], [0], [0], [1], [0, 0, 1, 1], [], []>} : vector<32x150xbf16>, vector<150x300xbf16>, vector<32x300xf32> -> vector<32x300xf32>
    %192 = arith.addf %177, %191 : vector<32x300xf32>
    %c0_147 = arith.constant 0 : index
    %c0_148 = arith.constant 0 : index
    %193 = vector.load %arg13[%c0_147, %c0_148] : memref<1x300xf32, #tpu.memory_space<vmem>>, vector<1x300xf32>
    %194 = vector.broadcast %193 : vector<1x300xf32> to vector<32x300xf32>
    %195 = arith.addf %192, %194 : vector<32x300xf32>
    %cst_149 = arith.constant 0.000000e+00 : f32
    %196 = vector.broadcast %cst_149 : f32 to vector<32x300xf32>
    %197 = arith.maximumf %195, %196 : vector<32x300xf32>
    %198 = arith.truncf %118 : vector<32x150xf32> to vector<32x150xbf16>
    %c0_150 = arith.constant 0 : index
    %c0_151 = arith.constant 0 : index
    %199 = vector.load %arg14[%c0_150, %c0_151] : memref<150x200xbf16, #tpu.memory_space<vmem>>, vector<150x200xbf16>
    %cst_152 = arith.constant dense<0.000000e+00> : vector<32x200xf32>
    %200 = tpu.matmul %198, %199, %cst_152 {dimension_numbers = #tpu.dot_dimension_numbers<[1], [0], [0], [1], [0, 0, 1, 1], [], []>} : vector<32x150xbf16>, vector<150x200xbf16>, vector<32x200xf32> -> vector<32x200xf32>
    %201 = arith.truncf %197 : vector<32x300xf32> to vector<32x300xbf16>
    %c0_153 = arith.constant 0 : index
    %c0_154 = arith.constant 0 : index
    %202 = vector.load %arg15[%c0_153, %c0_154] : memref<300x200xbf16, #tpu.memory_space<vmem>>, vector<300x200xbf16>
    %cst_155 = arith.constant dense<0.000000e+00> : vector<32x200xf32>
    %203 = tpu.matmul %201, %202, %cst_155 {dimension_numbers = #tpu.dot_dimension_numbers<[1], [0], [0], [1], [0, 0, 1, 1], [], []>} : vector<32x300xbf16>, vector<300x200xbf16>, vector<32x200xf32> -> vector<32x200xf32>
    %204 = arith.addf %200, %203 : vector<32x200xf32>
    %c0_156 = arith.constant 0 : index
    %c0_157 = arith.constant 0 : index
    %205 = vector.load %arg16[%c0_156, %c0_157] : memref<128x200xbf16, #tpu.memory_space<vmem>>, vector<128x200xbf16>
    %cst_158 = arith.constant dense<0.000000e+00> : vector<32x200xf32>
    %206 = tpu.matmul %4, %205, %cst_158 {dimension_numbers = #tpu.dot_dimension_numbers<[1], [0], [0], [1], [0, 0, 1, 1], [], []>} : vector<32x128xbf16>, vector<128x200xbf16>, vector<32x200xf32> -> vector<32x200xf32>
    %207 = arith.addf %204, %206 : vector<32x200xf32>
    %c0_159 = arith.constant 0 : index
    %c0_160 = arith.constant 0 : index
    %208 = vector.load %arg17[%c0_159, %c0_160] : memref<1x200xf32, #tpu.memory_space<vmem>>, vector<1x200xf32>
    %209 = vector.broadcast %208 : vector<1x200xf32> to vector<32x200xf32>
    %210 = arith.addf %207, %209 : vector<32x200xf32>
    %cst_161 = arith.constant 0.000000e+00 : f32
    %211 = vector.broadcast %cst_161 : f32 to vector<32x200xf32>
    %212 = arith.maximumf %210, %211 : vector<32x200xf32>
    %213 = arith.truncf %108 : vector<32x200xf32> to vector<32x200xbf16>
    %c0_162 = arith.constant 0 : index
    %c0_163 = arith.constant 0 : index
    %214 = vector.load %arg18[%c0_162, %c0_163] : memref<200x512xbf16, #tpu.memory_space<vmem>>, vector<200x512xbf16>
    %cst_164 = arith.constant dense<0.000000e+00> : vector<32x512xf32>
    %215 = tpu.matmul %213, %214, %cst_164 {dimension_numbers = #tpu.dot_dimension_numbers<[1], [0], [0], [1], [0, 0, 1, 1], [], []>} : vector<32x200xbf16>, vector<200x512xbf16>, vector<32x512xf32> -> vector<32x512xf32>
    %216 = arith.truncf %212 : vector<32x200xf32> to vector<32x200xbf16>
    %c0_165 = arith.constant 0 : index
    %c0_166 = arith.constant 0 : index
    %217 = vector.load %arg19[%c0_165, %c0_166] : memref<200x512xbf16, #tpu.memory_space<vmem>>, vector<200x512xbf16>
    %cst_167 = arith.constant dense<0.000000e+00> : vector<32x512xf32>
    %218 = tpu.matmul %216, %217, %cst_167 {dimension_numbers = #tpu.dot_dimension_numbers<[1], [0], [0], [1], [0, 0, 1, 1], [], []>} : vector<32x200xbf16>, vector<200x512xbf16>, vector<32x512xf32> -> vector<32x512xf32>
    %219 = arith.addf %215, %218 : vector<32x512xf32>
    %c0_168 = arith.constant 0 : index
    %c0_169 = arith.constant 0 : index
    %220 = vector.load %arg20[%c0_168, %c0_169] : memref<128x512xbf16, #tpu.memory_space<vmem>>, vector<128x512xbf16>
    %cst_170 = arith.constant dense<0.000000e+00> : vector<32x512xf32>
    %221 = tpu.matmul %4, %220, %cst_170 {dimension_numbers = #tpu.dot_dimension_numbers<[1], [0], [0], [1], [0, 0, 1, 1], [], []>} : vector<32x128xbf16>, vector<128x512xbf16>, vector<32x512xf32> -> vector<32x512xf32>
    %222 = arith.addf %219, %221 : vector<32x512xf32>
    %c0_171 = arith.constant 0 : index
    %c0_172 = arith.constant 0 : index
    %223 = vector.load %arg22[%c0_171, %c0_172] : memref<1x512xf32, #tpu.memory_space<vmem>>, vector<1x512xf32>
    %224 = vector.broadcast %223 : vector<1x512xf32> to vector<32x512xf32>
    %225 = arith.addf %222, %224 : vector<32x512xf32>
    %c0_173 = arith.constant 0 : index
    %c0_174 = arith.constant 0 : index
    %226 = vector.load %arg31[%c0_173, %c0_174] : memref<32x512xf32, #tpu.memory_space<vmem>>, vector<32x512xf32>
    tpu.vector_store %arg31[%c0_173, %c0_174], %225 {strides = array<i32>} : memref<32x512xf32, #tpu.memory_space<vmem>>, vector<32x512xf32>,
    %c0_175 = arith.constant 0 : index
    %c0_176 = arith.constant 0 : index
    %227 = vector.load %arg21[%c0_175, %c0_176] : memref<128x512xbf16, #tpu.memory_space<vmem>>, vector<128x512xbf16>
    %cst_177 = arith.constant 0.000000e+00 : f32
    %228 = vector.broadcast %cst_177 : f32 to vector<8x128xf32>
    %cst_178 = arith.constant 0.000000e+00 : f32
    %229 = vector.broadcast %cst_178 : f32 to vector<8x128xf32>
    %c0_179 = arith.constant 0 : index
    %c0_180 = arith.constant 0 : index
    %230 = vector.load %arg31[%c0_179, %c0_180] : memref<32x512xf32, #tpu.memory_space<vmem>>, vector<8x512xf32>
    %231 = arith.truncf %228 : vector<8x128xf32> to vector<8x128xbf16>
    %cst_181 = arith.constant dense<0.000000e+00> : vector<8x512xf32>
    %232 = tpu.matmul %231, %227, %cst_181 {dimension_numbers = #tpu.dot_dimension_numbers<[1], [0], [0], [1], [0, 0, 1, 1], [], []>} : vector<8x128xbf16>, vector<128x512xbf16>, vector<8x512xf32> -> vector<8x512xf32>
    %233 = arith.addf %230, %232 : vector<8x512xf32>
    %234 = vector.extract_strided_slice %233 {offsets = [0, 0], sizes = [8, 128], strides = [1, 1]} : vector<8x512xf32> to vector<8x128xf32>
    %235 = arith.negf %234 : vector<8x128xf32>
    %236 = math.exp %235 : vector<8x128xf32>
    %cst_182 = arith.constant 1.000000e+00 : f32
    %237 = vector.broadcast %cst_182 : f32 to vector<8x128xf32>
    %238 = arith.addf %237, %236 : vector<8x128xf32>
    %239 = arith.divf %237, %238 : vector<8x128xf32>
    %240 = vector.extract_strided_slice %233 {offsets = [0, 128], sizes = [8, 128], strides = [1, 1]} : vector<8x512xf32> to vector<8x128xf32>
    %241 = arith.negf %240 : vector<8x128xf32>
    %242 = math.exp %241 : vector<8x128xf32>
    %cst_183 = arith.constant 1.000000e+00 : f32
    %243 = vector.broadcast %cst_183 : f32 to vector<8x128xf32>
    %244 = arith.addf %243, %242 : vector<8x128xf32>
    %245 = arith.divf %243, %244 : vector<8x128xf32>
    %246 = vector.extract_strided_slice %233 {offsets = [0, 256], sizes = [8, 128], strides = [1, 1]} : vector<8x512xf32> to vector<8x128xf32>
    %247 = math.tanh %246 : vector<8x128xf32>
    %248 = vector.extract_strided_slice %233 {offsets = [0, 384], sizes = [8, 128], strides = [1, 1]} : vector<8x512xf32> to vector<8x128xf32>
    %249 = arith.negf %248 : vector<8x128xf32>
    %250 = math.exp %249 : vector<8x128xf32>
    %cst_184 = arith.constant 1.000000e+00 : f32
    %251 = vector.broadcast %cst_184 : f32 to vector<8x128xf32>
    %252 = arith.addf %251, %250 : vector<8x128xf32>
    %253 = arith.divf %251, %252 : vector<8x128xf32>
    %254 = arith.mulf %245, %229 : vector<8x128xf32>
    %255 = arith.mulf %239, %247 : vector<8x128xf32>
    %256 = arith.addf %254, %255 : vector<8x128xf32>
    %257 = math.tanh %256 : vector<8x128xf32>
    %258 = arith.mulf %253, %257 : vector<8x128xf32>
    %c0_185 = arith.constant 0 : index
    %c0_186 = arith.constant 0 : index
    %259 = vector.load %arg32[%c0_185, %c0_186] : memref<32x128xf32, #tpu.memory_space<vmem>>, vector<8x128xf32>
    tpu.vector_store %arg32[%c0_185, %c0_186], %258 {strides = array<i32>} : memref<32x128xf32, #tpu.memory_space<vmem>>, vector<8x128xf32>,
    %c8 = arith.constant 8 : index
    %c0_187 = arith.constant 0 : index
    %260 = vector.load %arg31[%c8, %c0_187] : memref<32x512xf32, #tpu.memory_space<vmem>>, vector<8x512xf32>
    %261 = arith.truncf %258 : vector<8x128xf32> to vector<8x128xbf16>
    %cst_188 = arith.constant dense<0.000000e+00> : vector<8x512xf32>
    %262 = tpu.matmul %261, %227, %cst_188 {dimension_numbers = #tpu.dot_dimension_numbers<[1], [0], [0], [1], [0, 0, 1, 1], [], []>} : vector<8x128xbf16>, vector<128x512xbf16>, vector<8x512xf32> -> vector<8x512xf32>
    %263 = arith.addf %260, %262 : vector<8x512xf32>
    %264 = vector.extract_strided_slice %263 {offsets = [0, 0], sizes = [8, 128], strides = [1, 1]} : vector<8x512xf32> to vector<8x128xf32>
    %265 = arith.negf %264 : vector<8x128xf32>
    %266 = math.exp %265 : vector<8x128xf32>
    %cst_189 = arith.constant 1.000000e+00 : f32
    %267 = vector.broadcast %cst_189 : f32 to vector<8x128xf32>
    %268 = arith.addf %267, %266 : vector<8x128xf32>
    %269 = arith.divf %267, %268 : vector<8x128xf32>
    %270 = vector.extract_strided_slice %263 {offsets = [0, 128], sizes = [8, 128], strides = [1, 1]} : vector<8x512xf32> to vector<8x128xf32>
    %271 = arith.negf %270 : vector<8x128xf32>
    %272 = math.exp %271 : vector<8x128xf32>
    %cst_190 = arith.constant 1.000000e+00 : f32
    %273 = vector.broadcast %cst_190 : f32 to vector<8x128xf32>
    %274 = arith.addf %273, %272 : vector<8x128xf32>
    %275 = arith.divf %273, %274 : vector<8x128xf32>
    %276 = vector.extract_strided_slice %263 {offsets = [0, 256], sizes = [8, 128], strides = [1, 1]} : vector<8x512xf32> to vector<8x128xf32>
    %277 = math.tanh %276 : vector<8x128xf32>
    %278 = vector.extract_strided_slice %263 {offsets = [0, 384], sizes = [8, 128], strides = [1, 1]} : vector<8x512xf32> to vector<8x128xf32>
    %279 = arith.negf %278 : vector<8x128xf32>
    %280 = math.exp %279 : vector<8x128xf32>
    %cst_191 = arith.constant 1.000000e+00 : f32
    %281 = vector.broadcast %cst_191 : f32 to vector<8x128xf32>
    %282 = arith.addf %281, %280 : vector<8x128xf32>
    %283 = arith.divf %281, %282 : vector<8x128xf32>
    %284 = arith.mulf %275, %256 : vector<8x128xf32>
    %285 = arith.mulf %269, %277 : vector<8x128xf32>
    %286 = arith.addf %284, %285 : vector<8x128xf32>
    %287 = math.tanh %286 : vector<8x128xf32>
    %288 = arith.mulf %283, %287 : vector<8x128xf32>
    %c8_192 = arith.constant 8 : index
    %c0_193 = arith.constant 0 : index
    %289 = vector.load %arg32[%c8_192, %c0_193] : memref<32x128xf32, #tpu.memory_space<vmem>>, vector<8x128xf32>
    tpu.vector_store %arg32[%c8_192, %c0_193], %288 {strides = array<i32>} : memref<32x128xf32, #tpu.memory_space<vmem>>, vector<8x128xf32>,
    %c16 = arith.constant 16 : index
    %c0_194 = arith.constant 0 : index
    %290 = vector.load %arg31[%c16, %c0_194] : memref<32x512xf32, #tpu.memory_space<vmem>>, vector<8x512xf32>
    %291 = arith.truncf %288 : vector<8x128xf32> to vector<8x128xbf16>
    %cst_195 = arith.constant dense<0.000000e+00> : vector<8x512xf32>
    %292 = tpu.matmul %291, %227, %cst_195 {dimension_numbers = #tpu.dot_dimension_numbers<[1], [0], [0], [1], [0, 0, 1, 1], [], []>} : vector<8x128xbf16>, vector<128x512xbf16>, vector<8x512xf32> -> vector<8x512xf32>
    %293 = arith.addf %290, %292 : vector<8x512xf32>
    %294 = vector.extract_strided_slice %293 {offsets = [0, 0], sizes = [8, 128], strides = [1, 1]} : vector<8x512xf32> to vector<8x128xf32>
    %295 = arith.negf %294 : vector<8x128xf32>
    %296 = math.exp %295 : vector<8x128xf32>
    %cst_196 = arith.constant 1.000000e+00 : f32
    %297 = vector.broadcast %cst_196 : f32 to vector<8x128xf32>
    %298 = arith.addf %297, %296 : vector<8x128xf32>
    %299 = arith.divf %297, %298 : vector<8x128xf32>
    %300 = vector.extract_strided_slice %293 {offsets = [0, 128], sizes = [8, 128], strides = [1, 1]} : vector<8x512xf32> to vector<8x128xf32>
    %301 = arith.negf %300 : vector<8x128xf32>
    %302 = math.exp %301 : vector<8x128xf32>
    %cst_197 = arith.constant 1.000000e+00 : f32
    %303 = vector.broadcast %cst_197 : f32 to vector<8x128xf32>
    %304 = arith.addf %303, %302 : vector<8x128xf32>
    %305 = arith.divf %303, %304 : vector<8x128xf32>
    %306 = vector.extract_strided_slice %293 {offsets = [0, 256], sizes = [8, 128], strides = [1, 1]} : vector<8x512xf32> to vector<8x128xf32>
    %307 = math.tanh %306 : vector<8x128xf32>
    %308 = vector.extract_strided_slice %293 {offsets = [0, 384], sizes = [8, 128], strides = [1, 1]} : vector<8x512xf32> to vector<8x128xf32>
    %309 = arith.negf %308 : vector<8x128xf32>
    %310 = math.exp %309 : vector<8x128xf32>
    %cst_198 = arith.constant 1.000000e+00 : f32
    %311 = vector.broadcast %cst_198 : f32 to vector<8x128xf32>
    %312 = arith.addf %311, %310 : vector<8x128xf32>
    %313 = arith.divf %311, %312 : vector<8x128xf32>
    %314 = arith.mulf %305, %286 : vector<8x128xf32>
    %315 = arith.mulf %299, %307 : vector<8x128xf32>
    %316 = arith.addf %314, %315 : vector<8x128xf32>
    %317 = math.tanh %316 : vector<8x128xf32>
    %318 = arith.mulf %313, %317 : vector<8x128xf32>
    %c16_199 = arith.constant 16 : index
    %c0_200 = arith.constant 0 : index
    %319 = vector.load %arg32[%c16_199, %c0_200] : memref<32x128xf32, #tpu.memory_space<vmem>>, vector<8x128xf32>
    tpu.vector_store %arg32[%c16_199, %c0_200], %318 {strides = array<i32>} : memref<32x128xf32, #tpu.memory_space<vmem>>, vector<8x128xf32>,
    %c24 = arith.constant 24 : index
    %c0_201 = arith.constant 0 : index
    %320 = vector.load %arg31[%c24, %c0_201] : memref<32x512xf32, #tpu.memory_space<vmem>>, vector<8x512xf32>
    %321 = arith.truncf %318 : vector<8x128xf32> to vector<8x128xbf16>
    %cst_202 = arith.constant dense<0.000000e+00> : vector<8x512xf32>
    %322 = tpu.matmul %321, %227, %cst_202 {dimension_numbers = #tpu.dot_dimension_numbers<[1], [0], [0], [1], [0, 0, 1, 1], [], []>} : vector<8x128xbf16>, vector<128x512xbf16>, vector<8x512xf32> -> vector<8x512xf32>
    %323 = arith.addf %320, %322 : vector<8x512xf32>
    %324 = vector.extract_strided_slice %323 {offsets = [0, 0], sizes = [8, 128], strides = [1, 1]} : vector<8x512xf32> to vector<8x128xf32>
    %325 = arith.negf %324 : vector<8x128xf32>
    %326 = math.exp %325 : vector<8x128xf32>
    %cst_203 = arith.constant 1.000000e+00 : f32
    %327 = vector.broadcast %cst_203 : f32 to vector<8x128xf32>
    %328 = arith.addf %327, %326 : vector<8x128xf32>
    %329 = arith.divf %327, %328 : vector<8x128xf32>
    %330 = vector.extract_strided_slice %323 {offsets = [0, 128], sizes = [8, 128], strides = [1, 1]} : vector<8x512xf32> to vector<8x128xf32>
    %331 = arith.negf %330 : vector<8x128xf32>
    %332 = math.exp %331 : vector<8x128xf32>
    %cst_204 = arith.constant 1.000000e+00 : f32
    %333 = vector.broadcast %cst_204 : f32 to vector<8x128xf32>
    %334 = arith.addf %333, %332 : vector<8x128xf32>
    %335 = arith.divf %333, %334 : vector<8x128xf32>
    %336 = vector.extract_strided_slice %323 {offsets = [0, 256], sizes = [8, 128], strides = [1, 1]} : vector<8x512xf32> to vector<8x128xf32>
    %337 = math.tanh %336 : vector<8x128xf32>
    %338 = vector.extract_strided_slice %323 {offsets = [0, 384], sizes = [8, 128], strides = [1, 1]} : vector<8x512xf32> to vector<8x128xf32>
    %339 = arith.negf %338 : vector<8x128xf32>
    %340 = math.exp %339 : vector<8x128xf32>
    %cst_205 = arith.constant 1.000000e+00 : f32
    %341 = vector.broadcast %cst_205 : f32 to vector<8x128xf32>
    %342 = arith.addf %341, %340 : vector<8x128xf32>
    %343 = arith.divf %341, %342 : vector<8x128xf32>
    %344 = arith.mulf %335, %316 : vector<8x128xf32>
    %345 = arith.mulf %329, %337 : vector<8x128xf32>
    %346 = arith.addf %344, %345 : vector<8x128xf32>
    %347 = math.tanh %346 : vector<8x128xf32>
    %348 = arith.mulf %343, %347 : vector<8x128xf32>
    %c24_206 = arith.constant 24 : index
    %c0_207 = arith.constant 0 : index
    %349 = vector.load %arg32[%c24_206, %c0_207] : memref<32x128xf32, #tpu.memory_space<vmem>>, vector<8x128xf32>
    tpu.vector_store %arg32[%c24_206, %c0_207], %348 {strides = array<i32>} : memref<32x128xf32, #tpu.memory_space<vmem>>, vector<8x128xf32>,
    %c0_208 = arith.constant 0 : index
    %c0_209 = arith.constant 0 : index
    %c0_210 = arith.constant 0 : index
    %350 = vector.load %arg30[%c0_208, %c0_209, %c0_210] : memref<2x8x128xf32, #tpu.memory_space<vmem>>, vector<1x8x128xf32>
    %351 = vector.shape_cast %350 : vector<1x8x128xf32> to vector<8x128xf32>
    %352 = vector.shape_cast %348 : vector<8x128xf32> to vector<1x8x128xf32>
    tpu.vector_store %arg30[%c0_208, %c0_209, %c0_210], %352 {strides = array<i32>} : memref<2x8x128xf32, #tpu.memory_space<vmem>>, vector<1x8x128xf32>,
    %c1_211 = arith.constant 1 : index
    %c0_212 = arith.constant 0 : index
    %c0_213 = arith.constant 0 : index
    %353 = vector.load %arg30[%c1_211, %c0_212, %c0_213] : memref<2x8x128xf32, #tpu.memory_space<vmem>>, vector<1x8x128xf32>
    %354 = vector.shape_cast %353 : vector<1x8x128xf32> to vector<8x128xf32>
    %355 = vector.shape_cast %346 : vector<8x128xf32> to vector<1x8x128xf32>
    tpu.vector_store %arg30[%c1_211, %c0_212, %c0_213], %355 {strides = array<i32>} : memref<2x8x128xf32, #tpu.memory_space<vmem>>, vector<1x8x128xf32>,
    %c0_214 = arith.constant 0 : index
    %c0_215 = arith.constant 0 : index
    %356 = vector.load %arg32[%c0_214, %c0_215] : memref<32x128xf32, #tpu.memory_space<vmem>>, vector<32x128xf32>
    %357 = arith.truncf %356 : vector<32x128xf32> to vector<32x128xbf16>
    %c0_216 = arith.constant 0 : index
    %c0_217 = arith.constant 0 : index
    %358 = vector.load %arg25[%c0_216, %c0_217] : memref<128x64xbf16, #tpu.memory_space<vmem>>, vector<128x64xbf16>
    %cst_218 = arith.constant dense<0.000000e+00> : vector<32x64xf32>
    %359 = tpu.matmul %357, %358, %cst_218 {dimension_numbers = #tpu.dot_dimension_numbers<[1], [0], [0], [1], [0, 0, 1, 1], [], []>} : vector<32x128xbf16>, vector<128x64xbf16>, vector<32x64xf32> -> vector<32x64xf32>
    %c0_219 = arith.constant 0 : index
    %c0_220 = arith.constant 0 : index
    %360 = vector.load %arg26[%c0_219, %c0_220] : memref<1x64xf32, #tpu.memory_space<vmem>>, vector<1x64xf32>
    %361 = vector.broadcast %360 : vector<1x64xf32> to vector<32x64xf32>
    %362 = arith.addf %359, %361 : vector<32x64xf32>
    %cst_221 = arith.constant 0.000000e+00 : f32
    %363 = vector.broadcast %cst_221 : f32 to vector<32x64xf32>
    %364 = arith.maximumf %362, %363 : vector<32x64xf32>
    %c0_222 = arith.constant 0 : index
    %c0_223 = arith.constant 0 : index
    %365 = vector.load %arg23[%c0_222, %c0_223] : memref<768x128xbf16, #tpu.memory_space<vmem>>, vector<768x128xbf16>
    %cst_224 = arith.constant dense<0.000000e+00> : vector<32x128xf32>
    %366 = tpu.matmul %2, %365, %cst_224 {dimension_numbers = #tpu.dot_dimension_numbers<[1], [0], [0], [1], [0, 0, 1, 1], [], []>} : vector<32x768xbf16>, vector<768x128xbf16>, vector<32x128xf32> -> vector<32x128xf32>
    %c0_225 = arith.constant 0 : index
    %c0_226 = arith.constant 0 : index
    %367 = vector.load %arg24[%c0_225, %c0_226] : memref<128x128xbf16, #tpu.memory_space<vmem>>, vector<128x128xbf16>
    %cst_227 = arith.constant dense<0.000000e+00> : vector<32x128xf32>
    %368 = tpu.matmul %357, %367, %cst_227 {dimension_numbers = #tpu.dot_dimension_numbers<[1], [0], [0], [1], [0, 0, 1, 1], [], []>} : vector<32x128xbf16>, vector<128x128xbf16>, vector<32x128xf32> -> vector<32x128xf32>
    %369 = arith.addf %366, %368 : vector<32x128xf32>
    %370 = arith.truncf %364 : vector<32x64xf32> to vector<32x64xbf16>
    %c0_228 = arith.constant 0 : index
    %c0_229 = arith.constant 0 : index
    %371 = vector.load %arg27[%c0_228, %c0_229] : memref<64x128xbf16, #tpu.memory_space<vmem>>, vector<64x128xbf16>
    %cst_230 = arith.constant dense<0.000000e+00> : vector<32x128xf32>
    %372 = tpu.matmul %370, %371, %cst_230 {dimension_numbers = #tpu.dot_dimension_numbers<[1], [0], [0], [1], [0, 0, 1, 1], [], []>} : vector<32x64xbf16>, vector<64x128xbf16>, vector<32x128xf32> -> vector<32x128xf32>
    %373 = arith.addf %369, %372 : vector<32x128xf32>
    %c0_231 = arith.constant 0 : index
    %c0_232 = arith.constant 0 : index
    %374 = vector.load %arg28[%c0_231, %c0_232] : memref<1x128xf32, #tpu.memory_space<vmem>>, vector<1x128xf32>
    %375 = vector.broadcast %374 : vector<1x128xf32> to vector<32x128xf32>
    %376 = arith.addf %373, %375 : vector<32x128xf32>
    %377 = tpu.iota {dimensions = array<i32: 1>} : vector<32x128xi32>
    %c14_i32 = arith.constant 14 : i32
    %378 = vector.broadcast %c14_i32 : i32 to vector<32x128xi32>
    %379 = arith.cmpi slt, %377, %378 : vector<32x128xi32>
    %cst_233 = arith.constant 0.000000e+00 : f32
    %380 = vector.broadcast %cst_233 : f32 to vector<32x128xf32>
    %381 = arith.maximumf %376, %380 : vector<32x128xf32>
    %382 = arith.extf %4 : vector<32x128xbf16> to vector<32x128xf32>
    %383 = arith.mulf %381, %382 : vector<32x128xf32>
    %384 = arith.select %379, %383, %376 : vector<32x128xi1>, vector<32x128xf32>
    %385 = vector.shape_cast %384 : vector<32x128xf32> to vector<4x8x128xf32>
    %c0_234 = arith.constant 0 : index
    %c0_235 = arith.constant 0 : index
    %c0_236 = arith.constant 0 : index
    %386 = vector.load %arg29[%c0_234, %c0_235, %c0_236] : memref<4x8x128xf32, #tpu.memory_space<vmem>>, vector<4x8x128xf32>
    tpu.vector_store %arg29[%c0_234, %c0_235, %c0_236], %385 {strides = array<i32>} : memref<4x8x128xf32, #tpu.memory_space<vmem>>, vector<4x8x128xf32>,
    return
  }
  func.func @transform_0(%arg0: i32) -> (i32, i32, i32) {
    %c0_i32 = arith.constant 0 : i32
    %c0_i32_0 = arith.constant 0 : i32
    %c0_i32_1 = arith.constant 0 : i32
    return %c0_i32, %arg0, %c0_i32_0 : i32, i32, i32
  }
  func.func @transform_1(%arg0: i32) -> (i32, i32, i32) {
    %c0_i32 = arith.constant 0 : i32
    %c0_i32_0 = arith.constant 0 : i32
    %c0_i32_1 = arith.constant 0 : i32
    %c0_i32_2 = arith.constant 0 : i32
    return %c0_i32, %c0_i32_0, %c0_i32_1 : i32, i32, i32
  }
  func.func @transform_2(%arg0: i32) -> (i32, i32, i32) {
    %c0_i32 = arith.constant 0 : i32
    %c0_i32_0 = arith.constant 0 : i32
    %c0_i32_1 = arith.constant 0 : i32
    %c0_i32_2 = arith.constant 0 : i32
    return %c0_i32, %c0_i32_0, %c0_i32_1 : i32, i32, i32
  }
  func.func @transform_3(%arg0: i32) -> (i32, i32, i32) {
    %c0_i32 = arith.constant 0 : i32
    %c0_i32_0 = arith.constant 0 : i32
    %c0_i32_1 = arith.constant 0 : i32
    %c0_i32_2 = arith.constant 0 : i32
    return %c0_i32, %c0_i32_0, %c0_i32_1 : i32, i32, i32
  }
  func.func @transform_4(%arg0: i32) -> (i32, i32) {
    %c0_i32 = arith.constant 0 : i32
    %c0_i32_0 = arith.constant 0 : i32
    %c0_i32_1 = arith.constant 0 : i32
    return %c0_i32, %c0_i32_0 : i32, i32
  }
  func.func @transform_5(%arg0: i32) -> (i32, i32) {
    %c0_i32 = arith.constant 0 : i32
    %c0_i32_0 = arith.constant 0 : i32
    %c0_i32_1 = arith.constant 0 : i32
    return %c0_i32, %c0_i32_0 : i32, i32
  }
  func.func @transform_6(%arg0: i32) -> (i32, i32) {
    %c0_i32 = arith.constant 0 : i32
    %c0_i32_0 = arith.constant 0 : i32
    %c0_i32_1 = arith.constant 0 : i32
    return %c0_i32, %c0_i32_0 : i32, i32
  }
  func.func @transform_7(%arg0: i32) -> (i32, i32) {
    %c0_i32 = arith.constant 0 : i32
    %c0_i32_0 = arith.constant 0 : i32
    %c0_i32_1 = arith.constant 0 : i32
    return %c0_i32, %c0_i32_0 : i32, i32
  }
  func.func @transform_8(%arg0: i32) -> (i32, i32) {
    %c0_i32 = arith.constant 0 : i32
    %c0_i32_0 = arith.constant 0 : i32
    %c0_i32_1 = arith.constant 0 : i32
    return %c0_i32, %c0_i32_0 : i32, i32
  }
  func.func @transform_9(%arg0: i32) -> (i32, i32, i32) {
    %c0_i32 = arith.constant 0 : i32
    %c0_i32_0 = arith.constant 0 : i32
    %c0_i32_1 = arith.constant 0 : i32
    %c0_i32_2 = arith.constant 0 : i32
    return %c0_i32, %c0_i32_0, %c0_i32_1 : i32, i32, i32
  }
  func.func @transform_10(%arg0: i32) -> (i32, i32, i32) {
    %c0_i32 = arith.constant 0 : i32
    %c0_i32_0 = arith.constant 0 : i32
    %c0_i32_1 = arith.constant 0 : i32
    %c0_i32_2 = arith.constant 0 : i32
    return %c0_i32, %c0_i32_0, %c0_i32_1 : i32, i32, i32
  }
  func.func @transform_11(%arg0: i32) -> (i32, i32, i32) {
    %c0_i32 = arith.constant 0 : i32
    %c0_i32_0 = arith.constant 0 : i32
    %c0_i32_1 = arith.constant 0 : i32
    %c0_i32_2 = arith.constant 0 : i32
    return %c0_i32, %c0_i32_0, %c0_i32_1 : i32, i32, i32
  }
  func.func @transform_12(%arg0: i32) -> (i32, i32) {
    %c0_i32 = arith.constant 0 : i32
    %c0_i32_0 = arith.constant 0 : i32
    %c0_i32_1 = arith.constant 0 : i32
    return %c0_i32, %c0_i32_0 : i32, i32
  }
  func.func @transform_13(%arg0: i32) -> (i32, i32) {
    %c0_i32 = arith.constant 0 : i32
    %c0_i32_0 = arith.constant 0 : i32
    %c0_i32_1 = arith.constant 0 : i32
    return %c0_i32, %c0_i32_0 : i32, i32
  }
  func.func @transform_14(%arg0: i32) -> (i32, i32) {
    %c0_i32 = arith.constant 0 : i32
    %c0_i32_0 = arith.constant 0 : i32
    %c0_i32_1 = arith.constant 0 : i32
    return %c0_i32, %c0_i32_0 : i32, i32
  }
  func.func @transform_15(%arg0: i32) -> (i32, i32) {
    %c0_i32 = arith.constant 0 : i32
    %c0_i32_0 = arith.constant 0 : i32
    %c0_i32_1 = arith.constant 0 : i32
    return %c0_i32, %c0_i32_0 : i32, i32
  }
  func.func @transform_16(%arg0: i32) -> (i32, i32) {
    %c0_i32 = arith.constant 0 : i32
    %c0_i32_0 = arith.constant 0 : i32
    %c0_i32_1 = arith.constant 0 : i32
    return %c0_i32, %c0_i32_0 : i32, i32
  }
  func.func @transform_17(%arg0: i32) -> (i32, i32) {
    %c0_i32 = arith.constant 0 : i32
    %c0_i32_0 = arith.constant 0 : i32
    %c0_i32_1 = arith.constant 0 : i32
    return %c0_i32, %c0_i32_0 : i32, i32
  }
  func.func @transform_18(%arg0: i32) -> (i32, i32) {
    %c0_i32 = arith.constant 0 : i32
    %c0_i32_0 = arith.constant 0 : i32
    %c0_i32_1 = arith.constant 0 : i32
    return %c0_i32, %c0_i32_0 : i32, i32
  }
  func.func @transform_19(%arg0: i32) -> (i32, i32) {
    %c0_i32 = arith.constant 0 : i32
    %c0_i32_0 = arith.constant 0 : i32
    %c0_i32_1 = arith.constant 0 : i32
    return %c0_i32, %c0_i32_0 : i32, i32
  }
  func.func @transform_20(%arg0: i32) -> (i32, i32) {
    %c0_i32 = arith.constant 0 : i32
    %c0_i32_0 = arith.constant 0 : i32
    %c0_i32_1 = arith.constant 0 : i32
    return %c0_i32, %c0_i32_0 : i32, i32
  }
  func.func @transform_21(%arg0: i32) -> (i32, i32) {
    %c0_i32 = arith.constant 0 : i32
    %c0_i32_0 = arith.constant 0 : i32
    %c0_i32_1 = arith.constant 0 : i32
    return %c0_i32, %c0_i32_0 : i32, i32
  }
  func.func @transform_22(%arg0: i32) -> (i32, i32) {
    %c0_i32 = arith.constant 0 : i32
    %c0_i32_0 = arith.constant 0 : i32
    %c0_i32_1 = arith.constant 0 : i32
    return %c0_i32, %c0_i32_0 : i32, i32
  }
  func.func @transform_23(%arg0: i32) -> (i32, i32) {
    %c0_i32 = arith.constant 0 : i32
    %c0_i32_0 = arith.constant 0 : i32
    %c0_i32_1 = arith.constant 0 : i32
    return %c0_i32, %c0_i32_0 : i32, i32
  }
  func.func @transform_24(%arg0: i32) -> (i32, i32) {
    %c0_i32 = arith.constant 0 : i32
    %c0_i32_0 = arith.constant 0 : i32
    %c0_i32_1 = arith.constant 0 : i32
    return %c0_i32, %c0_i32_0 : i32, i32
  }
  func.func @transform_25(%arg0: i32) -> (i32, i32) {
    %c0_i32 = arith.constant 0 : i32
    %c0_i32_0 = arith.constant 0 : i32
    %c0_i32_1 = arith.constant 0 : i32
    return %c0_i32, %c0_i32_0 : i32, i32
  }
  func.func @transform_26(%arg0: i32) -> (i32, i32) {
    %c0_i32 = arith.constant 0 : i32
    %c0_i32_0 = arith.constant 0 : i32
    %c0_i32_1 = arith.constant 0 : i32
    return %c0_i32, %c0_i32_0 : i32, i32
  }
  func.func @transform_27(%arg0: i32) -> (i32, i32) {
    %c0_i32 = arith.constant 0 : i32
    %c0_i32_0 = arith.constant 0 : i32
    %c0_i32_1 = arith.constant 0 : i32
    return %c0_i32, %c0_i32_0 : i32, i32
  }
  func.func @transform_28(%arg0: i32) -> (i32, i32, i32) {
    %c0_i32 = arith.constant 0 : i32
    %c0_i32_0 = arith.constant 0 : i32
    %c0_i32_1 = arith.constant 0 : i32
    return %c0_i32, %arg0, %c0_i32_0 : i32, i32, i32
  }
  func.func @transform_29(%arg0: i32) -> (i32, i32, i32) {
    %c0_i32 = arith.constant 0 : i32
    %c0_i32_0 = arith.constant 0 : i32
    %c0_i32_1 = arith.constant 0 : i32
    return %c0_i32, %arg0, %c0_i32_0 : i32, i32, i32
  }
}

</mosaic_0001>

<llo_original>
// kernel: main_model_forward.1
$region0: #{main_model_forward.1}
  #allocation0 [shape = 'u32[]', space=smem, size = 0x4, offset = 0x4, fixed_abs, tag = 'smem constant byte address 0x4 - core index']
  #allocation1 [shape = 'u32[72,128]{1,0:T(1,128)}', space=vmem, size = 0x9000, scoped, tag = 'internal scratch']
  #allocation2 [shape = 'f32[32,512]{1,0:T(8,128)}', space=vmem, size = 0x10000, scoped, tag = 'scratch operand']
  #allocation3 [shape = 'f32[32,128]{1,0:T(8,128)}', space=vmem, size = 0x4000, scoped, tag = 'scratch operand']
  %s0 = inlined_call_operand.smem [shape: u32[30], index: -1, kind: input, shape index: {}]
  %s1 = sld [smem:[%s0]]
  %s2 = scalar_lea.smem %s0, 1
  %s3 = sld [smem:[%s2]]
  %s4 = scalar_lea.smem %s0, 2
  %s5 = sld [smem:[%s4]]
  %s6 = scalar_lea.smem %s0, 3
  %s7 = sld [smem:[%s6]]
  %s8 = scalar_lea.smem %s0, 4
  %s9 = sld [smem:[%s8]]
  %s10 = scalar_lea.smem %s0, 5
  %s11 = sld [smem:[%s10]]
  %s12 = scalar_lea.smem %s0, 6
  %s13 = sld [smem:[%s12]]
  %s14 = scalar_lea.smem %s0, 7
  %s15 = sld [smem:[%s14]]
  %s16 = scalar_lea.smem %s0, 8
  %s17 = sld [smem:[%s16]]
  %s18 = scalar_lea.smem %s0, 9
  %s19 = sld [smem:[%s18]]
  %s20 = scalar_lea.smem %s0, 10
  %s21 = sld [smem:[%s20]]
  %s22 = scalar_lea.smem %s0, 11
  %s23 = sld [smem:[%s22]]
  %s24 = scalar_lea.smem %s0, 12
  %s25 = sld [smem:[%s24]]
  %s26 = scalar_lea.smem %s0, 13
  %s27 = sld [smem:[%s26]]
  %s28 = scalar_lea.smem %s0, 14
  %s29 = sld [smem:[%s28]]
  %s30 = scalar_lea.smem %s0, 15
  %s31 = sld [smem:[%s30]]
  %s32 = scalar_lea.smem %s0, 16
  %s33 = sld [smem:[%s32]]
  %s34 = scalar_lea.smem %s0, 17
  %s35 = sld [smem:[%s34]]
  %s36 = scalar_lea.smem %s0, 18
  %s37 = sld [smem:[%s36]]
  %s38 = scalar_lea.smem %s0, 19
  %s39 = sld [smem:[%s38]]
  %s40 = scalar_lea.smem %s0, 20
  %s41 = sld [smem:[%s40]]
  %s42 = scalar_lea.smem %s0, 21
  %s43 = sld [smem:[%s42]]
  %s44 = scalar_lea.smem %s0, 22
  %s45 = sld [smem:[%s44]]
  %s46 = scalar_lea.smem %s0, 23
  %s47 = sld [smem:[%s46]]
  %s48 = scalar_lea.smem %s0, 24
  %s49 = sld [smem:[%s48]]
  %s50 = scalar_lea.smem %s0, 25
  %s51 = sld [smem:[%s50]]
  %s52 = scalar_lea.smem %s0, 26
  %s53 = sld [smem:[%s52]]
  %s54 = scalar_lea.smem %s0, 27
  %s55 = sld [smem:[%s54]]
  %s56 = scalar_lea.smem %s0, 28
  %s57 = sld [smem:[%s56]]
  %s58 = scalar_lea.smem %s0, 29
  %s59 = sld [smem:[%s58]]
  %60 = xla_tuple %s57, %s59
  %s61 = sld [smem:[#allocation0]]
  $region166: #{main_model_forward.1} parent=0
    _
  %s63 = ssub.s32 1, %s61
  %s64 = scalar_select 0, %s63, %s61
  $region1: #{main_model_forward.1} parent=0
    #allocation4 [shape = 'u8[1024]{0}', space=vmem, size = 0x400, scoped, tag = 'input window, operand 8, single buffered']
    #allocation5 [shape = 's32[1]{0}', space=sflag, size = 0x4, scoped, tag = 'scoped memory for main_model_forward.1']
    #allocation6 [shape = 'u8[6144]{0}', space=vmem, size = 0x1800, scoped, tag = 'input window, operand 10, single buffered']
    #allocation7 [shape = 's32[1]{0}', space=sflag, size = 0x4, scoped, tag = 'scoped memory for main_model_forward.1']
    #allocation8 [shape = 'u8[1536]{0}', space=vmem, size = 0x800, scoped, tag = 'input window, operand 12, single buffered']
    #allocation9 [shape = 'u8[77824]{0}', space=vmem, size = 0x13000, scoped, tag = 'input window, operand 13, single buffered']
    #allocation10 [shape = 's32[1]{0}', space=sflag, size = 0x4, scoped, tag = 'scoped memory for main_model_forward.1']
    #allocation11 [shape = 'u8[1024]{0}', space=vmem, size = 0x400, scoped, tag = 'input window, operand 16, single buffered']
    #allocation12 [shape = 'u8[204800]{0}', space=vmem, size = 0x32000, scoped, tag = 'input window, operand 18, single buffered']
    #allocation13 [shape = 's32[1]{0}', space=sflag, size = 0x4, scoped, tag = 'scoped memory for main_model_forward.1']
    #allocation14 [shape = 'u8[196608]{0}', space=vmem, size = 0x30000, scoped, tag = 'input window, operand 22, single buffered']
    #allocation15 [shape = 'u8[512]{0}', space=vmem, size = 0x400, scoped, tag = 'input window, operand 25, single buffered']
    #allocation16 [shape = 's32[1]{0}', space=sflag, size = 0x4, scoped, tag = 'scoped memory for main_model_forward.1']
    #allocation17 [shape = 'u8[512]{0}', space=vmem, size = 0x400, scoped, tag = 'input window, operand 27, single buffered']
    %65 = vsyncpa [#allocation5], 0
    %66 = vsyncpa [#allocation7], 0
    %67 = vsyncpa [#allocation10], 0
    %68 = vsyncpa [#allocation13], 0
    %69 = vsyncpa [#allocation16], 0
    // Predicated region
    $region2: #{main_model_forward.1} parent=1 // pred_check
      _
    $region3: #{main_model_forward.1} parent=1 // pred_check_branch
      %71 = sbr.rel (0) target = $region5
    $region4: #{main_model_forward.1} parent=1 // pred_region
      _
    $region5: #{main_model_forward.1} parent=1 // pred_fallthru
      _
    // Predicated region
    $region6: #{main_model_forward.1} parent=1 // pred_check
      _
    $region7: #{main_model_forward.1} parent=1 // pred_check_branch
      %73 = sbr.rel (0) target = $region9
    $region8: #{main_model_forward.1} parent=1 // pred_region
      _
    $region9: #{main_model_forward.1} parent=1 // pred_fallthru
      _
    // Predicated region
    $region10: #{main_model_forward.1} parent=1 // pred_check
      _
    $region11: #{main_model_forward.1} parent=1 // pred_check_branch
      %75 = sbr.rel (0) target = $region13
    $region12: #{main_model_forward.1} parent=1 // pred_region
      _
    $region13: #{main_model_forward.1} parent=1 // pred_fallthru
      _
    // Predicated region
    $region14: #{main_model_forward.1} parent=1 // pred_check
      _
    $region15: #{main_model_forward.1} parent=1 // pred_check_branch
      %77 = sbr.rel (0) target = $region17
    $region16: #{main_model_forward.1} parent=1 // pred_region
      _
    $region17: #{main_model_forward.1} parent=1 // pred_fallthru
      _
    // Predicated region
    $region18: #{main_model_forward.1} parent=1 // pred_check
      _
    $region19: #{main_model_forward.1} parent=1 // pred_check_branch
      %79 = sbr.rel (0) target = $region21
    $region20: #{main_model_forward.1} parent=1 // pred_region
      _
    $region21: #{main_model_forward.1} parent=1 // pred_fallthru
      _
    // Predicated region
    $region22: #{main_model_forward.1} parent=1 // pred_check
      _
    $region23: #{main_model_forward.1} parent=1 // pred_check_branch
      %81 = sbr.rel (0) target = $region25
    $region24: #{main_model_forward.1} parent=1 // pred_region
      _
    $region25: #{main_model_forward.1} parent=1 // pred_fallthru
      _
    // Predicated region
    $region26: #{main_model_forward.1} parent=1 // pred_check
      _
    $region27: #{main_model_forward.1} parent=1 // pred_check_branch
      %83 = sbr.rel (0) target = $region29
    $region28: #{main_model_forward.1} parent=1 // pred_region
      _
    $region29: #{main_model_forward.1} parent=1 // pred_fallthru
      _
    // Predicated region
    $region30: #{main_model_forward.1} parent=1 // pred_check
      _
    $region31: #{main_model_forward.1} parent=1 // pred_check_branch
      %85 = sbr.rel (0) target = $region33
    $region32: #{main_model_forward.1} parent=1 // pred_region
      _
    $region33: #{main_model_forward.1} parent=1 // pred_fallthru
      _
    // Predicated region
    $region34: #{main_model_forward.1} parent=1 // pred_check
      _
    $region35: #{main_model_forward.1} parent=1 // pred_check_branch
      %87 = sbr.rel (0) target = $region37
    $region36: #{main_model_forward.1} parent=1 // pred_region
      %89 = vsyncadd [#allocation5], 0
      %s91 = sshll.u32 %s17, 4
      %s92 = int_to_ptr.hbm [resolvable:$true] %s91
      %s93 = sshll.u32 [#allocation4], 4
      %s94 = int_to_ptr.vmem [resolvable:$true] %s93
      %96 = dma.hbm_to_vmem [thread:$0]  %s92, 32, %s94, [#allocation5]
    $region37: #{main_model_forward.1} parent=1 // pred_fallthru
      _
    // Predicated region
    $region38: #{main_model_forward.1} parent=1 // pred_check
      _
    $region39: #{main_model_forward.1} parent=1 // pred_check_branch
      %98 = sbr.rel (0) target = $region41
    $region40: #{main_model_forward.1} parent=1 // pred_region
      _
    $region41: #{main_model_forward.1} parent=1 // pred_fallthru
      _
    // Predicated region
    $region42: #{main_model_forward.1} parent=1 // pred_check
      _
    $region43: #{main_model_forward.1} parent=1 // pred_check_branch
      %100 = sbr.rel (0) target = $region45
    $region44: #{main_model_forward.1} parent=1 // pred_region
      %102 = vsyncadd [#allocation7], 0
      %s103 = sshll.u32 %s21, 4
      %s104 = int_to_ptr.hbm [resolvable:$true] %s103
      %s105 = sshll.u32 [#allocation6], 4
      %s106 = int_to_ptr.vmem [resolvable:$true] %s105
      %111 = dma.hbm_to_vmem [thread:$0]  %s104, 192, %s106, [#allocation7], 32, 32, 2
    $region45: #{main_model_forward.1} parent=1 // pred_fallthru
      _
    // Predicated region
    $region46: #{main_model_forward.1} parent=1 // pred_check
      _
    $region47: #{main_model_forward.1} parent=1 // pred_check_branch
      %113 = sbr.rel (0) target = $region49
    $region48: #{main_model_forward.1} parent=1 // pred_region
      _
    $region49: #{main_model_forward.1} parent=1 // pred_fallthru
      _
    // Predicated region
    $region50: #{main_model_forward.1} parent=1 // pred_check
      _
    $region51: #{main_model_forward.1} parent=1 // pred_check_branch
      %115 = sbr.rel (0) target = $region53
    $region52: #{main_model_forward.1} parent=1 // pred_region
      %117 = vsyncadd [#allocation7], 0
      %s119 = sshll.u32 %s25, 4
      %s120 = int_to_ptr.hbm [resolvable:$true] %s119
      %s121 = sshll.u32 [#allocation8], 4
      %s122 = int_to_ptr.vmem [resolvable:$true] %s121
      %124 = dma.hbm_to_vmem [thread:$0]  %s120, 48, %s122, [#allocation7]
    $region53: #{main_model_forward.1} parent=1 // pred_fallthru
      _
    // Predicated region
    $region54: #{main_model_forward.1} parent=1 // pred_check
      _
    $region55: #{main_model_forward.1} parent=1 // pred_check_branch
      %126 = sbr.rel (0) target = $region57
    $region56: #{main_model_forward.1} parent=1 // pred_region
      %128 = vsyncadd [#allocation10], 0
      %s129 = sshll.u32 %s27, 4
      %s130 = int_to_ptr.hbm [resolvable:$true] %s129
      %s131 = sshll.u32 [#allocation9], 4
      %s132 = int_to_ptr.vmem [resolvable:$true] %s131
      %137 = dma.hbm_to_vmem [thread:$0]  %s130, 2432, %s132, [#allocation10], 128, 128, 8
    $region57: #{main_model_forward.1} parent=1 // pred_fallthru
      _
    // Predicated region
    $region58: #{main_model_forward.1} parent=1 // pred_check
      _
    $region59: #{main_model_forward.1} parent=1 // pred_check_branch
      %139 = sbr.rel (0) target = $region61
    $region60: #{main_model_forward.1} parent=1 // pred_region
      _
    $region61: #{main_model_forward.1} parent=1 // pred_fallthru
      _
    // Predicated region
    $region62: #{main_model_forward.1} parent=1 // pred_check
      _
    $region63: #{main_model_forward.1} parent=1 // pred_check_branch
      %141 = sbr.rel (0) target = $region65
    $region64: #{main_model_forward.1} parent=1 // pred_region
      _
    $region65: #{main_model_forward.1} parent=1 // pred_fallthru
      _
    // Predicated region
    $region66: #{main_model_forward.1} parent=1 // pred_check
      _
    $region67: #{main_model_forward.1} parent=1 // pred_check_branch
      %143 = sbr.rel (0) target = $region69
    $region68: #{main_model_forward.1} parent=1 // pred_region
      %145 = vsyncadd [#allocation10], 0
      %s147 = sshll.u32 %s33, 4
      %s148 = int_to_ptr.hbm [resolvable:$true] %s147
      %s149 = sshll.u32 [#allocation11], 4
      %s150 = int_to_ptr.vmem [resolvable:$true] %s149
      %152 = dma.hbm_to_vmem [thread:$0]  %s148, 32, %s150, [#allocation10]
    $region69: #{main_model_forward.1} parent=1 // pred_fallthru
      _
    // Predicated region
    $region70: #{main_model_forward.1} parent=1 // pred_check
      _
    $region71: #{main_model_forward.1} parent=1 // pred_check_branch
      %154 = sbr.rel (0) target = $region73
    $region72: #{main_model_forward.1} parent=1 // pred_region
      _
    $region73: #{main_model_forward.1} parent=1 // pred_fallthru
      _
    // Predicated region
    $region74: #{main_model_forward.1} parent=1 // pred_check
      _
    $region75: #{main_model_forward.1} parent=1 // pred_check_branch
      %156 = sbr.rel (0) target = $region77
    $region76: #{main_model_forward.1} parent=1 // pred_region
      %158 = vsyncadd [#allocation13], 0
      %s159 = sshll.u32 %s37, 4
      %s160 = int_to_ptr.hbm [resolvable:$true] %s159
      %s161 = sshll.u32 [#allocation12], 4
      %s162 = int_to_ptr.vmem [resolvable:$true] %s161
      %167 = dma.hbm_to_vmem [thread:$0]  %s160, 6400, %s162, [#allocation13], 256, 256, 16
    $region77: #{main_model_forward.1} parent=1 // pred_fallthru
      _
    // Predicated region
    $region78: #{main_model_forward.1} parent=1 // pred_check
      _
    $region79: #{main_model_forward.1} parent=1 // pred_check_branch
      %169 = sbr.rel (0) target = $region81
    $region80: #{main_model_forward.1} parent=1 // pred_region
      _
    $region81: #{main_model_forward.1} parent=1 // pred_fallthru
      _
    // Predicated region
    $region82: #{main_model_forward.1} parent=1 // pred_check
      _
    $region83: #{main_model_forward.1} parent=1 // pred_check_branch
      %171 = sbr.rel (0) target = $region85
    $region84: #{main_model_forward.1} parent=1 // pred_region
      _
    $region85: #{main_model_forward.1} parent=1 // pred_fallthru
      _
    // Predicated region
    $region86: #{main_model_forward.1} parent=1 // pred_check
      _
    $region87: #{main_model_forward.1} parent=1 // pred_check_branch
      %173 = sbr.rel (0) target = $region89
    $region88: #{main_model_forward.1} parent=1 // pred_region
      _
    $region89: #{main_model_forward.1} parent=1 // pred_fallthru
      _
    // Predicated region
    $region90: #{main_model_forward.1} parent=1 // pred_check
      _
    $region91: #{main_model_forward.1} parent=1 // pred_check_branch
      %175 = sbr.rel (0) target = $region93
    $region92: #{main_model_forward.1} parent=1 // pred_region
      %177 = vsyncadd [#allocation13], 0
      %s178 = sshll.u32 %s45, 4
      %s179 = int_to_ptr.hbm [resolvable:$true] %s178
      %s180 = sshll.u32 [#allocation14], 4
      %s181 = int_to_ptr.vmem [resolvable:$true] %s180
      %186 = dma.hbm_to_vmem [thread:$0]  %s179, 6144, %s181, [#allocation13], 64, 64, 4
    $region93: #{main_model_forward.1} parent=1 // pred_fallthru
      _
    // Predicated region
    $region94: #{main_model_forward.1} parent=1 // pred_check
      _
    $region95: #{main_model_forward.1} parent=1 // pred_check_branch
      %188 = sbr.rel (0) target = $region97
    $region96: #{main_model_forward.1} parent=1 // pred_region
      _
    $region97: #{main_model_forward.1} parent=1 // pred_fallthru
      _
    // Predicated region
    $region98: #{main_model_forward.1} parent=1 // pred_check
      _
    $region99: #{main_model_forward.1} parent=1 // pred_check_branch
      %190 = sbr.rel (0) target = $region101
    $region100: #{main_model_forward.1} parent=1 // pred_region
      _
    $region101: #{main_model_forward.1} parent=1 // pred_fallthru
      _
    // Predicated region
    $region102: #{main_model_forward.1} parent=1 // pred_check
      _
    $region103: #{main_model_forward.1} parent=1 // pred_check_branch
      %192 = sbr.rel (0) target = $region105
    $region104: #{main_model_forward.1} parent=1 // pred_region
      %194 = vsyncadd [#allocation16], 0
      %s196 = sshll.u32 %s51, 4
      %s197 = int_to_ptr.hbm [resolvable:$true] %s196
      %s198 = sshll.u32 [#allocation15], 4
      %s199 = int_to_ptr.vmem [resolvable:$true] %s198
      %201 = dma.hbm_to_vmem [thread:$0]  %s197, 16, %s199, [#allocation16]
    $region105: #{main_model_forward.1} parent=1 // pred_fallthru
      _
    // Predicated region
    $region106: #{main_model_forward.1} parent=1 // pred_check
      _
    $region107: #{main_model_forward.1} parent=1 // pred_check_branch
      %203 = sbr.rel (0) target = $region109
    $region108: #{main_model_forward.1} parent=1 // pred_region
      _
    $region109: #{main_model_forward.1} parent=1 // pred_fallthru
      _
    // Predicated region
    $region110: #{main_model_forward.1} parent=1 // pred_check
      _
    $region111: #{main_model_forward.1} parent=1 // pred_check_branch
      %205 = sbr.rel (0) target = $region113
    $region112: #{main_model_forward.1} parent=1 // pred_region
      %207 = vsyncadd [#allocation16], 0
      %s209 = sshll.u32 %s55, 4
      %s210 = int_to_ptr.hbm [resolvable:$true] %s209
      %s211 = sshll.u32 [#allocation17], 4
      %s212 = int_to_ptr.vmem [resolvable:$true] %s211
      %214 = dma.hbm_to_vmem [thread:$0]  %s210, 16, %s212, [#allocation16]
    $region113: #{main_model_forward.1} parent=1 // pred_fallthru
      _
    // Predicated region
    $region114: #{main_model_forward.1} parent=1 // pred_check
      _
    $region115: #{main_model_forward.1} parent=1 // pred_check_branch
      %216 = sbr.rel (0) target = $region117
    $region116: #{main_model_forward.1} parent=1 // pred_region
      %218 = dma.done [#allocation5], 32
    $region117: #{main_model_forward.1} parent=1 // pred_fallthru
      _
    // Predicated region
    $region118: #{main_model_forward.1} parent=1 // pred_check
      _
    $region119: #{main_model_forward.1} parent=1 // pred_check_branch
      %220 = sbr.rel (0) target = $region121
    $region120: #{main_model_forward.1} parent=1 // pred_region
      %222 = dma.done [#allocation7], 192
    $region121: #{main_model_forward.1} parent=1 // pred_fallthru
      _
    // Predicated region
    $region122: #{main_model_forward.1} parent=1 // pred_check
      _
    $region123: #{main_model_forward.1} parent=1 // pred_check_branch
      %224 = sbr.rel (0) target = $region125
    $region124: #{main_model_forward.1} parent=1 // pred_region
      %226 = dma.done [#allocation7], 48
    $region125: #{main_model_forward.1} parent=1 // pred_fallthru
      _
    // Predicated region
    $region126: #{main_model_forward.1} parent=1 // pred_check
      _
    $region127: #{main_model_forward.1} parent=1 // pred_check_branch
      %228 = sbr.rel (0) target = $region129
    $region128: #{main_model_forward.1} parent=1 // pred_region
      %230 = dma.done [#allocation10], 2432
    $region129: #{main_model_forward.1} parent=1 // pred_fallthru
      _
    // Predicated region
    $region130: #{main_model_forward.1} parent=1 // pred_check
      _
    $region131: #{main_model_forward.1} parent=1 // pred_check_branch
      %232 = sbr.rel (0) target = $region133
    $region132: #{main_model_forward.1} parent=1 // pred_region
      %234 = dma.done [#allocation10], 32
    $region133: #{main_model_forward.1} parent=1 // pred_fallthru
      _
    // Predicated region
    $region134: #{main_model_forward.1} parent=1 // pred_check
      _
    $region135: #{main_model_forward.1} parent=1 // pred_check_branch
      %236 = sbr.rel (0) target = $region137
    $region136: #{main_model_forward.1} parent=1 // pred_region
      %238 = dma.done [#allocation13], 6400
    $region137: #{main_model_forward.1} parent=1 // pred_fallthru
      _
    // Predicated region
    $region138: #{main_model_forward.1} parent=1 // pred_check
      _
    $region139: #{main_model_forward.1} parent=1 // pred_check_branch
      %240 = sbr.rel (0) target = $region141
    $region140: #{main_model_forward.1} parent=1 // pred_region
      %242 = dma.done [#allocation13], 6144
    $region141: #{main_model_forward.1} parent=1 // pred_fallthru
      _
    // Predicated region
    $region142: #{main_model_forward.1} parent=1 // pred_check
      _
    $region143: #{main_model_forward.1} parent=1 // pred_check_branch
      %244 = sbr.rel (0) target = $region145
    $region144: #{main_model_forward.1} parent=1 // pred_region
      %246 = dma.done [#allocation16], 16
    $region145: #{main_model_forward.1} parent=1 // pred_fallthru
      _
    // Predicated region
    $region146: #{main_model_forward.1} parent=1 // pred_check
      _
    $region147: #{main_model_forward.1} parent=1 // pred_check_branch
      %248 = sbr.rel (0) target = $region149
    $region148: #{main_model_forward.1} parent=1 // pred_region
      %250 = dma.done [#allocation16], 16
    $region149: #{main_model_forward.1} parent=1 // pred_fallthru
      _
    %v252 = vld [vmem:[%s1] sm:$0xff]
    %v253 = vld [vmem:[%s1 + $0x8] sm:$0xff]
    %v254 = vld [vmem:[%s1 + $0x10] sm:$0xff]
    %v255 = vld [vmem:[%s1 + $0x18] sm:$0xff]
    %v256 = vld [vmem:[%s1 + $0x20] sm:$0xff]
    %v257 = vld [vmem:[%s1 + $0x28] sm:$0xff]
    %v258 = vld [vmem:[%s1 + $0x30] sm:$0xf]
    %v259 = vld [vmem:[%s1 + $0x34] sm:$0xff]
    %v260 = vld [vmem:[%s1 + $0x3c] sm:$0xff]
    %v261 = vld [vmem:[%s1 + $0x44] sm:$0xff]
    %v262 = vld [vmem:[%s1 + $0x4c] sm:$0xff]
    %v263 = vld [vmem:[%s1 + $0x54] sm:$0xff]
    %v264 = vld [vmem:[%s1 + $0x5c] sm:$0xff]
    %v265 = vld [vmem:[%s1 + $0x64] sm:$0xf]
    %v266 = vld [vmem:[%s1 + $0x68] sm:$0xff]
    %v267 = vld [vmem:[%s1 + $0x70] sm:$0xff]
    %v268 = vld [vmem:[%s1 + $0x78] sm:$0xff]
    %v269 = vld [vmem:[%s1 + $0x80] sm:$0xff]
    %v270 = vld [vmem:[%s1 + $0x88] sm:$0xff]
    %v271 = vld [vmem:[%s1 + $0x90] sm:$0xff]
    %v272 = vld [vmem:[%s1 + $0x98] sm:$0xf]
    %v273 = vld [vmem:[%s1 + $0x9c] sm:$0xff]
    %v274 = vld [vmem:[%s1 + $0xa4] sm:$0xff]
    %v275 = vld [vmem:[%s1 + $0xac] sm:$0xff]
    %v276 = vld [vmem:[%s1 + $0xb4] sm:$0xff]
    %v277 = vld [vmem:[%s1 + $0xbc] sm:$0xff]
    %v278 = vld [vmem:[%s1 + $0xc4] sm:$0xff]
    %v279 = vld [vmem:[%s1 + $0xcc] sm:$0xf]
    %v280 = vld [vmem:[%s3] sm:$0xff]
    %v281 = vld [vmem:[%s3 + $0x8] sm:$0xff]
    %v282 = vld [vmem:[%s3 + $0x10] sm:$0xff]
    %v283 = vld [vmem:[%s3 + $0x18] sm:$0xff]
    %v284 = vld [vmem:[%s3 + $0x20] sm:$0xff]
    %v285 = vld [vmem:[%s3 + $0x28] sm:$0xff]
    %v286 = vld [vmem:[%s3 + $0x30] sm:$0xff]
    %v287 = vld [vmem:[%s3 + $0x38] sm:$0xff]
    %v288 = vld [vmem:[%s3 + $0x40] sm:$0xff]
    %v289 = vld [vmem:[%s3 + $0x48] sm:$0xff]
    %v290 = vld [vmem:[%s3 + $0x50] sm:$0xff]
    %v291 = vld [vmem:[%s3 + $0x58] sm:$0xff]
    %v292 = vld [vmem:[%s3 + $0x60] sm:$0xff]
    %v293 = vld [vmem:[%s3 + $0x68] sm:$0xff]
    %v294 = vld [vmem:[%s3 + $0x70] sm:$0xff]
    %v295 = vld [vmem:[%s3 + $0x78] sm:$0xff]
    %v296 = vld [vmem:[%s5] sm:$0x3]
    %v298 = vperm.slane %v296, 0
    %v299 = vperm.slane %v296, 1
    %v306 = vunpack.c.l.b16 %v252
    %v307 = vunpack.c.l.b16 %v259
    %v308 = vunpack.c.l.b16 %v266
    %v309 = vunpack.c.l.b16 %v273
    %v310 = vpack.c.b16 %v307, %v306
    %v311 = vpack.c.b16 %v309, %v308
    %v330 = vunpack.c.l.b16 %v280
    %v331 = vunpack.c.h.b16 %v280
    %v332 = vunpack.c.l.b16 %v281
    %v333 = vunpack.c.h.b16 %v281
    %v334 = vunpack.c.l.b16 %v282
    %v335 = vunpack.c.h.b16 %v282
    %v336 = vunpack.c.l.b16 %v283
    %v337 = vunpack.c.h.b16 %v283
    %v338 = vunpack.c.l.b16 %v284
    %v339 = vunpack.c.h.b16 %v284
    %v340 = vunpack.c.l.b16 %v285
    %v341 = vunpack.c.h.b16 %v285
    %v342 = vunpack.c.l.b16 %v286
    %v343 = vunpack.c.h.b16 %v286
    %v344 = vunpack.c.l.b16 %v287
    %v345 = vunpack.c.h.b16 %v287
    %v346 = vunpack.c.l.b16 %v288
    %v347 = vunpack.c.h.b16 %v288
    %v348 = vunpack.c.l.b16 %v289
    %v349 = vunpack.c.h.b16 %v289
    %v350 = vunpack.c.l.b16 %v290
    %v351 = vunpack.c.h.b16 %v290
    %v352 = vunpack.c.l.b16 %v291
    %v353 = vunpack.c.h.b16 %v291
    %v354 = vunpack.c.l.b16 %v292
    %v355 = vunpack.c.h.b16 %v292
    %v356 = vunpack.c.l.b16 %v293
    %v357 = vunpack.c.h.b16 %v293
    %v358 = vunpack.c.l.b16 %v294
    %v359 = vunpack.c.h.b16 %v294
    %v360 = vunpack.c.l.b16 %v295
    %v361 = vunpack.c.h.b16 %v295
    %v362 = vpack.c.b16 %v332, %v330
    %v363 = vpack.c.b16 %v333, %v331
    %v364 = vpack.c.b16 %v336, %v334
    %v365 = vpack.c.b16 %v337, %v335
    %v366 = vpack.c.b16 %v340, %v338
    %v367 = vpack.c.b16 %v341, %v339
    %v368 = vpack.c.b16 %v344, %v342
    %v369 = vpack.c.b16 %v345, %v343
    %v370 = vpack.c.b16 %v348, %v346
    %v371 = vpack.c.b16 %v349, %v347
    %v372 = vpack.c.b16 %v352, %v350
    %v373 = vpack.c.b16 %v353, %v351
    %v374 = vpack.c.b16 %v356, %v354
    %v375 = vpack.c.b16 %v357, %v355
    %v376 = vpack.c.b16 %v360, %v358
    %v377 = vpack.c.b16 %v361, %v359
    %394 = vmatpush.bf16.msra.mxu0 %v376
    %395 = vmatpush.bf16.msra.mxu0 %v374
    %396 = vmatpush.bf16.msra.mxu0 %v372
    %397 = vmatpush.bf16.msra.mxu0 %v370
    %398 = vmatpush.bf16.msra.mxu0 %v368
    %399 = vmatpush.bf16.msra.mxu0 %v366
    %400 = vmatpush.bf16.msra.mxu0 %v364
    %401 = vmatpush.bf16.msra.mxu0 %v362
    %402 = vmatmul.bf16.gmra.mxu0 %v310
    %v403 = vpop.f32.mrf.mxu0
    %v404 = vadd.f32 %v298, %v403
    %v405 = vpop.f32.mrf.mxu0
    %v406 = vadd.f32 %v298, %v405
    %407 = vmatmul.bf16.gmra.mxu0 %v311
    %v408 = vpop.f32.mrf.mxu0
    %v409 = vadd.f32 %v298, %v408
    %v410 = vpop.f32.mrf.mxu0
    %v411 = vadd.f32 %v298, %v410
    %412 = vdwg.mxu0
    %413 = vmatpush.bf16.msra.mxu0 %v377
    %414 = vmatpush.bf16.msra.mxu0 %v375
    %415 = vmatpush.bf16.msra.mxu0 %v373
    %416 = vmatpush.bf16.msra.mxu0 %v371
    %417 = vmatpush.bf16.msra.mxu0 %v369
    %418 = vmatpush.bf16.msra.mxu0 %v367
    %419 = vmatpush.bf16.msra.mxu0 %v365
    %420 = vmatpush.bf16.msra.mxu0 %v363
    %421 = vmatmul.bf16.gmra.mxu0 %v310
    %v422 = vpop.f32.mrf.mxu0
    %v423 = vadd.f32 %v299, %v422
    %v424 = vpop.f32.mrf.mxu0
    %v425 = vadd.f32 %v299, %v424
    %426 = vmatmul.bf16.gmra.mxu0 %v311
    %v427 = vpop.f32.mrf.mxu0
    %v428 = vadd.f32 %v299, %v427
    %v429 = vpop.f32.mrf.mxu0
    %v430 = vadd.f32 %v299, %v429
    %431 = vdwg.mxu0
    %v432 = vmax.f32 %v404, 0.0
    %v433 = vmax.f32 %v423, 0.0
    %v434 = vmax.f32 %v406, 0.0
    %v435 = vmax.f32 %v425, 0.0
    %v436 = vmax.f32 %v409, 0.0
    %v437 = vmax.f32 %v428, 0.0
    %v438 = vmax.f32 %v411, 0.0
    %v439 = vmax.f32 %v430, 0.0
    %s440 = scalar_lea.vmem %s3, 128
    %v441 = vld [vmem:[%s440] sm:$0xff]
    %v442 = vld [vmem:[%s440 + $0x8] sm:$0xff]
    %v443 = vld [vmem:[%s440 + $0x10] sm:$0xff]
    %v444 = vld [vmem:[%s440 + $0x18] sm:$0xff]
    %v445 = vld [vmem:[%s440 + $0x20] sm:$0xff]
    %v446 = vld [vmem:[%s440 + $0x28] sm:$0xff]
    %v447 = vld [vmem:[%s440 + $0x30] sm:$0xff]
    %v448 = vld [vmem:[%s440 + $0x38] sm:$0xff]
    %v449 = vld [vmem:[%s440 + $0x40] sm:$0xff]
    %v450 = vld [vmem:[%s440 + $0x48] sm:$0xff]
    %v451 = vld [vmem:[%s440 + $0x50] sm:$0xff]
    %v452 = vld [vmem:[%s440 + $0x58] sm:$0xff]
    %v453 = vld [vmem:[%s440 + $0x60] sm:$0xff]
    %v454 = vld [vmem:[%s440 + $0x68] sm:$0xff]
    %v455 = vld [vmem:[%s440 + $0x70] sm:$0xff]
    %v456 = vld [vmem:[%s440 + $0x78] sm:$0xff]
    %s457 = scalar_lea.vmem %s5, 2
    %v458 = vld [vmem:[%s457] sm:$0x3]
    %v460 = vperm.slane %v458, 0
    %v461 = vperm.slane %v458, 1
    %v464 = vunpack.c.h.b16 %v252
    %v465 = vunpack.c.h.b16 %v259
    %v466 = vunpack.c.h.b16 %v266
    %v467 = vunpack.c.h.b16 %v273
    %v468 = vpack.c.b16 %v465, %v464
    %v469 = vpack.c.b16 %v467, %v466
    %v488 = vunpack.c.l.b16 %v441
    %v489 = vunpack.c.h.b16 %v441
    %v490 = vunpack.c.l.b16 %v442
    %v491 = vunpack.c.h.b16 %v442
    %v492 = vunpack.c.l.b16 %v443
    %v493 = vunpack.c.h.b16 %v443
    %v494 = vunpack.c.l.b16 %v444
    %v495 = vunpack.c.h.b16 %v444
    %v496 = vunpack.c.l.b16 %v445
    %v497 = vunpack.c.h.b16 %v445
    %v498 = vunpack.c.l.b16 %v446
    %v499 = vunpack.c.h.b16 %v446
    %v500 = vunpack.c.l.b16 %v447
    %v501 = vunpack.c.h.b16 %v447
    %v502 = vunpack.c.l.b16 %v448
    %v503 = vunpack.c.h.b16 %v448
    %v504 = vunpack.c.l.b16 %v449
    %v505 = vunpack.c.h.b16 %v449
    %v506 = vunpack.c.l.b16 %v450
    %v507 = vunpack.c.h.b16 %v450
    %v508 = vunpack.c.l.b16 %v451
    %v509 = vunpack.c.h.b16 %v451
    %v510 = vunpack.c.l.b16 %v452
    %v511 = vunpack.c.h.b16 %v452
    %v512 = vunpack.c.l.b16 %v453
    %v513 = vunpack.c.h.b16 %v453
    %v514 = vunpack.c.l.b16 %v454
    %v515 = vunpack.c.h.b16 %v454
    %v516 = vunpack.c.l.b16 %v455
    %v517 = vunpack.c.h.b16 %v455
    %v518 = vunpack.c.l.b16 %v456
    %v519 = vunpack.c.h.b16 %v456
    %v520 = vpack.c.b16 %v490, %v488
    %v521 = vpack.c.b16 %v491, %v489
    %v522 = vpack.c.b16 %v494, %v492
    %v523 = vpack.c.b16 %v495, %v493
    %v524 = vpack.c.b16 %v498, %v496
    %v525 = vpack.c.b16 %v499, %v497
    %v526 = vpack.c.b16 %v502, %v500
    %v527 = vpack.c.b16 %v503, %v501
    %v528 = vpack.c.b16 %v506, %v504
    %v529 = vpack.c.b16 %v507, %v505
    %v530 = vpack.c.b16 %v510, %v508
    %v531 = vpack.c.b16 %v511, %v509
    %v532 = vpack.c.b16 %v514, %v512
    %v533 = vpack.c.b16 %v515, %v513
    %v534 = vpack.c.b16 %v518, %v516
    %v535 = vpack.c.b16 %v519, %v517
    %552 = vmatpush.bf16.msra.mxu0 %v534
    %553 = vmatpush.bf16.msra.mxu0 %v532
    %554 = vmatpush.bf16.msra.mxu0 %v530
    %555 = vmatpush.bf16.msra.mxu0 %v528
    %556 = vmatpush.bf16.msra.mxu0 %v526
    %557 = vmatpush.bf16.msra.mxu0 %v524
    %558 = vmatpush.bf16.msra.mxu0 %v522
    %559 = vmatpush.bf16.msra.mxu0 %v520
    %560 = vmatmul.bf16.gmra.mxu0 %v468
    %v561 = vpop.f32.mrf.mxu0
    %v562 = vadd.f32 %v460, %v561
    %v563 = vpop.f32.mrf.mxu0
    %v564 = vadd.f32 %v460, %v563
    %565 = vmatmul.bf16.gmra.mxu0 %v469
    %v566 = vpop.f32.mrf.mxu0
    %v567 = vadd.f32 %v460, %v566
    %v568 = vpop.f32.mrf.mxu0
    %v569 = vadd.f32 %v460, %v568
    %570 = vdwg.mxu0
    %571 = vmatpush.bf16.msra.mxu0 %v535
    %572 = vmatpush.bf16.msra.mxu0 %v533
    %573 = vmatpush.bf16.msra.mxu0 %v531
    %574 = vmatpush.bf16.msra.mxu0 %v529
    %575 = vmatpush.bf16.msra.mxu0 %v527
    %576 = vmatpush.bf16.msra.mxu0 %v525
    %577 = vmatpush.bf16.msra.mxu0 %v523
    %578 = vmatpush.bf16.msra.mxu0 %v521
    %579 = vmatmul.bf16.gmra.mxu0 %v468
    %v580 = vpop.f32.mrf.mxu0
    %v581 = vadd.f32 %v461, %v580
    %v582 = vpop.f32.mrf.mxu0
    %v583 = vadd.f32 %v461, %v582
    %584 = vmatmul.bf16.gmra.mxu0 %v469
    %v585 = vpop.f32.mrf.mxu0
    %v586 = vadd.f32 %v461, %v585
    %v587 = vpop.f32.mrf.mxu0
    %v588 = vadd.f32 %v461, %v587
    %589 = vdwg.mxu0
    %v590 = vmax.f32 %v562, 0.0
    %v591 = vmax.f32 %v581, 0.0
    %v592 = vmax.f32 %v564, 0.0
    %v593 = vmax.f32 %v583, 0.0
    %v594 = vmax.f32 %v567, 0.0
    %v595 = vmax.f32 %v586, 0.0
    %v596 = vmax.f32 %v569, 0.0
    %v597 = vmax.f32 %v588, 0.0
    %v598 = vpack.c.bf16 %v592, %v590
    %v599 = vpack.c.bf16 %v593, %v591
    %v600 = vpack.c.bf16 %v596, %v594
    %v601 = vpack.c.bf16 %v597, %v595
    %v602 = vld [vmem:[%s7] sm:$0xff]
    %v603 = vld [vmem:[%s7 + $0x8] sm:$0xf]
    %v604 = vld [vmem:[%s7 + $0xc] sm:$0xff]
    %v605 = vld [vmem:[%s7 + $0x14] sm:$0xf]
    %v606 = vld [vmem:[%s7 + $0x18] sm:$0xff]
    %v607 = vld [vmem:[%s7 + $0x20] sm:$0xf]
    %v608 = vld [vmem:[%s7 + $0x24] sm:$0xff]
    %v609 = vld [vmem:[%s7 + $0x2c] sm:$0xf]
    %v610 = vld [vmem:[%s7 + $0x30] sm:$0xff]
    %v611 = vld [vmem:[%s7 + $0x38] sm:$0xf]
    %v612 = vld [vmem:[%s7 + $0x3c] sm:$0xff]
    %v613 = vld [vmem:[%s7 + $0x44] sm:$0xf]
    %v614 = vld [vmem:[%s7 + $0x48] sm:$0xff]
    %v615 = vld [vmem:[%s7 + $0x50] sm:$0xf]
    %v616 = vld [vmem:[%s7 + $0x54] sm:$0xff]
    %v617 = vld [vmem:[%s7 + $0x5c] sm:$0xf]
    %v618 = vld [vmem:[%s7 + $0x60] sm:$0xff]
    %v619 = vld [vmem:[%s7 + $0x68] sm:$0xf]
    %v620 = vld [vmem:[%s7 + $0x6c] sm:$0xff]
    %v621 = vld [vmem:[%s7 + $0x74] sm:$0xf]
    %v622 = vld [vmem:[%s7 + $0x78] sm:$0xff]
    %v623 = vld [vmem:[%s7 + $0x80] sm:$0xf]
    %v624 = vld [vmem:[%s7 + $0x84] sm:$0xff]
    %v625 = vld [vmem:[%s7 + $0x8c] sm:$0xf]
    %v626 = vld [vmem:[%s7 + $0x90] sm:$0xff]
    %v627 = vld [vmem:[%s7 + $0x98] sm:$0xf]
    %v628 = vld [vmem:[%s7 + $0x9c] sm:$0xff]
    %v629 = vld [vmem:[%s7 + $0xa4] sm:$0xf]
    %v630 = vld [vmem:[%s7 + $0xa8] sm:$0xff]
    %v631 = vld [vmem:[%s7 + $0xb0] sm:$0xf]
    %v632 = vld [vmem:[%s7 + $0xb4] sm:$0xff]
    %v633 = vld [vmem:[%s7 + $0xbc] sm:$0xf]
    %v634 = vld [vmem:[%s7 + $0xc0] sm:$0xff]
    %v635 = vld [vmem:[%s7 + $0xc8] sm:$0xf]
    %v636 = vld [vmem:[%s7 + $0xcc] sm:$0xff]
    %v637 = vld [vmem:[%s7 + $0xd4] sm:$0xf]
    %v638 = vld [vmem:[%s7 + $0xd8] sm:$0x77]
    %v639 = vld [vmem:[%s7 + $0xe0] sm:$0x7]
    %s640 = scalar_lea.vmem %s3, 256
    %v641 = vld [vmem:[%s640] sm:$0xff]
    %v642 = vld [vmem:[%s640 + $0x8] sm:$0xff]
    %v643 = vld [vmem:[%s640 + $0x10] sm:$0xff]
    %v644 = vld [vmem:[%s640 + $0x18] sm:$0xff]
    %v645 = vld [vmem:[%s640 + $0x20] sm:$0xff]
    %v646 = vld [vmem:[%s640 + $0x28] sm:$0xff]
    %v647 = vld [vmem:[%s640 + $0x30] sm:$0xff]
    %v648 = vld [vmem:[%s640 + $0x38] sm:$0xff]
    %v649 = vld [vmem:[%s640 + $0x40] sm:$0xff]
    %v650 = vld [vmem:[%s640 + $0x48] sm:$0xff]
    %v651 = vld [vmem:[%s640 + $0x50] sm:$0xff]
    %v652 = vld [vmem:[%s640 + $0x58] sm:$0xff]
    %v653 = vld [vmem:[%s640 + $0x60] sm:$0xff]
    %v654 = vld [vmem:[%s640 + $0x68] sm:$0xff]
    %v655 = vld [vmem:[%s640 + $0x70] sm:$0xff]
    %v656 = vld [vmem:[%s640 + $0x78] sm:$0xff]
    %s657 = scalar_lea.vmem %s5, 4
    %v658 = vld [vmem:[%s657] sm:$0x3]
    %v660 = vperm.slane %v658, 0
    %v661 = vperm.slane %v658, 1
    %v668 = vunpack.c.l.b16 %v253
    %v669 = vunpack.c.l.b16 %v260
    %v670 = vunpack.c.l.b16 %v267
    %v671 = vunpack.c.l.b16 %v274
    %v672 = vpack.c.b16 %v669, %v668
    %v673 = vpack.c.b16 %v671, %v670
    %v692 = vunpack.c.l.b16 %v641
    %v693 = vunpack.c.h.b16 %v641
    %v694 = vunpack.c.l.b16 %v642
    %v695 = vunpack.c.h.b16 %v642
    %v696 = vunpack.c.l.b16 %v643
    %v697 = vunpack.c.h.b16 %v643
    %v698 = vunpack.c.l.b16 %v644
    %v699 = vunpack.c.h.b16 %v644
    %v700 = vunpack.c.l.b16 %v645
    %v701 = vunpack.c.h.b16 %v645
    %v702 = vunpack.c.l.b16 %v646
    %v703 = vunpack.c.h.b16 %v646
    %v704 = vunpack.c.l.b16 %v647
    %v705 = vunpack.c.h.b16 %v647
    %v706 = vunpack.c.l.b16 %v648
    %v707 = vunpack.c.h.b16 %v648
    %v708 = vunpack.c.l.b16 %v649
    %v709 = vunpack.c.h.b16 %v649
    %v710 = vunpack.c.l.b16 %v650
    %v711 = vunpack.c.h.b16 %v650
    %v712 = vunpack.c.l.b16 %v651
    %v713 = vunpack.c.h.b16 %v651
    %v714 = vunpack.c.l.b16 %v652
    %v715 = vunpack.c.h.b16 %v652
    %v716 = vunpack.c.l.b16 %v653
    %v717 = vunpack.c.h.b16 %v653
    %v718 = vunpack.c.l.b16 %v654
    %v719 = vunpack.c.h.b16 %v654
    %v720 = vunpack.c.l.b16 %v655
    %v721 = vunpack.c.h.b16 %v655
    %v722 = vunpack.c.l.b16 %v656
    %v723 = vunpack.c.h.b16 %v656
    %v724 = vpack.c.b16 %v694, %v692
    %v725 = vpack.c.b16 %v695, %v693
    %v726 = vpack.c.b16 %v698, %v696
    %v727 = vpack.c.b16 %v699, %v697
    %v728 = vpack.c.b16 %v702, %v700
    %v729 = vpack.c.b16 %v703, %v701
    %v730 = vpack.c.b16 %v706, %v704
    %v731 = vpack.c.b16 %v707, %v705
    %v732 = vpack.c.b16 %v710, %v708
    %v733 = vpack.c.b16 %v711, %v709
    %v734 = vpack.c.b16 %v714, %v712
    %v735 = vpack.c.b16 %v715, %v713
    %v736 = vpack.c.b16 %v718, %v716
    %v737 = vpack.c.b16 %v719, %v717
    %v738 = vpack.c.b16 %v722, %v720
    %v739 = vpack.c.b16 %v723, %v721
    %756 = vmatpush.bf16.msra.mxu0 %v738
    %757 = vmatpush.bf16.msra.mxu0 %v736
    %758 = vmatpush.bf16.msra.mxu0 %v734
    %759 = vmatpush.bf16.msra.mxu0 %v732
    %760 = vmatpush.bf16.msra.mxu0 %v730
    %761 = vmatpush.bf16.msra.mxu0 %v728
    %762 = vmatpush.bf16.msra.mxu0 %v726
    %763 = vmatpush.bf16.msra.mxu0 %v724
    %764 = vmatmul.bf16.gmra.mxu0 %v672
    %v765 = vpop.f32.mrf.mxu0
    %v766 = vadd.f32 %v660, %v765
    %v767 = vpop.f32.mrf.mxu0
    %v768 = vadd.f32 %v660, %v767
    %769 = vmatmul.bf16.gmra.mxu0 %v673
    %v770 = vpop.f32.mrf.mxu0
    %v771 = vadd.f32 %v660, %v770
    %v772 = vpop.f32.mrf.mxu0
    %v773 = vadd.f32 %v660, %v772
    %774 = vdwg.mxu0
    %775 = vmatpush.bf16.msra.mxu0 %v739
    %776 = vmatpush.bf16.msra.mxu0 %v737
    %777 = vmatpush.bf16.msra.mxu0 %v735
    %778 = vmatpush.bf16.msra.mxu0 %v733
    %779 = vmatpush.bf16.msra.mxu0 %v731
    %780 = vmatpush.bf16.msra.mxu0 %v729
    %781 = vmatpush.bf16.msra.mxu0 %v727
    %782 = vmatpush.bf16.msra.mxu0 %v725
    %783 = vmatmul.bf16.gmra.mxu0 %v672
    %v784 = vpop.f32.mrf.mxu0
    %v785 = vadd.f32 %v661, %v784
    %v786 = vpop.f32.mrf.mxu0
    %v787 = vadd.f32 %v661, %v786
    %788 = vmatmul.bf16.gmra.mxu0 %v673
    %v789 = vpop.f32.mrf.mxu0
    %v790 = vadd.f32 %v661, %v789
    %v791 = vpop.f32.mrf.mxu0
    %v792 = vadd.f32 %v661, %v791
    %793 = vdwg.mxu0
    %v794 = vmax.f32 %v766, 0.0
    %v795 = vmax.f32 %v785, 0.0
    %v796 = vmax.f32 %v768, 0.0
    %v797 = vmax.f32 %v787, 0.0
    %v798 = vmax.f32 %v771, 0.0
    %v799 = vmax.f32 %v790, 0.0
    %v800 = vmax.f32 %v773, 0.0
    %v801 = vmax.f32 %v792, 0.0
    %v802 = vpack.c.bf16 %v796, %v794
    %v803 = vpack.c.bf16 %v797, %v795
    %v804 = vpack.c.bf16 %v800, %v798
    %v805 = vpack.c.bf16 %v801, %v799
    %s806 = scalar_lea.vmem %s7, 228
    %v807 = vld [vmem:[%s806] sm:$0xff]
    %v808 = vld [vmem:[%s806 + $0x8] sm:$0xf]
    %v809 = vld [vmem:[%s806 + $0xc] sm:$0xff]
    %v810 = vld [vmem:[%s806 + $0x14] sm:$0xf]
    %v811 = vld [vmem:[%s806 + $0x18] sm:$0xff]
    %v812 = vld [vmem:[%s806 + $0x20] sm:$0xf]
    %v813 = vld [vmem:[%s806 + $0x24] sm:$0xff]
    %v814 = vld [vmem:[%s806 + $0x2c] sm:$0xf]
    %v815 = vld [vmem:[%s806 + $0x30] sm:$0xff]
    %v816 = vld [vmem:[%s806 + $0x38] sm:$0xf]
    %v817 = vld [vmem:[%s806 + $0x3c] sm:$0xff]
    %v818 = vld [vmem:[%s806 + $0x44] sm:$0xf]
    %v819 = vld [vmem:[%s806 + $0x48] sm:$0xff]
    %v820 = vld [vmem:[%s806 + $0x50] sm:$0xf]
    %v821 = vld [vmem:[%s806 + $0x54] sm:$0xff]
    %v822 = vld [vmem:[%s806 + $0x5c] sm:$0xf]
    %v823 = vld [vmem:[%s806 + $0x60] sm:$0xff]
    %v824 = vld [vmem:[%s806 + $0x68] sm:$0xf]
    %v825 = vld [vmem:[%s806 + $0x6c] sm:$0xff]
    %v826 = vld [vmem:[%s806 + $0x74] sm:$0xf]
    %v827 = vld [vmem:[%s806 + $0x78] sm:$0xff]
    %v828 = vld [vmem:[%s806 + $0x80] sm:$0xf]
    %v829 = vld [vmem:[%s806 + $0x84] sm:$0xff]
    %v830 = vld [vmem:[%s806 + $0x8c] sm:$0xf]
    %v831 = vld [vmem:[%s806 + $0x90] sm:$0xff]
    %v832 = vld [vmem:[%s806 + $0x98] sm:$0xf]
    %v833 = vld [vmem:[%s806 + $0x9c] sm:$0xff]
    %v834 = vld [vmem:[%s806 + $0xa4] sm:$0xf]
    %v835 = vld [vmem:[%s806 + $0xa8] sm:$0xff]
    %v836 = vld [vmem:[%s806 + $0xb0] sm:$0xf]
    %v837 = vld [vmem:[%s806 + $0xb4] sm:$0xff]
    %v838 = vld [vmem:[%s806 + $0xbc] sm:$0xf]
    %v839 = vld [vmem:[%s806 + $0xc0] sm:$0xff]
    %v840 = vld [vmem:[%s806 + $0xc8] sm:$0xf]
    %v841 = vld [vmem:[%s806 + $0xcc] sm:$0xff]
    %v842 = vld [vmem:[%s806 + $0xd4] sm:$0xf]
    %v843 = vld [vmem:[%s806 + $0xd8] sm:$0x77]
    %v844 = vld [vmem:[%s806 + $0xe0] sm:$0x7]
    %v883 = vunpack.c.l.b16 %v807
    %v884 = vunpack.c.h.b16 %v807
    %v885 = vunpack.c.l.b16 %v808
    %v886 = vunpack.c.l.b16 %v809
    %v887 = vunpack.c.h.b16 %v809
    %v888 = vunpack.c.l.b16 %v810
    %v889 = vunpack.c.l.b16 %v811
    %v890 = vunpack.c.h.b16 %v811
    %v891 = vunpack.c.l.b16 %v812
    %v892 = vunpack.c.l.b16 %v813
    %v893 = vunpack.c.h.b16 %v813
    %v894 = vunpack.c.l.b16 %v814
    %v895 = vunpack.c.l.b16 %v815
    %v896 = vunpack.c.h.b16 %v815
    %v897 = vunpack.c.l.b16 %v816
    %v898 = vunpack.c.l.b16 %v817
    %v899 = vunpack.c.h.b16 %v817
    %v900 = vunpack.c.l.b16 %v818
    %v901 = vunpack.c.l.b16 %v819
    %v902 = vunpack.c.h.b16 %v819
    %v903 = vunpack.c.l.b16 %v820
    %v904 = vunpack.c.l.b16 %v821
    %v905 = vunpack.c.h.b16 %v821
    %v906 = vunpack.c.l.b16 %v822
    %v907 = vunpack.c.l.b16 %v823
    %v908 = vunpack.c.h.b16 %v823
    %v909 = vunpack.c.l.b16 %v824
    %v910 = vunpack.c.l.b16 %v825
    %v911 = vunpack.c.h.b16 %v825
    %v912 = vunpack.c.l.b16 %v826
    %v913 = vunpack.c.l.b16 %v827
    %v914 = vunpack.c.h.b16 %v827
    %v915 = vunpack.c.l.b16 %v828
    %v916 = vunpack.c.l.b16 %v829
    %v917 = vunpack.c.h.b16 %v829
    %v918 = vunpack.c.l.b16 %v830
    %v919 = vunpack.c.l.b16 %v831
    %v920 = vunpack.c.h.b16 %v831
    %v921 = vunpack.c.l.b16 %v832
    %v922 = vunpack.c.l.b16 %v833
    %v923 = vunpack.c.h.b16 %v833
    %v924 = vunpack.c.l.b16 %v834
    %v925 = vunpack.c.l.b16 %v835
    %v926 = vunpack.c.h.b16 %v835
    %v927 = vunpack.c.l.b16 %v836
    %v928 = vunpack.c.l.b16 %v837
    %v929 = vunpack.c.h.b16 %v837
    %v930 = vunpack.c.l.b16 %v838
    %v931 = vunpack.c.l.b16 %v839
    %v932 = vunpack.c.h.b16 %v839
    %v933 = vunpack.c.l.b16 %v840
    %v934 = vunpack.c.l.b16 %v841
    %v935 = vunpack.c.h.b16 %v841
    %v936 = vunpack.c.l.b16 %v842
    %v937 = vunpack.c.l.b16 %v843
    %v938 = vunpack.c.h.b16 %v843
    %v939 = vunpack.c.l.b16 %v844
    %v940 = vpack.c.b16 %v886, %v883
    %v941 = vpack.c.b16 %v887, %v884
    %v942 = vpack.c.b16 %v888, %v885
    %v943 = vpack.c.b16 %v892, %v889
    %v944 = vpack.c.b16 %v893, %v890
    %v945 = vpack.c.b16 %v894, %v891
    %v946 = vpack.c.b16 %v898, %v895
    %v947 = vpack.c.b16 %v899, %v896
    %v948 = vpack.c.b16 %v900, %v897
    %v949 = vpack.c.b16 %v904, %v901
    %v950 = vpack.c.b16 %v905, %v902
    %v951 = vpack.c.b16 %v906, %v903
    %v952 = vpack.c.b16 %v910, %v907
    %v953 = vpack.c.b16 %v911, %v908
    %v954 = vpack.c.b16 %v912, %v909
    %v955 = vpack.c.b16 %v916, %v913
    %v956 = vpack.c.b16 %v917, %v914
    %v957 = vpack.c.b16 %v918, %v915
    %v958 = vpack.c.b16 %v922, %v919
    %v959 = vpack.c.b16 %v923, %v920
    %v960 = vpack.c.b16 %v924, %v921
    %v961 = vpack.c.b16 %v928, %v925
    %v962 = vpack.c.b16 %v929, %v926
    %v963 = vpack.c.b16 %v930, %v927
    %v964 = vpack.c.b16 %v934, %v931
    %v965 = vpack.c.b16 %v935, %v932
    %v966 = vpack.c.b16 %v936, %v933
    %v967 = vpack.c.b16 %v937, %v937
    %v968 = vpack.c.b16 %v938, %v938
    %v969 = vpack.c.b16 %v939, %v939
    %vm997 = vcmask 179200
    %v999 = vsel %vm997, %v803, 0
    %v1002 = vsel %vm997, %v805, 0
    %vm1004 = vcmask 1042432
    %v1006 = vsel %vm1004, %v967, 0
    %v1009 = vsel %vm1004, %v968, 0
    %v1012 = vsel %vm1004, %v969, 0
    %1014 = vmatpush.bf16.msra.mxu0 %v961
    %1015 = vmatpush.bf16.msra.mxu0 %v958
    %1016 = vmatpush.bf16.msra.mxu0 %v955
    %1017 = vmatpush.bf16.msra.mxu0 %v952
    %1018 = vmatpush.bf16.msra.mxu0 %v949
    %1019 = vmatpush.bf16.msra.mxu0 %v946
    %1020 = vmatpush.bf16.msra.mxu0 %v943
    %1021 = vmatpush.bf16.msra.mxu0 %v940
    %1022 = vmatmul.bf16.gmra.mxu0 %v802
    %v1023 = vpop.f32.mrf.mxu0
    %v1024 = vadd.f32 0.0, %v1023
    %v1025 = vpop.f32.mrf.mxu0
    %v1026 = vadd.f32 0.0, %v1025
    %1027 = vmatmul.bf16.gmra.mxu0 %v804
    %v1028 = vpop.f32.mrf.mxu0
    %v1029 = vadd.f32 0.0, %v1028
    %v1030 = vpop.f32.mrf.mxu0
    %v1031 = vadd.f32 0.0, %v1030
    %1032 = vdwg.mxu0
    %1033 = vmatpush.bf16.msra.mxu0 0
    %1034 = vmatpush.bf16.msra.mxu0 0
    %1035 = vmatpush.bf16.msra.mxu0 0
    %1036 = vmatpush.bf16.msra.mxu0 0
    %1037 = vmatpush.bf16.msra.mxu0 0
    %1038 = vmatpush.bf16.msra.mxu0 0
    %1039 = vmatpush.bf16.msra.mxu0 %v1006
    %1040 = vmatpush.bf16.msra.mxu0 %v964
    %1041 = vmatmul.bf16.gmra.mxu0 %v999
    %v1042 = vpop.f32.mrf.mxu0
    %v1043 = vadd.f32 %v1024, %v1042
    %v1044 = vpop.f32.mrf.mxu0
    %v1045 = vadd.f32 %v1026, %v1044
    %1046 = vmatmul.bf16.gmra.mxu0 %v1002
    %v1047 = vpop.f32.mrf.mxu0
    %v1048 = vadd.f32 %v1029, %v1047
    %v1049 = vpop.f32.mrf.mxu0
    %v1050 = vadd.f32 %v1031, %v1049
    %1051 = vdwg.mxu0
    %1052 = vmatpush.bf16.msra.mxu0 %v962
    %1053 = vmatpush.bf16.msra.mxu0 %v959
    %1054 = vmatpush.bf16.msra.mxu0 %v956
    %1055 = vmatpush.bf16.msra.mxu0 %v953
    %1056 = vmatpush.bf16.msra.mxu0 %v950
    %1057 = vmatpush.bf16.msra.mxu0 %v947
    %1058 = vmatpush.bf16.msra.mxu0 %v944
    %1059 = vmatpush.bf16.msra.mxu0 %v941
    %1060 = vmatmul.bf16.gmra.mxu0 %v802
    %v1061 = vpop.f32.mrf.mxu0
    %v1062 = vadd.f32 0.0, %v1061
    %v1063 = vpop.f32.mrf.mxu0
    %v1064 = vadd.f32 0.0, %v1063
    %1065 = vmatmul.bf16.gmra.mxu0 %v804
    %v1066 = vpop.f32.mrf.mxu0
    %v1067 = vadd.f32 0.0, %v1066
    %v1068 = vpop.f32.mrf.mxu0
    %v1069 = vadd.f32 0.0, %v1068
    %1070 = vdwg.mxu0
    %1071 = vmatpush.bf16.msra.mxu0 0
    %1072 = vmatpush.bf16.msra.mxu0 0
    %1073 = vmatpush.bf16.msra.mxu0 0
    %1074 = vmatpush.bf16.msra.mxu0 0
    %1075 = vmatpush.bf16.msra.mxu0 0
    %1076 = vmatpush.bf16.msra.mxu0 0
    %1077 = vmatpush.bf16.msra.mxu0 %v1009
    %1078 = vmatpush.bf16.msra.mxu0 %v965
    %1079 = vmatmul.bf16.gmra.mxu0 %v999
    %v1080 = vpop.f32.mrf.mxu0
    %v1081 = vadd.f32 %v1062, %v1080
    %v1082 = vpop.f32.mrf.mxu0
    %v1083 = vadd.f32 %v1064, %v1082
    %1084 = vmatmul.bf16.gmra.mxu0 %v1002
    %v1085 = vpop.f32.mrf.mxu0
    %v1086 = vadd.f32 %v1067, %v1085
    %v1087 = vpop.f32.mrf.mxu0
    %v1088 = vadd.f32 %v1069, %v1087
    %1089 = vdwg.mxu0
    %1090 = vmatpush.bf16.msra.mxu0 %v963
    %1091 = vmatpush.bf16.msra.mxu0 %v960
    %1092 = vmatpush.bf16.msra.mxu0 %v957
    %1093 = vmatpush.bf16.msra.mxu0 %v954
    %1094 = vmatpush.bf16.msra.mxu0 %v951
    %1095 = vmatpush.bf16.msra.mxu0 %v948
    %1096 = vmatpush.bf16.msra.mxu0 %v945
    %1097 = vmatpush.bf16.msra.mxu0 %v942
    %1098 = vmatmul.bf16.gmra.mxu0 %v802
    %v1099 = vpop.f32.mrf.mxu0
    %v1100 = vadd.f32 0.0, %v1099
    %v1101 = vpop.f32.mrf.mxu0
    %v1102 = vadd.f32 0.0, %v1101
    %1103 = vmatmul.bf16.gmra.mxu0 %v804
    %v1104 = vpop.f32.mrf.mxu0
    %v1105 = vadd.f32 0.0, %v1104
    %v1106 = vpop.f32.mrf.mxu0
    %v1107 = vadd.f32 0.0, %v1106
    %1108 = vdwg.mxu0
    %1109 = vmatpush.bf16.msra.mxu0 0
    %1110 = vmatpush.bf16.msra.mxu0 0
    %1111 = vmatpush.bf16.msra.mxu0 0
    %1112 = vmatpush.bf16.msra.mxu0 0
    %1113 = vmatpush.bf16.msra.mxu0 0
    %1114 = vmatpush.bf16.msra.mxu0 0
    %1115 = vmatpush.bf16.msra.mxu0 %v1012
    %1116 = vmatpush.bf16.msra.mxu0 %v966
    %1117 = vmatmul.bf16.gmra.mxu0 %v999
    %v1118 = vpop.f32.mrf.mxu0
    %v1119 = vadd.f32 %v1100, %v1118
    %v1120 = vpop.f32.mrf.mxu0
    %v1121 = vadd.f32 %v1102, %v1120
    %1122 = vmatmul.bf16.gmra.mxu0 %v1002
    %v1123 = vpop.f32.mrf.mxu0
    %v1124 = vadd.f32 %v1105, %v1123
    %v1125 = vpop.f32.mrf.mxu0
    %v1126 = vadd.f32 %v1107, %v1125
    %1127 = vdwg.mxu0
    %v1166 = vunpack.c.l.b16 %v602
    %v1167 = vunpack.c.h.b16 %v602
    %v1168 = vunpack.c.l.b16 %v603
    %v1169 = vunpack.c.l.b16 %v604
    %v1170 = vunpack.c.h.b16 %v604
    %v1171 = vunpack.c.l.b16 %v605
    %v1172 = vunpack.c.l.b16 %v606
    %v1173 = vunpack.c.h.b16 %v606
    %v1174 = vunpack.c.l.b16 %v607
    %v1175 = vunpack.c.l.b16 %v608
    %v1176 = vunpack.c.h.b16 %v608
    %v1177 = vunpack.c.l.b16 %v609
    %v1178 = vunpack.c.l.b16 %v610
    %v1179 = vunpack.c.h.b16 %v610
    %v1180 = vunpack.c.l.b16 %v611
    %v1181 = vunpack.c.l.b16 %v612
    %v1182 = vunpack.c.h.b16 %v612
    %v1183 = vunpack.c.l.b16 %v613
    %v1184 = vunpack.c.l.b16 %v614
    %v1185 = vunpack.c.h.b16 %v614
    %v1186 = vunpack.c.l.b16 %v615
    %v1187 = vunpack.c.l.b16 %v616
    %v1188 = vunpack.c.h.b16 %v616
    %v1189 = vunpack.c.l.b16 %v617
    %v1190 = vunpack.c.l.b16 %v618
    %v1191 = vunpack.c.h.b16 %v618
    %v1192 = vunpack.c.l.b16 %v619
    %v1193 = vunpack.c.l.b16 %v620
    %v1194 = vunpack.c.h.b16 %v620
    %v1195 = vunpack.c.l.b16 %v621
    %v1196 = vunpack.c.l.b16 %v622
    %v1197 = vunpack.c.h.b16 %v622
    %v1198 = vunpack.c.l.b16 %v623
    %v1199 = vunpack.c.l.b16 %v624
    %v1200 = vunpack.c.h.b16 %v624
    %v1201 = vunpack.c.l.b16 %v625
    %v1202 = vunpack.c.l.b16 %v626
    %v1203 = vunpack.c.h.b16 %v626
    %v1204 = vunpack.c.l.b16 %v627
    %v1205 = vunpack.c.l.b16 %v628
    %v1206 = vunpack.c.h.b16 %v628
    %v1207 = vunpack.c.l.b16 %v629
    %v1208 = vunpack.c.l.b16 %v630
    %v1209 = vunpack.c.h.b16 %v630
    %v1210 = vunpack.c.l.b16 %v631
    %v1211 = vunpack.c.l.b16 %v632
    %v1212 = vunpack.c.h.b16 %v632
    %v1213 = vunpack.c.l.b16 %v633
    %v1214 = vunpack.c.l.b16 %v634
    %v1215 = vunpack.c.h.b16 %v634
    %v1216 = vunpack.c.l.b16 %v635
    %v1217 = vunpack.c.l.b16 %v636
    %v1218 = vunpack.c.h.b16 %v636
    %v1219 = vunpack.c.l.b16 %v637
    %v1220 = vunpack.c.l.b16 %v638
    %v1221 = vunpack.c.h.b16 %v638
    %v1222 = vunpack.c.l.b16 %v639
    %v1223 = vpack.c.b16 %v1169, %v1166
    %v1224 = vpack.c.b16 %v1170, %v1167
    %v1225 = vpack.c.b16 %v1171, %v1168
    %v1226 = vpack.c.b16 %v1175, %v1172
    %v1227 = vpack.c.b16 %v1176, %v1173
    %v1228 = vpack.c.b16 %v1177, %v1174
    %v1229 = vpack.c.b16 %v1181, %v1178
    %v1230 = vpack.c.b16 %v1182, %v1179
    %v1231 = vpack.c.b16 %v1183, %v1180
    %v1232 = vpack.c.b16 %v1187, %v1184
    %v1233 = vpack.c.b16 %v1188, %v1185
    %v1234 = vpack.c.b16 %v1189, %v1186
    %v1235 = vpack.c.b16 %v1193, %v1190
    %v1236 = vpack.c.b16 %v1194, %v1191
    %v1237 = vpack.c.b16 %v1195, %v1192
    %v1238 = vpack.c.b16 %v1199, %v1196
    %v1239 = vpack.c.b16 %v1200, %v1197
    %v1240 = vpack.c.b16 %v1201, %v1198
    %v1241 = vpack.c.b16 %v1205, %v1202
    %v1242 = vpack.c.b16 %v1206, %v1203
    %v1243 = vpack.c.b16 %v1207, %v1204
    %v1244 = vpack.c.b16 %v1211, %v1208
    %v1245 = vpack.c.b16 %v1212, %v1209
    %v1246 = vpack.c.b16 %v1213, %v1210
    %v1247 = vpack.c.b16 %v1217, %v1214
    %v1248 = vpack.c.b16 %v1218, %v1215
    %v1249 = vpack.c.b16 %v1219, %v1216
    %v1250 = vpack.c.b16 %v1220, %v1220
    %v1251 = vpack.c.b16 %v1221, %v1221
    %v1252 = vpack.c.b16 %v1222, %v1222
    %v1281 = vsel %vm997, %v599, 0
    %v1284 = vsel %vm997, %v601, 0
    %v1287 = vsel %vm1004, %v1250, 0
    %v1290 = vsel %vm1004, %v1251, 0
    %v1293 = vsel %vm1004, %v1252, 0
    %1295 = vmatpush.bf16.msra.mxu0 %v1244
    %1296 = vmatpush.bf16.msra.mxu0 %v1241
    %1297 = vmatpush.bf16.msra.mxu0 %v1238
    %1298 = vmatpush.bf16.msra.mxu0 %v1235
    %1299 = vmatpush.bf16.msra.mxu0 %v1232
    %1300 = vmatpush.bf16.msra.mxu0 %v1229
    %1301 = vmatpush.bf16.msra.mxu0 %v1226
    %1302 = vmatpush.bf16.msra.mxu0 %v1223
    %1303 = vmatmul.bf16.gmra.mxu0 %v598
    %v1304 = vpop.f32.mrf.mxu0
    %v1305 = vadd.f32 %v1043, %v1304
    %v1306 = vpop.f32.mrf.mxu0
    %v1307 = vadd.f32 %v1045, %v1306
    %1308 = vmatmul.bf16.gmra.mxu0 %v600
    %v1309 = vpop.f32.mrf.mxu0
    %v1310 = vadd.f32 %v1048, %v1309
    %v1311 = vpop.f32.mrf.mxu0
    %v1312 = vadd.f32 %v1050, %v1311
    %1313 = vdwg.mxu0
    %1314 = vmatpush.bf16.msra.mxu0 0
    %1315 = vmatpush.bf16.msra.mxu0 0
    %1316 = vmatpush.bf16.msra.mxu0 0
    %1317 = vmatpush.bf16.msra.mxu0 0
    %1318 = vmatpush.bf16.msra.mxu0 0
    %1319 = vmatpush.bf16.msra.mxu0 0
    %1320 = vmatpush.bf16.msra.mxu0 %v1287
    %1321 = vmatpush.bf16.msra.mxu0 %v1247
    %1322 = vmatmul.bf16.gmra.mxu0 %v1281
    %v1323 = vpop.f32.mrf.mxu0
    %v1324 = vadd.f32 %v1305, %v1323
    %v1325 = vpop.f32.mrf.mxu0
    %v1326 = vadd.f32 %v1307, %v1325
    %1327 = vmatmul.bf16.gmra.mxu0 %v1284
    %v1328 = vpop.f32.mrf.mxu0
    %v1329 = vadd.f32 %v1310, %v1328
    %v1330 = vpop.f32.mrf.mxu0
    %v1331 = vadd.f32 %v1312, %v1330
    %1332 = vdwg.mxu0
    %1333 = vmatpush.bf16.msra.mxu0 %v1245
    %1334 = vmatpush.bf16.msra.mxu0 %v1242
    %1335 = vmatpush.bf16.msra.mxu0 %v1239
    %1336 = vmatpush.bf16.msra.mxu0 %v1236
    %1337 = vmatpush.bf16.msra.mxu0 %v1233
    %1338 = vmatpush.bf16.msra.mxu0 %v1230
    %1339 = vmatpush.bf16.msra.mxu0 %v1227
    %1340 = vmatpush.bf16.msra.mxu0 %v1224
    %1341 = vmatmul.bf16.gmra.mxu0 %v598
    %v1342 = vpop.f32.mrf.mxu0
    %v1343 = vadd.f32 %v1081, %v1342
    %v1344 = vpop.f32.mrf.mxu0
    %v1345 = vadd.f32 %v1083, %v1344
    %1346 = vmatmul.bf16.gmra.mxu0 %v600
    %v1347 = vpop.f32.mrf.mxu0
    %v1348 = vadd.f32 %v1086, %v1347
    %v1349 = vpop.f32.mrf.mxu0
    %v1350 = vadd.f32 %v1088, %v1349
    %1351 = vdwg.mxu0
    %1352 = vmatpush.bf16.msra.mxu0 0
    %1353 = vmatpush.bf16.msra.mxu0 0
    %1354 = vmatpush.bf16.msra.mxu0 0
    %1355 = vmatpush.bf16.msra.mxu0 0
    %1356 = vmatpush.bf16.msra.mxu0 0
    %1357 = vmatpush.bf16.msra.mxu0 0
    %1358 = vmatpush.bf16.msra.mxu0 %v1290
    %1359 = vmatpush.bf16.msra.mxu0 %v1248
    %1360 = vmatmul.bf16.gmra.mxu0 %v1281
    %v1361 = vpop.f32.mrf.mxu0
    %v1362 = vadd.f32 %v1343, %v1361
    %v1363 = vpop.f32.mrf.mxu0
    %v1364 = vadd.f32 %v1345, %v1363
    %1365 = vmatmul.bf16.gmra.mxu0 %v1284
    %v1366 = vpop.f32.mrf.mxu0
    %v1367 = vadd.f32 %v1348, %v1366
    %v1368 = vpop.f32.mrf.mxu0
    %v1369 = vadd.f32 %v1350, %v1368
    %1370 = vdwg.mxu0
    %1371 = vmatpush.bf16.msra.mxu0 %v1246
    %1372 = vmatpush.bf16.msra.mxu0 %v1243
    %1373 = vmatpush.bf16.msra.mxu0 %v1240
    %1374 = vmatpush.bf16.msra.mxu0 %v1237
    %1375 = vmatpush.bf16.msra.mxu0 %v1234
    %1376 = vmatpush.bf16.msra.mxu0 %v1231
    %1377 = vmatpush.bf16.msra.mxu0 %v1228
    %1378 = vmatpush.bf16.msra.mxu0 %v1225
    %1379 = vmatmul.bf16.gmra.mxu0 %v598
    %v1380 = vpop.f32.mrf.mxu0
    %v1381 = vadd.f32 %v1119, %v1380
    %v1382 = vpop.f32.mrf.mxu0
    %v1383 = vadd.f32 %v1121, %v1382
    %1384 = vmatmul.bf16.gmra.mxu0 %v600
    %v1385 = vpop.f32.mrf.mxu0
    %v1386 = vadd.f32 %v1124, %v1385
    %v1387 = vpop.f32.mrf.mxu0
    %v1388 = vadd.f32 %v1126, %v1387
    %1389 = vdwg.mxu0
    %1390 = vmatpush.bf16.msra.mxu0 0
    %1391 = vmatpush.bf16.msra.mxu0 0
    %1392 = vmatpush.bf16.msra.mxu0 0
    %1393 = vmatpush.bf16.msra.mxu0 0
    %1394 = vmatpush.bf16.msra.mxu0 0
    %1395 = vmatpush.bf16.msra.mxu0 0
    %1396 = vmatpush.bf16.msra.mxu0 %v1293
    %1397 = vmatpush.bf16.msra.mxu0 %v1249
    %1398 = vmatmul.bf16.gmra.mxu0 %v1281
    %v1399 = vpop.f32.mrf.mxu0
    %v1400 = vadd.f32 %v1381, %v1399
    %v1401 = vpop.f32.mrf.mxu0
    %v1402 = vadd.f32 %v1383, %v1401
    %1403 = vmatmul.bf16.gmra.mxu0 %v1284
    %v1404 = vpop.f32.mrf.mxu0
    %v1405 = vadd.f32 %v1386, %v1404
    %v1406 = vpop.f32.mrf.mxu0
    %v1407 = vadd.f32 %v1388, %v1406
    %1408 = vdwg.mxu0
    %s1409 = scalar_lea.vmem %s3, 384
    %v1410 = vld [vmem:[%s1409] sm:$0xff]
    %v1411 = vld [vmem:[%s1409 + $0x8] sm:$0xff]
    %v1412 = vld [vmem:[%s1409 + $0x10] sm:$0xff]
    %v1413 = vld [vmem:[%s1409 + $0x18] sm:$0xff]
    %v1414 = vld [vmem:[%s1409 + $0x20] sm:$0xff]
    %v1415 = vld [vmem:[%s1409 + $0x28] sm:$0xff]
    %v1416 = vld [vmem:[%s1409 + $0x30] sm:$0xff]
    %v1417 = vld [vmem:[%s1409 + $0x38] sm:$0xff]
    %v1418 = vld [vmem:[%s1409 + $0x40] sm:$0xff]
    %v1419 = vld [vmem:[%s1409 + $0x48] sm:$0xff]
    %v1420 = vld [vmem:[%s1409 + $0x50] sm:$0xff]
    %v1421 = vld [vmem:[%s1409 + $0x58] sm:$0xff]
    %v1422 = vld [vmem:[%s1409 + $0x60] sm:$0xff]
    %v1423 = vld [vmem:[%s1409 + $0x68] sm:$0xff]
    %v1424 = vld [vmem:[%s1409 + $0x70] sm:$0xff]
    %v1425 = vld [vmem:[%s1409 + $0x78] sm:$0xff]
    %s1426 = scalar_lea.vmem %s5, 6
    %v1427 = vld [vmem:[%s1426] sm:$0x3]
    %v1429 = vperm.slane %v1427, 0
    %v1430 = vperm.slane %v1427, 1
    %v1433 = vunpack.c.h.b16 %v253
    %v1434 = vunpack.c.h.b16 %v260
    %v1435 = vunpack.c.h.b16 %v267
    %v1436 = vunpack.c.h.b16 %v274
    %v1437 = vpack.c.b16 %v1434, %v1433
    %v1438 = vpack.c.b16 %v1436, %v1435
    %v1457 = vunpack.c.l.b16 %v1410
    %v1458 = vunpack.c.h.b16 %v1410
    %v1459 = vunpack.c.l.b16 %v1411
    %v1460 = vunpack.c.h.b16 %v1411
    %v1461 = vunpack.c.l.b16 %v1412
    %v1462 = vunpack.c.h.b16 %v1412
    %v1463 = vunpack.c.l.b16 %v1413
    %v1464 = vunpack.c.h.b16 %v1413
    %v1465 = vunpack.c.l.b16 %v1414
    %v1466 = vunpack.c.h.b16 %v1414
    %v1467 = vunpack.c.l.b16 %v1415
    %v1468 = vunpack.c.h.b16 %v1415
    %v1469 = vunpack.c.l.b16 %v1416
    %v1470 = vunpack.c.h.b16 %v1416
    %v1471 = vunpack.c.l.b16 %v1417
    %v1472 = vunpack.c.h.b16 %v1417
    %v1473 = vunpack.c.l.b16 %v1418
    %v1474 = vunpack.c.h.b16 %v1418
    %v1475 = vunpack.c.l.b16 %v1419
    %v1476 = vunpack.c.h.b16 %v1419
    %v1477 = vunpack.c.l.b16 %v1420
    %v1478 = vunpack.c.h.b16 %v1420
    %v1479 = vunpack.c.l.b16 %v1421
    %v1480 = vunpack.c.h.b16 %v1421
    %v1481 = vunpack.c.l.b16 %v1422
    %v1482 = vunpack.c.h.b16 %v1422
    %v1483 = vunpack.c.l.b16 %v1423
    %v1484 = vunpack.c.h.b16 %v1423
    %v1485 = vunpack.c.l.b16 %v1424
    %v1486 = vunpack.c.h.b16 %v1424
    %v1487 = vunpack.c.l.b16 %v1425
    %v1488 = vunpack.c.h.b16 %v1425
    %v1489 = vpack.c.b16 %v1459, %v1457
    %v1490 = vpack.c.b16 %v1460, %v1458
    %v1491 = vpack.c.b16 %v1463, %v1461
    %v1492 = vpack.c.b16 %v1464, %v1462
    %v1493 = vpack.c.b16 %v1467, %v1465
    %v1494 = vpack.c.b16 %v1468, %v1466
    %v1495 = vpack.c.b16 %v1471, %v1469
    %v1496 = vpack.c.b16 %v1472, %v1470
    %v1497 = vpack.c.b16 %v1475, %v1473
    %v1498 = vpack.c.b16 %v1476, %v1474
    %v1499 = vpack.c.b16 %v1479, %v1477
    %v1500 = vpack.c.b16 %v1480, %v1478
    %v1501 = vpack.c.b16 %v1483, %v1481
    %v1502 = vpack.c.b16 %v1484, %v1482
    %v1503 = vpack.c.b16 %v1487, %v1485
    %v1504 = vpack.c.b16 %v1488, %v1486
    %1521 = vmatpush.bf16.msra.mxu0 %v1503
    %1522 = vmatpush.bf16.msra.mxu0 %v1501
    %1523 = vmatpush.bf16.msra.mxu0 %v1499
    %1524 = vmatpush.bf16.msra.mxu0 %v1497
    %1525 = vmatpush.bf16.msra.mxu0 %v1495
    %1526 = vmatpush.bf16.msra.mxu0 %v1493
    %1527 = vmatpush.bf16.msra.mxu0 %v1491
    %1528 = vmatpush.bf16.msra.mxu0 %v1489
    %1529 = vmatmul.bf16.gmra.mxu0 %v1437
    %v1530 = vpop.f32.mrf.mxu0
    %v1531 = vadd.f32 %v1429, %v1530
    %v1532 = vpop.f32.mrf.mxu0
    %v1533 = vadd.f32 %v1429, %v1532
    %1534 = vmatmul.bf16.gmra.mxu0 %v1438
    %v1535 = vpop.f32.mrf.mxu0
    %v1536 = vadd.f32 %v1429, %v1535
    %v1537 = vpop.f32.mrf.mxu0
    %v1538 = vadd.f32 %v1429, %v1537
    %1539 = vdwg.mxu0
    %1540 = vmatpush.bf16.msra.mxu0 %v1504
    %1541 = vmatpush.bf16.msra.mxu0 %v1502
    %1542 = vmatpush.bf16.msra.mxu0 %v1500
    %1543 = vmatpush.bf16.msra.mxu0 %v1498
    %1544 = vmatpush.bf16.msra.mxu0 %v1496
    %1545 = vmatpush.bf16.msra.mxu0 %v1494
    %1546 = vmatpush.bf16.msra.mxu0 %v1492
    %1547 = vmatpush.bf16.msra.mxu0 %v1490
    %1548 = vmatmul.bf16.gmra.mxu0 %v1437
    %v1549 = vpop.f32.mrf.mxu0
    %v1550 = vadd.f32 %v1430, %v1549
    %v1551 = vpop.f32.mrf.mxu0
    %v1552 = vadd.f32 %v1430, %v1551
    %1553 = vmatmul.bf16.gmra.mxu0 %v1438
    %v1554 = vpop.f32.mrf.mxu0
    %v1555 = vadd.f32 %v1430, %v1554
    %v1556 = vpop.f32.mrf.mxu0
    %v1557 = vadd.f32 %v1430, %v1556
    %1558 = vdwg.mxu0
    %v1559 = vmax.f32 %v1531, 0.0
    %v1560 = vmax.f32 %v1550, 0.0
    %v1561 = vmax.f32 %v1533, 0.0
    %v1562 = vmax.f32 %v1552, 0.0
    %v1563 = vmax.f32 %v1536, 0.0
    %v1564 = vmax.f32 %v1555, 0.0
    %v1565 = vmax.f32 %v1538, 0.0
    %v1566 = vmax.f32 %v1557, 0.0
    %v1567 = vpack.c.bf16 %v1561, %v1559
    %v1568 = vpack.c.bf16 %v1562, %v1560
    %v1569 = vpack.c.bf16 %v1565, %v1563
    %v1570 = vpack.c.bf16 %v1566, %v1564
    %s1571 = scalar_lea.vmem %s7, 456
    %v1572 = vld [vmem:[%s1571] sm:$0xff]
    %v1573 = vld [vmem:[%s1571 + $0x8] sm:$0xf]
    %v1574 = vld [vmem:[%s1571 + $0xc] sm:$0xff]
    %v1575 = vld [vmem:[%s1571 + $0x14] sm:$0xf]
    %v1576 = vld [vmem:[%s1571 + $0x18] sm:$0xff]
    %v1577 = vld [vmem:[%s1571 + $0x20] sm:$0xf]
    %v1578 = vld [vmem:[%s1571 + $0x24] sm:$0xff]
    %v1579 = vld [vmem:[%s1571 + $0x2c] sm:$0xf]
    %v1580 = vld [vmem:[%s1571 + $0x30] sm:$0xff]
    %v1581 = vld [vmem:[%s1571 + $0x38] sm:$0xf]
    %v1582 = vld [vmem:[%s1571 + $0x3c] sm:$0xff]
    %v1583 = vld [vmem:[%s1571 + $0x44] sm:$0xf]
    %v1584 = vld [vmem:[%s1571 + $0x48] sm:$0xff]
    %v1585 = vld [vmem:[%s1571 + $0x50] sm:$0xf]
    %v1586 = vld [vmem:[%s1571 + $0x54] sm:$0xff]
    %v1587 = vld [vmem:[%s1571 + $0x5c] sm:$0xf]
    %v1588 = vld [vmem:[%s1571 + $0x60] sm:$0xff]
    %v1589 = vld [vmem:[%s1571 + $0x68] sm:$0xf]
    %v1590 = vld [vmem:[%s1571 + $0x6c] sm:$0xff]
    %v1591 = vld [vmem:[%s1571 + $0x74] sm:$0xf]
    %v1592 = vld [vmem:[%s1571 + $0x78] sm:$0xff]
    %v1593 = vld [vmem:[%s1571 + $0x80] sm:$0xf]
    %v1594 = vld [vmem:[%s1571 + $0x84] sm:$0xff]
    %v1595 = vld [vmem:[%s1571 + $0x8c] sm:$0xf]
    %v1596 = vld [vmem:[%s1571 + $0x90] sm:$0xff]
    %v1597 = vld [vmem:[%s1571 + $0x98] sm:$0xf]
    %v1598 = vld [vmem:[%s1571 + $0x9c] sm:$0xff]
    %v1599 = vld [vmem:[%s1571 + $0xa4] sm:$0xf]
    %v1600 = vld [vmem:[%s1571 + $0xa8] sm:$0xff]
    %v1601 = vld [vmem:[%s1571 + $0xb0] sm:$0xf]
    %v1602 = vld [vmem:[%s1571 + $0xb4] sm:$0xff]
    %v1603 = vld [vmem:[%s1571 + $0xbc] sm:$0xf]
    %v1604 = vld [vmem:[%s1571 + $0xc0] sm:$0xff]
    %v1605 = vld [vmem:[%s1571 + $0xc8] sm:$0xf]
    %v1606 = vld [vmem:[%s1571 + $0xcc] sm:$0xff]
    %v1607 = vld [vmem:[%s1571 + $0xd4] sm:$0xf]
    %v1608 = vld [vmem:[%s1571 + $0xd8] sm:$0x77]
    %v1609 = vld [vmem:[%s1571 + $0xe0] sm:$0x7]
    %v1648 = vunpack.c.l.b16 %v1572
    %v1649 = vunpack.c.h.b16 %v1572
    %v1650 = vunpack.c.l.b16 %v1573
    %v1651 = vunpack.c.l.b16 %v1574
    %v1652 = vunpack.c.h.b16 %v1574
    %v1653 = vunpack.c.l.b16 %v1575
    %v1654 = vunpack.c.l.b16 %v1576
    %v1655 = vunpack.c.h.b16 %v1576
    %v1656 = vunpack.c.l.b16 %v1577
    %v1657 = vunpack.c.l.b16 %v1578
    %v1658 = vunpack.c.h.b16 %v1578
    %v1659 = vunpack.c.l.b16 %v1579
    %v1660 = vunpack.c.l.b16 %v1580
    %v1661 = vunpack.c.h.b16 %v1580
    %v1662 = vunpack.c.l.b16 %v1581
    %v1663 = vunpack.c.l.b16 %v1582
    %v1664 = vunpack.c.h.b16 %v1582
    %v1665 = vunpack.c.l.b16 %v1583
    %v1666 = vunpack.c.l.b16 %v1584
    %v1667 = vunpack.c.h.b16 %v1584
    %v1668 = vunpack.c.l.b16 %v1585
    %v1669 = vunpack.c.l.b16 %v1586
    %v1670 = vunpack.c.h.b16 %v1586
    %v1671 = vunpack.c.l.b16 %v1587
    %v1672 = vunpack.c.l.b16 %v1588
    %v1673 = vunpack.c.h.b16 %v1588
    %v1674 = vunpack.c.l.b16 %v1589
    %v1675 = vunpack.c.l.b16 %v1590
    %v1676 = vunpack.c.h.b16 %v1590
    %v1677 = vunpack.c.l.b16 %v1591
    %v1678 = vunpack.c.l.b16 %v1592
    %v1679 = vunpack.c.h.b16 %v1592
    %v1680 = vunpack.c.l.b16 %v1593
    %v1681 = vunpack.c.l.b16 %v1594
    %v1682 = vunpack.c.h.b16 %v1594
    %v1683 = vunpack.c.l.b16 %v1595
    %v1684 = vunpack.c.l.b16 %v1596
    %v1685 = vunpack.c.h.b16 %v1596
    %v1686 = vunpack.c.l.b16 %v1597
    %v1687 = vunpack.c.l.b16 %v1598
    %v1688 = vunpack.c.h.b16 %v1598
    %v1689 = vunpack.c.l.b16 %v1599
    %v1690 = vunpack.c.l.b16 %v1600
    %v1691 = vunpack.c.h.b16 %v1600
    %v1692 = vunpack.c.l.b16 %v1601
    %v1693 = vunpack.c.l.b16 %v1602
    %v1694 = vunpack.c.h.b16 %v1602
    %v1695 = vunpack.c.l.b16 %v1603
    %v1696 = vunpack.c.l.b16 %v1604
    %v1697 = vunpack.c.h.b16 %v1604
    %v1698 = vunpack.c.l.b16 %v1605
    %v1699 = vunpack.c.l.b16 %v1606
    %v1700 = vunpack.c.h.b16 %v1606
    %v1701 = vunpack.c.l.b16 %v1607
    %v1702 = vunpack.c.l.b16 %v1608
    %v1703 = vunpack.c.h.b16 %v1608
    %v1704 = vunpack.c.l.b16 %v1609
    %v1705 = vpack.c.b16 %v1651, %v1648
    %v1706 = vpack.c.b16 %v1652, %v1649
    %v1707 = vpack.c.b16 %v1653, %v1650
    %v1708 = vpack.c.b16 %v1657, %v1654
    %v1709 = vpack.c.b16 %v1658, %v1655
    %v1710 = vpack.c.b16 %v1659, %v1656
    %v1711 = vpack.c.b16 %v1663, %v1660
    %v1712 = vpack.c.b16 %v1664, %v1661
    %v1713 = vpack.c.b16 %v1665, %v1662
    %v1714 = vpack.c.b16 %v1669, %v1666
    %v1715 = vpack.c.b16 %v1670, %v1667
    %v1716 = vpack.c.b16 %v1671, %v1668
    %v1717 = vpack.c.b16 %v1675, %v1672
    %v1718 = vpack.c.b16 %v1676, %v1673
    %v1719 = vpack.c.b16 %v1677, %v1674
    %v1720 = vpack.c.b16 %v1681, %v1678
    %v1721 = vpack.c.b16 %v1682, %v1679
    %v1722 = vpack.c.b16 %v1683, %v1680
    %v1723 = vpack.c.b16 %v1687, %v1684
    %v1724 = vpack.c.b16 %v1688, %v1685
    %v1725 = vpack.c.b16 %v1689, %v1686
    %v1726 = vpack.c.b16 %v1693, %v1690
    %v1727 = vpack.c.b16 %v1694, %v1691
    %v1728 = vpack.c.b16 %v1695, %v1692
    %v1729 = vpack.c.b16 %v1699, %v1696
    %v1730 = vpack.c.b16 %v1700, %v1697
    %v1731 = vpack.c.b16 %v1701, %v1698
    %v1732 = vpack.c.b16 %v1702, %v1702
    %v1733 = vpack.c.b16 %v1703, %v1703
    %v1734 = vpack.c.b16 %v1704, %v1704
    %v1763 = vsel %vm997, %v1568, 0
    %v1766 = vsel %vm997, %v1570, 0
    %v1769 = vsel %vm1004, %v1732, 0
    %v1772 = vsel %vm1004, %v1733, 0
    %v1775 = vsel %vm1004, %v1734, 0
    %1777 = vmatpush.bf16.msra.mxu0 %v1726
    %1778 = vmatpush.bf16.msra.mxu0 %v1723
    %1779 = vmatpush.bf16.msra.mxu0 %v1720
    %1780 = vmatpush.bf16.msra.mxu0 %v1717
    %1781 = vmatpush.bf16.msra.mxu0 %v1714
    %1782 = vmatpush.bf16.msra.mxu0 %v1711
    %1783 = vmatpush.bf16.msra.mxu0 %v1708
    %1784 = vmatpush.bf16.msra.mxu0 %v1705
    %1785 = vmatmul.bf16.gmra.mxu0 %v1567
    %v1786 = vpop.f32.mrf.mxu0
    %v1787 = vadd.f32 0.0, %v1786
    %v1788 = vpop.f32.mrf.mxu0
    %v1789 = vadd.f32 0.0, %v1788
    %1790 = vmatmul.bf16.gmra.mxu0 %v1569
    %v1791 = vpop.f32.mrf.mxu0
    %v1792 = vadd.f32 0.0, %v1791
    %v1793 = vpop.f32.mrf.mxu0
    %v1794 = vadd.f32 0.0, %v1793
    %1795 = vdwg.mxu0
    %1796 = vmatpush.bf16.msra.mxu0 0
    %1797 = vmatpush.bf16.msra.mxu0 0
    %1798 = vmatpush.bf16.msra.mxu0 0
    %1799 = vmatpush.bf16.msra.mxu0 0
    %1800 = vmatpush.bf16.msra.mxu0 0
    %1801 = vmatpush.bf16.msra.mxu0 0
    %1802 = vmatpush.bf16.msra.mxu0 %v1769
    %1803 = vmatpush.bf16.msra.mxu0 %v1729
    %1804 = vmatmul.bf16.gmra.mxu0 %v1763
    %v1805 = vpop.f32.mrf.mxu0
    %v1806 = vadd.f32 %v1787, %v1805
    %v1807 = vpop.f32.mrf.mxu0
    %v1808 = vadd.f32 %v1789, %v1807
    %1809 = vmatmul.bf16.gmra.mxu0 %v1766
    %v1810 = vpop.f32.mrf.mxu0
    %v1811 = vadd.f32 %v1792, %v1810
    %v1812 = vpop.f32.mrf.mxu0
    %v1813 = vadd.f32 %v1794, %v1812
    %1814 = vdwg.mxu0
    %1815 = vmatpush.bf16.msra.mxu0 %v1727
    %1816 = vmatpush.bf16.msra.mxu0 %v1724
    %1817 = vmatpush.bf16.msra.mxu0 %v1721
    %1818 = vmatpush.bf16.msra.mxu0 %v1718
    %1819 = vmatpush.bf16.msra.mxu0 %v1715
    %1820 = vmatpush.bf16.msra.mxu0 %v1712
    %1821 = vmatpush.bf16.msra.mxu0 %v1709
    %1822 = vmatpush.bf16.msra.mxu0 %v1706
    %1823 = vmatmul.bf16.gmra.mxu0 %v1567
    %v1824 = vpop.f32.mrf.mxu0
    %v1825 = vadd.f32 0.0, %v1824
    %v1826 = vpop.f32.mrf.mxu0
    %v1827 = vadd.f32 0.0, %v1826
    %1828 = vmatmul.bf16.gmra.mxu0 %v1569
    %v1829 = vpop.f32.mrf.mxu0
    %v1830 = vadd.f32 0.0, %v1829
    %v1831 = vpop.f32.mrf.mxu0
    %v1832 = vadd.f32 0.0, %v1831
    %1833 = vdwg.mxu0
    %1834 = vmatpush.bf16.msra.mxu0 0
    %1835 = vmatpush.bf16.msra.mxu0 0
    %1836 = vmatpush.bf16.msra.mxu0 0
    %1837 = vmatpush.bf16.msra.mxu0 0
    %1838 = vmatpush.bf16.msra.mxu0 0
    %1839 = vmatpush.bf16.msra.mxu0 0
    %1840 = vmatpush.bf16.msra.mxu0 %v1772
    %1841 = vmatpush.bf16.msra.mxu0 %v1730
    %1842 = vmatmul.bf16.gmra.mxu0 %v1763
    %v1843 = vpop.f32.mrf.mxu0
    %v1844 = vadd.f32 %v1825, %v1843
    %v1845 = vpop.f32.mrf.mxu0
    %v1846 = vadd.f32 %v1827, %v1845
    %1847 = vmatmul.bf16.gmra.mxu0 %v1766
    %v1848 = vpop.f32.mrf.mxu0
    %v1849 = vadd.f32 %v1830, %v1848
    %v1850 = vpop.f32.mrf.mxu0
    %v1851 = vadd.f32 %v1832, %v1850
    %1852 = vdwg.mxu0
    %1853 = vmatpush.bf16.msra.mxu0 %v1728
    %1854 = vmatpush.bf16.msra.mxu0 %v1725
    %1855 = vmatpush.bf16.msra.mxu0 %v1722
    %1856 = vmatpush.bf16.msra.mxu0 %v1719
    %1857 = vmatpush.bf16.msra.mxu0 %v1716
    %1858 = vmatpush.bf16.msra.mxu0 %v1713
    %1859 = vmatpush.bf16.msra.mxu0 %v1710
    %1860 = vmatpush.bf16.msra.mxu0 %v1707
    %1861 = vmatmul.bf16.gmra.mxu0 %v1567
    %v1862 = vpop.f32.mrf.mxu0
    %v1863 = vadd.f32 0.0, %v1862
    %v1864 = vpop.f32.mrf.mxu0
    %v1865 = vadd.f32 0.0, %v1864
    %1866 = vmatmul.bf16.gmra.mxu0 %v1569
    %v1867 = vpop.f32.mrf.mxu0
    %v1868 = vadd.f32 0.0, %v1867
    %v1869 = vpop.f32.mrf.mxu0
    %v1870 = vadd.f32 0.0, %v1869
    %1871 = vdwg.mxu0
    %1872 = vmatpush.bf16.msra.mxu0 0
    %1873 = vmatpush.bf16.msra.mxu0 0
    %1874 = vmatpush.bf16.msra.mxu0 0
    %1875 = vmatpush.bf16.msra.mxu0 0
    %1876 = vmatpush.bf16.msra.mxu0 0
    %1877 = vmatpush.bf16.msra.mxu0 0
    %1878 = vmatpush.bf16.msra.mxu0 %v1775
    %1879 = vmatpush.bf16.msra.mxu0 %v1731
    %1880 = vmatmul.bf16.gmra.mxu0 %v1763
    %v1881 = vpop.f32.mrf.mxu0
    %v1882 = vadd.f32 %v1863, %v1881
    %v1883 = vpop.f32.mrf.mxu0
    %v1884 = vadd.f32 %v1865, %v1883
    %1885 = vmatmul.bf16.gmra.mxu0 %v1766
    %v1886 = vpop.f32.mrf.mxu0
    %v1887 = vadd.f32 %v1868, %v1886
    %v1888 = vpop.f32.mrf.mxu0
    %v1889 = vadd.f32 %v1870, %v1888
    %1890 = vdwg.mxu0
    %v1891 = vadd.f32 %v1324, %v1806
    %v1892 = vadd.f32 %v1362, %v1844
    %v1893 = vadd.f32 %v1400, %v1882
    %v1894 = vadd.f32 %v1326, %v1808
    %v1895 = vadd.f32 %v1364, %v1846
    %v1896 = vadd.f32 %v1402, %v1884
    %v1897 = vadd.f32 %v1329, %v1811
    %v1898 = vadd.f32 %v1367, %v1849
    %v1899 = vadd.f32 %v1405, %v1887
    %v1900 = vadd.f32 %v1331, %v1813
    %v1901 = vadd.f32 %v1369, %v1851
    %v1902 = vadd.f32 %v1407, %v1889
    %s1903 = scalar_lea.vmem %s3, 512
    %v1904 = vld [vmem:[%s1903] sm:$0xff]
    %v1905 = vld [vmem:[%s1903 + $0x8] sm:$0xff]
    %v1906 = vld [vmem:[%s1903 + $0x10] sm:$0xff]
    %v1907 = vld [vmem:[%s1903 + $0x18] sm:$0xff]
    %v1908 = vld [vmem:[%s1903 + $0x20] sm:$0xff]
    %v1909 = vld [vmem:[%s1903 + $0x28] sm:$0xff]
    %v1910 = vld [vmem:[%s1903 + $0x30] sm:$0xff]
    %v1911 = vld [vmem:[%s1903 + $0x38] sm:$0xff]
    %v1912 = vld [vmem:[%s1903 + $0x40] sm:$0xff]
    %v1913 = vld [vmem:[%s1903 + $0x48] sm:$0xff]
    %v1914 = vld [vmem:[%s1903 + $0x50] sm:$0xff]
    %v1915 = vld [vmem:[%s1903 + $0x58] sm:$0xff]
    %v1916 = vld [vmem:[%s1903 + $0x60] sm:$0xff]
    %v1917 = vld [vmem:[%s1903 + $0x68] sm:$0xff]
    %v1918 = vld [vmem:[%s1903 + $0x70] sm:$0xff]
    %v1919 = vld [vmem:[%s1903 + $0x78] sm:$0xff]
    %s1920 = scalar_lea.vmem %s5, 8
    %v1921 = vld [vmem:[%s1920] sm:$0x3]
    %v1923 = vperm.slane %v1921, 0
    %v1924 = vperm.slane %v1921, 1
    %v1931 = vunpack.c.l.b16 %v254
    %v1932 = vunpack.c.l.b16 %v261
    %v1933 = vunpack.c.l.b16 %v268
    %v1934 = vunpack.c.l.b16 %v275
    %v1935 = vpack.c.b16 %v1932, %v1931
    %v1936 = vpack.c.b16 %v1934, %v1933
    %v1955 = vunpack.c.l.b16 %v1904
    %v1956 = vunpack.c.h.b16 %v1904
    %v1957 = vunpack.c.l.b16 %v1905
    %v1958 = vunpack.c.h.b16 %v1905
    %v1959 = vunpack.c.l.b16 %v1906
    %v1960 = vunpack.c.h.b16 %v1906
    %v1961 = vunpack.c.l.b16 %v1907
    %v1962 = vunpack.c.h.b16 %v1907
    %v1963 = vunpack.c.l.b16 %v1908
    %v1964 = vunpack.c.h.b16 %v1908
    %v1965 = vunpack.c.l.b16 %v1909
    %v1966 = vunpack.c.h.b16 %v1909
    %v1967 = vunpack.c.l.b16 %v1910
    %v1968 = vunpack.c.h.b16 %v1910
    %v1969 = vunpack.c.l.b16 %v1911
    %v1970 = vunpack.c.h.b16 %v1911
    %v1971 = vunpack.c.l.b16 %v1912
    %v1972 = vunpack.c.h.b16 %v1912
    %v1973 = vunpack.c.l.b16 %v1913
    %v1974 = vunpack.c.h.b16 %v1913
    %v1975 = vunpack.c.l.b16 %v1914
    %v1976 = vunpack.c.h.b16 %v1914
    %v1977 = vunpack.c.l.b16 %v1915
    %v1978 = vunpack.c.h.b16 %v1915
    %v1979 = vunpack.c.l.b16 %v1916
    %v1980 = vunpack.c.h.b16 %v1916
    %v1981 = vunpack.c.l.b16 %v1917
    %v1982 = vunpack.c.h.b16 %v1917
    %v1983 = vunpack.c.l.b16 %v1918
    %v1984 = vunpack.c.h.b16 %v1918
    %v1985 = vunpack.c.l.b16 %v1919
    %v1986 = vunpack.c.h.b16 %v1919
    %v1987 = vpack.c.b16 %v1957, %v1955
    %v1988 = vpack.c.b16 %v1958, %v1956
    %v1989 = vpack.c.b16 %v1961, %v1959
    %v1990 = vpack.c.b16 %v1962, %v1960
    %v1991 = vpack.c.b16 %v1965, %v1963
    %v1992 = vpack.c.b16 %v1966, %v1964
    %v1993 = vpack.c.b16 %v1969, %v1967
    %v1994 = vpack.c.b16 %v1970, %v1968
    %v1995 = vpack.c.b16 %v1973, %v1971
    %v1996 = vpack.c.b16 %v1974, %v1972
    %v1997 = vpack.c.b16 %v1977, %v1975
    %v1998 = vpack.c.b16 %v1978, %v1976
    %v1999 = vpack.c.b16 %v1981, %v1979
    %v2000 = vpack.c.b16 %v1982, %v1980
    %v2001 = vpack.c.b16 %v1985, %v1983
    %v2002 = vpack.c.b16 %v1986, %v1984
    %2019 = vmatpush.bf16.msra.mxu0 %v2001
    %2020 = vmatpush.bf16.msra.mxu0 %v1999
    %2021 = vmatpush.bf16.msra.mxu0 %v1997
    %2022 = vmatpush.bf16.msra.mxu0 %v1995
    %2023 = vmatpush.bf16.msra.mxu0 %v1993
    %2024 = vmatpush.bf16.msra.mxu0 %v1991
    %2025 = vmatpush.bf16.msra.mxu0 %v1989
    %2026 = vmatpush.bf16.msra.mxu0 %v1987
    %2027 = vmatmul.bf16.gmra.mxu0 %v1935
    %v2028 = vpop.f32.mrf.mxu0
    %v2029 = vadd.f32 %v1923, %v2028
    %v2030 = vpop.f32.mrf.mxu0
    %v2031 = vadd.f32 %v1923, %v2030
    %2032 = vmatmul.bf16.gmra.mxu0 %v1936
    %v2033 = vpop.f32.mrf.mxu0
    %v2034 = vadd.f32 %v1923, %v2033
    %v2035 = vpop.f32.mrf.mxu0
    %v2036 = vadd.f32 %v1923, %v2035
    %2037 = vdwg.mxu0
    %2038 = vmatpush.bf16.msra.mxu0 %v2002
    %2039 = vmatpush.bf16.msra.mxu0 %v2000
    %2040 = vmatpush.bf16.msra.mxu0 %v1998
    %2041 = vmatpush.bf16.msra.mxu0 %v1996
    %2042 = vmatpush.bf16.msra.mxu0 %v1994
    %2043 = vmatpush.bf16.msra.mxu0 %v1992
    %2044 = vmatpush.bf16.msra.mxu0 %v1990
    %2045 = vmatpush.bf16.msra.mxu0 %v1988
    %2046 = vmatmul.bf16.gmra.mxu0 %v1935
    %v2047 = vpop.f32.mrf.mxu0
    %v2048 = vadd.f32 %v1924, %v2047
    %v2049 = vpop.f32.mrf.mxu0
    %v2050 = vadd.f32 %v1924, %v2049
    %2051 = vmatmul.bf16.gmra.mxu0 %v1936
    %v2052 = vpop.f32.mrf.mxu0
    %v2053 = vadd.f32 %v1924, %v2052
    %v2054 = vpop.f32.mrf.mxu0
    %v2055 = vadd.f32 %v1924, %v2054
    %2056 = vdwg.mxu0
    %v2057 = vmax.f32 %v2029, 0.0
    %v2058 = vmax.f32 %v2048, 0.0
    %v2059 = vmax.f32 %v2031, 0.0
    %v2060 = vmax.f32 %v2050, 0.0
    %v2061 = vmax.f32 %v2034, 0.0
    %v2062 = vmax.f32 %v2053, 0.0
    %v2063 = vmax.f32 %v2036, 0.0
    %v2064 = vmax.f32 %v2055, 0.0
    %v2065 = vpack.c.bf16 %v2059, %v2057
    %v2066 = vpack.c.bf16 %v2060, %v2058
    %v2067 = vpack.c.bf16 %v2063, %v2061
    %v2068 = vpack.c.bf16 %v2064, %v2062
    %s2069 = scalar_lea.vmem %s7, 684
    %v2070 = vld [vmem:[%s2069] sm:$0xff]
    %v2071 = vld [vmem:[%s2069 + $0x8] sm:$0xf]
    %v2072 = vld [vmem:[%s2069 + $0xc] sm:$0xff]
    %v2073 = vld [vmem:[%s2069 + $0x14] sm:$0xf]
    %v2074 = vld [vmem:[%s2069 + $0x18] sm:$0xff]
    %v2075 = vld [vmem:[%s2069 + $0x20] sm:$0xf]
    %v2076 = vld [vmem:[%s2069 + $0x24] sm:$0xff]
    %v2077 = vld [vmem:[%s2069 + $0x2c] sm:$0xf]
    %v2078 = vld [vmem:[%s2069 + $0x30] sm:$0xff]
    %v2079 = vld [vmem:[%s2069 + $0x38] sm:$0xf]
    %v2080 = vld [vmem:[%s2069 + $0x3c] sm:$0xff]
    %v2081 = vld [vmem:[%s2069 + $0x44] sm:$0xf]
    %v2082 = vld [vmem:[%s2069 + $0x48] sm:$0xff]
    %v2083 = vld [vmem:[%s2069 + $0x50] sm:$0xf]
    %v2084 = vld [vmem:[%s2069 + $0x54] sm:$0xff]
    %v2085 = vld [vmem:[%s2069 + $0x5c] sm:$0xf]
    %v2086 = vld [vmem:[%s2069 + $0x60] sm:$0xff]
    %v2087 = vld [vmem:[%s2069 + $0x68] sm:$0xf]
    %v2088 = vld [vmem:[%s2069 + $0x6c] sm:$0xff]
    %v2089 = vld [vmem:[%s2069 + $0x74] sm:$0xf]
    %v2090 = vld [vmem:[%s2069 + $0x78] sm:$0xff]
    %v2091 = vld [vmem:[%s2069 + $0x80] sm:$0xf]
    %v2092 = vld [vmem:[%s2069 + $0x84] sm:$0xff]
    %v2093 = vld [vmem:[%s2069 + $0x8c] sm:$0xf]
    %v2094 = vld [vmem:[%s2069 + $0x90] sm:$0xff]
    %v2095 = vld [vmem:[%s2069 + $0x98] sm:$0xf]
    %v2096 = vld [vmem:[%s2069 + $0x9c] sm:$0xff]
    %v2097 = vld [vmem:[%s2069 + $0xa4] sm:$0xf]
    %v2098 = vld [vmem:[%s2069 + $0xa8] sm:$0xff]
    %v2099 = vld [vmem:[%s2069 + $0xb0] sm:$0xf]
    %v2100 = vld [vmem:[%s2069 + $0xb4] sm:$0xff]
    %v2101 = vld [vmem:[%s2069 + $0xbc] sm:$0xf]
    %v2102 = vld [vmem:[%s2069 + $0xc0] sm:$0xff]
    %v2103 = vld [vmem:[%s2069 + $0xc8] sm:$0xf]
    %v2104 = vld [vmem:[%s2069 + $0xcc] sm:$0xff]
    %v2105 = vld [vmem:[%s2069 + $0xd4] sm:$0xf]
    %v2106 = vld [vmem:[%s2069 + $0xd8] sm:$0x77]
    %v2107 = vld [vmem:[%s2069 + $0xe0] sm:$0x7]
    %v2146 = vunpack.c.l.b16 %v2070
    %v2147 = vunpack.c.h.b16 %v2070
    %v2148 = vunpack.c.l.b16 %v2071
    %v2149 = vunpack.c.l.b16 %v2072
    %v2150 = vunpack.c.h.b16 %v2072
    %v2151 = vunpack.c.l.b16 %v2073
    %v2152 = vunpack.c.l.b16 %v2074
    %v2153 = vunpack.c.h.b16 %v2074
    %v2154 = vunpack.c.l.b16 %v2075
    %v2155 = vunpack.c.l.b16 %v2076
    %v2156 = vunpack.c.h.b16 %v2076
    %v2157 = vunpack.c.l.b16 %v2077
    %v2158 = vunpack.c.l.b16 %v2078
    %v2159 = vunpack.c.h.b16 %v2078
    %v2160 = vunpack.c.l.b16 %v2079
    %v2161 = vunpack.c.l.b16 %v2080
    %v2162 = vunpack.c.h.b16 %v2080
    %v2163 = vunpack.c.l.b16 %v2081
    %v2164 = vunpack.c.l.b16 %v2082
    %v2165 = vunpack.c.h.b16 %v2082
    %v2166 = vunpack.c.l.b16 %v2083
    %v2167 = vunpack.c.l.b16 %v2084
    %v2168 = vunpack.c.h.b16 %v2084
    %v2169 = vunpack.c.l.b16 %v2085
    %v2170 = vunpack.c.l.b16 %v2086
    %v2171 = vunpack.c.h.b16 %v2086
    %v2172 = vunpack.c.l.b16 %v2087
    %v2173 = vunpack.c.l.b16 %v2088
    %v2174 = vunpack.c.h.b16 %v2088
    %v2175 = vunpack.c.l.b16 %v2089
    %v2176 = vunpack.c.l.b16 %v2090
    %v2177 = vunpack.c.h.b16 %v2090
    %v2178 = vunpack.c.l.b16 %v2091
    %v2179 = vunpack.c.l.b16 %v2092
    %v2180 = vunpack.c.h.b16 %v2092
    %v2181 = vunpack.c.l.b16 %v2093
    %v2182 = vunpack.c.l.b16 %v2094
    %v2183 = vunpack.c.h.b16 %v2094
    %v2184 = vunpack.c.l.b16 %v2095
    %v2185 = vunpack.c.l.b16 %v2096
    %v2186 = vunpack.c.h.b16 %v2096
    %v2187 = vunpack.c.l.b16 %v2097
    %v2188 = vunpack.c.l.b16 %v2098
    %v2189 = vunpack.c.h.b16 %v2098
    %v2190 = vunpack.c.l.b16 %v2099
    %v2191 = vunpack.c.l.b16 %v2100
    %v2192 = vunpack.c.h.b16 %v2100
    %v2193 = vunpack.c.l.b16 %v2101
    %v2194 = vunpack.c.l.b16 %v2102
    %v2195 = vunpack.c.h.b16 %v2102
    %v2196 = vunpack.c.l.b16 %v2103
    %v2197 = vunpack.c.l.b16 %v2104
    %v2198 = vunpack.c.h.b16 %v2104
    %v2199 = vunpack.c.l.b16 %v2105
    %v2200 = vunpack.c.l.b16 %v2106
    %v2201 = vunpack.c.h.b16 %v2106
    %v2202 = vunpack.c.l.b16 %v2107
    %v2203 = vpack.c.b16 %v2149, %v2146
    %v2204 = vpack.c.b16 %v2150, %v2147
    %v2205 = vpack.c.b16 %v2151, %v2148
    %v2206 = vpack.c.b16 %v2155, %v2152
    %v2207 = vpack.c.b16 %v2156, %v2153
    %v2208 = vpack.c.b16 %v2157, %v2154
    %v2209 = vpack.c.b16 %v2161, %v2158
    %v2210 = vpack.c.b16 %v2162, %v2159
    %v2211 = vpack.c.b16 %v2163, %v2160
    %v2212 = vpack.c.b16 %v2167, %v2164
    %v2213 = vpack.c.b16 %v2168, %v2165
    %v2214 = vpack.c.b16 %v2169, %v2166
    %v2215 = vpack.c.b16 %v2173, %v2170
    %v2216 = vpack.c.b16 %v2174, %v2171
    %v2217 = vpack.c.b16 %v2175, %v2172
    %v2218 = vpack.c.b16 %v2179, %v2176
    %v2219 = vpack.c.b16 %v2180, %v2177
    %v2220 = vpack.c.b16 %v2181, %v2178
    %v2221 = vpack.c.b16 %v2185, %v2182
    %v2222 = vpack.c.b16 %v2186, %v2183
    %v2223 = vpack.c.b16 %v2187, %v2184
    %v2224 = vpack.c.b16 %v2191, %v2188
    %v2225 = vpack.c.b16 %v2192, %v2189
    %v2226 = vpack.c.b16 %v2193, %v2190
    %v2227 = vpack.c.b16 %v2197, %v2194
    %v2228 = vpack.c.b16 %v2198, %v2195
    %v2229 = vpack.c.b16 %v2199, %v2196
    %v2230 = vpack.c.b16 %v2200, %v2200
    %v2231 = vpack.c.b16 %v2201, %v2201
    %v2232 = vpack.c.b16 %v2202, %v2202
    %v2261 = vsel %vm997, %v2066, 0
    %v2264 = vsel %vm997, %v2068, 0
    %v2267 = vsel %vm1004, %v2230, 0
    %v2270 = vsel %vm1004, %v2231, 0
    %v2273 = vsel %vm1004, %v2232, 0
    %2275 = vmatpush.bf16.msra.mxu0 %v2224
    %2276 = vmatpush.bf16.msra.mxu0 %v2221
    %2277 = vmatpush.bf16.msra.mxu0 %v2218
    %2278 = vmatpush.bf16.msra.mxu0 %v2215
    %2279 = vmatpush.bf16.msra.mxu0 %v2212
    %2280 = vmatpush.bf16.msra.mxu0 %v2209
    %2281 = vmatpush.bf16.msra.mxu0 %v2206
    %2282 = vmatpush.bf16.msra.mxu0 %v2203
    %2283 = vmatmul.bf16.gmra.mxu0 %v2065
    %v2284 = vpop.f32.mrf.mxu0
    %v2285 = vadd.f32 0.0, %v2284
    %v2286 = vpop.f32.mrf.mxu0
    %v2287 = vadd.f32 0.0, %v2286
    %2288 = vmatmul.bf16.gmra.mxu0 %v2067
    %v2289 = vpop.f32.mrf.mxu0
    %v2290 = vadd.f32 0.0, %v2289
    %v2291 = vpop.f32.mrf.mxu0
    %v2292 = vadd.f32 0.0, %v2291
    %2293 = vdwg.mxu0
    %2294 = vmatpush.bf16.msra.mxu0 0
    %2295 = vmatpush.bf16.msra.mxu0 0
    %2296 = vmatpush.bf16.msra.mxu0 0
    %2297 = vmatpush.bf16.msra.mxu0 0
    %2298 = vmatpush.bf16.msra.mxu0 0
    %2299 = vmatpush.bf16.msra.mxu0 0
    %2300 = vmatpush.bf16.msra.mxu0 %v2267
    %2301 = vmatpush.bf16.msra.mxu0 %v2227
    %2302 = vmatmul.bf16.gmra.mxu0 %v2261
    %v2303 = vpop.f32.mrf.mxu0
    %v2304 = vadd.f32 %v2285, %v2303
    %v2305 = vpop.f32.mrf.mxu0
    %v2306 = vadd.f32 %v2287, %v2305
    %2307 = vmatmul.bf16.gmra.mxu0 %v2264
    %v2308 = vpop.f32.mrf.mxu0
    %v2309 = vadd.f32 %v2290, %v2308
    %v2310 = vpop.f32.mrf.mxu0
    %v2311 = vadd.f32 %v2292, %v2310
    %2312 = vdwg.mxu0
    %2313 = vmatpush.bf16.msra.mxu0 %v2225
    %2314 = vmatpush.bf16.msra.mxu0 %v2222
    %2315 = vmatpush.bf16.msra.mxu0 %v2219
    %2316 = vmatpush.bf16.msra.mxu0 %v2216
    %2317 = vmatpush.bf16.msra.mxu0 %v2213
    %2318 = vmatpush.bf16.msra.mxu0 %v2210
    %2319 = vmatpush.bf16.msra.mxu0 %v2207
    %2320 = vmatpush.bf16.msra.mxu0 %v2204
    %2321 = vmatmul.bf16.gmra.mxu0 %v2065
    %v2322 = vpop.f32.mrf.mxu0
    %v2323 = vadd.f32 0.0, %v2322
    %v2324 = vpop.f32.mrf.mxu0
    %v2325 = vadd.f32 0.0, %v2324
    %2326 = vmatmul.bf16.gmra.mxu0 %v2067
    %v2327 = vpop.f32.mrf.mxu0
    %v2328 = vadd.f32 0.0, %v2327
    %v2329 = vpop.f32.mrf.mxu0
    %v2330 = vadd.f32 0.0, %v2329
    %2331 = vdwg.mxu0
    %2332 = vmatpush.bf16.msra.mxu0 0
    %2333 = vmatpush.bf16.msra.mxu0 0
    %2334 = vmatpush.bf16.msra.mxu0 0
    %2335 = vmatpush.bf16.msra.mxu0 0
    %2336 = vmatpush.bf16.msra.mxu0 0
    %2337 = vmatpush.bf16.msra.mxu0 0
    %2338 = vmatpush.bf16.msra.mxu0 %v2270
    %2339 = vmatpush.bf16.msra.mxu0 %v2228
    %2340 = vmatmul.bf16.gmra.mxu0 %v2261
    %v2341 = vpop.f32.mrf.mxu0
    %v2342 = vadd.f32 %v2323, %v2341
    %v2343 = vpop.f32.mrf.mxu0
    %v2344 = vadd.f32 %v2325, %v2343
    %2345 = vmatmul.bf16.gmra.mxu0 %v2264
    %v2346 = vpop.f32.mrf.mxu0
    %v2347 = vadd.f32 %v2328, %v2346
    %v2348 = vpop.f32.mrf.mxu0
    %v2349 = vadd.f32 %v2330, %v2348
    %2350 = vdwg.mxu0
    %2351 = vmatpush.bf16.msra.mxu0 %v2226
    %2352 = vmatpush.bf16.msra.mxu0 %v2223
    %2353 = vmatpush.bf16.msra.mxu0 %v2220
    %2354 = vmatpush.bf16.msra.mxu0 %v2217
    %2355 = vmatpush.bf16.msra.mxu0 %v2214
    %2356 = vmatpush.bf16.msra.mxu0 %v2211
    %2357 = vmatpush.bf16.msra.mxu0 %v2208
    %2358 = vmatpush.bf16.msra.mxu0 %v2205
    %2359 = vmatmul.bf16.gmra.mxu0 %v2065
    %v2360 = vpop.f32.mrf.mxu0
    %v2361 = vadd.f32 0.0, %v2360
    %v2362 = vpop.f32.mrf.mxu0
    %v2363 = vadd.f32 0.0, %v2362
    %2364 = vmatmul.bf16.gmra.mxu0 %v2067
    %v2365 = vpop.f32.mrf.mxu0
    %v2366 = vadd.f32 0.0, %v2365
    %v2367 = vpop.f32.mrf.mxu0
    %v2368 = vadd.f32 0.0, %v2367
    %2369 = vdwg.mxu0
    %2370 = vmatpush.bf16.msra.mxu0 0
    %2371 = vmatpush.bf16.msra.mxu0 0
    %2372 = vmatpush.bf16.msra.mxu0 0
    %2373 = vmatpush.bf16.msra.mxu0 0
    %2374 = vmatpush.bf16.msra.mxu0 0
    %2375 = vmatpush.bf16.msra.mxu0 0
    %2376 = vmatpush.bf16.msra.mxu0 %v2273
    %2377 = vmatpush.bf16.msra.mxu0 %v2229
    %2378 = vmatmul.bf16.gmra.mxu0 %v2261
    %v2379 = vpop.f32.mrf.mxu0
    %v2380 = vadd.f32 %v2361, %v2379
    %v2381 = vpop.f32.mrf.mxu0
    %v2382 = vadd.f32 %v2363, %v2381
    %2383 = vmatmul.bf16.gmra.mxu0 %v2264
    %v2384 = vpop.f32.mrf.mxu0
    %v2385 = vadd.f32 %v2366, %v2384
    %v2386 = vpop.f32.mrf.mxu0
    %v2387 = vadd.f32 %v2368, %v2386
    %2388 = vdwg.mxu0
    %v2389 = vadd.f32 %v1891, %v2304
    %v2390 = vadd.f32 %v1892, %v2342
    %v2391 = vadd.f32 %v1893, %v2380
    %v2392 = vadd.f32 %v1894, %v2306
    %v2393 = vadd.f32 %v1895, %v2344
    %v2394 = vadd.f32 %v1896, %v2382
    %v2395 = vadd.f32 %v1897, %v2309
    %v2396 = vadd.f32 %v1898, %v2347
    %v2397 = vadd.f32 %v1899, %v2385
    %v2398 = vadd.f32 %v1900, %v2311
    %v2399 = vadd.f32 %v1901, %v2349
    %v2400 = vadd.f32 %v1902, %v2387
    %s2401 = scalar_lea.vmem %s3, 640
    %v2402 = vld [vmem:[%s2401] sm:$0xff]
    %v2403 = vld [vmem:[%s2401 + $0x8] sm:$0xff]
    %v2404 = vld [vmem:[%s2401 + $0x10] sm:$0xff]
    %v2405 = vld [vmem:[%s2401 + $0x18] sm:$0xff]
    %v2406 = vld [vmem:[%s2401 + $0x20] sm:$0xff]
    %v2407 = vld [vmem:[%s2401 + $0x28] sm:$0xff]
    %v2408 = vld [vmem:[%s2401 + $0x30] sm:$0xff]
    %v2409 = vld [vmem:[%s2401 + $0x38] sm:$0xff]
    %v2410 = vld [vmem:[%s2401 + $0x40] sm:$0xff]
    %v2411 = vld [vmem:[%s2401 + $0x48] sm:$0xff]
    %v2412 = vld [vmem:[%s2401 + $0x50] sm:$0xff]
    %v2413 = vld [vmem:[%s2401 + $0x58] sm:$0xff]
    %v2414 = vld [vmem:[%s2401 + $0x60] sm:$0xff]
    %v2415 = vld [vmem:[%s2401 + $0x68] sm:$0xff]
    %v2416 = vld [vmem:[%s2401 + $0x70] sm:$0xff]
    %v2417 = vld [vmem:[%s2401 + $0x78] sm:$0xff]
    %s2418 = scalar_lea.vmem %s5, 10
    %v2419 = vld [vmem:[%s2418] sm:$0x3]
    %v2421 = vperm.slane %v2419, 0
    %v2422 = vperm.slane %v2419, 1
    %v2425 = vunpack.c.h.b16 %v254
    %v2426 = vunpack.c.h.b16 %v261
    %v2427 = vunpack.c.h.b16 %v268
    %v2428 = vunpack.c.h.b16 %v275
    %v2429 = vpack.c.b16 %v2426, %v2425
    %v2430 = vpack.c.b16 %v2428, %v2427
    %v2449 = vunpack.c.l.b16 %v2402
    %v2450 = vunpack.c.h.b16 %v2402
    %v2451 = vunpack.c.l.b16 %v2403
    %v2452 = vunpack.c.h.b16 %v2403
    %v2453 = vunpack.c.l.b16 %v2404
    %v2454 = vunpack.c.h.b16 %v2404
    %v2455 = vunpack.c.l.b16 %v2405
    %v2456 = vunpack.c.h.b16 %v2405
    %v2457 = vunpack.c.l.b16 %v2406
    %v2458 = vunpack.c.h.b16 %v2406
    %v2459 = vunpack.c.l.b16 %v2407
    %v2460 = vunpack.c.h.b16 %v2407
    %v2461 = vunpack.c.l.b16 %v2408
    %v2462 = vunpack.c.h.b16 %v2408
    %v2463 = vunpack.c.l.b16 %v2409
    %v2464 = vunpack.c.h.b16 %v2409
    %v2465 = vunpack.c.l.b16 %v2410
    %v2466 = vunpack.c.h.b16 %v2410
    %v2467 = vunpack.c.l.b16 %v2411
    %v2468 = vunpack.c.h.b16 %v2411
    %v2469 = vunpack.c.l.b16 %v2412
    %v2470 = vunpack.c.h.b16 %v2412
    %v2471 = vunpack.c.l.b16 %v2413
    %v2472 = vunpack.c.h.b16 %v2413
    %v2473 = vunpack.c.l.b16 %v2414
    %v2474 = vunpack.c.h.b16 %v2414
    %v2475 = vunpack.c.l.b16 %v2415
    %v2476 = vunpack.c.h.b16 %v2415
    %v2477 = vunpack.c.l.b16 %v2416
    %v2478 = vunpack.c.h.b16 %v2416
    %v2479 = vunpack.c.l.b16 %v2417
    %v2480 = vunpack.c.h.b16 %v2417
    %v2481 = vpack.c.b16 %v2451, %v2449
    %v2482 = vpack.c.b16 %v2452, %v2450
    %v2483 = vpack.c.b16 %v2455, %v2453
    %v2484 = vpack.c.b16 %v2456, %v2454
    %v2485 = vpack.c.b16 %v2459, %v2457
    %v2486 = vpack.c.b16 %v2460, %v2458
    %v2487 = vpack.c.b16 %v2463, %v2461
    %v2488 = vpack.c.b16 %v2464, %v2462
    %v2489 = vpack.c.b16 %v2467, %v2465
    %v2490 = vpack.c.b16 %v2468, %v2466
    %v2491 = vpack.c.b16 %v2471, %v2469
    %v2492 = vpack.c.b16 %v2472, %v2470
    %v2493 = vpack.c.b16 %v2475, %v2473
    %v2494 = vpack.c.b16 %v2476, %v2474
    %v2495 = vpack.c.b16 %v2479, %v2477
    %v2496 = vpack.c.b16 %v2480, %v2478
    %2513 = vmatpush.bf16.msra.mxu0 %v2495
    %2514 = vmatpush.bf16.msra.mxu0 %v2493
    %2515 = vmatpush.bf16.msra.mxu0 %v2491
    %2516 = vmatpush.bf16.msra.mxu0 %v2489
    %2517 = vmatpush.bf16.msra.mxu0 %v2487
    %2518 = vmatpush.bf16.msra.mxu0 %v2485
    %2519 = vmatpush.bf16.msra.mxu0 %v2483
    %2520 = vmatpush.bf16.msra.mxu0 %v2481
    %2521 = vmatmul.bf16.gmra.mxu0 %v2429
    %v2522 = vpop.f32.mrf.mxu0
    %v2523 = vadd.f32 %v2421, %v2522
    %v2524 = vpop.f32.mrf.mxu0
    %v2525 = vadd.f32 %v2421, %v2524
    %2526 = vmatmul.bf16.gmra.mxu0 %v2430
    %v2527 = vpop.f32.mrf.mxu0
    %v2528 = vadd.f32 %v2421, %v2527
    %v2529 = vpop.f32.mrf.mxu0
    %v2530 = vadd.f32 %v2421, %v2529
    %2531 = vdwg.mxu0
    %2532 = vmatpush.bf16.msra.mxu0 %v2496
    %2533 = vmatpush.bf16.msra.mxu0 %v2494
    %2534 = vmatpush.bf16.msra.mxu0 %v2492
    %2535 = vmatpush.bf16.msra.mxu0 %v2490
    %2536 = vmatpush.bf16.msra.mxu0 %v2488
    %2537 = vmatpush.bf16.msra.mxu0 %v2486
    %2538 = vmatpush.bf16.msra.mxu0 %v2484
    %2539 = vmatpush.bf16.msra.mxu0 %v2482
    %2540 = vmatmul.bf16.gmra.mxu0 %v2429
    %v2541 = vpop.f32.mrf.mxu0
    %v2542 = vadd.f32 %v2422, %v2541
    %v2543 = vpop.f32.mrf.mxu0
    %v2544 = vadd.f32 %v2422, %v2543
    %2545 = vmatmul.bf16.gmra.mxu0 %v2430
    %v2546 = vpop.f32.mrf.mxu0
    %v2547 = vadd.f32 %v2422, %v2546
    %v2548 = vpop.f32.mrf.mxu0
    %v2549 = vadd.f32 %v2422, %v2548
    %2550 = vdwg.mxu0
    %v2551 = vmax.f32 %v2523, 0.0
    %v2552 = vmax.f32 %v2542, 0.0
    %v2553 = vmax.f32 %v2525, 0.0
    %v2554 = vmax.f32 %v2544, 0.0
    %v2555 = vmax.f32 %v2528, 0.0
    %v2556 = vmax.f32 %v2547, 0.0
    %v2557 = vmax.f32 %v2530, 0.0
    %v2558 = vmax.f32 %v2549, 0.0
    %v2559 = vpack.c.bf16 %v2553, %v2551
    %v2560 = vpack.c.bf16 %v2554, %v2552
    %v2561 = vpack.c.bf16 %v2557, %v2555
    %v2562 = vpack.c.bf16 %v2558, %v2556
    %s2563 = scalar_lea.vmem %s7, 912
    %v2564 = vld [vmem:[%s2563] sm:$0xff]
    %v2565 = vld [vmem:[%s2563 + $0x8] sm:$0xf]
    %v2566 = vld [vmem:[%s2563 + $0xc] sm:$0xff]
    %v2567 = vld [vmem:[%s2563 + $0x14] sm:$0xf]
    %v2568 = vld [vmem:[%s2563 + $0x18] sm:$0xff]
    %v2569 = vld [vmem:[%s2563 + $0x20] sm:$0xf]
    %v2570 = vld [vmem:[%s2563 + $0x24] sm:$0xff]
    %v2571 = vld [vmem:[%s2563 + $0x2c] sm:$0xf]
    %v2572 = vld [vmem:[%s2563 + $0x30] sm:$0xff]
    %v2573 = vld [vmem:[%s2563 + $0x38] sm:$0xf]
    %v2574 = vld [vmem:[%s2563 + $0x3c] sm:$0xff]
    %v2575 = vld [vmem:[%s2563 + $0x44] sm:$0xf]
    %v2576 = vld [vmem:[%s2563 + $0x48] sm:$0xff]
    %v2577 = vld [vmem:[%s2563 + $0x50] sm:$0xf]
    %v2578 = vld [vmem:[%s2563 + $0x54] sm:$0xff]
    %v2579 = vld [vmem:[%s2563 + $0x5c] sm:$0xf]
    %v2580 = vld [vmem:[%s2563 + $0x60] sm:$0xff]
    %v2581 = vld [vmem:[%s2563 + $0x68] sm:$0xf]
    %v2582 = vld [vmem:[%s2563 + $0x6c] sm:$0xff]
    %v2583 = vld [vmem:[%s2563 + $0x74] sm:$0xf]
    %v2584 = vld [vmem:[%s2563 + $0x78] sm:$0xff]
    %v2585 = vld [vmem:[%s2563 + $0x80] sm:$0xf]
    %v2586 = vld [vmem:[%s2563 + $0x84] sm:$0xff]
    %v2587 = vld [vmem:[%s2563 + $0x8c] sm:$0xf]
    %v2588 = vld [vmem:[%s2563 + $0x90] sm:$0xff]
    %v2589 = vld [vmem:[%s2563 + $0x98] sm:$0xf]
    %v2590 = vld [vmem:[%s2563 + $0x9c] sm:$0xff]
    %v2591 = vld [vmem:[%s2563 + $0xa4] sm:$0xf]
    %v2592 = vld [vmem:[%s2563 + $0xa8] sm:$0xff]
    %v2593 = vld [vmem:[%s2563 + $0xb0] sm:$0xf]
    %v2594 = vld [vmem:[%s2563 + $0xb4] sm:$0xff]
    %v2595 = vld [vmem:[%s2563 + $0xbc] sm:$0xf]
    %v2596 = vld [vmem:[%s2563 + $0xc0] sm:$0xff]
    %v2597 = vld [vmem:[%s2563 + $0xc8] sm:$0xf]
    %v2598 = vld [vmem:[%s2563 + $0xcc] sm:$0xff]
    %v2599 = vld [vmem:[%s2563 + $0xd4] sm:$0xf]
    %v2600 = vld [vmem:[%s2563 + $0xd8] sm:$0x77]
    %v2601 = vld [vmem:[%s2563 + $0xe0] sm:$0x7]
    %v2640 = vunpack.c.l.b16 %v2564
    %v2641 = vunpack.c.h.b16 %v2564
    %v2642 = vunpack.c.l.b16 %v2565
    %v2643 = vunpack.c.l.b16 %v2566
    %v2644 = vunpack.c.h.b16 %v2566
    %v2645 = vunpack.c.l.b16 %v2567
    %v2646 = vunpack.c.l.b16 %v2568
    %v2647 = vunpack.c.h.b16 %v2568
    %v2648 = vunpack.c.l.b16 %v2569
    %v2649 = vunpack.c.l.b16 %v2570
    %v2650 = vunpack.c.h.b16 %v2570
    %v2651 = vunpack.c.l.b16 %v2571
    %v2652 = vunpack.c.l.b16 %v2572
    %v2653 = vunpack.c.h.b16 %v2572
    %v2654 = vunpack.c.l.b16 %v2573
    %v2655 = vunpack.c.l.b16 %v2574
    %v2656 = vunpack.c.h.b16 %v2574
    %v2657 = vunpack.c.l.b16 %v2575
    %v2658 = vunpack.c.l.b16 %v2576
    %v2659 = vunpack.c.h.b16 %v2576
    %v2660 = vunpack.c.l.b16 %v2577
    %v2661 = vunpack.c.l.b16 %v2578
    %v2662 = vunpack.c.h.b16 %v2578
    %v2663 = vunpack.c.l.b16 %v2579
    %v2664 = vunpack.c.l.b16 %v2580
    %v2665 = vunpack.c.h.b16 %v2580
    %v2666 = vunpack.c.l.b16 %v2581
    %v2667 = vunpack.c.l.b16 %v2582
    %v2668 = vunpack.c.h.b16 %v2582
    %v2669 = vunpack.c.l.b16 %v2583
    %v2670 = vunpack.c.l.b16 %v2584
    %v2671 = vunpack.c.h.b16 %v2584
    %v2672 = vunpack.c.l.b16 %v2585
    %v2673 = vunpack.c.l.b16 %v2586
    %v2674 = vunpack.c.h.b16 %v2586
    %v2675 = vunpack.c.l.b16 %v2587
    %v2676 = vunpack.c.l.b16 %v2588
    %v2677 = vunpack.c.h.b16 %v2588
    %v2678 = vunpack.c.l.b16 %v2589
    %v2679 = vunpack.c.l.b16 %v2590
    %v2680 = vunpack.c.h.b16 %v2590
    %v2681 = vunpack.c.l.b16 %v2591
    %v2682 = vunpack.c.l.b16 %v2592
    %v2683 = vunpack.c.h.b16 %v2592
    %v2684 = vunpack.c.l.b16 %v2593
    %v2685 = vunpack.c.l.b16 %v2594
    %v2686 = vunpack.c.h.b16 %v2594
    %v2687 = vunpack.c.l.b16 %v2595
    %v2688 = vunpack.c.l.b16 %v2596
    %v2689 = vunpack.c.h.b16 %v2596
    %v2690 = vunpack.c.l.b16 %v2597
    %v2691 = vunpack.c.l.b16 %v2598
    %v2692 = vunpack.c.h.b16 %v2598
    %v2693 = vunpack.c.l.b16 %v2599
    %v2694 = vunpack.c.l.b16 %v2600
    %v2695 = vunpack.c.h.b16 %v2600
    %v2696 = vunpack.c.l.b16 %v2601
    %v2697 = vpack.c.b16 %v2643, %v2640
    %v2698 = vpack.c.b16 %v2644, %v2641
    %v2699 = vpack.c.b16 %v2645, %v2642
    %v2700 = vpack.c.b16 %v2649, %v2646
    %v2701 = vpack.c.b16 %v2650, %v2647
    %v2702 = vpack.c.b16 %v2651, %v2648
    %v2703 = vpack.c.b16 %v2655, %v2652
    %v2704 = vpack.c.b16 %v2656, %v2653
    %v2705 = vpack.c.b16 %v2657, %v2654
    %v2706 = vpack.c.b16 %v2661, %v2658
    %v2707 = vpack.c.b16 %v2662, %v2659
    %v2708 = vpack.c.b16 %v2663, %v2660
    %v2709 = vpack.c.b16 %v2667, %v2664
    %v2710 = vpack.c.b16 %v2668, %v2665
    %v2711 = vpack.c.b16 %v2669, %v2666
    %v2712 = vpack.c.b16 %v2673, %v2670
    %v2713 = vpack.c.b16 %v2674, %v2671
    %v2714 = vpack.c.b16 %v2675, %v2672
    %v2715 = vpack.c.b16 %v2679, %v2676
    %v2716 = vpack.c.b16 %v2680, %v2677
    %v2717 = vpack.c.b16 %v2681, %v2678
    %v2718 = vpack.c.b16 %v2685, %v2682
    %v2719 = vpack.c.b16 %v2686, %v2683
    %v2720 = vpack.c.b16 %v2687, %v2684
    %v2721 = vpack.c.b16 %v2691, %v2688
    %v2722 = vpack.c.b16 %v2692, %v2689
    %v2723 = vpack.c.b16 %v2693, %v2690
    %v2724 = vpack.c.b16 %v2694, %v2694
    %v2725 = vpack.c.b16 %v2695, %v2695
    %v2726 = vpack.c.b16 %v2696, %v2696
    %v2755 = vsel %vm997, %v2560, 0
    %v2758 = vsel %vm997, %v2562, 0
    %v2761 = vsel %vm1004, %v2724, 0
    %v2764 = vsel %vm1004, %v2725, 0
    %v2767 = vsel %vm1004, %v2726, 0
    %2769 = vmatpush.bf16.msra.mxu0 %v2718
    %2770 = vmatpush.bf16.msra.mxu0 %v2715
    %2771 = vmatpush.bf16.msra.mxu0 %v2712
    %2772 = vmatpush.bf16.msra.mxu0 %v2709
    %2773 = vmatpush.bf16.msra.mxu0 %v2706
    %2774 = vmatpush.bf16.msra.mxu0 %v2703
    %2775 = vmatpush.bf16.msra.mxu0 %v2700
    %2776 = vmatpush.bf16.msra.mxu0 %v2697
    %2777 = vmatmul.bf16.gmra.mxu0 %v2559
    %v2778 = vpop.f32.mrf.mxu0
    %v2779 = vadd.f32 0.0, %v2778
    %v2780 = vpop.f32.mrf.mxu0
    %v2781 = vadd.f32 0.0, %v2780
    %2782 = vmatmul.bf16.gmra.mxu0 %v2561
    %v2783 = vpop.f32.mrf.mxu0
    %v2784 = vadd.f32 0.0, %v2783
    %v2785 = vpop.f32.mrf.mxu0
    %v2786 = vadd.f32 0.0, %v2785
    %2787 = vdwg.mxu0
    %2788 = vmatpush.bf16.msra.mxu0 0
    %2789 = vmatpush.bf16.msra.mxu0 0
    %2790 = vmatpush.bf16.msra.mxu0 0
    %2791 = vmatpush.bf16.msra.mxu0 0
    %2792 = vmatpush.bf16.msra.mxu0 0
    %2793 = vmatpush.bf16.msra.mxu0 0
    %2794 = vmatpush.bf16.msra.mxu0 %v2761
    %2795 = vmatpush.bf16.msra.mxu0 %v2721
    %2796 = vmatmul.bf16.gmra.mxu0 %v2755
    %v2797 = vpop.f32.mrf.mxu0
    %v2798 = vadd.f32 %v2779, %v2797
    %v2799 = vpop.f32.mrf.mxu0
    %v2800 = vadd.f32 %v2781, %v2799
    %2801 = vmatmul.bf16.gmra.mxu0 %v2758
    %v2802 = vpop.f32.mrf.mxu0
    %v2803 = vadd.f32 %v2784, %v2802
    %v2804 = vpop.f32.mrf.mxu0
    %v2805 = vadd.f32 %v2786, %v2804
    %2806 = vdwg.mxu0
    %2807 = vmatpush.bf16.msra.mxu0 %v2719
    %2808 = vmatpush.bf16.msra.mxu0 %v2716
    %2809 = vmatpush.bf16.msra.mxu0 %v2713
    %2810 = vmatpush.bf16.msra.mxu0 %v2710
    %2811 = vmatpush.bf16.msra.mxu0 %v2707
    %2812 = vmatpush.bf16.msra.mxu0 %v2704
    %2813 = vmatpush.bf16.msra.mxu0 %v2701
    %2814 = vmatpush.bf16.msra.mxu0 %v2698
    %2815 = vmatmul.bf16.gmra.mxu0 %v2559
    %v2816 = vpop.f32.mrf.mxu0
    %v2817 = vadd.f32 0.0, %v2816
    %v2818 = vpop.f32.mrf.mxu0
    %v2819 = vadd.f32 0.0, %v2818
    %2820 = vmatmul.bf16.gmra.mxu0 %v2561
    %v2821 = vpop.f32.mrf.mxu0
    %v2822 = vadd.f32 0.0, %v2821
    %v2823 = vpop.f32.mrf.mxu0
    %v2824 = vadd.f32 0.0, %v2823
    %2825 = vdwg.mxu0
    %2826 = vmatpush.bf16.msra.mxu0 0
    %2827 = vmatpush.bf16.msra.mxu0 0
    %2828 = vmatpush.bf16.msra.mxu0 0
    %2829 = vmatpush.bf16.msra.mxu0 0
    %2830 = vmatpush.bf16.msra.mxu0 0
    %2831 = vmatpush.bf16.msra.mxu0 0
    %2832 = vmatpush.bf16.msra.mxu0 %v2764
    %2833 = vmatpush.bf16.msra.mxu0 %v2722
    %2834 = vmatmul.bf16.gmra.mxu0 %v2755
    %v2835 = vpop.f32.mrf.mxu0
    %v2836 = vadd.f32 %v2817, %v2835
    %v2837 = vpop.f32.mrf.mxu0
    %v2838 = vadd.f32 %v2819, %v2837
    %2839 = vmatmul.bf16.gmra.mxu0 %v2758
    %v2840 = vpop.f32.mrf.mxu0
    %v2841 = vadd.f32 %v2822, %v2840
    %v2842 = vpop.f32.mrf.mxu0
    %v2843 = vadd.f32 %v2824, %v2842
    %2844 = vdwg.mxu0
    %2845 = vmatpush.bf16.msra.mxu0 %v2720
    %2846 = vmatpush.bf16.msra.mxu0 %v2717
    %2847 = vmatpush.bf16.msra.mxu0 %v2714
    %2848 = vmatpush.bf16.msra.mxu0 %v2711
    %2849 = vmatpush.bf16.msra.mxu0 %v2708
    %2850 = vmatpush.bf16.msra.mxu0 %v2705
    %2851 = vmatpush.bf16.msra.mxu0 %v2702
    %2852 = vmatpush.bf16.msra.mxu0 %v2699
    %2853 = vmatmul.bf16.gmra.mxu0 %v2559
    %v2854 = vpop.f32.mrf.mxu0
    %v2855 = vadd.f32 0.0, %v2854
    %v2856 = vpop.f32.mrf.mxu0
    %v2857 = vadd.f32 0.0, %v2856
    %2858 = vmatmul.bf16.gmra.mxu0 %v2561
    %v2859 = vpop.f32.mrf.mxu0
    %v2860 = vadd.f32 0.0, %v2859
    %v2861 = vpop.f32.mrf.mxu0
    %v2862 = vadd.f32 0.0, %v2861
    %2863 = vdwg.mxu0
    %2864 = vmatpush.bf16.msra.mxu0 0
    %2865 = vmatpush.bf16.msra.mxu0 0
    %2866 = vmatpush.bf16.msra.mxu0 0
    %2867 = vmatpush.bf16.msra.mxu0 0
    %2868 = vmatpush.bf16.msra.mxu0 0
    %2869 = vmatpush.bf16.msra.mxu0 0
    %2870 = vmatpush.bf16.msra.mxu0 %v2767
    %2871 = vmatpush.bf16.msra.mxu0 %v2723
    %2872 = vmatmul.bf16.gmra.mxu0 %v2755
    %v2873 = vpop.f32.mrf.mxu0
    %v2874 = vadd.f32 %v2855, %v2873
    %v2875 = vpop.f32.mrf.mxu0
    %v2876 = vadd.f32 %v2857, %v2875
    %2877 = vmatmul.bf16.gmra.mxu0 %v2758
    %v2878 = vpop.f32.mrf.mxu0
    %v2879 = vadd.f32 %v2860, %v2878
    %v2880 = vpop.f32.mrf.mxu0
    %v2881 = vadd.f32 %v2862, %v2880
    %2882 = vdwg.mxu0
    %v2883 = vadd.f32 %v2389, %v2798
    %v2884 = vadd.f32 %v2390, %v2836
    %v2885 = vadd.f32 %v2391, %v2874
    %v2886 = vadd.f32 %v2392, %v2800
    %v2887 = vadd.f32 %v2393, %v2838
    %v2888 = vadd.f32 %v2394, %v2876
    %v2889 = vadd.f32 %v2395, %v2803
    %v2890 = vadd.f32 %v2396, %v2841
    %v2891 = vadd.f32 %v2397, %v2879
    %v2892 = vadd.f32 %v2398, %v2805
    %v2893 = vadd.f32 %v2399, %v2843
    %v2894 = vadd.f32 %v2400, %v2881
    %v2895 = vld [vmem:[%s9] sm:$0x7]
    %v2897 = vperm.slane %v2895, 0
    %v2898 = vperm.slane %v2895, 1
    %v2899 = vperm.slane %v2895, 2
    %v2903 = vadd.f32 %v2883, %v2897
    %v2904 = vadd.f32 %v2884, %v2898
    %v2905 = vadd.f32 %v2885, %v2899
    %v2906 = vadd.f32 %v2886, %v2897
    %v2907 = vadd.f32 %v2887, %v2898
    %v2908 = vadd.f32 %v2888, %v2899
    %v2909 = vadd.f32 %v2889, %v2897
    %v2910 = vadd.f32 %v2890, %v2898
    %v2911 = vadd.f32 %v2891, %v2899
    %v2912 = vadd.f32 %v2892, %v2897
    %v2913 = vadd.f32 %v2893, %v2898
    %v2914 = vadd.f32 %v2894, %v2899
    %v2915 = vmax.f32 %v2903, 0.0
    %v2916 = vmax.f32 %v2904, 0.0
    %v2917 = vmax.f32 %v2905, 0.0
    %v2918 = vmax.f32 %v2906, 0.0
    %v2919 = vmax.f32 %v2907, 0.0
    %v2920 = vmax.f32 %v2908, 0.0
    %v2921 = vmax.f32 %v2909, 0.0
    %v2922 = vmax.f32 %v2910, 0.0
    %v2923 = vmax.f32 %v2911, 0.0
    %v2924 = vmax.f32 %v2912, 0.0
    %v2925 = vmax.f32 %v2913, 0.0
    %v2926 = vmax.f32 %v2914, 0.0
    %v2927 = vpack.c.bf16 %v434, %v432
    %v2928 = vpack.c.bf16 %v435, %v433
    %v2929 = vpack.c.bf16 %v438, %v436
    %v2930 = vpack.c.bf16 %v439, %v437
    %v2931 = vld [vmem:[%s11] sm:$0xff]
    %v2932 = vld [vmem:[%s11 + $0x8] sm:$0xff]
    %v2933 = vld [vmem:[%s11 + $0x10] sm:$0xff]
    %v2934 = vld [vmem:[%s11 + $0x18] sm:$0xff]
    %v2935 = vld [vmem:[%s11 + $0x20] sm:$0xff]
    %v2936 = vld [vmem:[%s11 + $0x28] sm:$0xff]
    %v2937 = vld [vmem:[%s11 + $0x30] sm:$0xff]
    %v2938 = vld [vmem:[%s11 + $0x38] sm:$0xff]
    %v2939 = vld [vmem:[%s11 + $0x40] sm:$0xff]
    %v2940 = vld [vmem:[%s11 + $0x48] sm:$0xff]
    %v2941 = vld [vmem:[%s11 + $0x50] sm:$0xff]
    %v2942 = vld [vmem:[%s11 + $0x58] sm:$0xff]
    %v2943 = vld [vmem:[%s11 + $0x60] sm:$0xff]
    %v2944 = vld [vmem:[%s11 + $0x68] sm:$0xff]
    %v2945 = vld [vmem:[%s11 + $0x70] sm:$0xff]
    %v2946 = vld [vmem:[%s11 + $0x78] sm:$0xff]
    %v2947 = vld [vmem:[%s11 + $0x80] sm:$0xff]
    %v2948 = vld [vmem:[%s11 + $0x88] sm:$0xff]
    %v2949 = vld [vmem:[%s11 + $0x90] sm:$0x77]
    %v2950 = vpack.c.bf16 %v2918, %v2915
    %v2951 = vpack.c.bf16 %v2919, %v2916
    %v2952 = vpack.c.bf16 %v2920, %v2917
    %v2953 = vpack.c.bf16 %v2924, %v2921
    %v2954 = vpack.c.bf16 %v2925, %v2922
    %v2955 = vpack.c.bf16 %v2926, %v2923
    %v2956 = vld [vmem:[%s13] sm:$0xff]
    %v2957 = vld [vmem:[%s13 + $0x8] sm:$0xff]
    %v2958 = vld [vmem:[%s13 + $0x10] sm:$0xff]
    %v2959 = vld [vmem:[%s13 + $0x18] sm:$0xff]
    %v2960 = vld [vmem:[%s13 + $0x20] sm:$0xff]
    %v2961 = vld [vmem:[%s13 + $0x28] sm:$0xff]
    %v2962 = vld [vmem:[%s13 + $0x30] sm:$0xff]
    %v2963 = vld [vmem:[%s13 + $0x38] sm:$0xff]
    %v2964 = vld [vmem:[%s13 + $0x40] sm:$0xff]
    %v2965 = vld [vmem:[%s13 + $0x48] sm:$0xff]
    %v2966 = vld [vmem:[%s13 + $0x50] sm:$0xff]
    %v2967 = vld [vmem:[%s13 + $0x58] sm:$0xff]
    %v2968 = vld [vmem:[%s13 + $0x60] sm:$0xff]
    %v2969 = vld [vmem:[%s13 + $0x68] sm:$0xff]
    %v2970 = vld [vmem:[%s13 + $0x70] sm:$0xff]
    %v2971 = vld [vmem:[%s13 + $0x78] sm:$0xff]
    %v2972 = vld [vmem:[%s13 + $0x80] sm:$0xff]
    %v2973 = vld [vmem:[%s13 + $0x88] sm:$0xff]
    %v2974 = vld [vmem:[%s13 + $0x90] sm:$0xff]
    %v2975 = vld [vmem:[%s13 + $0x98] sm:$0xff]
    %v2976 = vld [vmem:[%s13 + $0xa0] sm:$0xff]
    %v2977 = vld [vmem:[%s13 + $0xa8] sm:$0xff]
    %v2978 = vld [vmem:[%s13 + $0xb0] sm:$0xff]
    %v2979 = vld [vmem:[%s13 + $0xb8] sm:$0xff]
    %v2980 = vld [vmem:[%s13 + $0xc0] sm:$0xff]
    %v2981 = vld [vmem:[%s13 + $0xc8] sm:$0xff]
    %v2982 = vld [vmem:[%s13 + $0xd0] sm:$0xff]
    %v2983 = vld [vmem:[%s13 + $0xd8] sm:$0xff]
    %v2984 = vld [vmem:[%s13 + $0xe0] sm:$0xff]
    %v2985 = vld [vmem:[%s13 + $0xe8] sm:$0xff]
    %v2986 = vld [vmem:[%s13 + $0xf0] sm:$0xff]
    %v2987 = vld [vmem:[%s13 + $0xf8] sm:$0xff]
    %v2988 = vld [vmem:[%s13 + $0x100] sm:$0xff]
    %v2989 = vld [vmem:[%s13 + $0x108] sm:$0xff]
    %v2990 = vld [vmem:[%s13 + $0x110] sm:$0xff]
    %v2991 = vld [vmem:[%s13 + $0x118] sm:$0xff]
    %v2992 = vld [vmem:[%s13 + $0x120] sm:$0xff]
    %v2993 = vld [vmem:[%s13 + $0x128] sm:$0x33]
    %v3032 = vunpack.c.l.b16 %v2956
    %v3033 = vunpack.c.h.b16 %v2956
    %v3034 = vunpack.c.l.b16 %v2957
    %v3035 = vunpack.c.h.b16 %v2957
    %v3036 = vunpack.c.l.b16 %v2958
    %v3037 = vunpack.c.h.b16 %v2958
    %v3038 = vunpack.c.l.b16 %v2959
    %v3039 = vunpack.c.h.b16 %v2959
    %v3040 = vunpack.c.l.b16 %v2960
    %v3041 = vunpack.c.h.b16 %v2960
    %v3042 = vunpack.c.l.b16 %v2961
    %v3043 = vunpack.c.h.b16 %v2961
    %v3044 = vunpack.c.l.b16 %v2962
    %v3045 = vunpack.c.h.b16 %v2962
    %v3046 = vunpack.c.l.b16 %v2963
    %v3047 = vunpack.c.h.b16 %v2963
    %v3048 = vunpack.c.l.b16 %v2964
    %v3049 = vunpack.c.h.b16 %v2964
    %v3050 = vunpack.c.l.b16 %v2965
    %v3051 = vunpack.c.h.b16 %v2965
    %v3052 = vunpack.c.l.b16 %v2966
    %v3053 = vunpack.c.h.b16 %v2966
    %v3054 = vunpack.c.l.b16 %v2967
    %v3055 = vunpack.c.h.b16 %v2967
    %v3056 = vunpack.c.l.b16 %v2968
    %v3057 = vunpack.c.h.b16 %v2968
    %v3058 = vunpack.c.l.b16 %v2969
    %v3059 = vunpack.c.h.b16 %v2969
    %v3060 = vunpack.c.l.b16 %v2970
    %v3061 = vunpack.c.h.b16 %v2970
    %v3062 = vunpack.c.l.b16 %v2971
    %v3063 = vunpack.c.h.b16 %v2971
    %v3064 = vunpack.c.l.b16 %v2972
    %v3065 = vunpack.c.h.b16 %v2972
    %v3066 = vunpack.c.l.b16 %v2973
    %v3067 = vunpack.c.h.b16 %v2973
    %v3068 = vunpack.c.l.b16 %v2974
    %v3069 = vunpack.c.h.b16 %v2974
    %v3070 = vunpack.c.l.b16 %v2975
    %v3071 = vunpack.c.h.b16 %v2975
    %v3072 = vunpack.c.l.b16 %v2976
    %v3073 = vunpack.c.h.b16 %v2976
    %v3074 = vunpack.c.l.b16 %v2977
    %v3075 = vunpack.c.h.b16 %v2977
    %v3076 = vunpack.c.l.b16 %v2978
    %v3077 = vunpack.c.h.b16 %v2978
    %v3078 = vunpack.c.l.b16 %v2979
    %v3079 = vunpack.c.h.b16 %v2979
    %v3080 = vunpack.c.l.b16 %v2980
    %v3081 = vunpack.c.h.b16 %v2980
    %v3082 = vunpack.c.l.b16 %v2981
    %v3083 = vunpack.c.h.b16 %v2981
    %v3084 = vunpack.c.l.b16 %v2982
    %v3085 = vunpack.c.h.b16 %v2982
    %v3086 = vunpack.c.l.b16 %v2983
    %v3087 = vunpack.c.h.b16 %v2983
    %v3088 = vunpack.c.l.b16 %v2984
    %v3089 = vunpack.c.h.b16 %v2984
    %v3090 = vunpack.c.l.b16 %v2985
    %v3091 = vunpack.c.h.b16 %v2985
    %v3092 = vunpack.c.l.b16 %v2986
    %v3093 = vunpack.c.h.b16 %v2986
    %v3094 = vunpack.c.l.b16 %v2987
    %v3095 = vunpack.c.h.b16 %v2987
    %v3096 = vunpack.c.l.b16 %v2988
    %v3097 = vunpack.c.h.b16 %v2988
    %v3098 = vunpack.c.l.b16 %v2989
    %v3099 = vunpack.c.h.b16 %v2989
    %v3100 = vunpack.c.l.b16 %v2990
    %v3101 = vunpack.c.h.b16 %v2990
    %v3102 = vunpack.c.l.b16 %v2991
    %v3103 = vunpack.c.h.b16 %v2991
    %v3104 = vunpack.c.l.b16 %v2992
    %v3105 = vunpack.c.h.b16 %v2992
    %v3106 = vunpack.c.l.b16 %v2993
    %v3107 = vunpack.c.h.b16 %v2993
    %v3108 = vpack.c.b16 %v3034, %v3032
    %v3109 = vpack.c.b16 %v3035, %v3033
    %v3110 = vpack.c.b16 %v3038, %v3036
    %v3111 = vpack.c.b16 %v3039, %v3037
    %v3112 = vpack.c.b16 %v3042, %v3040
    %v3113 = vpack.c.b16 %v3043, %v3041
    %v3114 = vpack.c.b16 %v3046, %v3044
    %v3115 = vpack.c.b16 %v3047, %v3045
    %v3116 = vpack.c.b16 %v3050, %v3048
    %v3117 = vpack.c.b16 %v3051, %v3049
    %v3118 = vpack.c.b16 %v3054, %v3052
    %v3119 = vpack.c.b16 %v3055, %v3053
    %v3120 = vpack.c.b16 %v3058, %v3056
    %v3121 = vpack.c.b16 %v3059, %v3057
    %v3122 = vpack.c.b16 %v3062, %v3060
    %v3123 = vpack.c.b16 %v3063, %v3061
    %v3124 = vpack.c.b16 %v3066, %v3064
    %v3125 = vpack.c.b16 %v3067, %v3065
    %v3126 = vpack.c.b16 %v3070, %v3068
    %v3127 = vpack.c.b16 %v3071, %v3069
    %v3128 = vpack.c.b16 %v3074, %v3072
    %v3129 = vpack.c.b16 %v3075, %v3073
    %v3130 = vpack.c.b16 %v3078, %v3076
    %v3131 = vpack.c.b16 %v3079, %v3077
    %v3132 = vpack.c.b16 %v3082, %v3080
    %v3133 = vpack.c.b16 %v3083, %v3081
    %v3134 = vpack.c.b16 %v3086, %v3084
    %v3135 = vpack.c.b16 %v3087, %v3085
    %v3136 = vpack.c.b16 %v3090, %v3088
    %v3137 = vpack.c.b16 %v3091, %v3089
    %v3138 = vpack.c.b16 %v3094, %v3092
    %v3139 = vpack.c.b16 %v3095, %v3093
    %v3140 = vpack.c.b16 %v3098, %v3096
    %v3141 = vpack.c.b16 %v3099, %v3097
    %v3142 = vpack.c.b16 %v3102, %v3100
    %v3143 = vpack.c.b16 %v3103, %v3101
    %v3144 = vpack.c.b16 %v3106, %v3104
    %v3145 = vpack.c.b16 %v3107, %v3105
    %vm3182 = vcmask 359424
    %v3184 = vsel %vm3182, %v2952, 0
    %v3187 = vsel %vm3182, %v2955, 0
    %vm3189 = vcmask 1045504
    %v3191 = vsel %vm3189, %v3144, 0
    %v3194 = vsel %vm3189, %v3145, 0
    %3196 = vmatpush.bf16.msra.mxu0 %v3122
    %3197 = vmatpush.bf16.msra.mxu0 %v3120
    %3198 = vmatpush.bf16.msra.mxu0 %v3118
    %3199 = vmatpush.bf16.msra.mxu0 %v3116
    %3200 = vmatpush.bf16.msra.mxu0 %v3114
    %3201 = vmatpush.bf16.msra.mxu0 %v3112
    %3202 = vmatpush.bf16.msra.mxu0 %v3110
    %3203 = vmatpush.bf16.msra.mxu0 %v3108
    %3204 = vmatmul.bf16.gmra.mxu0 %v2950
    %v3205 = vpop.f32.mrf.mxu0
    %v3206 = vadd.f32 0.0, %v3205
    %v3207 = vpop.f32.mrf.mxu0
    %v3208 = vadd.f32 0.0, %v3207
    %3209 = vmatmul.bf16.gmra.mxu0 %v2953
    %v3210 = vpop.f32.mrf.mxu0
    %v3211 = vadd.f32 0.0, %v3210
    %v3212 = vpop.f32.mrf.mxu0
    %v3213 = vadd.f32 0.0, %v3212
    %3214 = vdwg.mxu0
    %3215 = vmatpush.bf16.msra.mxu0 %v3138
    %3216 = vmatpush.bf16.msra.mxu0 %v3136
    %3217 = vmatpush.bf16.msra.mxu0 %v3134
    %3218 = vmatpush.bf16.msra.mxu0 %v3132
    %3219 = vmatpush.bf16.msra.mxu0 %v3130
    %3220 = vmatpush.bf16.msra.mxu0 %v3128
    %3221 = vmatpush.bf16.msra.mxu0 %v3126
    %3222 = vmatpush.bf16.msra.mxu0 %v3124
    %3223 = vmatmul.bf16.gmra.mxu0 %v2951
    %v3224 = vpop.f32.mrf.mxu0
    %v3225 = vadd.f32 %v3206, %v3224
    %v3226 = vpop.f32.mrf.mxu0
    %v3227 = vadd.f32 %v3208, %v3226
    %3228 = vmatmul.bf16.gmra.mxu0 %v2954
    %v3229 = vpop.f32.mrf.mxu0
    %v3230 = vadd.f32 %v3211, %v3229
    %v3231 = vpop.f32.mrf.mxu0
    %v3232 = vadd.f32 %v3213, %v3231
    %3233 = vdwg.mxu0
    %3234 = vmatpush.bf16.msra.mxu0 0
    %3235 = vmatpush.bf16.msra.mxu0 0
    %3236 = vmatpush.bf16.msra.mxu0 0
    %3237 = vmatpush.bf16.msra.mxu0 0
    %3238 = vmatpush.bf16.msra.mxu0 0
    %3239 = vmatpush.bf16.msra.mxu0 %v3191
    %3240 = vmatpush.bf16.msra.mxu0 %v3142
    %3241 = vmatpush.bf16.msra.mxu0 %v3140
    %3242 = vmatmul.bf16.gmra.mxu0 %v3184
    %v3243 = vpop.f32.mrf.mxu0
    %v3244 = vadd.f32 %v3225, %v3243
    %v3245 = vpop.f32.mrf.mxu0
    %v3246 = vadd.f32 %v3227, %v3245
    %3247 = vmatmul.bf16.gmra.mxu0 %v3187
    %v3248 = vpop.f32.mrf.mxu0
    %v3249 = vadd.f32 %v3230, %v3248
    %v3250 = vpop.f32.mrf.mxu0
    %v3251 = vadd.f32 %v3232, %v3250
    %3252 = vdwg.mxu0
    %3253 = vmatpush.bf16.msra.mxu0 %v3123
    %3254 = vmatpush.bf16.msra.mxu0 %v3121
    %3255 = vmatpush.bf16.msra.mxu0 %v3119
    %3256 = vmatpush.bf16.msra.mxu0 %v3117
    %3257 = vmatpush.bf16.msra.mxu0 %v3115
    %3258 = vmatpush.bf16.msra.mxu0 %v3113
    %3259 = vmatpush.bf16.msra.mxu0 %v3111
    %3260 = vmatpush.bf16.msra.mxu0 %v3109
    %3261 = vmatmul.bf16.gmra.mxu0 %v2950
    %v3262 = vpop.f32.mrf.mxu0
    %v3263 = vadd.f32 0.0, %v3262
    %v3264 = vpop.f32.mrf.mxu0
    %v3265 = vadd.f32 0.0, %v3264
    %3266 = vmatmul.bf16.gmra.mxu0 %v2953
    %v3267 = vpop.f32.mrf.mxu0
    %v3268 = vadd.f32 0.0, %v3267
    %v3269 = vpop.f32.mrf.mxu0
    %v3270 = vadd.f32 0.0, %v3269
    %3271 = vdwg.mxu0
    %3272 = vmatpush.bf16.msra.mxu0 %v3139
    %3273 = vmatpush.bf16.msra.mxu0 %v3137
    %3274 = vmatpush.bf16.msra.mxu0 %v3135
    %3275 = vmatpush.bf16.msra.mxu0 %v3133
    %3276 = vmatpush.bf16.msra.mxu0 %v3131
    %3277 = vmatpush.bf16.msra.mxu0 %v3129
    %3278 = vmatpush.bf16.msra.mxu0 %v3127
    %3279 = vmatpush.bf16.msra.mxu0 %v3125
    %3280 = vmatmul.bf16.gmra.mxu0 %v2951
    %v3281 = vpop.f32.mrf.mxu0
    %v3282 = vadd.f32 %v3263, %v3281
    %v3283 = vpop.f32.mrf.mxu0
    %v3284 = vadd.f32 %v3265, %v3283
    %3285 = vmatmul.bf16.gmra.mxu0 %v2954
    %v3286 = vpop.f32.mrf.mxu0
    %v3287 = vadd.f32 %v3268, %v3286
    %v3288 = vpop.f32.mrf.mxu0
    %v3289 = vadd.f32 %v3270, %v3288
    %3290 = vdwg.mxu0
    %3291 = vmatpush.bf16.msra.mxu0 0
    %3292 = vmatpush.bf16.msra.mxu0 0
    %3293 = vmatpush.bf16.msra.mxu0 0
    %3294 = vmatpush.bf16.msra.mxu0 0
    %3295 = vmatpush.bf16.msra.mxu0 0
    %3296 = vmatpush.bf16.msra.mxu0 %v3194
    %3297 = vmatpush.bf16.msra.mxu0 %v3143
    %3298 = vmatpush.bf16.msra.mxu0 %v3141
    %3299 = vmatmul.bf16.gmra.mxu0 %v3184
    %v3300 = vpop.f32.mrf.mxu0
    %v3301 = vadd.f32 %v3282, %v3300
    %v3302 = vpop.f32.mrf.mxu0
    %v3303 = vadd.f32 %v3284, %v3302
    %3304 = vmatmul.bf16.gmra.mxu0 %v3187
    %v3305 = vpop.f32.mrf.mxu0
    %v3306 = vadd.f32 %v3287, %v3305
    %v3307 = vpop.f32.mrf.mxu0
    %v3308 = vadd.f32 %v3289, %v3307
    %3309 = vdwg.mxu0
    %v3329 = vunpack.c.l.b16 %v2931
    %v3330 = vunpack.c.h.b16 %v2931
    %v3331 = vunpack.c.l.b16 %v2932
    %v3332 = vunpack.c.h.b16 %v2932
    %v3333 = vunpack.c.l.b16 %v2933
    %v3334 = vunpack.c.h.b16 %v2933
    %v3335 = vunpack.c.l.b16 %v2934
    %v3336 = vunpack.c.h.b16 %v2934
    %v3337 = vunpack.c.l.b16 %v2935
    %v3338 = vunpack.c.h.b16 %v2935
    %v3339 = vunpack.c.l.b16 %v2936
    %v3340 = vunpack.c.h.b16 %v2936
    %v3341 = vunpack.c.l.b16 %v2937
    %v3342 = vunpack.c.h.b16 %v2937
    %v3343 = vunpack.c.l.b16 %v2938
    %v3344 = vunpack.c.h.b16 %v2938
    %v3345 = vunpack.c.l.b16 %v2939
    %v3346 = vunpack.c.h.b16 %v2939
    %v3347 = vunpack.c.l.b16 %v2940
    %v3348 = vunpack.c.h.b16 %v2940
    %v3349 = vunpack.c.l.b16 %v2941
    %v3350 = vunpack.c.h.b16 %v2941
    %v3351 = vunpack.c.l.b16 %v2942
    %v3352 = vunpack.c.h.b16 %v2942
    %v3353 = vunpack.c.l.b16 %v2943
    %v3354 = vunpack.c.h.b16 %v2943
    %v3355 = vunpack.c.l.b16 %v2944
    %v3356 = vunpack.c.h.b16 %v2944
    %v3357 = vunpack.c.l.b16 %v2945
    %v3358 = vunpack.c.h.b16 %v2945
    %v3359 = vunpack.c.l.b16 %v2946
    %v3360 = vunpack.c.h.b16 %v2946
    %v3361 = vunpack.c.l.b16 %v2947
    %v3362 = vunpack.c.h.b16 %v2947
    %v3363 = vunpack.c.l.b16 %v2948
    %v3364 = vunpack.c.h.b16 %v2948
    %v3365 = vunpack.c.l.b16 %v2949
    %v3366 = vunpack.c.h.b16 %v2949
    %v3367 = vpack.c.b16 %v3331, %v3329
    %v3368 = vpack.c.b16 %v3332, %v3330
    %v3369 = vpack.c.b16 %v3335, %v3333
    %v3370 = vpack.c.b16 %v3336, %v3334
    %v3371 = vpack.c.b16 %v3339, %v3337
    %v3372 = vpack.c.b16 %v3340, %v3338
    %v3373 = vpack.c.b16 %v3343, %v3341
    %v3374 = vpack.c.b16 %v3344, %v3342
    %v3375 = vpack.c.b16 %v3347, %v3345
    %v3376 = vpack.c.b16 %v3348, %v3346
    %v3377 = vpack.c.b16 %v3351, %v3349
    %v3378 = vpack.c.b16 %v3352, %v3350
    %v3379 = vpack.c.b16 %v3355, %v3353
    %v3380 = vpack.c.b16 %v3356, %v3354
    %v3381 = vpack.c.b16 %v3359, %v3357
    %v3382 = vpack.c.b16 %v3360, %v3358
    %v3383 = vpack.c.b16 %v3363, %v3361
    %v3384 = vpack.c.b16 %v3364, %v3362
    %v3385 = vpack.c.b16 %v3365, %v3365
    %v3386 = vpack.c.b16 %v3366, %v3366
    %v3406 = vsel %vm997, %v2928, 0
    %v3409 = vsel %vm997, %v2930, 0
    %v3412 = vsel %vm1004, %v3385, 0
    %v3415 = vsel %vm1004, %v3386, 0
    %3417 = vmatpush.bf16.msra.mxu0 %v3381
    %3418 = vmatpush.bf16.msra.mxu0 %v3379
    %3419 = vmatpush.bf16.msra.mxu0 %v3377
    %3420 = vmatpush.bf16.msra.mxu0 %v3375
    %3421 = vmatpush.bf16.msra.mxu0 %v3373
    %3422 = vmatpush.bf16.msra.mxu0 %v3371
    %3423 = vmatpush.bf16.msra.mxu0 %v3369
    %3424 = vmatpush.bf16.msra.mxu0 %v3367
    %3425 = vmatmul.bf16.gmra.mxu0 %v2927
    %v3426 = vpop.f32.mrf.mxu0
    %v3427 = vadd.f32 %v3244, %v3426
    %v3428 = vpop.f32.mrf.mxu0
    %v3429 = vadd.f32 %v3246, %v3428
    %3430 = vmatmul.bf16.gmra.mxu0 %v2929
    %v3431 = vpop.f32.mrf.mxu0
    %v3432 = vadd.f32 %v3249, %v3431
    %v3433 = vpop.f32.mrf.mxu0
    %v3434 = vadd.f32 %v3251, %v3433
    %3435 = vdwg.mxu0
    %3436 = vmatpush.bf16.msra.mxu0 0
    %3437 = vmatpush.bf16.msra.mxu0 0
    %3438 = vmatpush.bf16.msra.mxu0 0
    %3439 = vmatpush.bf16.msra.mxu0 0
    %3440 = vmatpush.bf16.msra.mxu0 0
    %3441 = vmatpush.bf16.msra.mxu0 0
    %3442 = vmatpush.bf16.msra.mxu0 %v3412
    %3443 = vmatpush.bf16.msra.mxu0 %v3383
    %3444 = vmatmul.bf16.gmra.mxu0 %v3406
    %v3445 = vpop.f32.mrf.mxu0
    %v3446 = vadd.f32 %v3427, %v3445
    %v3447 = vpop.f32.mrf.mxu0
    %v3448 = vadd.f32 %v3429, %v3447
    %3449 = vmatmul.bf16.gmra.mxu0 %v3409
    %v3450 = vpop.f32.mrf.mxu0
    %v3451 = vadd.f32 %v3432, %v3450
    %v3452 = vpop.f32.mrf.mxu0
    %v3453 = vadd.f32 %v3434, %v3452
    %3454 = vdwg.mxu0
    %3455 = vmatpush.bf16.msra.mxu0 %v3382
    %3456 = vmatpush.bf16.msra.mxu0 %v3380
    %3457 = vmatpush.bf16.msra.mxu0 %v3378
    %3458 = vmatpush.bf16.msra.mxu0 %v3376
    %3459 = vmatpush.bf16.msra.mxu0 %v3374
    %3460 = vmatpush.bf16.msra.mxu0 %v3372
    %3461 = vmatpush.bf16.msra.mxu0 %v3370
    %3462 = vmatpush.bf16.msra.mxu0 %v3368
    %3463 = vmatmul.bf16.gmra.mxu0 %v2927
    %v3464 = vpop.f32.mrf.mxu0
    %v3465 = vadd.f32 %v3301, %v3464
    %v3466 = vpop.f32.mrf.mxu0
    %v3467 = vadd.f32 %v3303, %v3466
    %3468 = vmatmul.bf16.gmra.mxu0 %v2929
    %v3469 = vpop.f32.mrf.mxu0
    %v3470 = vadd.f32 %v3306, %v3469
    %v3471 = vpop.f32.mrf.mxu0
    %v3472 = vadd.f32 %v3308, %v3471
    %3473 = vdwg.mxu0
    %3474 = vmatpush.bf16.msra.mxu0 0
    %3475 = vmatpush.bf16.msra.mxu0 0
    %3476 = vmatpush.bf16.msra.mxu0 0
    %3477 = vmatpush.bf16.msra.mxu0 0
    %3478 = vmatpush.bf16.msra.mxu0 0
    %3479 = vmatpush.bf16.msra.mxu0 0
    %3480 = vmatpush.bf16.msra.mxu0 %v3415
    %3481 = vmatpush.bf16.msra.mxu0 %v3384
    %3482 = vmatmul.bf16.gmra.mxu0 %v3406
    %v3483 = vpop.f32.mrf.mxu0
    %v3484 = vadd.f32 %v3465, %v3483
    %v3485 = vpop.f32.mrf.mxu0
    %v3486 = vadd.f32 %v3467, %v3485
    %3487 = vmatmul.bf16.gmra.mxu0 %v3409
    %v3488 = vpop.f32.mrf.mxu0
    %v3489 = vadd.f32 %v3470, %v3488
    %v3490 = vpop.f32.mrf.mxu0
    %v3491 = vadd.f32 %v3472, %v3490
    %3492 = vdwg.mxu0
    %v3493 = vld [vmem:[%s15] sm:$0xff]
    %v3494 = vld [vmem:[%s15 + $0x8] sm:$0xff]
    %v3495 = vld [vmem:[%s15 + $0x10] sm:$0xff]
    %v3496 = vld [vmem:[%s15 + $0x18] sm:$0xff]
    %v3497 = vld [vmem:[%s15 + $0x20] sm:$0xff]
    %v3498 = vld [vmem:[%s15 + $0x28] sm:$0xff]
    %v3499 = vld [vmem:[%s15 + $0x30] sm:$0xff]
    %v3500 = vld [vmem:[%s15 + $0x38] sm:$0xff]
    %v3501 = vld [vmem:[%s15 + $0x40] sm:$0xff]
    %v3502 = vld [vmem:[%s15 + $0x48] sm:$0xff]
    %v3503 = vld [vmem:[%s15 + $0x50] sm:$0xff]
    %v3504 = vld [vmem:[%s15 + $0x58] sm:$0xff]
    %v3505 = vld [vmem:[%s15 + $0x60] sm:$0xff]
    %v3506 = vld [vmem:[%s15 + $0x68] sm:$0xff]
    %v3507 = vld [vmem:[%s15 + $0x70] sm:$0xff]
    %v3508 = vld [vmem:[%s15 + $0x78] sm:$0xff]
    %v3513 = vunpack.c.l.b16 %v258
    %v3514 = vunpack.c.l.b16 %v265
    %v3515 = vunpack.c.l.b16 %v272
    %v3516 = vunpack.c.l.b16 %v279
    %v3517 = vpack.c.b16 %v3514, %v3513
    %v3518 = vpack.c.b16 %v3516, %v3515
    %v3537 = vunpack.c.l.b16 %v3493
    %v3538 = vunpack.c.h.b16 %v3493
    %v3539 = vunpack.c.l.b16 %v3494
    %v3540 = vunpack.c.h.b16 %v3494
    %v3541 = vunpack.c.l.b16 %v3495
    %v3542 = vunpack.c.h.b16 %v3495
    %v3543 = vunpack.c.l.b16 %v3496
    %v3544 = vunpack.c.h.b16 %v3496
    %v3545 = vunpack.c.l.b16 %v3497
    %v3546 = vunpack.c.h.b16 %v3497
    %v3547 = vunpack.c.l.b16 %v3498
    %v3548 = vunpack.c.h.b16 %v3498
    %v3549 = vunpack.c.l.b16 %v3499
    %v3550 = vunpack.c.h.b16 %v3499
    %v3551 = vunpack.c.l.b16 %v3500
    %v3552 = vunpack.c.h.b16 %v3500
    %v3553 = vunpack.c.l.b16 %v3501
    %v3554 = vunpack.c.h.b16 %v3501
    %v3555 = vunpack.c.l.b16 %v3502
    %v3556 = vunpack.c.h.b16 %v3502
    %v3557 = vunpack.c.l.b16 %v3503
    %v3558 = vunpack.c.h.b16 %v3503
    %v3559 = vunpack.c.l.b16 %v3504
    %v3560 = vunpack.c.h.b16 %v3504
    %v3561 = vunpack.c.l.b16 %v3505
    %v3562 = vunpack.c.h.b16 %v3505
    %v3563 = vunpack.c.l.b16 %v3506
    %v3564 = vunpack.c.h.b16 %v3506
    %v3565 = vunpack.c.l.b16 %v3507
    %v3566 = vunpack.c.h.b16 %v3507
    %v3567 = vunpack.c.l.b16 %v3508
    %v3568 = vunpack.c.h.b16 %v3508
    %v3569 = vpack.c.b16 %v3539, %v3537
    %v3570 = vpack.c.b16 %v3540, %v3538
    %v3571 = vpack.c.b16 %v3543, %v3541
    %v3572 = vpack.c.b16 %v3544, %v3542
    %v3573 = vpack.c.b16 %v3547, %v3545
    %v3574 = vpack.c.b16 %v3548, %v3546
    %v3575 = vpack.c.b16 %v3551, %v3549
    %v3576 = vpack.c.b16 %v3552, %v3550
    %v3577 = vpack.c.b16 %v3555, %v3553
    %v3578 = vpack.c.b16 %v3556, %v3554
    %v3579 = vpack.c.b16 %v3559, %v3557
    %v3580 = vpack.c.b16 %v3560, %v3558
    %v3581 = vpack.c.b16 %v3563, %v3561
    %v3582 = vpack.c.b16 %v3564, %v3562
    %v3583 = vpack.c.b16 %v3567, %v3565
    %v3584 = vpack.c.b16 %v3568, %v3566
    %3601 = vmatpush.bf16.msra.mxu0 %v3583
    %3602 = vmatpush.bf16.msra.mxu0 %v3581
    %3603 = vmatpush.bf16.msra.mxu0 %v3579
    %3604 = vmatpush.bf16.msra.mxu0 %v3577
    %3605 = vmatpush.bf16.msra.mxu0 %v3575
    %3606 = vmatpush.bf16.msra.mxu0 %v3573
    %3607 = vmatpush.bf16.msra.mxu0 %v3571
    %3608 = vmatpush.bf16.msra.mxu0 %v3569
    %3609 = vmatmul.bf16.gmra.mxu0 %v3517
    %v3610 = vpop.f32.mrf.mxu0
    %v3611 = vadd.f32 0.0, %v3610
    %v3612 = vpop.f32.mrf.mxu0
    %v3613 = vadd.f32 0.0, %v3612
    %3614 = vmatmul.bf16.gmra.mxu0 %v3518
    %v3615 = vpop.f32.mrf.mxu0
    %v3616 = vadd.f32 0.0, %v3615
    %v3617 = vpop.f32.mrf.mxu0
    %v3618 = vadd.f32 0.0, %v3617
    %3619 = vdwg.mxu0
    %3620 = vmatpush.bf16.msra.mxu0 %v3584
    %3621 = vmatpush.bf16.msra.mxu0 %v3582
    %3622 = vmatpush.bf16.msra.mxu0 %v3580
    %3623 = vmatpush.bf16.msra.mxu0 %v3578
    %3624 = vmatpush.bf16.msra.mxu0 %v3576
    %3625 = vmatpush.bf16.msra.mxu0 %v3574
    %3626 = vmatpush.bf16.msra.mxu0 %v3572
    %3627 = vmatpush.bf16.msra.mxu0 %v3570
    %3628 = vmatmul.bf16.gmra.mxu0 %v3517
    %v3629 = vpop.f32.mrf.mxu0
    %v3630 = vadd.f32 0.0, %v3629
    %v3631 = vpop.f32.mrf.mxu0
    %v3632 = vadd.f32 0.0, %v3631
    %3633 = vmatmul.bf16.gmra.mxu0 %v3518
    %v3634 = vpop.f32.mrf.mxu0
    %v3635 = vadd.f32 0.0, %v3634
    %v3636 = vpop.f32.mrf.mxu0
    %v3637 = vadd.f32 0.0, %v3636
    %3638 = vdwg.mxu0
    %v3639 = vadd.f32 %v3446, %v3611
    %v3640 = vadd.f32 %v3484, %v3630
    %v3641 = vadd.f32 %v3448, %v3613
    %v3642 = vadd.f32 %v3486, %v3632
    %v3643 = vadd.f32 %v3451, %v3616
    %v3644 = vadd.f32 %v3489, %v3635
    %v3645 = vadd.f32 %v3453, %v3618
    %v3646 = vadd.f32 %v3491, %v3637
    %v3647 = vld [vmem:[#allocation4] sm:$0x3]
    %v3649 = vperm.slane %v3647, 0
    %v3650 = vperm.slane %v3647, 1
    %v3653 = vadd.f32 %v3639, %v3649
    %v3654 = vadd.f32 %v3640, %v3650
    %v3655 = vadd.f32 %v3641, %v3649
    %v3656 = vadd.f32 %v3642, %v3650
    %v3657 = vadd.f32 %v3643, %v3649
    %v3658 = vadd.f32 %v3644, %v3650
    %v3659 = vadd.f32 %v3645, %v3649
    %v3660 = vadd.f32 %v3646, %v3650
    %v3661 = vmax.f32 %v3653, 0.0
    %v3662 = vmax.f32 %v3654, 0.0
    %v3663 = vmax.f32 %v3655, 0.0
    %v3664 = vmax.f32 %v3656, 0.0
    %v3665 = vmax.f32 %v3657, 0.0
    %v3666 = vmax.f32 %v3658, 0.0
    %v3667 = vmax.f32 %v3659, 0.0
    %v3668 = vmax.f32 %v3660, 0.0
    %v3669 = vld [vmem:[%s19] sm:$0xff]
    %v3670 = vld [vmem:[%s19 + $0x8] sm:$0xff]
    %v3671 = vld [vmem:[%s19 + $0x10] sm:$0xff]
    %v3672 = vld [vmem:[%s19 + $0x18] sm:$0xff]
    %v3673 = vld [vmem:[%s19 + $0x20] sm:$0xff]
    %v3674 = vld [vmem:[%s19 + $0x28] sm:$0xff]
    %v3675 = vld [vmem:[%s19 + $0x30] sm:$0xff]
    %v3676 = vld [vmem:[%s19 + $0x38] sm:$0xff]
    %v3677 = vld [vmem:[%s19 + $0x40] sm:$0xff]
    %v3678 = vld [vmem:[%s19 + $0x48] sm:$0xff]
    %v3679 = vld [vmem:[%s19 + $0x50] sm:$0xff]
    %v3680 = vld [vmem:[%s19 + $0x58] sm:$0xff]
    %v3681 = vld [vmem:[%s19 + $0x60] sm:$0xff]
    %v3682 = vld [vmem:[%s19 + $0x68] sm:$0xff]
    %v3683 = vld [vmem:[%s19 + $0x70] sm:$0xff]
    %v3684 = vld [vmem:[%s19 + $0x78] sm:$0xff]
    %v3685 = vld [vmem:[#allocation6] sm:$0x3]
    %v3687 = vperm.slane %v3685, 0
    %v3688 = vperm.slane %v3685, 1
    %v3695 = vunpack.c.l.b16 %v255
    %v3696 = vunpack.c.l.b16 %v262
    %v3697 = vunpack.c.l.b16 %v269
    %v3698 = vunpack.c.l.b16 %v276
    %v3699 = vpack.c.b16 %v3696, %v3695
    %v3700 = vpack.c.b16 %v3698, %v3697
    %v3719 = vunpack.c.l.b16 %v3669
    %v3720 = vunpack.c.h.b16 %v3669
    %v3721 = vunpack.c.l.b16 %v3670
    %v3722 = vunpack.c.h.b16 %v3670
    %v3723 = vunpack.c.l.b16 %v3671
    %v3724 = vunpack.c.h.b16 %v3671
    %v3725 = vunpack.c.l.b16 %v3672
    %v3726 = vunpack.c.h.b16 %v3672
    %v3727 = vunpack.c.l.b16 %v3673
    %v3728 = vunpack.c.h.b16 %v3673
    %v3729 = vunpack.c.l.b16 %v3674
    %v3730 = vunpack.c.h.b16 %v3674
    %v3731 = vunpack.c.l.b16 %v3675
    %v3732 = vunpack.c.h.b16 %v3675
    %v3733 = vunpack.c.l.b16 %v3676
    %v3734 = vunpack.c.h.b16 %v3676
    %v3735 = vunpack.c.l.b16 %v3677
    %v3736 = vunpack.c.h.b16 %v3677
    %v3737 = vunpack.c.l.b16 %v3678
    %v3738 = vunpack.c.h.b16 %v3678
    %v3739 = vunpack.c.l.b16 %v3679
    %v3740 = vunpack.c.h.b16 %v3679
    %v3741 = vunpack.c.l.b16 %v3680
    %v3742 = vunpack.c.h.b16 %v3680
    %v3743 = vunpack.c.l.b16 %v3681
    %v3744 = vunpack.c.h.b16 %v3681
    %v3745 = vunpack.c.l.b16 %v3682
    %v3746 = vunpack.c.h.b16 %v3682
    %v3747 = vunpack.c.l.b16 %v3683
    %v3748 = vunpack.c.h.b16 %v3683
    %v3749 = vunpack.c.l.b16 %v3684
    %v3750 = vunpack.c.h.b16 %v3684
    %v3751 = vpack.c.b16 %v3721, %v3719
    %v3752 = vpack.c.b16 %v3722, %v3720
    %v3753 = vpack.c.b16 %v3725, %v3723
    %v3754 = vpack.c.b16 %v3726, %v3724
    %v3755 = vpack.c.b16 %v3729, %v3727
    %v3756 = vpack.c.b16 %v3730, %v3728
    %v3757 = vpack.c.b16 %v3733, %v3731
    %v3758 = vpack.c.b16 %v3734, %v3732
    %v3759 = vpack.c.b16 %v3737, %v3735
    %v3760 = vpack.c.b16 %v3738, %v3736
    %v3761 = vpack.c.b16 %v3741, %v3739
    %v3762 = vpack.c.b16 %v3742, %v3740
    %v3763 = vpack.c.b16 %v3745, %v3743
    %v3764 = vpack.c.b16 %v3746, %v3744
    %v3765 = vpack.c.b16 %v3749, %v3747
    %v3766 = vpack.c.b16 %v3750, %v3748
    %3783 = vmatpush.bf16.msra.mxu0 %v3765
    %3784 = vmatpush.bf16.msra.mxu0 %v3763
    %3785 = vmatpush.bf16.msra.mxu0 %v3761
    %3786 = vmatpush.bf16.msra.mxu0 %v3759
    %3787 = vmatpush.bf16.msra.mxu0 %v3757
    %3788 = vmatpush.bf16.msra.mxu0 %v3755
    %3789 = vmatpush.bf16.msra.mxu0 %v3753
    %3790 = vmatpush.bf16.msra.mxu0 %v3751
    %3791 = vmatmul.bf16.gmra.mxu0 %v3699
    %v3792 = vpop.f32.mrf.mxu0
    %v3793 = vadd.f32 %v3687, %v3792
    %v3794 = vpop.f32.mrf.mxu0
    %v3795 = vadd.f32 %v3687, %v3794
    %3796 = vmatmul.bf16.gmra.mxu0 %v3700
    %v3797 = vpop.f32.mrf.mxu0
    %v3798 = vadd.f32 %v3687, %v3797
    %v3799 = vpop.f32.mrf.mxu0
    %v3800 = vadd.f32 %v3687, %v3799
    %3801 = vdwg.mxu0
    %3802 = vmatpush.bf16.msra.mxu0 %v3766
    %3803 = vmatpush.bf16.msra.mxu0 %v3764
    %3804 = vmatpush.bf16.msra.mxu0 %v3762
    %3805 = vmatpush.bf16.msra.mxu0 %v3760
    %3806 = vmatpush.bf16.msra.mxu0 %v3758
    %3807 = vmatpush.bf16.msra.mxu0 %v3756
    %3808 = vmatpush.bf16.msra.mxu0 %v3754
    %3809 = vmatpush.bf16.msra.mxu0 %v3752
    %3810 = vmatmul.bf16.gmra.mxu0 %v3699
    %v3811 = vpop.f32.mrf.mxu0
    %v3812 = vadd.f32 %v3688, %v3811
    %v3813 = vpop.f32.mrf.mxu0
    %v3814 = vadd.f32 %v3688, %v3813
    %3815 = vmatmul.bf16.gmra.mxu0 %v3700
    %v3816 = vpop.f32.mrf.mxu0
    %v3817 = vadd.f32 %v3688, %v3816
    %v3818 = vpop.f32.mrf.mxu0
    %v3819 = vadd.f32 %v3688, %v3818
    %3820 = vdwg.mxu0
    %v3821 = vmax.f32 %v3793, 0.0
    %v3822 = vmax.f32 %v3812, 0.0
    %v3823 = vmax.f32 %v3795, 0.0
    %v3824 = vmax.f32 %v3814, 0.0
    %v3825 = vmax.f32 %v3798, 0.0
    %v3826 = vmax.f32 %v3817, 0.0
    %v3827 = vmax.f32 %v3800, 0.0
    %v3828 = vmax.f32 %v3819, 0.0
    %s3829 = scalar_lea.vmem %s19, 128
    %v3830 = vld [vmem:[%s3829] sm:$0xff]
    %v3831 = vld [vmem:[%s3829 + $0x8] sm:$0xff]
    %v3832 = vld [vmem:[%s3829 + $0x10] sm:$0xff]
    %v3833 = vld [vmem:[%s3829 + $0x18] sm:$0xff]
    %v3834 = vld [vmem:[%s3829 + $0x20] sm:$0xff]
    %v3835 = vld [vmem:[%s3829 + $0x28] sm:$0xff]
    %v3836 = vld [vmem:[%s3829 + $0x30] sm:$0xff]
    %v3837 = vld [vmem:[%s3829 + $0x38] sm:$0xff]
    %v3838 = vld [vmem:[%s3829 + $0x40] sm:$0xff]
    %v3839 = vld [vmem:[%s3829 + $0x48] sm:$0xff]
    %v3840 = vld [vmem:[%s3829 + $0x50] sm:$0xff]
    %v3841 = vld [vmem:[%s3829 + $0x58] sm:$0xff]
    %v3842 = vld [vmem:[%s3829 + $0x60] sm:$0xff]
    %v3843 = vld [vmem:[%s3829 + $0x68] sm:$0xff]
    %v3844 = vld [vmem:[%s3829 + $0x70] sm:$0xff]
    %v3845 = vld [vmem:[%s3829 + $0x78] sm:$0xff]
    %s3846 = scalar_lea.vmem [#allocation6], 2
    %v3847 = vld [vmem:[%s3846] sm:$0x3]
    %v3849 = vperm.slane %v3847, 0
    %v3850 = vperm.slane %v3847, 1
    %v3853 = vunpack.c.h.b16 %v255
    %v3854 = vunpack.c.h.b16 %v262
    %v3855 = vunpack.c.h.b16 %v269
    %v3856 = vunpack.c.h.b16 %v276
    %v3857 = vpack.c.b16 %v3854, %v3853
    %v3858 = vpack.c.b16 %v3856, %v3855
    %v3877 = vunpack.c.l.b16 %v3830
    %v3878 = vunpack.c.h.b16 %v3830
    %v3879 = vunpack.c.l.b16 %v3831
    %v3880 = vunpack.c.h.b16 %v3831
    %v3881 = vunpack.c.l.b16 %v3832
    %v3882 = vunpack.c.h.b16 %v3832
    %v3883 = vunpack.c.l.b16 %v3833
    %v3884 = vunpack.c.h.b16 %v3833
    %v3885 = vunpack.c.l.b16 %v3834
    %v3886 = vunpack.c.h.b16 %v3834
    %v3887 = vunpack.c.l.b16 %v3835
    %v3888 = vunpack.c.h.b16 %v3835
    %v3889 = vunpack.c.l.b16 %v3836
    %v3890 = vunpack.c.h.b16 %v3836
    %v3891 = vunpack.c.l.b16 %v3837
    %v3892 = vunpack.c.h.b16 %v3837
    %v3893 = vunpack.c.l.b16 %v3838
    %v3894 = vunpack.c.h.b16 %v3838
    %v3895 = vunpack.c.l.b16 %v3839
    %v3896 = vunpack.c.h.b16 %v3839
    %v3897 = vunpack.c.l.b16 %v3840
    %v3898 = vunpack.c.h.b16 %v3840
    %v3899 = vunpack.c.l.b16 %v3841
    %v3900 = vunpack.c.h.b16 %v3841
    %v3901 = vunpack.c.l.b16 %v3842
    %v3902 = vunpack.c.h.b16 %v3842
    %v3903 = vunpack.c.l.b16 %v3843
    %v3904 = vunpack.c.h.b16 %v3843
    %v3905 = vunpack.c.l.b16 %v3844
    %v3906 = vunpack.c.h.b16 %v3844
    %v3907 = vunpack.c.l.b16 %v3845
    %v3908 = vunpack.c.h.b16 %v3845
    %v3909 = vpack.c.b16 %v3879, %v3877
    %v3910 = vpack.c.b16 %v3880, %v3878
    %v3911 = vpack.c.b16 %v3883, %v3881
    %v3912 = vpack.c.b16 %v3884, %v3882
    %v3913 = vpack.c.b16 %v3887, %v3885
    %v3914 = vpack.c.b16 %v3888, %v3886
    %v3915 = vpack.c.b16 %v3891, %v3889
    %v3916 = vpack.c.b16 %v3892, %v3890
    %v3917 = vpack.c.b16 %v3895, %v3893
    %v3918 = vpack.c.b16 %v3896, %v3894
    %v3919 = vpack.c.b16 %v3899, %v3897
    %v3920 = vpack.c.b16 %v3900, %v3898
    %v3921 = vpack.c.b16 %v3903, %v3901
    %v3922 = vpack.c.b16 %v3904, %v3902
    %v3923 = vpack.c.b16 %v3907, %v3905
    %v3924 = vpack.c.b16 %v3908, %v3906
    %3941 = vmatpush.bf16.msra.mxu0 %v3923
    %3942 = vmatpush.bf16.msra.mxu0 %v3921
    %3943 = vmatpush.bf16.msra.mxu0 %v3919
    %3944 = vmatpush.bf16.msra.mxu0 %v3917
    %3945 = vmatpush.bf16.msra.mxu0 %v3915
    %3946 = vmatpush.bf16.msra.mxu0 %v3913
    %3947 = vmatpush.bf16.msra.mxu0 %v3911
    %3948 = vmatpush.bf16.msra.mxu0 %v3909
    %3949 = vmatmul.bf16.gmra.mxu0 %v3857
    %v3950 = vpop.f32.mrf.mxu0
    %v3951 = vadd.f32 %v3849, %v3950
    %v3952 = vpop.f32.mrf.mxu0
    %v3953 = vadd.f32 %v3849, %v3952
    %3954 = vmatmul.bf16.gmra.mxu0 %v3858
    %v3955 = vpop.f32.mrf.mxu0
    %v3956 = vadd.f32 %v3849, %v3955
    %v3957 = vpop.f32.mrf.mxu0
    %v3958 = vadd.f32 %v3849, %v3957
    %3959 = vdwg.mxu0
    %3960 = vmatpush.bf16.msra.mxu0 %v3924
    %3961 = vmatpush.bf16.msra.mxu0 %v3922
    %3962 = vmatpush.bf16.msra.mxu0 %v3920
    %3963 = vmatpush.bf16.msra.mxu0 %v3918
    %3964 = vmatpush.bf16.msra.mxu0 %v3916
    %3965 = vmatpush.bf16.msra.mxu0 %v3914
    %3966 = vmatpush.bf16.msra.mxu0 %v3912
    %3967 = vmatpush.bf16.msra.mxu0 %v3910
    %3968 = vmatmul.bf16.gmra.mxu0 %v3857
    %v3969 = vpop.f32.mrf.mxu0
    %v3970 = vadd.f32 %v3850, %v3969
    %v3971 = vpop.f32.mrf.mxu0
    %v3972 = vadd.f32 %v3850, %v3971
    %3973 = vmatmul.bf16.gmra.mxu0 %v3858
    %v3974 = vpop.f32.mrf.mxu0
    %v3975 = vadd.f32 %v3850, %v3974
    %v3976 = vpop.f32.mrf.mxu0
    %v3977 = vadd.f32 %v3850, %v3976
    %3978 = vdwg.mxu0
    %v3979 = vmax.f32 %v3951, 0.0
    %v3980 = vmax.f32 %v3970, 0.0
    %v3981 = vmax.f32 %v3953, 0.0
    %v3982 = vmax.f32 %v3972, 0.0
    %v3983 = vmax.f32 %v3956, 0.0
    %v3984 = vmax.f32 %v3975, 0.0
    %v3985 = vmax.f32 %v3958, 0.0
    %v3986 = vmax.f32 %v3977, 0.0
    %v3987 = vpack.c.bf16 %v3981, %v3979
    %v3988 = vpack.c.bf16 %v3982, %v3980
    %v3989 = vpack.c.bf16 %v3985, %v3983
    %v3990 = vpack.c.bf16 %v3986, %v3984
    %v3991 = vld [vmem:[%s23] sm:$0xff]
    %v3992 = vld [vmem:[%s23 + $0x8] sm:$0xf]
    %v3993 = vld [vmem:[%s23 + $0xc] sm:$0xff]
    %v3994 = vld [vmem:[%s23 + $0x14] sm:$0xf]
    %v3995 = vld [vmem:[%s23 + $0x18] sm:$0xff]
    %v3996 = vld [vmem:[%s23 + $0x20] sm:$0xf]
    %v3997 = vld [vmem:[%s23 + $0x24] sm:$0xff]
    %v3998 = vld [vmem:[%s23 + $0x2c] sm:$0xf]
    %v3999 = vld [vmem:[%s23 + $0x30] sm:$0xff]
    %v4000 = vld [vmem:[%s23 + $0x38] sm:$0xf]
    %v4001 = vld [vmem:[%s23 + $0x3c] sm:$0xff]
    %v4002 = vld [vmem:[%s23 + $0x44] sm:$0xf]
    %v4003 = vld [vmem:[%s23 + $0x48] sm:$0xff]
    %v4004 = vld [vmem:[%s23 + $0x50] sm:$0xf]
    %v4005 = vld [vmem:[%s23 + $0x54] sm:$0xff]
    %v4006 = vld [vmem:[%s23 + $0x5c] sm:$0xf]
    %v4007 = vld [vmem:[%s23 + $0x60] sm:$0xff]
    %v4008 = vld [vmem:[%s23 + $0x68] sm:$0xf]
    %v4009 = vld [vmem:[%s23 + $0x6c] sm:$0xff]
    %v4010 = vld [vmem:[%s23 + $0x74] sm:$0xf]
    %v4011 = vld [vmem:[%s23 + $0x78] sm:$0xff]
    %v4012 = vld [vmem:[%s23 + $0x80] sm:$0xf]
    %v4013 = vld [vmem:[%s23 + $0x84] sm:$0xff]
    %v4014 = vld [vmem:[%s23 + $0x8c] sm:$0xf]
    %v4015 = vld [vmem:[%s23 + $0x90] sm:$0xff]
    %v4016 = vld [vmem:[%s23 + $0x98] sm:$0xf]
    %v4017 = vld [vmem:[%s23 + $0x9c] sm:$0xff]
    %v4018 = vld [vmem:[%s23 + $0xa4] sm:$0xf]
    %v4019 = vld [vmem:[%s23 + $0xa8] sm:$0xff]
    %v4020 = vld [vmem:[%s23 + $0xb0] sm:$0xf]
    %v4021 = vld [vmem:[%s23 + $0xb4] sm:$0xff]
    %v4022 = vld [vmem:[%s23 + $0xbc] sm:$0xf]
    %v4023 = vld [vmem:[%s23 + $0xc0] sm:$0xff]
    %v4024 = vld [vmem:[%s23 + $0xc8] sm:$0xf]
    %v4025 = vld [vmem:[%s23 + $0xcc] sm:$0xff]
    %v4026 = vld [vmem:[%s23 + $0xd4] sm:$0xf]
    %v4027 = vld [vmem:[%s23 + $0xd8] sm:$0x77]
    %v4028 = vld [vmem:[%s23 + $0xe0] sm:$0x7]
    %s4029 = scalar_lea.vmem %s19, 256
    %v4030 = vld [vmem:[%s4029] sm:$0xff]
    %v4031 = vld [vmem:[%s4029 + $0x8] sm:$0xff]
    %v4032 = vld [vmem:[%s4029 + $0x10] sm:$0xff]
    %v4033 = vld [vmem:[%s4029 + $0x18] sm:$0xff]
    %v4034 = vld [vmem:[%s4029 + $0x20] sm:$0xff]
    %v4035 = vld [vmem:[%s4029 + $0x28] sm:$0xff]
    %v4036 = vld [vmem:[%s4029 + $0x30] sm:$0xff]
    %v4037 = vld [vmem:[%s4029 + $0x38] sm:$0xff]
    %v4038 = vld [vmem:[%s4029 + $0x40] sm:$0xff]
    %v4039 = vld [vmem:[%s4029 + $0x48] sm:$0xff]
    %v4040 = vld [vmem:[%s4029 + $0x50] sm:$0xff]
    %v4041 = vld [vmem:[%s4029 + $0x58] sm:$0xff]
    %v4042 = vld [vmem:[%s4029 + $0x60] sm:$0xff]
    %v4043 = vld [vmem:[%s4029 + $0x68] sm:$0xff]
    %v4044 = vld [vmem:[%s4029 + $0x70] sm:$0xff]
    %v4045 = vld [vmem:[%s4029 + $0x78] sm:$0xff]
    %s4046 = scalar_lea.vmem [#allocation6], 4
    %v4047 = vld [vmem:[%s4046] sm:$0x3]
    %v4049 = vperm.slane %v4047, 0
    %v4050 = vperm.slane %v4047, 1
    %v4057 = vunpack.c.l.b16 %v256
    %v4058 = vunpack.c.l.b16 %v263
    %v4059 = vunpack.c.l.b16 %v270
    %v4060 = vunpack.c.l.b16 %v277
    %v4061 = vpack.c.b16 %v4058, %v4057
    %v4062 = vpack.c.b16 %v4060, %v4059
    %v4081 = vunpack.c.l.b16 %v4030
    %v4082 = vunpack.c.h.b16 %v4030
    %v4083 = vunpack.c.l.b16 %v4031
    %v4084 = vunpack.c.h.b16 %v4031
    %v4085 = vunpack.c.l.b16 %v4032
    %v4086 = vunpack.c.h.b16 %v4032
    %v4087 = vunpack.c.l.b16 %v4033
    %v4088 = vunpack.c.h.b16 %v4033
    %v4089 = vunpack.c.l.b16 %v4034
    %v4090 = vunpack.c.h.b16 %v4034
    %v4091 = vunpack.c.l.b16 %v4035
    %v4092 = vunpack.c.h.b16 %v4035
    %v4093 = vunpack.c.l.b16 %v4036
    %v4094 = vunpack.c.h.b16 %v4036
    %v4095 = vunpack.c.l.b16 %v4037
    %v4096 = vunpack.c.h.b16 %v4037
    %v4097 = vunpack.c.l.b16 %v4038
    %v4098 = vunpack.c.h.b16 %v4038
    %v4099 = vunpack.c.l.b16 %v4039
    %v4100 = vunpack.c.h.b16 %v4039
    %v4101 = vunpack.c.l.b16 %v4040
    %v4102 = vunpack.c.h.b16 %v4040
    %v4103 = vunpack.c.l.b16 %v4041
    %v4104 = vunpack.c.h.b16 %v4041
    %v4105 = vunpack.c.l.b16 %v4042
    %v4106 = vunpack.c.h.b16 %v4042
    %v4107 = vunpack.c.l.b16 %v4043
    %v4108 = vunpack.c.h.b16 %v4043
    %v4109 = vunpack.c.l.b16 %v4044
    %v4110 = vunpack.c.h.b16 %v4044
    %v4111 = vunpack.c.l.b16 %v4045
    %v4112 = vunpack.c.h.b16 %v4045
    %v4113 = vpack.c.b16 %v4083, %v4081
    %v4114 = vpack.c.b16 %v4084, %v4082
    %v4115 = vpack.c.b16 %v4087, %v4085
    %v4116 = vpack.c.b16 %v4088, %v4086
    %v4117 = vpack.c.b16 %v4091, %v4089
    %v4118 = vpack.c.b16 %v4092, %v4090
    %v4119 = vpack.c.b16 %v4095, %v4093
    %v4120 = vpack.c.b16 %v4096, %v4094
    %v4121 = vpack.c.b16 %v4099, %v4097
    %v4122 = vpack.c.b16 %v4100, %v4098
    %v4123 = vpack.c.b16 %v4103, %v4101
    %v4124 = vpack.c.b16 %v4104, %v4102
    %v4125 = vpack.c.b16 %v4107, %v4105
    %v4126 = vpack.c.b16 %v4108, %v4106
    %v4127 = vpack.c.b16 %v4111, %v4109
    %v4128 = vpack.c.b16 %v4112, %v4110
    %4145 = vmatpush.bf16.msra.mxu0 %v4127
    %4146 = vmatpush.bf16.msra.mxu0 %v4125
    %4147 = vmatpush.bf16.msra.mxu0 %v4123
    %4148 = vmatpush.bf16.msra.mxu0 %v4121
    %4149 = vmatpush.bf16.msra.mxu0 %v4119
    %4150 = vmatpush.bf16.msra.mxu0 %v4117
    %4151 = vmatpush.bf16.msra.mxu0 %v4115
    %4152 = vmatpush.bf16.msra.mxu0 %v4113
    %4153 = vmatmul.bf16.gmra.mxu0 %v4061
    %v4154 = vpop.f32.mrf.mxu0
    %v4155 = vadd.f32 %v4049, %v4154
    %v4156 = vpop.f32.mrf.mxu0
    %v4157 = vadd.f32 %v4049, %v4156
    %4158 = vmatmul.bf16.gmra.mxu0 %v4062
    %v4159 = vpop.f32.mrf.mxu0
    %v4160 = vadd.f32 %v4049, %v4159
    %v4161 = vpop.f32.mrf.mxu0
    %v4162 = vadd.f32 %v4049, %v4161
    %4163 = vdwg.mxu0
    %4164 = vmatpush.bf16.msra.mxu0 %v4128
    %4165 = vmatpush.bf16.msra.mxu0 %v4126
    %4166 = vmatpush.bf16.msra.mxu0 %v4124
    %4167 = vmatpush.bf16.msra.mxu0 %v4122
    %4168 = vmatpush.bf16.msra.mxu0 %v4120
    %4169 = vmatpush.bf16.msra.mxu0 %v4118
    %4170 = vmatpush.bf16.msra.mxu0 %v4116
    %4171 = vmatpush.bf16.msra.mxu0 %v4114
    %4172 = vmatmul.bf16.gmra.mxu0 %v4061
    %v4173 = vpop.f32.mrf.mxu0
    %v4174 = vadd.f32 %v4050, %v4173
    %v4175 = vpop.f32.mrf.mxu0
    %v4176 = vadd.f32 %v4050, %v4175
    %4177 = vmatmul.bf16.gmra.mxu0 %v4062
    %v4178 = vpop.f32.mrf.mxu0
    %v4179 = vadd.f32 %v4050, %v4178
    %v4180 = vpop.f32.mrf.mxu0
    %v4181 = vadd.f32 %v4050, %v4180
    %4182 = vdwg.mxu0
    %v4183 = vmax.f32 %v4155, 0.0
    %v4184 = vmax.f32 %v4174, 0.0
    %v4185 = vmax.f32 %v4157, 0.0
    %v4186 = vmax.f32 %v4176, 0.0
    %v4187 = vmax.f32 %v4160, 0.0
    %v4188 = vmax.f32 %v4179, 0.0
    %v4189 = vmax.f32 %v4162, 0.0
    %v4190 = vmax.f32 %v4181, 0.0
    %v4191 = vpack.c.bf16 %v4185, %v4183
    %v4192 = vpack.c.bf16 %v4186, %v4184
    %v4193 = vpack.c.bf16 %v4189, %v4187
    %v4194 = vpack.c.bf16 %v4190, %v4188
    %s4195 = scalar_lea.vmem %s23, 228
    %v4196 = vld [vmem:[%s4195] sm:$0xff]
    %v4197 = vld [vmem:[%s4195 + $0x8] sm:$0xf]
    %v4198 = vld [vmem:[%s4195 + $0xc] sm:$0xff]
    %v4199 = vld [vmem:[%s4195 + $0x14] sm:$0xf]
    %v4200 = vld [vmem:[%s4195 + $0x18] sm:$0xff]
    %v4201 = vld [vmem:[%s4195 + $0x20] sm:$0xf]
    %v4202 = vld [vmem:[%s4195 + $0x24] sm:$0xff]
    %v4203 = vld [vmem:[%s4195 + $0x2c] sm:$0xf]
    %v4204 = vld [vmem:[%s4195 + $0x30] sm:$0xff]
    %v4205 = vld [vmem:[%s4195 + $0x38] sm:$0xf]
    %v4206 = vld [vmem:[%s4195 + $0x3c] sm:$0xff]
    %v4207 = vld [vmem:[%s4195 + $0x44] sm:$0xf]
    %v4208 = vld [vmem:[%s4195 + $0x48] sm:$0xff]
    %v4209 = vld [vmem:[%s4195 + $0x50] sm:$0xf]
    %v4210 = vld [vmem:[%s4195 + $0x54] sm:$0xff]
    %v4211 = vld [vmem:[%s4195 + $0x5c] sm:$0xf]
    %v4212 = vld [vmem:[%s4195 + $0x60] sm:$0xff]
    %v4213 = vld [vmem:[%s4195 + $0x68] sm:$0xf]
    %v4214 = vld [vmem:[%s4195 + $0x6c] sm:$0xff]
    %v4215 = vld [vmem:[%s4195 + $0x74] sm:$0xf]
    %v4216 = vld [vmem:[%s4195 + $0x78] sm:$0xff]
    %v4217 = vld [vmem:[%s4195 + $0x80] sm:$0xf]
    %v4218 = vld [vmem:[%s4195 + $0x84] sm:$0xff]
    %v4219 = vld [vmem:[%s4195 + $0x8c] sm:$0xf]
    %v4220 = vld [vmem:[%s4195 + $0x90] sm:$0xff]
    %v4221 = vld [vmem:[%s4195 + $0x98] sm:$0xf]
    %v4222 = vld [vmem:[%s4195 + $0x9c] sm:$0xff]
    %v4223 = vld [vmem:[%s4195 + $0xa4] sm:$0xf]
    %v4224 = vld [vmem:[%s4195 + $0xa8] sm:$0xff]
    %v4225 = vld [vmem:[%s4195 + $0xb0] sm:$0xf]
    %v4226 = vld [vmem:[%s4195 + $0xb4] sm:$0xff]
    %v4227 = vld [vmem:[%s4195 + $0xbc] sm:$0xf]
    %v4228 = vld [vmem:[%s4195 + $0xc0] sm:$0xff]
    %v4229 = vld [vmem:[%s4195 + $0xc8] sm:$0xf]
    %v4230 = vld [vmem:[%s4195 + $0xcc] sm:$0xff]
    %v4231 = vld [vmem:[%s4195 + $0xd4] sm:$0xf]
    %v4232 = vld [vmem:[%s4195 + $0xd8] sm:$0x77]
    %v4233 = vld [vmem:[%s4195 + $0xe0] sm:$0x7]
    %v4272 = vunpack.c.l.b16 %v4196
    %v4273 = vunpack.c.h.b16 %v4196
    %v4274 = vunpack.c.l.b16 %v4197
    %v4275 = vunpack.c.l.b16 %v4198
    %v4276 = vunpack.c.h.b16 %v4198
    %v4277 = vunpack.c.l.b16 %v4199
    %v4278 = vunpack.c.l.b16 %v4200
    %v4279 = vunpack.c.h.b16 %v4200
    %v4280 = vunpack.c.l.b16 %v4201
    %v4281 = vunpack.c.l.b16 %v4202
    %v4282 = vunpack.c.h.b16 %v4202
    %v4283 = vunpack.c.l.b16 %v4203
    %v4284 = vunpack.c.l.b16 %v4204
    %v4285 = vunpack.c.h.b16 %v4204
    %v4286 = vunpack.c.l.b16 %v4205
    %v4287 = vunpack.c.l.b16 %v4206
    %v4288 = vunpack.c.h.b16 %v4206
    %v4289 = vunpack.c.l.b16 %v4207
    %v4290 = vunpack.c.l.b16 %v4208
    %v4291 = vunpack.c.h.b16 %v4208
    %v4292 = vunpack.c.l.b16 %v4209
    %v4293 = vunpack.c.l.b16 %v4210
    %v4294 = vunpack.c.h.b16 %v4210
    %v4295 = vunpack.c.l.b16 %v4211
    %v4296 = vunpack.c.l.b16 %v4212
    %v4297 = vunpack.c.h.b16 %v4212
    %v4298 = vunpack.c.l.b16 %v4213
    %v4299 = vunpack.c.l.b16 %v4214
    %v4300 = vunpack.c.h.b16 %v4214
    %v4301 = vunpack.c.l.b16 %v4215
    %v4302 = vunpack.c.l.b16 %v4216
    %v4303 = vunpack.c.h.b16 %v4216
    %v4304 = vunpack.c.l.b16 %v4217
    %v4305 = vunpack.c.l.b16 %v4218
    %v4306 = vunpack.c.h.b16 %v4218
    %v4307 = vunpack.c.l.b16 %v4219
    %v4308 = vunpack.c.l.b16 %v4220
    %v4309 = vunpack.c.h.b16 %v4220
    %v4310 = vunpack.c.l.b16 %v4221
    %v4311 = vunpack.c.l.b16 %v4222
    %v4312 = vunpack.c.h.b16 %v4222
    %v4313 = vunpack.c.l.b16 %v4223
    %v4314 = vunpack.c.l.b16 %v4224
    %v4315 = vunpack.c.h.b16 %v4224
    %v4316 = vunpack.c.l.b16 %v4225
    %v4317 = vunpack.c.l.b16 %v4226
    %v4318 = vunpack.c.h.b16 %v4226
    %v4319 = vunpack.c.l.b16 %v4227
    %v4320 = vunpack.c.l.b16 %v4228
    %v4321 = vunpack.c.h.b16 %v4228
    %v4322 = vunpack.c.l.b16 %v4229
    %v4323 = vunpack.c.l.b16 %v4230
    %v4324 = vunpack.c.h.b16 %v4230
    %v4325 = vunpack.c.l.b16 %v4231
    %v4326 = vunpack.c.l.b16 %v4232
    %v4327 = vunpack.c.h.b16 %v4232
    %v4328 = vunpack.c.l.b16 %v4233
    %v4329 = vpack.c.b16 %v4275, %v4272
    %v4330 = vpack.c.b16 %v4276, %v4273
    %v4331 = vpack.c.b16 %v4277, %v4274
    %v4332 = vpack.c.b16 %v4281, %v4278
    %v4333 = vpack.c.b16 %v4282, %v4279
    %v4334 = vpack.c.b16 %v4283, %v4280
    %v4335 = vpack.c.b16 %v4287, %v4284
    %v4336 = vpack.c.b16 %v4288, %v4285
    %v4337 = vpack.c.b16 %v4289, %v4286
    %v4338 = vpack.c.b16 %v4293, %v4290
    %v4339 = vpack.c.b16 %v4294, %v4291
    %v4340 = vpack.c.b16 %v4295, %v4292
    %v4341 = vpack.c.b16 %v4299, %v4296
    %v4342 = vpack.c.b16 %v4300, %v4297
    %v4343 = vpack.c.b16 %v4301, %v4298
    %v4344 = vpack.c.b16 %v4305, %v4302
    %v4345 = vpack.c.b16 %v4306, %v4303
    %v4346 = vpack.c.b16 %v4307, %v4304
    %v4347 = vpack.c.b16 %v4311, %v4308
    %v4348 = vpack.c.b16 %v4312, %v4309
    %v4349 = vpack.c.b16 %v4313, %v4310
    %v4350 = vpack.c.b16 %v4317, %v4314
    %v4351 = vpack.c.b16 %v4318, %v4315
    %v4352 = vpack.c.b16 %v4319, %v4316
    %v4353 = vpack.c.b16 %v4323, %v4320
    %v4354 = vpack.c.b16 %v4324, %v4321
    %v4355 = vpack.c.b16 %v4325, %v4322
    %v4356 = vpack.c.b16 %v4326, %v4326
    %v4357 = vpack.c.b16 %v4327, %v4327
    %v4358 = vpack.c.b16 %v4328, %v4328
    %v4387 = vsel %vm997, %v4192, 0
    %v4390 = vsel %vm997, %v4194, 0
    %v4393 = vsel %vm1004, %v4356, 0
    %v4396 = vsel %vm1004, %v4357, 0
    %v4399 = vsel %vm1004, %v4358, 0
    %4401 = vmatpush.bf16.msra.mxu0 %v4350
    %4402 = vmatpush.bf16.msra.mxu0 %v4347
    %4403 = vmatpush.bf16.msra.mxu0 %v4344
    %4404 = vmatpush.bf16.msra.mxu0 %v4341
    %4405 = vmatpush.bf16.msra.mxu0 %v4338
    %4406 = vmatpush.bf16.msra.mxu0 %v4335
    %4407 = vmatpush.bf16.msra.mxu0 %v4332
    %4408 = vmatpush.bf16.msra.mxu0 %v4329
    %4409 = vmatmul.bf16.gmra.mxu0 %v4191
    %v4410 = vpop.f32.mrf.mxu0
    %v4411 = vadd.f32 0.0, %v4410
    %v4412 = vpop.f32.mrf.mxu0
    %v4413 = vadd.f32 0.0, %v4412
    %4414 = vmatmul.bf16.gmra.mxu0 %v4193
    %v4415 = vpop.f32.mrf.mxu0
    %v4416 = vadd.f32 0.0, %v4415
    %v4417 = vpop.f32.mrf.mxu0
    %v4418 = vadd.f32 0.0, %v4417
    %4419 = vdwg.mxu0
    %4420 = vmatpush.bf16.msra.mxu0 0
    %4421 = vmatpush.bf16.msra.mxu0 0
    %4422 = vmatpush.bf16.msra.mxu0 0
    %4423 = vmatpush.bf16.msra.mxu0 0
    %4424 = vmatpush.bf16.msra.mxu0 0
    %4425 = vmatpush.bf16.msra.mxu0 0
    %4426 = vmatpush.bf16.msra.mxu0 %v4393
    %4427 = vmatpush.bf16.msra.mxu0 %v4353
    %4428 = vmatmul.bf16.gmra.mxu0 %v4387
    %v4429 = vpop.f32.mrf.mxu0
    %v4430 = vadd.f32 %v4411, %v4429
    %v4431 = vpop.f32.mrf.mxu0
    %v4432 = vadd.f32 %v4413, %v4431
    %4433 = vmatmul.bf16.gmra.mxu0 %v4390
    %v4434 = vpop.f32.mrf.mxu0
    %v4435 = vadd.f32 %v4416, %v4434
    %v4436 = vpop.f32.mrf.mxu0
    %v4437 = vadd.f32 %v4418, %v4436
    %4438 = vdwg.mxu0
    %4439 = vmatpush.bf16.msra.mxu0 %v4351
    %4440 = vmatpush.bf16.msra.mxu0 %v4348
    %4441 = vmatpush.bf16.msra.mxu0 %v4345
    %4442 = vmatpush.bf16.msra.mxu0 %v4342
    %4443 = vmatpush.bf16.msra.mxu0 %v4339
    %4444 = vmatpush.bf16.msra.mxu0 %v4336
    %4445 = vmatpush.bf16.msra.mxu0 %v4333
    %4446 = vmatpush.bf16.msra.mxu0 %v4330
    %4447 = vmatmul.bf16.gmra.mxu0 %v4191
    %v4448 = vpop.f32.mrf.mxu0
    %v4449 = vadd.f32 0.0, %v4448
    %v4450 = vpop.f32.mrf.mxu0
    %v4451 = vadd.f32 0.0, %v4450
    %4452 = vmatmul.bf16.gmra.mxu0 %v4193
    %v4453 = vpop.f32.mrf.mxu0
    %v4454 = vadd.f32 0.0, %v4453
    %v4455 = vpop.f32.mrf.mxu0
    %v4456 = vadd.f32 0.0, %v4455
    %4457 = vdwg.mxu0
    %4458 = vmatpush.bf16.msra.mxu0 0
    %4459 = vmatpush.bf16.msra.mxu0 0
    %4460 = vmatpush.bf16.msra.mxu0 0
    %4461 = vmatpush.bf16.msra.mxu0 0
    %4462 = vmatpush.bf16.msra.mxu0 0
    %4463 = vmatpush.bf16.msra.mxu0 0
    %4464 = vmatpush.bf16.msra.mxu0 %v4396
    %4465 = vmatpush.bf16.msra.mxu0 %v4354
    %4466 = vmatmul.bf16.gmra.mxu0 %v4387
    %v4467 = vpop.f32.mrf.mxu0
    %v4468 = vadd.f32 %v4449, %v4467
    %v4469 = vpop.f32.mrf.mxu0
    %v4470 = vadd.f32 %v4451, %v4469
    %4471 = vmatmul.bf16.gmra.mxu0 %v4390
    %v4472 = vpop.f32.mrf.mxu0
    %v4473 = vadd.f32 %v4454, %v4472
    %v4474 = vpop.f32.mrf.mxu0
    %v4475 = vadd.f32 %v4456, %v4474
    %4476 = vdwg.mxu0
    %4477 = vmatpush.bf16.msra.mxu0 %v4352
    %4478 = vmatpush.bf16.msra.mxu0 %v4349
    %4479 = vmatpush.bf16.msra.mxu0 %v4346
    %4480 = vmatpush.bf16.msra.mxu0 %v4343
    %4481 = vmatpush.bf16.msra.mxu0 %v4340
    %4482 = vmatpush.bf16.msra.mxu0 %v4337
    %4483 = vmatpush.bf16.msra.mxu0 %v4334
    %4484 = vmatpush.bf16.msra.mxu0 %v4331
    %4485 = vmatmul.bf16.gmra.mxu0 %v4191
    %v4486 = vpop.f32.mrf.mxu0
    %v4487 = vadd.f32 0.0, %v4486
    %v4488 = vpop.f32.mrf.mxu0
    %v4489 = vadd.f32 0.0, %v4488
    %4490 = vmatmul.bf16.gmra.mxu0 %v4193
    %v4491 = vpop.f32.mrf.mxu0
    %v4492 = vadd.f32 0.0, %v4491
    %v4493 = vpop.f32.mrf.mxu0
    %v4494 = vadd.f32 0.0, %v4493
    %4495 = vdwg.mxu0
    %4496 = vmatpush.bf16.msra.mxu0 0
    %4497 = vmatpush.bf16.msra.mxu0 0
    %4498 = vmatpush.bf16.msra.mxu0 0
    %4499 = vmatpush.bf16.msra.mxu0 0
    %4500 = vmatpush.bf16.msra.mxu0 0
    %4501 = vmatpush.bf16.msra.mxu0 0
    %4502 = vmatpush.bf16.msra.mxu0 %v4399
    %4503 = vmatpush.bf16.msra.mxu0 %v4355
    %4504 = vmatmul.bf16.gmra.mxu0 %v4387
    %v4505 = vpop.f32.mrf.mxu0
    %v4506 = vadd.f32 %v4487, %v4505
    %v4507 = vpop.f32.mrf.mxu0
    %v4508 = vadd.f32 %v4489, %v4507
    %4509 = vmatmul.bf16.gmra.mxu0 %v4390
    %v4510 = vpop.f32.mrf.mxu0
    %v4511 = vadd.f32 %v4492, %v4510
    %v4512 = vpop.f32.mrf.mxu0
    %v4513 = vadd.f32 %v4494, %v4512
    %4514 = vdwg.mxu0
    %v4553 = vunpack.c.l.b16 %v3991
    %v4554 = vunpack.c.h.b16 %v3991
    %v4555 = vunpack.c.l.b16 %v3992
    %v4556 = vunpack.c.l.b16 %v3993
    %v4557 = vunpack.c.h.b16 %v3993
    %v4558 = vunpack.c.l.b16 %v3994
    %v4559 = vunpack.c.l.b16 %v3995
    %v4560 = vunpack.c.h.b16 %v3995
    %v4561 = vunpack.c.l.b16 %v3996
    %v4562 = vunpack.c.l.b16 %v3997
    %v4563 = vunpack.c.h.b16 %v3997
    %v4564 = vunpack.c.l.b16 %v3998
    %v4565 = vunpack.c.l.b16 %v3999
    %v4566 = vunpack.c.h.b16 %v3999
    %v4567 = vunpack.c.l.b16 %v4000
    %v4568 = vunpack.c.l.b16 %v4001
    %v4569 = vunpack.c.h.b16 %v4001
    %v4570 = vunpack.c.l.b16 %v4002
    %v4571 = vunpack.c.l.b16 %v4003
    %v4572 = vunpack.c.h.b16 %v4003
    %v4573 = vunpack.c.l.b16 %v4004
    %v4574 = vunpack.c.l.b16 %v4005
    %v4575 = vunpack.c.h.b16 %v4005
    %v4576 = vunpack.c.l.b16 %v4006
    %v4577 = vunpack.c.l.b16 %v4007
    %v4578 = vunpack.c.h.b16 %v4007
    %v4579 = vunpack.c.l.b16 %v4008
    %v4580 = vunpack.c.l.b16 %v4009
    %v4581 = vunpack.c.h.b16 %v4009
    %v4582 = vunpack.c.l.b16 %v4010
    %v4583 = vunpack.c.l.b16 %v4011
    %v4584 = vunpack.c.h.b16 %v4011
    %v4585 = vunpack.c.l.b16 %v4012
    %v4586 = vunpack.c.l.b16 %v4013
    %v4587 = vunpack.c.h.b16 %v4013
    %v4588 = vunpack.c.l.b16 %v4014
    %v4589 = vunpack.c.l.b16 %v4015
    %v4590 = vunpack.c.h.b16 %v4015
    %v4591 = vunpack.c.l.b16 %v4016
    %v4592 = vunpack.c.l.b16 %v4017
    %v4593 = vunpack.c.h.b16 %v4017
    %v4594 = vunpack.c.l.b16 %v4018
    %v4595 = vunpack.c.l.b16 %v4019
    %v4596 = vunpack.c.h.b16 %v4019
    %v4597 = vunpack.c.l.b16 %v4020
    %v4598 = vunpack.c.l.b16 %v4021
    %v4599 = vunpack.c.h.b16 %v4021
    %v4600 = vunpack.c.l.b16 %v4022
    %v4601 = vunpack.c.l.b16 %v4023
    %v4602 = vunpack.c.h.b16 %v4023
    %v4603 = vunpack.c.l.b16 %v4024
    %v4604 = vunpack.c.l.b16 %v4025
    %v4605 = vunpack.c.h.b16 %v4025
    %v4606 = vunpack.c.l.b16 %v4026
    %v4607 = vunpack.c.l.b16 %v4027
    %v4608 = vunpack.c.h.b16 %v4027
    %v4609 = vunpack.c.l.b16 %v4028
    %v4610 = vpack.c.b16 %v4556, %v4553
    %v4611 = vpack.c.b16 %v4557, %v4554
    %v4612 = vpack.c.b16 %v4558, %v4555
    %v4613 = vpack.c.b16 %v4562, %v4559
    %v4614 = vpack.c.b16 %v4563, %v4560
    %v4615 = vpack.c.b16 %v4564, %v4561
    %v4616 = vpack.c.b16 %v4568, %v4565
    %v4617 = vpack.c.b16 %v4569, %v4566
    %v4618 = vpack.c.b16 %v4570, %v4567
    %v4619 = vpack.c.b16 %v4574, %v4571
    %v4620 = vpack.c.b16 %v4575, %v4572
    %v4621 = vpack.c.b16 %v4576, %v4573
    %v4622 = vpack.c.b16 %v4580, %v4577
    %v4623 = vpack.c.b16 %v4581, %v4578
    %v4624 = vpack.c.b16 %v4582, %v4579
    %v4625 = vpack.c.b16 %v4586, %v4583
    %v4626 = vpack.c.b16 %v4587, %v4584
    %v4627 = vpack.c.b16 %v4588, %v4585
    %v4628 = vpack.c.b16 %v4592, %v4589
    %v4629 = vpack.c.b16 %v4593, %v4590
    %v4630 = vpack.c.b16 %v4594, %v4591
    %v4631 = vpack.c.b16 %v4598, %v4595
    %v4632 = vpack.c.b16 %v4599, %v4596
    %v4633 = vpack.c.b16 %v4600, %v4597
    %v4634 = vpack.c.b16 %v4604, %v4601
    %v4635 = vpack.c.b16 %v4605, %v4602
    %v4636 = vpack.c.b16 %v4606, %v4603
    %v4637 = vpack.c.b16 %v4607, %v4607
    %v4638 = vpack.c.b16 %v4608, %v4608
    %v4639 = vpack.c.b16 %v4609, %v4609
    %v4668 = vsel %vm997, %v3988, 0
    %v4671 = vsel %vm997, %v3990, 0
    %v4674 = vsel %vm1004, %v4637, 0
    %v4677 = vsel %vm1004, %v4638, 0
    %v4680 = vsel %vm1004, %v4639, 0
    %4682 = vmatpush.bf16.msra.mxu0 %v4631
    %4683 = vmatpush.bf16.msra.mxu0 %v4628
    %4684 = vmatpush.bf16.msra.mxu0 %v4625
    %4685 = vmatpush.bf16.msra.mxu0 %v4622
    %4686 = vmatpush.bf16.msra.mxu0 %v4619
    %4687 = vmatpush.bf16.msra.mxu0 %v4616
    %4688 = vmatpush.bf16.msra.mxu0 %v4613
    %4689 = vmatpush.bf16.msra.mxu0 %v4610
    %4690 = vmatmul.bf16.gmra.mxu0 %v3987
    %v4691 = vpop.f32.mrf.mxu0
    %v4692 = vadd.f32 %v4430, %v4691
    %v4693 = vpop.f32.mrf.mxu0
    %v4694 = vadd.f32 %v4432, %v4693
    %4695 = vmatmul.bf16.gmra.mxu0 %v3989
    %v4696 = vpop.f32.mrf.mxu0
    %v4697 = vadd.f32 %v4435, %v4696
    %v4698 = vpop.f32.mrf.mxu0
    %v4699 = vadd.f32 %v4437, %v4698
    %4700 = vdwg.mxu0
    %4701 = vmatpush.bf16.msra.mxu0 0
    %4702 = vmatpush.bf16.msra.mxu0 0
    %4703 = vmatpush.bf16.msra.mxu0 0
    %4704 = vmatpush.bf16.msra.mxu0 0
    %4705 = vmatpush.bf16.msra.mxu0 0
    %4706 = vmatpush.bf16.msra.mxu0 0
    %4707 = vmatpush.bf16.msra.mxu0 %v4674
    %4708 = vmatpush.bf16.msra.mxu0 %v4634
    %4709 = vmatmul.bf16.gmra.mxu0 %v4668
    %v4710 = vpop.f32.mrf.mxu0
    %v4711 = vadd.f32 %v4692, %v4710
    %v4712 = vpop.f32.mrf.mxu0
    %v4713 = vadd.f32 %v4694, %v4712
    %4714 = vmatmul.bf16.gmra.mxu0 %v4671
    %v4715 = vpop.f32.mrf.mxu0
    %v4716 = vadd.f32 %v4697, %v4715
    %v4717 = vpop.f32.mrf.mxu0
    %v4718 = vadd.f32 %v4699, %v4717
    %4719 = vdwg.mxu0
    %4720 = vmatpush.bf16.msra.mxu0 %v4632
    %4721 = vmatpush.bf16.msra.mxu0 %v4629
    %4722 = vmatpush.bf16.msra.mxu0 %v4626
    %4723 = vmatpush.bf16.msra.mxu0 %v4623
    %4724 = vmatpush.bf16.msra.mxu0 %v4620
    %4725 = vmatpush.bf16.msra.mxu0 %v4617
    %4726 = vmatpush.bf16.msra.mxu0 %v4614
    %4727 = vmatpush.bf16.msra.mxu0 %v4611
    %4728 = vmatmul.bf16.gmra.mxu0 %v3987
    %v4729 = vpop.f32.mrf.mxu0
    %v4730 = vadd.f32 %v4468, %v4729
    %v4731 = vpop.f32.mrf.mxu0
    %v4732 = vadd.f32 %v4470, %v4731
    %4733 = vmatmul.bf16.gmra.mxu0 %v3989
    %v4734 = vpop.f32.mrf.mxu0
    %v4735 = vadd.f32 %v4473, %v4734
    %v4736 = vpop.f32.mrf.mxu0
    %v4737 = vadd.f32 %v4475, %v4736
    %4738 = vdwg.mxu0
    %4739 = vmatpush.bf16.msra.mxu0 0
    %4740 = vmatpush.bf16.msra.mxu0 0
    %4741 = vmatpush.bf16.msra.mxu0 0
    %4742 = vmatpush.bf16.msra.mxu0 0
    %4743 = vmatpush.bf16.msra.mxu0 0
    %4744 = vmatpush.bf16.msra.mxu0 0
    %4745 = vmatpush.bf16.msra.mxu0 %v4677
    %4746 = vmatpush.bf16.msra.mxu0 %v4635
    %4747 = vmatmul.bf16.gmra.mxu0 %v4668
    %v4748 = vpop.f32.mrf.mxu0
    %v4749 = vadd.f32 %v4730, %v4748
    %v4750 = vpop.f32.mrf.mxu0
    %v4751 = vadd.f32 %v4732, %v4750
    %4752 = vmatmul.bf16.gmra.mxu0 %v4671
    %v4753 = vpop.f32.mrf.mxu0
    %v4754 = vadd.f32 %v4735, %v4753
    %v4755 = vpop.f32.mrf.mxu0
    %v4756 = vadd.f32 %v4737, %v4755
    %4757 = vdwg.mxu0
    %4758 = vmatpush.bf16.msra.mxu0 %v4633
    %4759 = vmatpush.bf16.msra.mxu0 %v4630
    %4760 = vmatpush.bf16.msra.mxu0 %v4627
    %4761 = vmatpush.bf16.msra.mxu0 %v4624
    %4762 = vmatpush.bf16.msra.mxu0 %v4621
    %4763 = vmatpush.bf16.msra.mxu0 %v4618
    %4764 = vmatpush.bf16.msra.mxu0 %v4615
    %4765 = vmatpush.bf16.msra.mxu0 %v4612
    %4766 = vmatmul.bf16.gmra.mxu0 %v3987
    %v4767 = vpop.f32.mrf.mxu0
    %v4768 = vadd.f32 %v4506, %v4767
    %v4769 = vpop.f32.mrf.mxu0
    %v4770 = vadd.f32 %v4508, %v4769
    %4771 = vmatmul.bf16.gmra.mxu0 %v3989
    %v4772 = vpop.f32.mrf.mxu0
    %v4773 = vadd.f32 %v4511, %v4772
    %v4774 = vpop.f32.mrf.mxu0
    %v4775 = vadd.f32 %v4513, %v4774
    %4776 = vdwg.mxu0
    %4777 = vmatpush.bf16.msra.mxu0 0
    %4778 = vmatpush.bf16.msra.mxu0 0
    %4779 = vmatpush.bf16.msra.mxu0 0
    %4780 = vmatpush.bf16.msra.mxu0 0
    %4781 = vmatpush.bf16.msra.mxu0 0
    %4782 = vmatpush.bf16.msra.mxu0 0
    %4783 = vmatpush.bf16.msra.mxu0 %v4680
    %4784 = vmatpush.bf16.msra.mxu0 %v4636
    %4785 = vmatmul.bf16.gmra.mxu0 %v4668
    %v4786 = vpop.f32.mrf.mxu0
    %v4787 = vadd.f32 %v4768, %v4786
    %v4788 = vpop.f32.mrf.mxu0
    %v4789 = vadd.f32 %v4770, %v4788
    %4790 = vmatmul.bf16.gmra.mxu0 %v4671
    %v4791 = vpop.f32.mrf.mxu0
    %v4792 = vadd.f32 %v4773, %v4791
    %v4793 = vpop.f32.mrf.mxu0
    %v4794 = vadd.f32 %v4775, %v4793
    %4795 = vdwg.mxu0
    %s4796 = scalar_lea.vmem %s19, 384
    %v4797 = vld [vmem:[%s4796] sm:$0xff]
    %v4798 = vld [vmem:[%s4796 + $0x8] sm:$0xff]
    %v4799 = vld [vmem:[%s4796 + $0x10] sm:$0xff]
    %v4800 = vld [vmem:[%s4796 + $0x18] sm:$0xff]
    %v4801 = vld [vmem:[%s4796 + $0x20] sm:$0xff]
    %v4802 = vld [vmem:[%s4796 + $0x28] sm:$0xff]
    %v4803 = vld [vmem:[%s4796 + $0x30] sm:$0xff]
    %v4804 = vld [vmem:[%s4796 + $0x38] sm:$0xff]
    %v4805 = vld [vmem:[%s4796 + $0x40] sm:$0xff]
    %v4806 = vld [vmem:[%s4796 + $0x48] sm:$0xff]
    %v4807 = vld [vmem:[%s4796 + $0x50] sm:$0xff]
    %v4808 = vld [vmem:[%s4796 + $0x58] sm:$0xff]
    %v4809 = vld [vmem:[%s4796 + $0x60] sm:$0xff]
    %v4810 = vld [vmem:[%s4796 + $0x68] sm:$0xff]
    %v4811 = vld [vmem:[%s4796 + $0x70] sm:$0xff]
    %v4812 = vld [vmem:[%s4796 + $0x78] sm:$0xff]
    %s4813 = scalar_lea.vmem [#allocation6], 6
    %v4814 = vld [vmem:[%s4813] sm:$0x3]
    %v4816 = vperm.slane %v4814, 0
    %v4817 = vperm.slane %v4814, 1
    %v4820 = vunpack.c.h.b16 %v256
    %v4821 = vunpack.c.h.b16 %v263
    %v4822 = vunpack.c.h.b16 %v270
    %v4823 = vunpack.c.h.b16 %v277
    %v4824 = vpack.c.b16 %v4821, %v4820
    %v4825 = vpack.c.b16 %v4823, %v4822
    %v4844 = vunpack.c.l.b16 %v4797
    %v4845 = vunpack.c.h.b16 %v4797
    %v4846 = vunpack.c.l.b16 %v4798
    %v4847 = vunpack.c.h.b16 %v4798
    %v4848 = vunpack.c.l.b16 %v4799
    %v4849 = vunpack.c.h.b16 %v4799
    %v4850 = vunpack.c.l.b16 %v4800
    %v4851 = vunpack.c.h.b16 %v4800
    %v4852 = vunpack.c.l.b16 %v4801
    %v4853 = vunpack.c.h.b16 %v4801
    %v4854 = vunpack.c.l.b16 %v4802
    %v4855 = vunpack.c.h.b16 %v4802
    %v4856 = vunpack.c.l.b16 %v4803
    %v4857 = vunpack.c.h.b16 %v4803
    %v4858 = vunpack.c.l.b16 %v4804
    %v4859 = vunpack.c.h.b16 %v4804
    %v4860 = vunpack.c.l.b16 %v4805
    %v4861 = vunpack.c.h.b16 %v4805
    %v4862 = vunpack.c.l.b16 %v4806
    %v4863 = vunpack.c.h.b16 %v4806
    %v4864 = vunpack.c.l.b16 %v4807
    %v4865 = vunpack.c.h.b16 %v4807
    %v4866 = vunpack.c.l.b16 %v4808
    %v4867 = vunpack.c.h.b16 %v4808
    %v4868 = vunpack.c.l.b16 %v4809
    %v4869 = vunpack.c.h.b16 %v4809
    %v4870 = vunpack.c.l.b16 %v4810
    %v4871 = vunpack.c.h.b16 %v4810
    %v4872 = vunpack.c.l.b16 %v4811
    %v4873 = vunpack.c.h.b16 %v4811
    %v4874 = vunpack.c.l.b16 %v4812
    %v4875 = vunpack.c.h.b16 %v4812
    %v4876 = vpack.c.b16 %v4846, %v4844
    %v4877 = vpack.c.b16 %v4847, %v4845
    %v4878 = vpack.c.b16 %v4850, %v4848
    %v4879 = vpack.c.b16 %v4851, %v4849
    %v4880 = vpack.c.b16 %v4854, %v4852
    %v4881 = vpack.c.b16 %v4855, %v4853
    %v4882 = vpack.c.b16 %v4858, %v4856
    %v4883 = vpack.c.b16 %v4859, %v4857
    %v4884 = vpack.c.b16 %v4862, %v4860
    %v4885 = vpack.c.b16 %v4863, %v4861
    %v4886 = vpack.c.b16 %v4866, %v4864
    %v4887 = vpack.c.b16 %v4867, %v4865
    %v4888 = vpack.c.b16 %v4870, %v4868
    %v4889 = vpack.c.b16 %v4871, %v4869
    %v4890 = vpack.c.b16 %v4874, %v4872
    %v4891 = vpack.c.b16 %v4875, %v4873
    %4908 = vmatpush.bf16.msra.mxu0 %v4890
    %4909 = vmatpush.bf16.msra.mxu0 %v4888
    %4910 = vmatpush.bf16.msra.mxu0 %v4886
    %4911 = vmatpush.bf16.msra.mxu0 %v4884
    %4912 = vmatpush.bf16.msra.mxu0 %v4882
    %4913 = vmatpush.bf16.msra.mxu0 %v4880
    %4914 = vmatpush.bf16.msra.mxu0 %v4878
    %4915 = vmatpush.bf16.msra.mxu0 %v4876
    %4916 = vmatmul.bf16.gmra.mxu0 %v4824
    %v4917 = vpop.f32.mrf.mxu0
    %v4918 = vadd.f32 %v4816, %v4917
    %v4919 = vpop.f32.mrf.mxu0
    %v4920 = vadd.f32 %v4816, %v4919
    %4921 = vmatmul.bf16.gmra.mxu0 %v4825
    %v4922 = vpop.f32.mrf.mxu0
    %v4923 = vadd.f32 %v4816, %v4922
    %v4924 = vpop.f32.mrf.mxu0
    %v4925 = vadd.f32 %v4816, %v4924
    %4926 = vdwg.mxu0
    %4927 = vmatpush.bf16.msra.mxu0 %v4891
    %4928 = vmatpush.bf16.msra.mxu0 %v4889
    %4929 = vmatpush.bf16.msra.mxu0 %v4887
    %4930 = vmatpush.bf16.msra.mxu0 %v4885
    %4931 = vmatpush.bf16.msra.mxu0 %v4883
    %4932 = vmatpush.bf16.msra.mxu0 %v4881
    %4933 = vmatpush.bf16.msra.mxu0 %v4879
    %4934 = vmatpush.bf16.msra.mxu0 %v4877
    %4935 = vmatmul.bf16.gmra.mxu0 %v4824
    %v4936 = vpop.f32.mrf.mxu0
    %v4937 = vadd.f32 %v4817, %v4936
    %v4938 = vpop.f32.mrf.mxu0
    %v4939 = vadd.f32 %v4817, %v4938
    %4940 = vmatmul.bf16.gmra.mxu0 %v4825
    %v4941 = vpop.f32.mrf.mxu0
    %v4942 = vadd.f32 %v4817, %v4941
    %v4943 = vpop.f32.mrf.mxu0
    %v4944 = vadd.f32 %v4817, %v4943
    %4945 = vdwg.mxu0
    %v4946 = vmax.f32 %v4918, 0.0
    %v4947 = vmax.f32 %v4937, 0.0
    %v4948 = vmax.f32 %v4920, 0.0
    %v4949 = vmax.f32 %v4939, 0.0
    %v4950 = vmax.f32 %v4923, 0.0
    %v4951 = vmax.f32 %v4942, 0.0
    %v4952 = vmax.f32 %v4925, 0.0
    %v4953 = vmax.f32 %v4944, 0.0
    %v4954 = vpack.c.bf16 %v4948, %v4946
    %v4955 = vpack.c.bf16 %v4949, %v4947
    %v4956 = vpack.c.bf16 %v4952, %v4950
    %v4957 = vpack.c.bf16 %v4953, %v4951
    %s4958 = scalar_lea.vmem %s23, 456
    %v4959 = vld [vmem:[%s4958] sm:$0xff]
    %v4960 = vld [vmem:[%s4958 + $0x8] sm:$0xf]
    %v4961 = vld [vmem:[%s4958 + $0xc] sm:$0xff]
    %v4962 = vld [vmem:[%s4958 + $0x14] sm:$0xf]
    %v4963 = vld [vmem:[%s4958 + $0x18] sm:$0xff]
    %v4964 = vld [vmem:[%s4958 + $0x20] sm:$0xf]
    %v4965 = vld [vmem:[%s4958 + $0x24] sm:$0xff]
    %v4966 = vld [vmem:[%s4958 + $0x2c] sm:$0xf]
    %v4967 = vld [vmem:[%s4958 + $0x30] sm:$0xff]
    %v4968 = vld [vmem:[%s4958 + $0x38] sm:$0xf]
    %v4969 = vld [vmem:[%s4958 + $0x3c] sm:$0xff]
    %v4970 = vld [vmem:[%s4958 + $0x44] sm:$0xf]
    %v4971 = vld [vmem:[%s4958 + $0x48] sm:$0xff]
    %v4972 = vld [vmem:[%s4958 + $0x50] sm:$0xf]
    %v4973 = vld [vmem:[%s4958 + $0x54] sm:$0xff]
    %v4974 = vld [vmem:[%s4958 + $0x5c] sm:$0xf]
    %v4975 = vld [vmem:[%s4958 + $0x60] sm:$0xff]
    %v4976 = vld [vmem:[%s4958 + $0x68] sm:$0xf]
    %v4977 = vld [vmem:[%s4958 + $0x6c] sm:$0xff]
    %v4978 = vld [vmem:[%s4958 + $0x74] sm:$0xf]
    %v4979 = vld [vmem:[%s4958 + $0x78] sm:$0xff]
    %v4980 = vld [vmem:[%s4958 + $0x80] sm:$0xf]
    %v4981 = vld [vmem:[%s4958 + $0x84] sm:$0xff]
    %v4982 = vld [vmem:[%s4958 + $0x8c] sm:$0xf]
    %v4983 = vld [vmem:[%s4958 + $0x90] sm:$0xff]
    %v4984 = vld [vmem:[%s4958 + $0x98] sm:$0xf]
    %v4985 = vld [vmem:[%s4958 + $0x9c] sm:$0xff]
    %v4986 = vld [vmem:[%s4958 + $0xa4] sm:$0xf]
    %v4987 = vld [vmem:[%s4958 + $0xa8] sm:$0xff]
    %v4988 = vld [vmem:[%s4958 + $0xb0] sm:$0xf]
    %v4989 = vld [vmem:[%s4958 + $0xb4] sm:$0xff]
    %v4990 = vld [vmem:[%s4958 + $0xbc] sm:$0xf]
    %v4991 = vld [vmem:[%s4958 + $0xc0] sm:$0xff]
    %v4992 = vld [vmem:[%s4958 + $0xc8] sm:$0xf]
    %v4993 = vld [vmem:[%s4958 + $0xcc] sm:$0xff]
    %v4994 = vld [vmem:[%s4958 + $0xd4] sm:$0xf]
    %v4995 = vld [vmem:[%s4958 + $0xd8] sm:$0x77]
    %v4996 = vld [vmem:[%s4958 + $0xe0] sm:$0x7]
    %v5035 = vunpack.c.l.b16 %v4959
    %v5036 = vunpack.c.h.b16 %v4959
    %v5037 = vunpack.c.l.b16 %v4960
    %v5038 = vunpack.c.l.b16 %v4961
    %v5039 = vunpack.c.h.b16 %v4961
    %v5040 = vunpack.c.l.b16 %v4962
    %v5041 = vunpack.c.l.b16 %v4963
    %v5042 = vunpack.c.h.b16 %v4963
    %v5043 = vunpack.c.l.b16 %v4964
    %v5044 = vunpack.c.l.b16 %v4965
    %v5045 = vunpack.c.h.b16 %v4965
    %v5046 = vunpack.c.l.b16 %v4966
    %v5047 = vunpack.c.l.b16 %v4967
    %v5048 = vunpack.c.h.b16 %v4967
    %v5049 = vunpack.c.l.b16 %v4968
    %v5050 = vunpack.c.l.b16 %v4969
    %v5051 = vunpack.c.h.b16 %v4969
    %v5052 = vunpack.c.l.b16 %v4970
    %v5053 = vunpack.c.l.b16 %v4971
    %v5054 = vunpack.c.h.b16 %v4971
    %v5055 = vunpack.c.l.b16 %v4972
    %v5056 = vunpack.c.l.b16 %v4973
    %v5057 = vunpack.c.h.b16 %v4973
    %v5058 = vunpack.c.l.b16 %v4974
    %v5059 = vunpack.c.l.b16 %v4975
    %v5060 = vunpack.c.h.b16 %v4975
    %v5061 = vunpack.c.l.b16 %v4976
    %v5062 = vunpack.c.l.b16 %v4977
    %v5063 = vunpack.c.h.b16 %v4977
    %v5064 = vunpack.c.l.b16 %v4978
    %v5065 = vunpack.c.l.b16 %v4979
    %v5066 = vunpack.c.h.b16 %v4979
    %v5067 = vunpack.c.l.b16 %v4980
    %v5068 = vunpack.c.l.b16 %v4981
    %v5069 = vunpack.c.h.b16 %v4981
    %v5070 = vunpack.c.l.b16 %v4982
    %v5071 = vunpack.c.l.b16 %v4983
    %v5072 = vunpack.c.h.b16 %v4983
    %v5073 = vunpack.c.l.b16 %v4984
    %v5074 = vunpack.c.l.b16 %v4985
    %v5075 = vunpack.c.h.b16 %v4985
    %v5076 = vunpack.c.l.b16 %v4986
    %v5077 = vunpack.c.l.b16 %v4987
    %v5078 = vunpack.c.h.b16 %v4987
    %v5079 = vunpack.c.l.b16 %v4988
    %v5080 = vunpack.c.l.b16 %v4989
    %v5081 = vunpack.c.h.b16 %v4989
    %v5082 = vunpack.c.l.b16 %v4990
    %v5083 = vunpack.c.l.b16 %v4991
    %v5084 = vunpack.c.h.b16 %v4991
    %v5085 = vunpack.c.l.b16 %v4992
    %v5086 = vunpack.c.l.b16 %v4993
    %v5087 = vunpack.c.h.b16 %v4993
    %v5088 = vunpack.c.l.b16 %v4994
    %v5089 = vunpack.c.l.b16 %v4995
    %v5090 = vunpack.c.h.b16 %v4995
    %v5091 = vunpack.c.l.b16 %v4996
    %v5092 = vpack.c.b16 %v5038, %v5035
    %v5093 = vpack.c.b16 %v5039, %v5036
    %v5094 = vpack.c.b16 %v5040, %v5037
    %v5095 = vpack.c.b16 %v5044, %v5041
    %v5096 = vpack.c.b16 %v5045, %v5042
    %v5097 = vpack.c.b16 %v5046, %v5043
    %v5098 = vpack.c.b16 %v5050, %v5047
    %v5099 = vpack.c.b16 %v5051, %v5048
    %v5100 = vpack.c.b16 %v5052, %v5049
    %v5101 = vpack.c.b16 %v5056, %v5053
    %v5102 = vpack.c.b16 %v5057, %v5054
    %v5103 = vpack.c.b16 %v5058, %v5055
    %v5104 = vpack.c.b16 %v5062, %v5059
    %v5105 = vpack.c.b16 %v5063, %v5060
    %v5106 = vpack.c.b16 %v5064, %v5061
    %v5107 = vpack.c.b16 %v5068, %v5065
    %v5108 = vpack.c.b16 %v5069, %v5066
    %v5109 = vpack.c.b16 %v5070, %v5067
    %v5110 = vpack.c.b16 %v5074, %v5071
    %v5111 = vpack.c.b16 %v5075, %v5072
    %v5112 = vpack.c.b16 %v5076, %v5073
    %v5113 = vpack.c.b16 %v5080, %v5077
    %v5114 = vpack.c.b16 %v5081, %v5078
    %v5115 = vpack.c.b16 %v5082, %v5079
    %v5116 = vpack.c.b16 %v5086, %v5083
    %v5117 = vpack.c.b16 %v5087, %v5084
    %v5118 = vpack.c.b16 %v5088, %v5085
    %v5119 = vpack.c.b16 %v5089, %v5089
    %v5120 = vpack.c.b16 %v5090, %v5090
    %v5121 = vpack.c.b16 %v5091, %v5091
    %v5150 = vsel %vm997, %v4955, 0
    %v5153 = vsel %vm997, %v4957, 0
    %v5156 = vsel %vm1004, %v5119, 0
    %v5159 = vsel %vm1004, %v5120, 0
    %v5162 = vsel %vm1004, %v5121, 0
    %5164 = vmatpush.bf16.msra.mxu0 %v5113
    %5165 = vmatpush.bf16.msra.mxu0 %v5110
    %5166 = vmatpush.bf16.msra.mxu0 %v5107
    %5167 = vmatpush.bf16.msra.mxu0 %v5104
    %5168 = vmatpush.bf16.msra.mxu0 %v5101
    %5169 = vmatpush.bf16.msra.mxu0 %v5098
    %5170 = vmatpush.bf16.msra.mxu0 %v5095
    %5171 = vmatpush.bf16.msra.mxu0 %v5092
    %5172 = vmatmul.bf16.gmra.mxu0 %v4954
    %v5173 = vpop.f32.mrf.mxu0
    %v5174 = vadd.f32 0.0, %v5173
    %v5175 = vpop.f32.mrf.mxu0
    %v5176 = vadd.f32 0.0, %v5175
    %5177 = vmatmul.bf16.gmra.mxu0 %v4956
    %v5178 = vpop.f32.mrf.mxu0
    %v5179 = vadd.f32 0.0, %v5178
    %v5180 = vpop.f32.mrf.mxu0
    %v5181 = vadd.f32 0.0, %v5180
    %5182 = vdwg.mxu0
    %5183 = vmatpush.bf16.msra.mxu0 0
    %5184 = vmatpush.bf16.msra.mxu0 0
    %5185 = vmatpush.bf16.msra.mxu0 0
    %5186 = vmatpush.bf16.msra.mxu0 0
    %5187 = vmatpush.bf16.msra.mxu0 0
    %5188 = vmatpush.bf16.msra.mxu0 0
    %5189 = vmatpush.bf16.msra.mxu0 %v5156
    %5190 = vmatpush.bf16.msra.mxu0 %v5116
    %5191 = vmatmul.bf16.gmra.mxu0 %v5150
    %v5192 = vpop.f32.mrf.mxu0
    %v5193 = vadd.f32 %v5174, %v5192
    %v5194 = vpop.f32.mrf.mxu0
    %v5195 = vadd.f32 %v5176, %v5194
    %5196 = vmatmul.bf16.gmra.mxu0 %v5153
    %v5197 = vpop.f32.mrf.mxu0
    %v5198 = vadd.f32 %v5179, %v5197
    %v5199 = vpop.f32.mrf.mxu0
    %v5200 = vadd.f32 %v5181, %v5199
    %5201 = vdwg.mxu0
    %5202 = vmatpush.bf16.msra.mxu0 %v5114
    %5203 = vmatpush.bf16.msra.mxu0 %v5111
    %5204 = vmatpush.bf16.msra.mxu0 %v5108
    %5205 = vmatpush.bf16.msra.mxu0 %v5105
    %5206 = vmatpush.bf16.msra.mxu0 %v5102
    %5207 = vmatpush.bf16.msra.mxu0 %v5099
    %5208 = vmatpush.bf16.msra.mxu0 %v5096
    %5209 = vmatpush.bf16.msra.mxu0 %v5093
    %5210 = vmatmul.bf16.gmra.mxu0 %v4954
    %v5211 = vpop.f32.mrf.mxu0
    %v5212 = vadd.f32 0.0, %v5211
    %v5213 = vpop.f32.mrf.mxu0
    %v5214 = vadd.f32 0.0, %v5213
    %5215 = vmatmul.bf16.gmra.mxu0 %v4956
    %v5216 = vpop.f32.mrf.mxu0
    %v5217 = vadd.f32 0.0, %v5216
    %v5218 = vpop.f32.mrf.mxu0
    %v5219 = vadd.f32 0.0, %v5218
    %5220 = vdwg.mxu0
    %5221 = vmatpush.bf16.msra.mxu0 0
    %5222 = vmatpush.bf16.msra.mxu0 0
    %5223 = vmatpush.bf16.msra.mxu0 0
    %5224 = vmatpush.bf16.msra.mxu0 0
    %5225 = vmatpush.bf16.msra.mxu0 0
    %5226 = vmatpush.bf16.msra.mxu0 0
    %5227 = vmatpush.bf16.msra.mxu0 %v5159
    %5228 = vmatpush.bf16.msra.mxu0 %v5117
    %5229 = vmatmul.bf16.gmra.mxu0 %v5150
    %v5230 = vpop.f32.mrf.mxu0
    %v5231 = vadd.f32 %v5212, %v5230
    %v5232 = vpop.f32.mrf.mxu0
    %v5233 = vadd.f32 %v5214, %v5232
    %5234 = vmatmul.bf16.gmra.mxu0 %v5153
    %v5235 = vpop.f32.mrf.mxu0
    %v5236 = vadd.f32 %v5217, %v5235
    %v5237 = vpop.f32.mrf.mxu0
    %v5238 = vadd.f32 %v5219, %v5237
    %5239 = vdwg.mxu0
    %5240 = vmatpush.bf16.msra.mxu0 %v5115
    %5241 = vmatpush.bf16.msra.mxu0 %v5112
    %5242 = vmatpush.bf16.msra.mxu0 %v5109
    %5243 = vmatpush.bf16.msra.mxu0 %v5106
    %5244 = vmatpush.bf16.msra.mxu0 %v5103
    %5245 = vmatpush.bf16.msra.mxu0 %v5100
    %5246 = vmatpush.bf16.msra.mxu0 %v5097
    %5247 = vmatpush.bf16.msra.mxu0 %v5094
    %5248 = vmatmul.bf16.gmra.mxu0 %v4954
    %v5249 = vpop.f32.mrf.mxu0
    %v5250 = vadd.f32 0.0, %v5249
    %v5251 = vpop.f32.mrf.mxu0
    %v5252 = vadd.f32 0.0, %v5251
    %5253 = vmatmul.bf16.gmra.mxu0 %v4956
    %v5254 = vpop.f32.mrf.mxu0
    %v5255 = vadd.f32 0.0, %v5254
    %v5256 = vpop.f32.mrf.mxu0
    %v5257 = vadd.f32 0.0, %v5256
    %5258 = vdwg.mxu0
    %5259 = vmatpush.bf16.msra.mxu0 0
    %5260 = vmatpush.bf16.msra.mxu0 0
    %5261 = vmatpush.bf16.msra.mxu0 0
    %5262 = vmatpush.bf16.msra.mxu0 0
    %5263 = vmatpush.bf16.msra.mxu0 0
    %5264 = vmatpush.bf16.msra.mxu0 0
    %5265 = vmatpush.bf16.msra.mxu0 %v5162
    %5266 = vmatpush.bf16.msra.mxu0 %v5118
    %5267 = vmatmul.bf16.gmra.mxu0 %v5150
    %v5268 = vpop.f32.mrf.mxu0
    %v5269 = vadd.f32 %v5250, %v5268
    %v5270 = vpop.f32.mrf.mxu0
    %v5271 = vadd.f32 %v5252, %v5270
    %5272 = vmatmul.bf16.gmra.mxu0 %v5153
    %v5273 = vpop.f32.mrf.mxu0
    %v5274 = vadd.f32 %v5255, %v5273
    %v5275 = vpop.f32.mrf.mxu0
    %v5276 = vadd.f32 %v5257, %v5275
    %5277 = vdwg.mxu0
    %v5278 = vadd.f32 %v4711, %v5193
    %v5279 = vadd.f32 %v4749, %v5231
    %v5280 = vadd.f32 %v4787, %v5269
    %v5281 = vadd.f32 %v4713, %v5195
    %v5282 = vadd.f32 %v4751, %v5233
    %v5283 = vadd.f32 %v4789, %v5271
    %v5284 = vadd.f32 %v4716, %v5198
    %v5285 = vadd.f32 %v4754, %v5236
    %v5286 = vadd.f32 %v4792, %v5274
    %v5287 = vadd.f32 %v4718, %v5200
    %v5288 = vadd.f32 %v4756, %v5238
    %v5289 = vadd.f32 %v4794, %v5276
    %s5290 = scalar_lea.vmem %s19, 512
    %v5291 = vld [vmem:[%s5290] sm:$0xff]
    %v5292 = vld [vmem:[%s5290 + $0x8] sm:$0xff]
    %v5293 = vld [vmem:[%s5290 + $0x10] sm:$0xff]
    %v5294 = vld [vmem:[%s5290 + $0x18] sm:$0xff]
    %v5295 = vld [vmem:[%s5290 + $0x20] sm:$0xff]
    %v5296 = vld [vmem:[%s5290 + $0x28] sm:$0xff]
    %v5297 = vld [vmem:[%s5290 + $0x30] sm:$0xff]
    %v5298 = vld [vmem:[%s5290 + $0x38] sm:$0xff]
    %v5299 = vld [vmem:[%s5290 + $0x40] sm:$0xff]
    %v5300 = vld [vmem:[%s5290 + $0x48] sm:$0xff]
    %v5301 = vld [vmem:[%s5290 + $0x50] sm:$0xff]
    %v5302 = vld [vmem:[%s5290 + $0x58] sm:$0xff]
    %v5303 = vld [vmem:[%s5290 + $0x60] sm:$0xff]
    %v5304 = vld [vmem:[%s5290 + $0x68] sm:$0xff]
    %v5305 = vld [vmem:[%s5290 + $0x70] sm:$0xff]
    %v5306 = vld [vmem:[%s5290 + $0x78] sm:$0xff]
    %s5307 = scalar_lea.vmem [#allocation6], 8
    %v5308 = vld [vmem:[%s5307] sm:$0x3]
    %v5310 = vperm.slane %v5308, 0
    %v5311 = vperm.slane %v5308, 1
    %v5318 = vunpack.c.l.b16 %v257
    %v5319 = vunpack.c.l.b16 %v264
    %v5320 = vunpack.c.l.b16 %v271
    %v5321 = vunpack.c.l.b16 %v278
    %v5322 = vpack.c.b16 %v5319, %v5318
    %v5323 = vpack.c.b16 %v5321, %v5320
    %v5342 = vunpack.c.l.b16 %v5291
    %v5343 = vunpack.c.h.b16 %v5291
    %v5344 = vunpack.c.l.b16 %v5292
    %v5345 = vunpack.c.h.b16 %v5292
    %v5346 = vunpack.c.l.b16 %v5293
    %v5347 = vunpack.c.h.b16 %v5293
    %v5348 = vunpack.c.l.b16 %v5294
    %v5349 = vunpack.c.h.b16 %v5294
    %v5350 = vunpack.c.l.b16 %v5295
    %v5351 = vunpack.c.h.b16 %v5295
    %v5352 = vunpack.c.l.b16 %v5296
    %v5353 = vunpack.c.h.b16 %v5296
    %v5354 = vunpack.c.l.b16 %v5297
    %v5355 = vunpack.c.h.b16 %v5297
    %v5356 = vunpack.c.l.b16 %v5298
    %v5357 = vunpack.c.h.b16 %v5298
    %v5358 = vunpack.c.l.b16 %v5299
    %v5359 = vunpack.c.h.b16 %v5299
    %v5360 = vunpack.c.l.b16 %v5300
    %v5361 = vunpack.c.h.b16 %v5300
    %v5362 = vunpack.c.l.b16 %v5301
    %v5363 = vunpack.c.h.b16 %v5301
    %v5364 = vunpack.c.l.b16 %v5302
    %v5365 = vunpack.c.h.b16 %v5302
    %v5366 = vunpack.c.l.b16 %v5303
    %v5367 = vunpack.c.h.b16 %v5303
    %v5368 = vunpack.c.l.b16 %v5304
    %v5369 = vunpack.c.h.b16 %v5304
    %v5370 = vunpack.c.l.b16 %v5305
    %v5371 = vunpack.c.h.b16 %v5305
    %v5372 = vunpack.c.l.b16 %v5306
    %v5373 = vunpack.c.h.b16 %v5306
    %v5374 = vpack.c.b16 %v5344, %v5342
    %v5375 = vpack.c.b16 %v5345, %v5343
    %v5376 = vpack.c.b16 %v5348, %v5346
    %v5377 = vpack.c.b16 %v5349, %v5347
    %v5378 = vpack.c.b16 %v5352, %v5350
    %v5379 = vpack.c.b16 %v5353, %v5351
    %v5380 = vpack.c.b16 %v5356, %v5354
    %v5381 = vpack.c.b16 %v5357, %v5355
    %v5382 = vpack.c.b16 %v5360, %v5358
    %v5383 = vpack.c.b16 %v5361, %v5359
    %v5384 = vpack.c.b16 %v5364, %v5362
    %v5385 = vpack.c.b16 %v5365, %v5363
    %v5386 = vpack.c.b16 %v5368, %v5366
    %v5387 = vpack.c.b16 %v5369, %v5367
    %v5388 = vpack.c.b16 %v5372, %v5370
    %v5389 = vpack.c.b16 %v5373, %v5371
    %5406 = vmatpush.bf16.msra.mxu0 %v5388
    %5407 = vmatpush.bf16.msra.mxu0 %v5386
    %5408 = vmatpush.bf16.msra.mxu0 %v5384
    %5409 = vmatpush.bf16.msra.mxu0 %v5382
    %5410 = vmatpush.bf16.msra.mxu0 %v5380
    %5411 = vmatpush.bf16.msra.mxu0 %v5378
    %5412 = vmatpush.bf16.msra.mxu0 %v5376
    %5413 = vmatpush.bf16.msra.mxu0 %v5374
    %5414 = vmatmul.bf16.gmra.mxu0 %v5322
    %v5415 = vpop.f32.mrf.mxu0
    %v5416 = vadd.f32 %v5310, %v5415
    %v5417 = vpop.f32.mrf.mxu0
    %v5418 = vadd.f32 %v5310, %v5417
    %5419 = vmatmul.bf16.gmra.mxu0 %v5323
    %v5420 = vpop.f32.mrf.mxu0
    %v5421 = vadd.f32 %v5310, %v5420
    %v5422 = vpop.f32.mrf.mxu0
    %v5423 = vadd.f32 %v5310, %v5422
    %5424 = vdwg.mxu0
    %5425 = vmatpush.bf16.msra.mxu0 %v5389
    %5426 = vmatpush.bf16.msra.mxu0 %v5387
    %5427 = vmatpush.bf16.msra.mxu0 %v5385
    %5428 = vmatpush.bf16.msra.mxu0 %v5383
    %5429 = vmatpush.bf16.msra.mxu0 %v5381
    %5430 = vmatpush.bf16.msra.mxu0 %v5379
    %5431 = vmatpush.bf16.msra.mxu0 %v5377
    %5432 = vmatpush.bf16.msra.mxu0 %v5375
    %5433 = vmatmul.bf16.gmra.mxu0 %v5322
    %v5434 = vpop.f32.mrf.mxu0
    %v5435 = vadd.f32 %v5311, %v5434
    %v5436 = vpop.f32.mrf.mxu0
    %v5437 = vadd.f32 %v5311, %v5436
    %5438 = vmatmul.bf16.gmra.mxu0 %v5323
    %v5439 = vpop.f32.mrf.mxu0
    %v5440 = vadd.f32 %v5311, %v5439
    %v5441 = vpop.f32.mrf.mxu0
    %v5442 = vadd.f32 %v5311, %v5441
    %5443 = vdwg.mxu0
    %v5444 = vmax.f32 %v5416, 0.0
    %v5445 = vmax.f32 %v5435, 0.0
    %v5446 = vmax.f32 %v5418, 0.0
    %v5447 = vmax.f32 %v5437, 0.0
    %v5448 = vmax.f32 %v5421, 0.0
    %v5449 = vmax.f32 %v5440, 0.0
    %v5450 = vmax.f32 %v5423, 0.0
    %v5451 = vmax.f32 %v5442, 0.0
    %v5452 = vpack.c.bf16 %v5446, %v5444
    %v5453 = vpack.c.bf16 %v5447, %v5445
    %v5454 = vpack.c.bf16 %v5450, %v5448
    %v5455 = vpack.c.bf16 %v5451, %v5449
    %s5456 = scalar_lea.vmem %s23, 684
    %v5457 = vld [vmem:[%s5456] sm:$0xff]
    %v5458 = vld [vmem:[%s5456 + $0x8] sm:$0xf]
    %v5459 = vld [vmem:[%s5456 + $0xc] sm:$0xff]
    %v5460 = vld [vmem:[%s5456 + $0x14] sm:$0xf]
    %v5461 = vld [vmem:[%s5456 + $0x18] sm:$0xff]
    %v5462 = vld [vmem:[%s5456 + $0x20] sm:$0xf]
    %v5463 = vld [vmem:[%s5456 + $0x24] sm:$0xff]
    %v5464 = vld [vmem:[%s5456 + $0x2c] sm:$0xf]
    %v5465 = vld [vmem:[%s5456 + $0x30] sm:$0xff]
    %v5466 = vld [vmem:[%s5456 + $0x38] sm:$0xf]
    %v5467 = vld [vmem:[%s5456 + $0x3c] sm:$0xff]
    %v5468 = vld [vmem:[%s5456 + $0x44] sm:$0xf]
    %v5469 = vld [vmem:[%s5456 + $0x48] sm:$0xff]
    %v5470 = vld [vmem:[%s5456 + $0x50] sm:$0xf]
    %v5471 = vld [vmem:[%s5456 + $0x54] sm:$0xff]
    %v5472 = vld [vmem:[%s5456 + $0x5c] sm:$0xf]
    %v5473 = vld [vmem:[%s5456 + $0x60] sm:$0xff]
    %v5474 = vld [vmem:[%s5456 + $0x68] sm:$0xf]
    %v5475 = vld [vmem:[%s5456 + $0x6c] sm:$0xff]
    %v5476 = vld [vmem:[%s5456 + $0x74] sm:$0xf]
    %v5477 = vld [vmem:[%s5456 + $0x78] sm:$0xff]
    %v5478 = vld [vmem:[%s5456 + $0x80] sm:$0xf]
    %v5479 = vld [vmem:[%s5456 + $0x84] sm:$0xff]
    %v5480 = vld [vmem:[%s5456 + $0x8c] sm:$0xf]
    %v5481 = vld [vmem:[%s5456 + $0x90] sm:$0xff]
    %v5482 = vld [vmem:[%s5456 + $0x98] sm:$0xf]
    %v5483 = vld [vmem:[%s5456 + $0x9c] sm:$0xff]
    %v5484 = vld [vmem:[%s5456 + $0xa4] sm:$0xf]
    %v5485 = vld [vmem:[%s5456 + $0xa8] sm:$0xff]
    %v5486 = vld [vmem:[%s5456 + $0xb0] sm:$0xf]
    %v5487 = vld [vmem:[%s5456 + $0xb4] sm:$0xff]
    %v5488 = vld [vmem:[%s5456 + $0xbc] sm:$0xf]
    %v5489 = vld [vmem:[%s5456 + $0xc0] sm:$0xff]
    %v5490 = vld [vmem:[%s5456 + $0xc8] sm:$0xf]
    %v5491 = vld [vmem:[%s5456 + $0xcc] sm:$0xff]
    %v5492 = vld [vmem:[%s5456 + $0xd4] sm:$0xf]
    %v5493 = vld [vmem:[%s5456 + $0xd8] sm:$0x77]
    %v5494 = vld [vmem:[%s5456 + $0xe0] sm:$0x7]
    %v5533 = vunpack.c.l.b16 %v5457
    %v5534 = vunpack.c.h.b16 %v5457
    %v5535 = vunpack.c.l.b16 %v5458
    %v5536 = vunpack.c.l.b16 %v5459
    %v5537 = vunpack.c.h.b16 %v5459
    %v5538 = vunpack.c.l.b16 %v5460
    %v5539 = vunpack.c.l.b16 %v5461
    %v5540 = vunpack.c.h.b16 %v5461
    %v5541 = vunpack.c.l.b16 %v5462
    %v5542 = vunpack.c.l.b16 %v5463
    %v5543 = vunpack.c.h.b16 %v5463
    %v5544 = vunpack.c.l.b16 %v5464
    %v5545 = vunpack.c.l.b16 %v5465
    %v5546 = vunpack.c.h.b16 %v5465
    %v5547 = vunpack.c.l.b16 %v5466
    %v5548 = vunpack.c.l.b16 %v5467
    %v5549 = vunpack.c.h.b16 %v5467
    %v5550 = vunpack.c.l.b16 %v5468
    %v5551 = vunpack.c.l.b16 %v5469
    %v5552 = vunpack.c.h.b16 %v5469
    %v5553 = vunpack.c.l.b16 %v5470
    %v5554 = vunpack.c.l.b16 %v5471
    %v5555 = vunpack.c.h.b16 %v5471
    %v5556 = vunpack.c.l.b16 %v5472
    %v5557 = vunpack.c.l.b16 %v5473
    %v5558 = vunpack.c.h.b16 %v5473
    %v5559 = vunpack.c.l.b16 %v5474
    %v5560 = vunpack.c.l.b16 %v5475
    %v5561 = vunpack.c.h.b16 %v5475
    %v5562 = vunpack.c.l.b16 %v5476
    %v5563 = vunpack.c.l.b16 %v5477
    %v5564 = vunpack.c.h.b16 %v5477
    %v5565 = vunpack.c.l.b16 %v5478
    %v5566 = vunpack.c.l.b16 %v5479
    %v5567 = vunpack.c.h.b16 %v5479
    %v5568 = vunpack.c.l.b16 %v5480
    %v5569 = vunpack.c.l.b16 %v5481
    %v5570 = vunpack.c.h.b16 %v5481
    %v5571 = vunpack.c.l.b16 %v5482
    %v5572 = vunpack.c.l.b16 %v5483
    %v5573 = vunpack.c.h.b16 %v5483
    %v5574 = vunpack.c.l.b16 %v5484
    %v5575 = vunpack.c.l.b16 %v5485
    %v5576 = vunpack.c.h.b16 %v5485
    %v5577 = vunpack.c.l.b16 %v5486
    %v5578 = vunpack.c.l.b16 %v5487
    %v5579 = vunpack.c.h.b16 %v5487
    %v5580 = vunpack.c.l.b16 %v5488
    %v5581 = vunpack.c.l.b16 %v5489
    %v5582 = vunpack.c.h.b16 %v5489
    %v5583 = vunpack.c.l.b16 %v5490
    %v5584 = vunpack.c.l.b16 %v5491
    %v5585 = vunpack.c.h.b16 %v5491
    %v5586 = vunpack.c.l.b16 %v5492
    %v5587 = vunpack.c.l.b16 %v5493
    %v5588 = vunpack.c.h.b16 %v5493
    %v5589 = vunpack.c.l.b16 %v5494
    %v5590 = vpack.c.b16 %v5536, %v5533
    %v5591 = vpack.c.b16 %v5537, %v5534
    %v5592 = vpack.c.b16 %v5538, %v5535
    %v5593 = vpack.c.b16 %v5542, %v5539
    %v5594 = vpack.c.b16 %v5543, %v5540
    %v5595 = vpack.c.b16 %v5544, %v5541
    %v5596 = vpack.c.b16 %v5548, %v5545
    %v5597 = vpack.c.b16 %v5549, %v5546
    %v5598 = vpack.c.b16 %v5550, %v5547
    %v5599 = vpack.c.b16 %v5554, %v5551
    %v5600 = vpack.c.b16 %v5555, %v5552
    %v5601 = vpack.c.b16 %v5556, %v5553
    %v5602 = vpack.c.b16 %v5560, %v5557
    %v5603 = vpack.c.b16 %v5561, %v5558
    %v5604 = vpack.c.b16 %v5562, %v5559
    %v5605 = vpack.c.b16 %v5566, %v5563
    %v5606 = vpack.c.b16 %v5567, %v5564
    %v5607 = vpack.c.b16 %v5568, %v5565
    %v5608 = vpack.c.b16 %v5572, %v5569
    %v5609 = vpack.c.b16 %v5573, %v5570
    %v5610 = vpack.c.b16 %v5574, %v5571
    %v5611 = vpack.c.b16 %v5578, %v5575
    %v5612 = vpack.c.b16 %v5579, %v5576
    %v5613 = vpack.c.b16 %v5580, %v5577
    %v5614 = vpack.c.b16 %v5584, %v5581
    %v5615 = vpack.c.b16 %v5585, %v5582
    %v5616 = vpack.c.b16 %v5586, %v5583
    %v5617 = vpack.c.b16 %v5587, %v5587
    %v5618 = vpack.c.b16 %v5588, %v5588
    %v5619 = vpack.c.b16 %v5589, %v5589
    %v5648 = vsel %vm997, %v5453, 0
    %v5651 = vsel %vm997, %v5455, 0
    %v5654 = vsel %vm1004, %v5617, 0
    %v5657 = vsel %vm1004, %v5618, 0
    %v5660 = vsel %vm1004, %v5619, 0
    %5662 = vmatpush.bf16.msra.mxu0 %v5611
    %5663 = vmatpush.bf16.msra.mxu0 %v5608
    %5664 = vmatpush.bf16.msra.mxu0 %v5605
    %5665 = vmatpush.bf16.msra.mxu0 %v5602
    %5666 = vmatpush.bf16.msra.mxu0 %v5599
    %5667 = vmatpush.bf16.msra.mxu0 %v5596
    %5668 = vmatpush.bf16.msra.mxu0 %v5593
    %5669 = vmatpush.bf16.msra.mxu0 %v5590
    %5670 = vmatmul.bf16.gmra.mxu0 %v5452
    %v5671 = vpop.f32.mrf.mxu0
    %v5672 = vadd.f32 0.0, %v5671
    %v5673 = vpop.f32.mrf.mxu0
    %v5674 = vadd.f32 0.0, %v5673
    %5675 = vmatmul.bf16.gmra.mxu0 %v5454
    %v5676 = vpop.f32.mrf.mxu0
    %v5677 = vadd.f32 0.0, %v5676
    %v5678 = vpop.f32.mrf.mxu0
    %v5679 = vadd.f32 0.0, %v5678
    %5680 = vdwg.mxu0
    %5681 = vmatpush.bf16.msra.mxu0 0
    %5682 = vmatpush.bf16.msra.mxu0 0
    %5683 = vmatpush.bf16.msra.mxu0 0
    %5684 = vmatpush.bf16.msra.mxu0 0
    %5685 = vmatpush.bf16.msra.mxu0 0
    %5686 = vmatpush.bf16.msra.mxu0 0
    %5687 = vmatpush.bf16.msra.mxu0 %v5654
    %5688 = vmatpush.bf16.msra.mxu0 %v5614
    %5689 = vmatmul.bf16.gmra.mxu0 %v5648
    %v5690 = vpop.f32.mrf.mxu0
    %v5691 = vadd.f32 %v5672, %v5690
    %v5692 = vpop.f32.mrf.mxu0
    %v5693 = vadd.f32 %v5674, %v5692
    %5694 = vmatmul.bf16.gmra.mxu0 %v5651
    %v5695 = vpop.f32.mrf.mxu0
    %v5696 = vadd.f32 %v5677, %v5695
    %v5697 = vpop.f32.mrf.mxu0
    %v5698 = vadd.f32 %v5679, %v5697
    %5699 = vdwg.mxu0
    %5700 = vmatpush.bf16.msra.mxu0 %v5612
    %5701 = vmatpush.bf16.msra.mxu0 %v5609
    %5702 = vmatpush.bf16.msra.mxu0 %v5606
    %5703 = vmatpush.bf16.msra.mxu0 %v5603
    %5704 = vmatpush.bf16.msra.mxu0 %v5600
    %5705 = vmatpush.bf16.msra.mxu0 %v5597
    %5706 = vmatpush.bf16.msra.mxu0 %v5594
    %5707 = vmatpush.bf16.msra.mxu0 %v5591
    %5708 = vmatmul.bf16.gmra.mxu0 %v5452
    %v5709 = vpop.f32.mrf.mxu0
    %v5710 = vadd.f32 0.0, %v5709
    %v5711 = vpop.f32.mrf.mxu0
    %v5712 = vadd.f32 0.0, %v5711
    %5713 = vmatmul.bf16.gmra.mxu0 %v5454
    %v5714 = vpop.f32.mrf.mxu0
    %v5715 = vadd.f32 0.0, %v5714
    %v5716 = vpop.f32.mrf.mxu0
    %v5717 = vadd.f32 0.0, %v5716
    %5718 = vdwg.mxu0
    %5719 = vmatpush.bf16.msra.mxu0 0
    %5720 = vmatpush.bf16.msra.mxu0 0
    %5721 = vmatpush.bf16.msra.mxu0 0
    %5722 = vmatpush.bf16.msra.mxu0 0
    %5723 = vmatpush.bf16.msra.mxu0 0
    %5724 = vmatpush.bf16.msra.mxu0 0
    %5725 = vmatpush.bf16.msra.mxu0 %v5657
    %5726 = vmatpush.bf16.msra.mxu0 %v5615
    %5727 = vmatmul.bf16.gmra.mxu0 %v5648
    %v5728 = vpop.f32.mrf.mxu0
    %v5729 = vadd.f32 %v5710, %v5728
    %v5730 = vpop.f32.mrf.mxu0
    %v5731 = vadd.f32 %v5712, %v5730
    %5732 = vmatmul.bf16.gmra.mxu0 %v5651
    %v5733 = vpop.f32.mrf.mxu0
    %v5734 = vadd.f32 %v5715, %v5733
    %v5735 = vpop.f32.mrf.mxu0
    %v5736 = vadd.f32 %v5717, %v5735
    %5737 = vdwg.mxu0
    %5738 = vmatpush.bf16.msra.mxu0 %v5613
    %5739 = vmatpush.bf16.msra.mxu0 %v5610
    %5740 = vmatpush.bf16.msra.mxu0 %v5607
    %5741 = vmatpush.bf16.msra.mxu0 %v5604
    %5742 = vmatpush.bf16.msra.mxu0 %v5601
    %5743 = vmatpush.bf16.msra.mxu0 %v5598
    %5744 = vmatpush.bf16.msra.mxu0 %v5595
    %5745 = vmatpush.bf16.msra.mxu0 %v5592
    %5746 = vmatmul.bf16.gmra.mxu0 %v5452
    %v5747 = vpop.f32.mrf.mxu0
    %v5748 = vadd.f32 0.0, %v5747
    %v5749 = vpop.f32.mrf.mxu0
    %v5750 = vadd.f32 0.0, %v5749
    %5751 = vmatmul.bf16.gmra.mxu0 %v5454
    %v5752 = vpop.f32.mrf.mxu0
    %v5753 = vadd.f32 0.0, %v5752
    %v5754 = vpop.f32.mrf.mxu0
    %v5755 = vadd.f32 0.0, %v5754
    %5756 = vdwg.mxu0
    %5757 = vmatpush.bf16.msra.mxu0 0
    %5758 = vmatpush.bf16.msra.mxu0 0
    %5759 = vmatpush.bf16.msra.mxu0 0
    %5760 = vmatpush.bf16.msra.mxu0 0
    %5761 = vmatpush.bf16.msra.mxu0 0
    %5762 = vmatpush.bf16.msra.mxu0 0
    %5763 = vmatpush.bf16.msra.mxu0 %v5660
    %5764 = vmatpush.bf16.msra.mxu0 %v5616
    %5765 = vmatmul.bf16.gmra.mxu0 %v5648
    %v5766 = vpop.f32.mrf.mxu0
    %v5767 = vadd.f32 %v5748, %v5766
    %v5768 = vpop.f32.mrf.mxu0
    %v5769 = vadd.f32 %v5750, %v5768
    %5770 = vmatmul.bf16.gmra.mxu0 %v5651
    %v5771 = vpop.f32.mrf.mxu0
    %v5772 = vadd.f32 %v5753, %v5771
    %v5773 = vpop.f32.mrf.mxu0
    %v5774 = vadd.f32 %v5755, %v5773
    %5775 = vdwg.mxu0
    %v5776 = vadd.f32 %v5278, %v5691
    %v5777 = vadd.f32 %v5279, %v5729
    %v5778 = vadd.f32 %v5280, %v5767
    %v5779 = vadd.f32 %v5281, %v5693
    %v5780 = vadd.f32 %v5282, %v5731
    %v5781 = vadd.f32 %v5283, %v5769
    %v5782 = vadd.f32 %v5284, %v5696
    %v5783 = vadd.f32 %v5285, %v5734
    %v5784 = vadd.f32 %v5286, %v5772
    %v5785 = vadd.f32 %v5287, %v5698
    %v5786 = vadd.f32 %v5288, %v5736
    %v5787 = vadd.f32 %v5289, %v5774
    %s5788 = scalar_lea.vmem %s19, 640
    %v5789 = vld [vmem:[%s5788] sm:$0xff]
    %v5790 = vld [vmem:[%s5788 + $0x8] sm:$0xff]
    %v5791 = vld [vmem:[%s5788 + $0x10] sm:$0xff]
    %v5792 = vld [vmem:[%s5788 + $0x18] sm:$0xff]
    %v5793 = vld [vmem:[%s5788 + $0x20] sm:$0xff]
    %v5794 = vld [vmem:[%s5788 + $0x28] sm:$0xff]
    %v5795 = vld [vmem:[%s5788 + $0x30] sm:$0xff]
    %v5796 = vld [vmem:[%s5788 + $0x38] sm:$0xff]
    %v5797 = vld [vmem:[%s5788 + $0x40] sm:$0xff]
    %v5798 = vld [vmem:[%s5788 + $0x48] sm:$0xff]
    %v5799 = vld [vmem:[%s5788 + $0x50] sm:$0xff]
    %v5800 = vld [vmem:[%s5788 + $0x58] sm:$0xff]
    %v5801 = vld [vmem:[%s5788 + $0x60] sm:$0xff]
    %v5802 = vld [vmem:[%s5788 + $0x68] sm:$0xff]
    %v5803 = vld [vmem:[%s5788 + $0x70] sm:$0xff]
    %v5804 = vld [vmem:[%s5788 + $0x78] sm:$0xff]
    %s5805 = scalar_lea.vmem [#allocation6], 10
    %v5806 = vld [vmem:[%s5805] sm:$0x3]
    %v5808 = vperm.slane %v5806, 0
    %v5809 = vperm.slane %v5806, 1
    %v5812 = vunpack.c.h.b16 %v257
    %v5813 = vunpack.c.h.b16 %v264
    %v5814 = vunpack.c.h.b16 %v271
    %v5815 = vunpack.c.h.b16 %v278
    %v5816 = vpack.c.b16 %v5813, %v5812
    %v5817 = vpack.c.b16 %v5815, %v5814
    %v5836 = vunpack.c.l.b16 %v5789
    %v5837 = vunpack.c.h.b16 %v5789
    %v5838 = vunpack.c.l.b16 %v5790
    %v5839 = vunpack.c.h.b16 %v5790
    %v5840 = vunpack.c.l.b16 %v5791
    %v5841 = vunpack.c.h.b16 %v5791
    %v5842 = vunpack.c.l.b16 %v5792
    %v5843 = vunpack.c.h.b16 %v5792
    %v5844 = vunpack.c.l.b16 %v5793
    %v5845 = vunpack.c.h.b16 %v5793
    %v5846 = vunpack.c.l.b16 %v5794
    %v5847 = vunpack.c.h.b16 %v5794
    %v5848 = vunpack.c.l.b16 %v5795
    %v5849 = vunpack.c.h.b16 %v5795
    %v5850 = vunpack.c.l.b16 %v5796
    %v5851 = vunpack.c.h.b16 %v5796
    %v5852 = vunpack.c.l.b16 %v5797
    %v5853 = vunpack.c.h.b16 %v5797
    %v5854 = vunpack.c.l.b16 %v5798
    %v5855 = vunpack.c.h.b16 %v5798
    %v5856 = vunpack.c.l.b16 %v5799
    %v5857 = vunpack.c.h.b16 %v5799
    %v5858 = vunpack.c.l.b16 %v5800
    %v5859 = vunpack.c.h.b16 %v5800
    %v5860 = vunpack.c.l.b16 %v5801
    %v5861 = vunpack.c.h.b16 %v5801
    %v5862 = vunpack.c.l.b16 %v5802
    %v5863 = vunpack.c.h.b16 %v5802
    %v5864 = vunpack.c.l.b16 %v5803
    %v5865 = vunpack.c.h.b16 %v5803
    %v5866 = vunpack.c.l.b16 %v5804
    %v5867 = vunpack.c.h.b16 %v5804
    %v5868 = vpack.c.b16 %v5838, %v5836
    %v5869 = vpack.c.b16 %v5839, %v5837
    %v5870 = vpack.c.b16 %v5842, %v5840
    %v5871 = vpack.c.b16 %v5843, %v5841
    %v5872 = vpack.c.b16 %v5846, %v5844
    %v5873 = vpack.c.b16 %v5847, %v5845
    %v5874 = vpack.c.b16 %v5850, %v5848
    %v5875 = vpack.c.b16 %v5851, %v5849
    %v5876 = vpack.c.b16 %v5854, %v5852
    %v5877 = vpack.c.b16 %v5855, %v5853
    %v5878 = vpack.c.b16 %v5858, %v5856
    %v5879 = vpack.c.b16 %v5859, %v5857
    %v5880 = vpack.c.b16 %v5862, %v5860
    %v5881 = vpack.c.b16 %v5863, %v5861
    %v5882 = vpack.c.b16 %v5866, %v5864
    %v5883 = vpack.c.b16 %v5867, %v5865
    %5900 = vmatpush.bf16.msra.mxu0 %v5882
    %5901 = vmatpush.bf16.msra.mxu0 %v5880
    %5902 = vmatpush.bf16.msra.mxu0 %v5878
    %5903 = vmatpush.bf16.msra.mxu0 %v5876
    %5904 = vmatpush.bf16.msra.mxu0 %v5874
    %5905 = vmatpush.bf16.msra.mxu0 %v5872
    %5906 = vmatpush.bf16.msra.mxu0 %v5870
    %5907 = vmatpush.bf16.msra.mxu0 %v5868
    %5908 = vmatmul.bf16.gmra.mxu0 %v5816
    %v5909 = vpop.f32.mrf.mxu0
    %v5910 = vadd.f32 %v5808, %v5909
    %v5911 = vpop.f32.mrf.mxu0
    %v5912 = vadd.f32 %v5808, %v5911
    %5913 = vmatmul.bf16.gmra.mxu0 %v5817
    %v5914 = vpop.f32.mrf.mxu0
    %v5915 = vadd.f32 %v5808, %v5914
    %v5916 = vpop.f32.mrf.mxu0
    %v5917 = vadd.f32 %v5808, %v5916
    %5918 = vdwg.mxu0
    %5919 = vmatpush.bf16.msra.mxu0 %v5883
    %5920 = vmatpush.bf16.msra.mxu0 %v5881
    %5921 = vmatpush.bf16.msra.mxu0 %v5879
    %5922 = vmatpush.bf16.msra.mxu0 %v5877
    %5923 = vmatpush.bf16.msra.mxu0 %v5875
    %5924 = vmatpush.bf16.msra.mxu0 %v5873
    %5925 = vmatpush.bf16.msra.mxu0 %v5871
    %5926 = vmatpush.bf16.msra.mxu0 %v5869
    %5927 = vmatmul.bf16.gmra.mxu0 %v5816
    %v5928 = vpop.f32.mrf.mxu0
    %v5929 = vadd.f32 %v5809, %v5928
    %v5930 = vpop.f32.mrf.mxu0
    %v5931 = vadd.f32 %v5809, %v5930
    %5932 = vmatmul.bf16.gmra.mxu0 %v5817
    %v5933 = vpop.f32.mrf.mxu0
    %v5934 = vadd.f32 %v5809, %v5933
    %v5935 = vpop.f32.mrf.mxu0
    %v5936 = vadd.f32 %v5809, %v5935
    %5937 = vdwg.mxu0
    %v5938 = vmax.f32 %v5910, 0.0
    %v5939 = vmax.f32 %v5929, 0.0
    %v5940 = vmax.f32 %v5912, 0.0
    %v5941 = vmax.f32 %v5931, 0.0
    %v5942 = vmax.f32 %v5915, 0.0
    %v5943 = vmax.f32 %v5934, 0.0
    %v5944 = vmax.f32 %v5917, 0.0
    %v5945 = vmax.f32 %v5936, 0.0
    %v5946 = vpack.c.bf16 %v5940, %v5938
    %v5947 = vpack.c.bf16 %v5941, %v5939
    %v5948 = vpack.c.bf16 %v5944, %v5942
    %v5949 = vpack.c.bf16 %v5945, %v5943
    %s5950 = scalar_lea.vmem %s23, 912
    %v5951 = vld [vmem:[%s5950] sm:$0xff]
    %v5952 = vld [vmem:[%s5950 + $0x8] sm:$0xf]
    %v5953 = vld [vmem:[%s5950 + $0xc] sm:$0xff]
    %v5954 = vld [vmem:[%s5950 + $0x14] sm:$0xf]
    %v5955 = vld [vmem:[%s5950 + $0x18] sm:$0xff]
    %v5956 = vld [vmem:[%s5950 + $0x20] sm:$0xf]
    %v5957 = vld [vmem:[%s5950 + $0x24] sm:$0xff]
    %v5958 = vld [vmem:[%s5950 + $0x2c] sm:$0xf]
    %v5959 = vld [vmem:[%s5950 + $0x30] sm:$0xff]
    %v5960 = vld [vmem:[%s5950 + $0x38] sm:$0xf]
    %v5961 = vld [vmem:[%s5950 + $0x3c] sm:$0xff]
    %v5962 = vld [vmem:[%s5950 + $0x44] sm:$0xf]
    %v5963 = vld [vmem:[%s5950 + $0x48] sm:$0xff]
    %v5964 = vld [vmem:[%s5950 + $0x50] sm:$0xf]
    %v5965 = vld [vmem:[%s5950 + $0x54] sm:$0xff]
    %v5966 = vld [vmem:[%s5950 + $0x5c] sm:$0xf]
    %v5967 = vld [vmem:[%s5950 + $0x60] sm:$0xff]
    %v5968 = vld [vmem:[%s5950 + $0x68] sm:$0xf]
    %v5969 = vld [vmem:[%s5950 + $0x6c] sm:$0xff]
    %v5970 = vld [vmem:[%s5950 + $0x74] sm:$0xf]
    %v5971 = vld [vmem:[%s5950 + $0x78] sm:$0xff]
    %v5972 = vld [vmem:[%s5950 + $0x80] sm:$0xf]
    %v5973 = vld [vmem:[%s5950 + $0x84] sm:$0xff]
    %v5974 = vld [vmem:[%s5950 + $0x8c] sm:$0xf]
    %v5975 = vld [vmem:[%s5950 + $0x90] sm:$0xff]
    %v5976 = vld [vmem:[%s5950 + $0x98] sm:$0xf]
    %v5977 = vld [vmem:[%s5950 + $0x9c] sm:$0xff]
    %v5978 = vld [vmem:[%s5950 + $0xa4] sm:$0xf]
    %v5979 = vld [vmem:[%s5950 + $0xa8] sm:$0xff]
    %v5980 = vld [vmem:[%s5950 + $0xb0] sm:$0xf]
    %v5981 = vld [vmem:[%s5950 + $0xb4] sm:$0xff]
    %v5982 = vld [vmem:[%s5950 + $0xbc] sm:$0xf]
    %v5983 = vld [vmem:[%s5950 + $0xc0] sm:$0xff]
    %v5984 = vld [vmem:[%s5950 + $0xc8] sm:$0xf]
    %v5985 = vld [vmem:[%s5950 + $0xcc] sm:$0xff]
    %v5986 = vld [vmem:[%s5950 + $0xd4] sm:$0xf]
    %v5987 = vld [vmem:[%s5950 + $0xd8] sm:$0x77]
    %v5988 = vld [vmem:[%s5950 + $0xe0] sm:$0x7]
    %v6027 = vunpack.c.l.b16 %v5951
    %v6028 = vunpack.c.h.b16 %v5951
    %v6029 = vunpack.c.l.b16 %v5952
    %v6030 = vunpack.c.l.b16 %v5953
    %v6031 = vunpack.c.h.b16 %v5953
    %v6032 = vunpack.c.l.b16 %v5954
    %v6033 = vunpack.c.l.b16 %v5955
    %v6034 = vunpack.c.h.b16 %v5955
    %v6035 = vunpack.c.l.b16 %v5956
    %v6036 = vunpack.c.l.b16 %v5957
    %v6037 = vunpack.c.h.b16 %v5957
    %v6038 = vunpack.c.l.b16 %v5958
    %v6039 = vunpack.c.l.b16 %v5959
    %v6040 = vunpack.c.h.b16 %v5959
    %v6041 = vunpack.c.l.b16 %v5960
    %v6042 = vunpack.c.l.b16 %v5961
    %v6043 = vunpack.c.h.b16 %v5961
    %v6044 = vunpack.c.l.b16 %v5962
    %v6045 = vunpack.c.l.b16 %v5963
    %v6046 = vunpack.c.h.b16 %v5963
    %v6047 = vunpack.c.l.b16 %v5964
    %v6048 = vunpack.c.l.b16 %v5965
    %v6049 = vunpack.c.h.b16 %v5965
    %v6050 = vunpack.c.l.b16 %v5966
    %v6051 = vunpack.c.l.b16 %v5967
    %v6052 = vunpack.c.h.b16 %v5967
    %v6053 = vunpack.c.l.b16 %v5968
    %v6054 = vunpack.c.l.b16 %v5969
    %v6055 = vunpack.c.h.b16 %v5969
    %v6056 = vunpack.c.l.b16 %v5970
    %v6057 = vunpack.c.l.b16 %v5971
    %v6058 = vunpack.c.h.b16 %v5971
    %v6059 = vunpack.c.l.b16 %v5972
    %v6060 = vunpack.c.l.b16 %v5973
    %v6061 = vunpack.c.h.b16 %v5973
    %v6062 = vunpack.c.l.b16 %v5974
    %v6063 = vunpack.c.l.b16 %v5975
    %v6064 = vunpack.c.h.b16 %v5975
    %v6065 = vunpack.c.l.b16 %v5976
    %v6066 = vunpack.c.l.b16 %v5977
    %v6067 = vunpack.c.h.b16 %v5977
    %v6068 = vunpack.c.l.b16 %v5978
    %v6069 = vunpack.c.l.b16 %v5979
    %v6070 = vunpack.c.h.b16 %v5979
    %v6071 = vunpack.c.l.b16 %v5980
    %v6072 = vunpack.c.l.b16 %v5981
    %v6073 = vunpack.c.h.b16 %v5981
    %v6074 = vunpack.c.l.b16 %v5982
    %v6075 = vunpack.c.l.b16 %v5983
    %v6076 = vunpack.c.h.b16 %v5983
    %v6077 = vunpack.c.l.b16 %v5984
    %v6078 = vunpack.c.l.b16 %v5985
    %v6079 = vunpack.c.h.b16 %v5985
    %v6080 = vunpack.c.l.b16 %v5986
    %v6081 = vunpack.c.l.b16 %v5987
    %v6082 = vunpack.c.h.b16 %v5987
    %v6083 = vunpack.c.l.b16 %v5988
    %v6084 = vpack.c.b16 %v6030, %v6027
    %v6085 = vpack.c.b16 %v6031, %v6028
    %v6086 = vpack.c.b16 %v6032, %v6029
    %v6087 = vpack.c.b16 %v6036, %v6033
    %v6088 = vpack.c.b16 %v6037, %v6034
    %v6089 = vpack.c.b16 %v6038, %v6035
    %v6090 = vpack.c.b16 %v6042, %v6039
    %v6091 = vpack.c.b16 %v6043, %v6040
    %v6092 = vpack.c.b16 %v6044, %v6041
    %v6093 = vpack.c.b16 %v6048, %v6045
    %v6094 = vpack.c.b16 %v6049, %v6046
    %v6095 = vpack.c.b16 %v6050, %v6047
    %v6096 = vpack.c.b16 %v6054, %v6051
    %v6097 = vpack.c.b16 %v6055, %v6052
    %v6098 = vpack.c.b16 %v6056, %v6053
    %v6099 = vpack.c.b16 %v6060, %v6057
    %v6100 = vpack.c.b16 %v6061, %v6058
    %v6101 = vpack.c.b16 %v6062, %v6059
    %v6102 = vpack.c.b16 %v6066, %v6063
    %v6103 = vpack.c.b16 %v6067, %v6064
    %v6104 = vpack.c.b16 %v6068, %v6065
    %v6105 = vpack.c.b16 %v6072, %v6069
    %v6106 = vpack.c.b16 %v6073, %v6070
    %v6107 = vpack.c.b16 %v6074, %v6071
    %v6108 = vpack.c.b16 %v6078, %v6075
    %v6109 = vpack.c.b16 %v6079, %v6076
    %v6110 = vpack.c.b16 %v6080, %v6077
    %v6111 = vpack.c.b16 %v6081, %v6081
    %v6112 = vpack.c.b16 %v6082, %v6082
    %v6113 = vpack.c.b16 %v6083, %v6083
    %v6142 = vsel %vm997, %v5947, 0
    %v6145 = vsel %vm997, %v5949, 0
    %v6148 = vsel %vm1004, %v6111, 0
    %v6151 = vsel %vm1004, %v6112, 0
    %v6154 = vsel %vm1004, %v6113, 0
    %6156 = vmatpush.bf16.msra.mxu0 %v6105
    %6157 = vmatpush.bf16.msra.mxu0 %v6102
    %6158 = vmatpush.bf16.msra.mxu0 %v6099
    %6159 = vmatpush.bf16.msra.mxu0 %v6096
    %6160 = vmatpush.bf16.msra.mxu0 %v6093
    %6161 = vmatpush.bf16.msra.mxu0 %v6090
    %6162 = vmatpush.bf16.msra.mxu0 %v6087
    %6163 = vmatpush.bf16.msra.mxu0 %v6084
    %6164 = vmatmul.bf16.gmra.mxu0 %v5946
    %v6165 = vpop.f32.mrf.mxu0
    %v6166 = vadd.f32 0.0, %v6165
    %v6167 = vpop.f32.mrf.mxu0
    %v6168 = vadd.f32 0.0, %v6167
    %6169 = vmatmul.bf16.gmra.mxu0 %v5948
    %v6170 = vpop.f32.mrf.mxu0
    %v6171 = vadd.f32 0.0, %v6170
    %v6172 = vpop.f32.mrf.mxu0
    %v6173 = vadd.f32 0.0, %v6172
    %6174 = vdwg.mxu0
    %6175 = vmatpush.bf16.msra.mxu0 0
    %6176 = vmatpush.bf16.msra.mxu0 0
    %6177 = vmatpush.bf16.msra.mxu0 0
    %6178 = vmatpush.bf16.msra.mxu0 0
    %6179 = vmatpush.bf16.msra.mxu0 0
    %6180 = vmatpush.bf16.msra.mxu0 0
    %6181 = vmatpush.bf16.msra.mxu0 %v6148
    %6182 = vmatpush.bf16.msra.mxu0 %v6108
    %6183 = vmatmul.bf16.gmra.mxu0 %v6142
    %v6184 = vpop.f32.mrf.mxu0
    %v6185 = vadd.f32 %v6166, %v6184
    %v6186 = vpop.f32.mrf.mxu0
    %v6187 = vadd.f32 %v6168, %v6186
    %6188 = vmatmul.bf16.gmra.mxu0 %v6145
    %v6189 = vpop.f32.mrf.mxu0
    %v6190 = vadd.f32 %v6171, %v6189
    %v6191 = vpop.f32.mrf.mxu0
    %v6192 = vadd.f32 %v6173, %v6191
    %6193 = vdwg.mxu0
    %6194 = vmatpush.bf16.msra.mxu0 %v6106
    %6195 = vmatpush.bf16.msra.mxu0 %v6103
    %6196 = vmatpush.bf16.msra.mxu0 %v6100
    %6197 = vmatpush.bf16.msra.mxu0 %v6097
    %6198 = vmatpush.bf16.msra.mxu0 %v6094
    %6199 = vmatpush.bf16.msra.mxu0 %v6091
    %6200 = vmatpush.bf16.msra.mxu0 %v6088
    %6201 = vmatpush.bf16.msra.mxu0 %v6085
    %6202 = vmatmul.bf16.gmra.mxu0 %v5946
    %v6203 = vpop.f32.mrf.mxu0
    %v6204 = vadd.f32 0.0, %v6203
    %v6205 = vpop.f32.mrf.mxu0
    %v6206 = vadd.f32 0.0, %v6205
    %6207 = vmatmul.bf16.gmra.mxu0 %v5948
    %v6208 = vpop.f32.mrf.mxu0
    %v6209 = vadd.f32 0.0, %v6208
    %v6210 = vpop.f32.mrf.mxu0
    %v6211 = vadd.f32 0.0, %v6210
    %6212 = vdwg.mxu0
    %6213 = vmatpush.bf16.msra.mxu0 0
    %6214 = vmatpush.bf16.msra.mxu0 0
    %6215 = vmatpush.bf16.msra.mxu0 0
    %6216 = vmatpush.bf16.msra.mxu0 0
    %6217 = vmatpush.bf16.msra.mxu0 0
    %6218 = vmatpush.bf16.msra.mxu0 0
    %6219 = vmatpush.bf16.msra.mxu0 %v6151
    %6220 = vmatpush.bf16.msra.mxu0 %v6109
    %6221 = vmatmul.bf16.gmra.mxu0 %v6142
    %v6222 = vpop.f32.mrf.mxu0
    %v6223 = vadd.f32 %v6204, %v6222
    %v6224 = vpop.f32.mrf.mxu0
    %v6225 = vadd.f32 %v6206, %v6224
    %6226 = vmatmul.bf16.gmra.mxu0 %v6145
    %v6227 = vpop.f32.mrf.mxu0
    %v6228 = vadd.f32 %v6209, %v6227
    %v6229 = vpop.f32.mrf.mxu0
    %v6230 = vadd.f32 %v6211, %v6229
    %6231 = vdwg.mxu0
    %6232 = vmatpush.bf16.msra.mxu0 %v6107
    %6233 = vmatpush.bf16.msra.mxu0 %v6104
    %6234 = vmatpush.bf16.msra.mxu0 %v6101
    %6235 = vmatpush.bf16.msra.mxu0 %v6098
    %6236 = vmatpush.bf16.msra.mxu0 %v6095
    %6237 = vmatpush.bf16.msra.mxu0 %v6092
    %6238 = vmatpush.bf16.msra.mxu0 %v6089
    %6239 = vmatpush.bf16.msra.mxu0 %v6086
    %6240 = vmatmul.bf16.gmra.mxu0 %v5946
    %v6241 = vpop.f32.mrf.mxu0
    %v6242 = vadd.f32 0.0, %v6241
    %v6243 = vpop.f32.mrf.mxu0
    %v6244 = vadd.f32 0.0, %v6243
    %6245 = vmatmul.bf16.gmra.mxu0 %v5948
    %v6246 = vpop.f32.mrf.mxu0
    %v6247 = vadd.f32 0.0, %v6246
    %v6248 = vpop.f32.mrf.mxu0
    %v6249 = vadd.f32 0.0, %v6248
    %6250 = vdwg.mxu0
    %6251 = vmatpush.bf16.msra.mxu0 0
    %6252 = vmatpush.bf16.msra.mxu0 0
    %6253 = vmatpush.bf16.msra.mxu0 0
    %6254 = vmatpush.bf16.msra.mxu0 0
    %6255 = vmatpush.bf16.msra.mxu0 0
    %6256 = vmatpush.bf16.msra.mxu0 0
    %6257 = vmatpush.bf16.msra.mxu0 %v6154
    %6258 = vmatpush.bf16.msra.mxu0 %v6110
    %6259 = vmatmul.bf16.gmra.mxu0 %v6142
    %v6260 = vpop.f32.mrf.mxu0
    %v6261 = vadd.f32 %v6242, %v6260
    %v6262 = vpop.f32.mrf.mxu0
    %v6263 = vadd.f32 %v6244, %v6262
    %6264 = vmatmul.bf16.gmra.mxu0 %v6145
    %v6265 = vpop.f32.mrf.mxu0
    %v6266 = vadd.f32 %v6247, %v6265
    %v6267 = vpop.f32.mrf.mxu0
    %v6268 = vadd.f32 %v6249, %v6267
    %6269 = vdwg.mxu0
    %v6270 = vadd.f32 %v5776, %v6185
    %v6271 = vadd.f32 %v5777, %v6223
    %v6272 = vadd.f32 %v5778, %v6261
    %v6273 = vadd.f32 %v5779, %v6187
    %v6274 = vadd.f32 %v5780, %v6225
    %v6275 = vadd.f32 %v5781, %v6263
    %v6276 = vadd.f32 %v5782, %v6190
    %v6277 = vadd.f32 %v5783, %v6228
    %v6278 = vadd.f32 %v5784, %v6266
    %v6279 = vadd.f32 %v5785, %v6192
    %v6280 = vadd.f32 %v5786, %v6230
    %v6281 = vadd.f32 %v5787, %v6268
    %v6282 = vld [vmem:[#allocation8] sm:$0x7]
    %v6284 = vperm.slane %v6282, 0
    %v6285 = vperm.slane %v6282, 1
    %v6286 = vperm.slane %v6282, 2
    %v6290 = vadd.f32 %v6270, %v6284
    %v6291 = vadd.f32 %v6271, %v6285
    %v6292 = vadd.f32 %v6272, %v6286
    %v6293 = vadd.f32 %v6273, %v6284
    %v6294 = vadd.f32 %v6274, %v6285
    %v6295 = vadd.f32 %v6275, %v6286
    %v6296 = vadd.f32 %v6276, %v6284
    %v6297 = vadd.f32 %v6277, %v6285
    %v6298 = vadd.f32 %v6278, %v6286
    %v6299 = vadd.f32 %v6279, %v6284
    %v6300 = vadd.f32 %v6280, %v6285
    %v6301 = vadd.f32 %v6281, %v6286
    %v6302 = vmax.f32 %v6290, 0.0
    %v6303 = vmax.f32 %v6291, 0.0
    %v6304 = vmax.f32 %v6292, 0.0
    %v6305 = vmax.f32 %v6293, 0.0
    %v6306 = vmax.f32 %v6294, 0.0
    %v6307 = vmax.f32 %v6295, 0.0
    %v6308 = vmax.f32 %v6296, 0.0
    %v6309 = vmax.f32 %v6297, 0.0
    %v6310 = vmax.f32 %v6298, 0.0
    %v6311 = vmax.f32 %v6299, 0.0
    %v6312 = vmax.f32 %v6300, 0.0
    %v6313 = vmax.f32 %v6301, 0.0
    %v6314 = vpack.c.bf16 %v3823, %v3821
    %v6315 = vpack.c.bf16 %v3824, %v3822
    %v6316 = vpack.c.bf16 %v3827, %v3825
    %v6317 = vpack.c.bf16 %v3828, %v3826
    %v6318 = vld [vmem:[#allocation9] sm:$0xff]
    %v6319 = vld [vmem:[#allocation9 + $0x8] sm:$0xff]
    %v6320 = vld [vmem:[#allocation9 + $0x10] sm:$0xff]
    %v6321 = vld [vmem:[#allocation9 + $0x18] sm:$0xff]
    %v6322 = vld [vmem:[#allocation9 + $0x20] sm:$0xff]
    %v6323 = vld [vmem:[#allocation9 + $0x28] sm:$0xff]
    %v6324 = vld [vmem:[#allocation9 + $0x30] sm:$0xff]
    %v6325 = vld [vmem:[#allocation9 + $0x38] sm:$0xff]
    %v6326 = vld [vmem:[#allocation9 + $0x40] sm:$0xff]
    %v6327 = vld [vmem:[#allocation9 + $0x48] sm:$0xff]
    %v6328 = vld [vmem:[#allocation9 + $0x50] sm:$0xff]
    %v6329 = vld [vmem:[#allocation9 + $0x58] sm:$0xff]
    %v6330 = vld [vmem:[#allocation9 + $0x60] sm:$0xff]
    %v6331 = vld [vmem:[#allocation9 + $0x68] sm:$0xff]
    %v6332 = vld [vmem:[#allocation9 + $0x70] sm:$0xff]
    %v6333 = vld [vmem:[#allocation9 + $0x78] sm:$0xff]
    %v6334 = vld [vmem:[#allocation9 + $0x80] sm:$0xff]
    %v6335 = vld [vmem:[#allocation9 + $0x88] sm:$0xff]
    %v6336 = vld [vmem:[#allocation9 + $0x90] sm:$0x77]
    %v6337 = vpack.c.bf16 %v6305, %v6302
    %v6338 = vpack.c.bf16 %v6306, %v6303
    %v6339 = vpack.c.bf16 %v6307, %v6304
    %v6340 = vpack.c.bf16 %v6311, %v6308
    %v6341 = vpack.c.bf16 %v6312, %v6309
    %v6342 = vpack.c.bf16 %v6313, %v6310
    %v6343 = vld [vmem:[%s29] sm:$0xff]
    %v6344 = vld [vmem:[%s29 + $0x8] sm:$0xff]
    %v6345 = vld [vmem:[%s29 + $0x10] sm:$0xff]
    %v6346 = vld [vmem:[%s29 + $0x18] sm:$0xff]
    %v6347 = vld [vmem:[%s29 + $0x20] sm:$0xff]
    %v6348 = vld [vmem:[%s29 + $0x28] sm:$0xff]
    %v6349 = vld [vmem:[%s29 + $0x30] sm:$0xff]
    %v6350 = vld [vmem:[%s29 + $0x38] sm:$0xff]
    %v6351 = vld [vmem:[%s29 + $0x40] sm:$0xff]
    %v6352 = vld [vmem:[%s29 + $0x48] sm:$0xff]
    %v6353 = vld [vmem:[%s29 + $0x50] sm:$0xff]
    %v6354 = vld [vmem:[%s29 + $0x58] sm:$0xff]
    %v6355 = vld [vmem:[%s29 + $0x60] sm:$0xff]
    %v6356 = vld [vmem:[%s29 + $0x68] sm:$0xff]
    %v6357 = vld [vmem:[%s29 + $0x70] sm:$0xff]
    %v6358 = vld [vmem:[%s29 + $0x78] sm:$0xff]
    %v6359 = vld [vmem:[%s29 + $0x80] sm:$0xff]
    %v6360 = vld [vmem:[%s29 + $0x88] sm:$0xff]
    %v6361 = vld [vmem:[%s29 + $0x90] sm:$0xff]
    %v6362 = vld [vmem:[%s29 + $0x98] sm:$0xff]
    %v6363 = vld [vmem:[%s29 + $0xa0] sm:$0xff]
    %v6364 = vld [vmem:[%s29 + $0xa8] sm:$0xff]
    %v6365 = vld [vmem:[%s29 + $0xb0] sm:$0xff]
    %v6366 = vld [vmem:[%s29 + $0xb8] sm:$0xff]
    %v6367 = vld [vmem:[%s29 + $0xc0] sm:$0xff]
    %v6368 = vld [vmem:[%s29 + $0xc8] sm:$0xff]
    %v6369 = vld [vmem:[%s29 + $0xd0] sm:$0xff]
    %v6370 = vld [vmem:[%s29 + $0xd8] sm:$0xff]
    %v6371 = vld [vmem:[%s29 + $0xe0] sm:$0xff]
    %v6372 = vld [vmem:[%s29 + $0xe8] sm:$0xff]
    %v6373 = vld [vmem:[%s29 + $0xf0] sm:$0xff]
    %v6374 = vld [vmem:[%s29 + $0xf8] sm:$0xff]
    %v6375 = vld [vmem:[%s29 + $0x100] sm:$0xff]
    %v6376 = vld [vmem:[%s29 + $0x108] sm:$0xff]
    %v6377 = vld [vmem:[%s29 + $0x110] sm:$0xff]
    %v6378 = vld [vmem:[%s29 + $0x118] sm:$0xff]
    %v6379 = vld [vmem:[%s29 + $0x120] sm:$0xff]
    %v6380 = vld [vmem:[%s29 + $0x128] sm:$0x33]
    %v6419 = vunpack.c.l.b16 %v6343
    %v6420 = vunpack.c.h.b16 %v6343
    %v6421 = vunpack.c.l.b16 %v6344
    %v6422 = vunpack.c.h.b16 %v6344
    %v6423 = vunpack.c.l.b16 %v6345
    %v6424 = vunpack.c.h.b16 %v6345
    %v6425 = vunpack.c.l.b16 %v6346
    %v6426 = vunpack.c.h.b16 %v6346
    %v6427 = vunpack.c.l.b16 %v6347
    %v6428 = vunpack.c.h.b16 %v6347
    %v6429 = vunpack.c.l.b16 %v6348
    %v6430 = vunpack.c.h.b16 %v6348
    %v6431 = vunpack.c.l.b16 %v6349
    %v6432 = vunpack.c.h.b16 %v6349
    %v6433 = vunpack.c.l.b16 %v6350
    %v6434 = vunpack.c.h.b16 %v6350
    %v6435 = vunpack.c.l.b16 %v6351
    %v6436 = vunpack.c.h.b16 %v6351
    %v6437 = vunpack.c.l.b16 %v6352
    %v6438 = vunpack.c.h.b16 %v6352
    %v6439 = vunpack.c.l.b16 %v6353
    %v6440 = vunpack.c.h.b16 %v6353
    %v6441 = vunpack.c.l.b16 %v6354
    %v6442 = vunpack.c.h.b16 %v6354
    %v6443 = vunpack.c.l.b16 %v6355
    %v6444 = vunpack.c.h.b16 %v6355
    %v6445 = vunpack.c.l.b16 %v6356
    %v6446 = vunpack.c.h.b16 %v6356
    %v6447 = vunpack.c.l.b16 %v6357
    %v6448 = vunpack.c.h.b16 %v6357
    %v6449 = vunpack.c.l.b16 %v6358
    %v6450 = vunpack.c.h.b16 %v6358
    %v6451 = vunpack.c.l.b16 %v6359
    %v6452 = vunpack.c.h.b16 %v6359
    %v6453 = vunpack.c.l.b16 %v6360
    %v6454 = vunpack.c.h.b16 %v6360
    %v6455 = vunpack.c.l.b16 %v6361
    %v6456 = vunpack.c.h.b16 %v6361
    %v6457 = vunpack.c.l.b16 %v6362
    %v6458 = vunpack.c.h.b16 %v6362
    %v6459 = vunpack.c.l.b16 %v6363
    %v6460 = vunpack.c.h.b16 %v6363
    %v6461 = vunpack.c.l.b16 %v6364
    %v6462 = vunpack.c.h.b16 %v6364
    %v6463 = vunpack.c.l.b16 %v6365
    %v6464 = vunpack.c.h.b16 %v6365
    %v6465 = vunpack.c.l.b16 %v6366
    %v6466 = vunpack.c.h.b16 %v6366
    %v6467 = vunpack.c.l.b16 %v6367
    %v6468 = vunpack.c.h.b16 %v6367
    %v6469 = vunpack.c.l.b16 %v6368
    %v6470 = vunpack.c.h.b16 %v6368
    %v6471 = vunpack.c.l.b16 %v6369
    %v6472 = vunpack.c.h.b16 %v6369
    %v6473 = vunpack.c.l.b16 %v6370
    %v6474 = vunpack.c.h.b16 %v6370
    %v6475 = vunpack.c.l.b16 %v6371
    %v6476 = vunpack.c.h.b16 %v6371
    %v6477 = vunpack.c.l.b16 %v6372
    %v6478 = vunpack.c.h.b16 %v6372
    %v6479 = vunpack.c.l.b16 %v6373
    %v6480 = vunpack.c.h.b16 %v6373
    %v6481 = vunpack.c.l.b16 %v6374
    %v6482 = vunpack.c.h.b16 %v6374
    %v6483 = vunpack.c.l.b16 %v6375
    %v6484 = vunpack.c.h.b16 %v6375
    %v6485 = vunpack.c.l.b16 %v6376
    %v6486 = vunpack.c.h.b16 %v6376
    %v6487 = vunpack.c.l.b16 %v6377
    %v6488 = vunpack.c.h.b16 %v6377
    %v6489 = vunpack.c.l.b16 %v6378
    %v6490 = vunpack.c.h.b16 %v6378
    %v6491 = vunpack.c.l.b16 %v6379
    %v6492 = vunpack.c.h.b16 %v6379
    %v6493 = vunpack.c.l.b16 %v6380
    %v6494 = vunpack.c.h.b16 %v6380
    %v6495 = vpack.c.b16 %v6421, %v6419
    %v6496 = vpack.c.b16 %v6422, %v6420
    %v6497 = vpack.c.b16 %v6425, %v6423
    %v6498 = vpack.c.b16 %v6426, %v6424
    %v6499 = vpack.c.b16 %v6429, %v6427
    %v6500 = vpack.c.b16 %v6430, %v6428
    %v6501 = vpack.c.b16 %v6433, %v6431
    %v6502 = vpack.c.b16 %v6434, %v6432
    %v6503 = vpack.c.b16 %v6437, %v6435
    %v6504 = vpack.c.b16 %v6438, %v6436
    %v6505 = vpack.c.b16 %v6441, %v6439
    %v6506 = vpack.c.b16 %v6442, %v6440
    %v6507 = vpack.c.b16 %v6445, %v6443
    %v6508 = vpack.c.b16 %v6446, %v6444
    %v6509 = vpack.c.b16 %v6449, %v6447
    %v6510 = vpack.c.b16 %v6450, %v6448
    %v6511 = vpack.c.b16 %v6453, %v6451
    %v6512 = vpack.c.b16 %v6454, %v6452
    %v6513 = vpack.c.b16 %v6457, %v6455
    %v6514 = vpack.c.b16 %v6458, %v6456
    %v6515 = vpack.c.b16 %v6461, %v6459
    %v6516 = vpack.c.b16 %v6462, %v6460
    %v6517 = vpack.c.b16 %v6465, %v6463
    %v6518 = vpack.c.b16 %v6466, %v6464
    %v6519 = vpack.c.b16 %v6469, %v6467
    %v6520 = vpack.c.b16 %v6470, %v6468
    %v6521 = vpack.c.b16 %v6473, %v6471
    %v6522 = vpack.c.b16 %v6474, %v6472
    %v6523 = vpack.c.b16 %v6477, %v6475
    %v6524 = vpack.c.b16 %v6478, %v6476
    %v6525 = vpack.c.b16 %v6481, %v6479
    %v6526 = vpack.c.b16 %v6482, %v6480
    %v6527 = vpack.c.b16 %v6485, %v6483
    %v6528 = vpack.c.b16 %v6486, %v6484
    %v6529 = vpack.c.b16 %v6489, %v6487
    %v6530 = vpack.c.b16 %v6490, %v6488
    %v6531 = vpack.c.b16 %v6493, %v6491
    %v6532 = vpack.c.b16 %v6494, %v6492
    %v6570 = vsel %vm3182, %v6339, 0
    %v6573 = vsel %vm3182, %v6342, 0
    %v6576 = vsel %vm3189, %v6531, 0
    %v6579 = vsel %vm3189, %v6532, 0
    %6581 = vmatpush.bf16.msra.mxu0 %v6509
    %6582 = vmatpush.bf16.msra.mxu0 %v6507
    %6583 = vmatpush.bf16.msra.mxu0 %v6505
    %6584 = vmatpush.bf16.msra.mxu0 %v6503
    %6585 = vmatpush.bf16.msra.mxu0 %v6501
    %6586 = vmatpush.bf16.msra.mxu0 %v6499
    %6587 = vmatpush.bf16.msra.mxu0 %v6497
    %6588 = vmatpush.bf16.msra.mxu0 %v6495
    %6589 = vmatmul.bf16.gmra.mxu0 %v6337
    %v6590 = vpop.f32.mrf.mxu0
    %v6591 = vadd.f32 0.0, %v6590
    %v6592 = vpop.f32.mrf.mxu0
    %v6593 = vadd.f32 0.0, %v6592
    %6594 = vmatmul.bf16.gmra.mxu0 %v6340
    %v6595 = vpop.f32.mrf.mxu0
    %v6596 = vadd.f32 0.0, %v6595
    %v6597 = vpop.f32.mrf.mxu0
    %v6598 = vadd.f32 0.0, %v6597
    %6599 = vdwg.mxu0
    %6600 = vmatpush.bf16.msra.mxu0 %v6525
    %6601 = vmatpush.bf16.msra.mxu0 %v6523
    %6602 = vmatpush.bf16.msra.mxu0 %v6521
    %6603 = vmatpush.bf16.msra.mxu0 %v6519
    %6604 = vmatpush.bf16.msra.mxu0 %v6517
    %6605 = vmatpush.bf16.msra.mxu0 %v6515
    %6606 = vmatpush.bf16.msra.mxu0 %v6513
    %6607 = vmatpush.bf16.msra.mxu0 %v6511
    %6608 = vmatmul.bf16.gmra.mxu0 %v6338
    %v6609 = vpop.f32.mrf.mxu0
    %v6610 = vadd.f32 %v6591, %v6609
    %v6611 = vpop.f32.mrf.mxu0
    %v6612 = vadd.f32 %v6593, %v6611
    %6613 = vmatmul.bf16.gmra.mxu0 %v6341
    %v6614 = vpop.f32.mrf.mxu0
    %v6615 = vadd.f32 %v6596, %v6614
    %v6616 = vpop.f32.mrf.mxu0
    %v6617 = vadd.f32 %v6598, %v6616
    %6618 = vdwg.mxu0
    %6619 = vmatpush.bf16.msra.mxu0 0
    %6620 = vmatpush.bf16.msra.mxu0 0
    %6621 = vmatpush.bf16.msra.mxu0 0
    %6622 = vmatpush.bf16.msra.mxu0 0
    %6623 = vmatpush.bf16.msra.mxu0 0
    %6624 = vmatpush.bf16.msra.mxu0 %v6576
    %6625 = vmatpush.bf16.msra.mxu0 %v6529
    %6626 = vmatpush.bf16.msra.mxu0 %v6527
    %6627 = vmatmul.bf16.gmra.mxu0 %v6570
    %v6628 = vpop.f32.mrf.mxu0
    %v6629 = vadd.f32 %v6610, %v6628
    %v6630 = vpop.f32.mrf.mxu0
    %v6631 = vadd.f32 %v6612, %v6630
    %6632 = vmatmul.bf16.gmra.mxu0 %v6573
    %v6633 = vpop.f32.mrf.mxu0
    %v6634 = vadd.f32 %v6615, %v6633
    %v6635 = vpop.f32.mrf.mxu0
    %v6636 = vadd.f32 %v6617, %v6635
    %6637 = vdwg.mxu0
    %6638 = vmatpush.bf16.msra.mxu0 %v6510
    %6639 = vmatpush.bf16.msra.mxu0 %v6508
    %6640 = vmatpush.bf16.msra.mxu0 %v6506
    %6641 = vmatpush.bf16.msra.mxu0 %v6504
    %6642 = vmatpush.bf16.msra.mxu0 %v6502
    %6643 = vmatpush.bf16.msra.mxu0 %v6500
    %6644 = vmatpush.bf16.msra.mxu0 %v6498
    %6645 = vmatpush.bf16.msra.mxu0 %v6496
    %6646 = vmatmul.bf16.gmra.mxu0 %v6337
    %v6647 = vpop.f32.mrf.mxu0
    %v6648 = vadd.f32 0.0, %v6647
    %v6649 = vpop.f32.mrf.mxu0
    %v6650 = vadd.f32 0.0, %v6649
    %6651 = vmatmul.bf16.gmra.mxu0 %v6340
    %v6652 = vpop.f32.mrf.mxu0
    %v6653 = vadd.f32 0.0, %v6652
    %v6654 = vpop.f32.mrf.mxu0
    %v6655 = vadd.f32 0.0, %v6654
    %6656 = vdwg.mxu0
    %6657 = vmatpush.bf16.msra.mxu0 %v6526
    %6658 = vmatpush.bf16.msra.mxu0 %v6524
    %6659 = vmatpush.bf16.msra.mxu0 %v6522
    %6660 = vmatpush.bf16.msra.mxu0 %v6520
    %6661 = vmatpush.bf16.msra.mxu0 %v6518
    %6662 = vmatpush.bf16.msra.mxu0 %v6516
    %6663 = vmatpush.bf16.msra.mxu0 %v6514
    %6664 = vmatpush.bf16.msra.mxu0 %v6512
    %6665 = vmatmul.bf16.gmra.mxu0 %v6338
    %v6666 = vpop.f32.mrf.mxu0
    %v6667 = vadd.f32 %v6648, %v6666
    %v6668 = vpop.f32.mrf.mxu0
    %v6669 = vadd.f32 %v6650, %v6668
    %6670 = vmatmul.bf16.gmra.mxu0 %v6341
    %v6671 = vpop.f32.mrf.mxu0
    %v6672 = vadd.f32 %v6653, %v6671
    %v6673 = vpop.f32.mrf.mxu0
    %v6674 = vadd.f32 %v6655, %v6673
    %6675 = vdwg.mxu0
    %6676 = vmatpush.bf16.msra.mxu0 0
    %6677 = vmatpush.bf16.msra.mxu0 0
    %6678 = vmatpush.bf16.msra.mxu0 0
    %6679 = vmatpush.bf16.msra.mxu0 0
    %6680 = vmatpush.bf16.msra.mxu0 0
    %6681 = vmatpush.bf16.msra.mxu0 %v6579
    %6682 = vmatpush.bf16.msra.mxu0 %v6530
    %6683 = vmatpush.bf16.msra.mxu0 %v6528
    %6684 = vmatmul.bf16.gmra.mxu0 %v6570
    %v6685 = vpop.f32.mrf.mxu0
    %v6686 = vadd.f32 %v6667, %v6685
    %v6687 = vpop.f32.mrf.mxu0
    %v6688 = vadd.f32 %v6669, %v6687
    %6689 = vmatmul.bf16.gmra.mxu0 %v6573
    %v6690 = vpop.f32.mrf.mxu0
    %v6691 = vadd.f32 %v6672, %v6690
    %v6692 = vpop.f32.mrf.mxu0
    %v6693 = vadd.f32 %v6674, %v6692
    %6694 = vdwg.mxu0
    %v6714 = vunpack.c.l.b16 %v6318
    %v6715 = vunpack.c.h.b16 %v6318
    %v6716 = vunpack.c.l.b16 %v6319
    %v6717 = vunpack.c.h.b16 %v6319
    %v6718 = vunpack.c.l.b16 %v6320
    %v6719 = vunpack.c.h.b16 %v6320
    %v6720 = vunpack.c.l.b16 %v6321
    %v6721 = vunpack.c.h.b16 %v6321
    %v6722 = vunpack.c.l.b16 %v6322
    %v6723 = vunpack.c.h.b16 %v6322
    %v6724 = vunpack.c.l.b16 %v6323
    %v6725 = vunpack.c.h.b16 %v6323
    %v6726 = vunpack.c.l.b16 %v6324
    %v6727 = vunpack.c.h.b16 %v6324
    %v6728 = vunpack.c.l.b16 %v6325
    %v6729 = vunpack.c.h.b16 %v6325
    %v6730 = vunpack.c.l.b16 %v6326
    %v6731 = vunpack.c.h.b16 %v6326
    %v6732 = vunpack.c.l.b16 %v6327
    %v6733 = vunpack.c.h.b16 %v6327
    %v6734 = vunpack.c.l.b16 %v6328
    %v6735 = vunpack.c.h.b16 %v6328
    %v6736 = vunpack.c.l.b16 %v6329
    %v6737 = vunpack.c.h.b16 %v6329
    %v6738 = vunpack.c.l.b16 %v6330
    %v6739 = vunpack.c.h.b16 %v6330
    %v6740 = vunpack.c.l.b16 %v6331
    %v6741 = vunpack.c.h.b16 %v6331
    %v6742 = vunpack.c.l.b16 %v6332
    %v6743 = vunpack.c.h.b16 %v6332
    %v6744 = vunpack.c.l.b16 %v6333
    %v6745 = vunpack.c.h.b16 %v6333
    %v6746 = vunpack.c.l.b16 %v6334
    %v6747 = vunpack.c.h.b16 %v6334
    %v6748 = vunpack.c.l.b16 %v6335
    %v6749 = vunpack.c.h.b16 %v6335
    %v6750 = vunpack.c.l.b16 %v6336
    %v6751 = vunpack.c.h.b16 %v6336
    %v6752 = vpack.c.b16 %v6716, %v6714
    %v6753 = vpack.c.b16 %v6717, %v6715
    %v6754 = vpack.c.b16 %v6720, %v6718
    %v6755 = vpack.c.b16 %v6721, %v6719
    %v6756 = vpack.c.b16 %v6724, %v6722
    %v6757 = vpack.c.b16 %v6725, %v6723
    %v6758 = vpack.c.b16 %v6728, %v6726
    %v6759 = vpack.c.b16 %v6729, %v6727
    %v6760 = vpack.c.b16 %v6732, %v6730
    %v6761 = vpack.c.b16 %v6733, %v6731
    %v6762 = vpack.c.b16 %v6736, %v6734
    %v6763 = vpack.c.b16 %v6737, %v6735
    %v6764 = vpack.c.b16 %v6740, %v6738
    %v6765 = vpack.c.b16 %v6741, %v6739
    %v6766 = vpack.c.b16 %v6744, %v6742
    %v6767 = vpack.c.b16 %v6745, %v6743
    %v6768 = vpack.c.b16 %v6748, %v6746
    %v6769 = vpack.c.b16 %v6749, %v6747
    %v6770 = vpack.c.b16 %v6750, %v6750
    %v6771 = vpack.c.b16 %v6751, %v6751
    %v6791 = vsel %vm997, %v6315, 0
    %v6794 = vsel %vm997, %v6317, 0
    %v6797 = vsel %vm1004, %v6770, 0
    %v6800 = vsel %vm1004, %v6771, 0
    %6802 = vmatpush.bf16.msra.mxu0 %v6766
    %6803 = vmatpush.bf16.msra.mxu0 %v6764
    %6804 = vmatpush.bf16.msra.mxu0 %v6762
    %6805 = vmatpush.bf16.msra.mxu0 %v6760
    %6806 = vmatpush.bf16.msra.mxu0 %v6758
    %6807 = vmatpush.bf16.msra.mxu0 %v6756
    %6808 = vmatpush.bf16.msra.mxu0 %v6754
    %6809 = vmatpush.bf16.msra.mxu0 %v6752
    %6810 = vmatmul.bf16.gmra.mxu0 %v6314
    %v6811 = vpop.f32.mrf.mxu0
    %v6812 = vadd.f32 %v6629, %v6811
    %v6813 = vpop.f32.mrf.mxu0
    %v6814 = vadd.f32 %v6631, %v6813
    %6815 = vmatmul.bf16.gmra.mxu0 %v6316
    %v6816 = vpop.f32.mrf.mxu0
    %v6817 = vadd.f32 %v6634, %v6816
    %v6818 = vpop.f32.mrf.mxu0
    %v6819 = vadd.f32 %v6636, %v6818
    %6820 = vdwg.mxu0
    %6821 = vmatpush.bf16.msra.mxu0 0
    %6822 = vmatpush.bf16.msra.mxu0 0
    %6823 = vmatpush.bf16.msra.mxu0 0
    %6824 = vmatpush.bf16.msra.mxu0 0
    %6825 = vmatpush.bf16.msra.mxu0 0
    %6826 = vmatpush.bf16.msra.mxu0 0
    %6827 = vmatpush.bf16.msra.mxu0 %v6797
    %6828 = vmatpush.bf16.msra.mxu0 %v6768
    %6829 = vmatmul.bf16.gmra.mxu0 %v6791
    %v6830 = vpop.f32.mrf.mxu0
    %v6831 = vadd.f32 %v6812, %v6830
    %v6832 = vpop.f32.mrf.mxu0
    %v6833 = vadd.f32 %v6814, %v6832
    %6834 = vmatmul.bf16.gmra.mxu0 %v6794
    %v6835 = vpop.f32.mrf.mxu0
    %v6836 = vadd.f32 %v6817, %v6835
    %v6837 = vpop.f32.mrf.mxu0
    %v6838 = vadd.f32 %v6819, %v6837
    %6839 = vdwg.mxu0
    %6840 = vmatpush.bf16.msra.mxu0 %v6767
    %6841 = vmatpush.bf16.msra.mxu0 %v6765
    %6842 = vmatpush.bf16.msra.mxu0 %v6763
    %6843 = vmatpush.bf16.msra.mxu0 %v6761
    %6844 = vmatpush.bf16.msra.mxu0 %v6759
    %6845 = vmatpush.bf16.msra.mxu0 %v6757
    %6846 = vmatpush.bf16.msra.mxu0 %v6755
    %6847 = vmatpush.bf16.msra.mxu0 %v6753
    %6848 = vmatmul.bf16.gmra.mxu0 %v6314
    %v6849 = vpop.f32.mrf.mxu0
    %v6850 = vadd.f32 %v6686, %v6849
    %v6851 = vpop.f32.mrf.mxu0
    %v6852 = vadd.f32 %v6688, %v6851
    %6853 = vmatmul.bf16.gmra.mxu0 %v6316
    %v6854 = vpop.f32.mrf.mxu0
    %v6855 = vadd.f32 %v6691, %v6854
    %v6856 = vpop.f32.mrf.mxu0
    %v6857 = vadd.f32 %v6693, %v6856
    %6858 = vdwg.mxu0
    %6859 = vmatpush.bf16.msra.mxu0 0
    %6860 = vmatpush.bf16.msra.mxu0 0
    %6861 = vmatpush.bf16.msra.mxu0 0
    %6862 = vmatpush.bf16.msra.mxu0 0
    %6863 = vmatpush.bf16.msra.mxu0 0
    %6864 = vmatpush.bf16.msra.mxu0 0
    %6865 = vmatpush.bf16.msra.mxu0 %v6800
    %6866 = vmatpush.bf16.msra.mxu0 %v6769
    %6867 = vmatmul.bf16.gmra.mxu0 %v6791
    %v6868 = vpop.f32.mrf.mxu0
    %v6869 = vadd.f32 %v6850, %v6868
    %v6870 = vpop.f32.mrf.mxu0
    %v6871 = vadd.f32 %v6852, %v6870
    %6872 = vmatmul.bf16.gmra.mxu0 %v6794
    %v6873 = vpop.f32.mrf.mxu0
    %v6874 = vadd.f32 %v6855, %v6873
    %v6875 = vpop.f32.mrf.mxu0
    %v6876 = vadd.f32 %v6857, %v6875
    %6877 = vdwg.mxu0
    %v6878 = vld [vmem:[%s31] sm:$0xff]
    %v6879 = vld [vmem:[%s31 + $0x8] sm:$0xff]
    %v6880 = vld [vmem:[%s31 + $0x10] sm:$0xff]
    %v6881 = vld [vmem:[%s31 + $0x18] sm:$0xff]
    %v6882 = vld [vmem:[%s31 + $0x20] sm:$0xff]
    %v6883 = vld [vmem:[%s31 + $0x28] sm:$0xff]
    %v6884 = vld [vmem:[%s31 + $0x30] sm:$0xff]
    %v6885 = vld [vmem:[%s31 + $0x38] sm:$0xff]
    %v6886 = vld [vmem:[%s31 + $0x40] sm:$0xff]
    %v6887 = vld [vmem:[%s31 + $0x48] sm:$0xff]
    %v6888 = vld [vmem:[%s31 + $0x50] sm:$0xff]
    %v6889 = vld [vmem:[%s31 + $0x58] sm:$0xff]
    %v6890 = vld [vmem:[%s31 + $0x60] sm:$0xff]
    %v6891 = vld [vmem:[%s31 + $0x68] sm:$0xff]
    %v6892 = vld [vmem:[%s31 + $0x70] sm:$0xff]
    %v6893 = vld [vmem:[%s31 + $0x78] sm:$0xff]
    %v6910 = vunpack.c.l.b16 %v6878
    %v6911 = vunpack.c.h.b16 %v6878
    %v6912 = vunpack.c.l.b16 %v6879
    %v6913 = vunpack.c.h.b16 %v6879
    %v6914 = vunpack.c.l.b16 %v6880
    %v6915 = vunpack.c.h.b16 %v6880
    %v6916 = vunpack.c.l.b16 %v6881
    %v6917 = vunpack.c.h.b16 %v6881
    %v6918 = vunpack.c.l.b16 %v6882
    %v6919 = vunpack.c.h.b16 %v6882
    %v6920 = vunpack.c.l.b16 %v6883
    %v6921 = vunpack.c.h.b16 %v6883
    %v6922 = vunpack.c.l.b16 %v6884
    %v6923 = vunpack.c.h.b16 %v6884
    %v6924 = vunpack.c.l.b16 %v6885
    %v6925 = vunpack.c.h.b16 %v6885
    %v6926 = vunpack.c.l.b16 %v6886
    %v6927 = vunpack.c.h.b16 %v6886
    %v6928 = vunpack.c.l.b16 %v6887
    %v6929 = vunpack.c.h.b16 %v6887
    %v6930 = vunpack.c.l.b16 %v6888
    %v6931 = vunpack.c.h.b16 %v6888
    %v6932 = vunpack.c.l.b16 %v6889
    %v6933 = vunpack.c.h.b16 %v6889
    %v6934 = vunpack.c.l.b16 %v6890
    %v6935 = vunpack.c.h.b16 %v6890
    %v6936 = vunpack.c.l.b16 %v6891
    %v6937 = vunpack.c.h.b16 %v6891
    %v6938 = vunpack.c.l.b16 %v6892
    %v6939 = vunpack.c.h.b16 %v6892
    %v6940 = vunpack.c.l.b16 %v6893
    %v6941 = vunpack.c.h.b16 %v6893
    %v6942 = vpack.c.b16 %v6912, %v6910
    %v6943 = vpack.c.b16 %v6913, %v6911
    %v6944 = vpack.c.b16 %v6916, %v6914
    %v6945 = vpack.c.b16 %v6917, %v6915
    %v6946 = vpack.c.b16 %v6920, %v6918
    %v6947 = vpack.c.b16 %v6921, %v6919
    %v6948 = vpack.c.b16 %v6924, %v6922
    %v6949 = vpack.c.b16 %v6925, %v6923
    %v6950 = vpack.c.b16 %v6928, %v6926
    %v6951 = vpack.c.b16 %v6929, %v6927
    %v6952 = vpack.c.b16 %v6932, %v6930
    %v6953 = vpack.c.b16 %v6933, %v6931
    %v6954 = vpack.c.b16 %v6936, %v6934
    %v6955 = vpack.c.b16 %v6937, %v6935
    %v6956 = vpack.c.b16 %v6940, %v6938
    %v6957 = vpack.c.b16 %v6941, %v6939
    %6974 = vmatpush.bf16.msra.mxu0 %v6956
    %6975 = vmatpush.bf16.msra.mxu0 %v6954
    %6976 = vmatpush.bf16.msra.mxu0 %v6952
    %6977 = vmatpush.bf16.msra.mxu0 %v6950
    %6978 = vmatpush.bf16.msra.mxu0 %v6948
    %6979 = vmatpush.bf16.msra.mxu0 %v6946
    %6980 = vmatpush.bf16.msra.mxu0 %v6944
    %6981 = vmatpush.bf16.msra.mxu0 %v6942
    %6982 = vmatmul.bf16.gmra.mxu0 %v3517
    %v6983 = vpop.f32.mrf.mxu0
    %v6984 = vadd.f32 0.0, %v6983
    %v6985 = vpop.f32.mrf.mxu0
    %v6986 = vadd.f32 0.0, %v6985
    %6987 = vmatmul.bf16.gmra.mxu0 %v3518
    %v6988 = vpop.f32.mrf.mxu0
    %v6989 = vadd.f32 0.0, %v6988
    %v6990 = vpop.f32.mrf.mxu0
    %v6991 = vadd.f32 0.0, %v6990
    %6992 = vdwg.mxu0
    %6993 = vmatpush.bf16.msra.mxu0 %v6957
    %6994 = vmatpush.bf16.msra.mxu0 %v6955
    %6995 = vmatpush.bf16.msra.mxu0 %v6953
    %6996 = vmatpush.bf16.msra.mxu0 %v6951
    %6997 = vmatpush.bf16.msra.mxu0 %v6949
    %6998 = vmatpush.bf16.msra.mxu0 %v6947
    %6999 = vmatpush.bf16.msra.mxu0 %v6945
    %7000 = vmatpush.bf16.msra.mxu0 %v6943
    %7001 = vmatmul.bf16.gmra.mxu0 %v3517
    %v7002 = vpop.f32.mrf.mxu0
    %v7003 = vadd.f32 0.0, %v7002
    %v7004 = vpop.f32.mrf.mxu0
    %v7005 = vadd.f32 0.0, %v7004
    %7006 = vmatmul.bf16.gmra.mxu0 %v3518
    %v7007 = vpop.f32.mrf.mxu0
    %v7008 = vadd.f32 0.0, %v7007
    %v7009 = vpop.f32.mrf.mxu0
    %v7010 = vadd.f32 0.0, %v7009
    %7011 = vdwg.mxu0
    %v7012 = vadd.f32 %v6831, %v6984
    %v7013 = vadd.f32 %v6869, %v7003
    %v7014 = vadd.f32 %v6833, %v6986
    %v7015 = vadd.f32 %v6871, %v7005
    %v7016 = vadd.f32 %v6836, %v6989
    %v7017 = vadd.f32 %v6874, %v7008
    %v7018 = vadd.f32 %v6838, %v6991
    %v7019 = vadd.f32 %v6876, %v7010
    %v7020 = vld [vmem:[#allocation11] sm:$0x3]
    %v7022 = vperm.slane %v7020, 0
    %v7023 = vperm.slane %v7020, 1
    %v7026 = vadd.f32 %v7012, %v7022
    %v7027 = vadd.f32 %v7013, %v7023
    %v7028 = vadd.f32 %v7014, %v7022
    %v7029 = vadd.f32 %v7015, %v7023
    %v7030 = vadd.f32 %v7016, %v7022
    %v7031 = vadd.f32 %v7017, %v7023
    %v7032 = vadd.f32 %v7018, %v7022
    %v7033 = vadd.f32 %v7019, %v7023
    %v7034 = vmax.f32 %v7026, 0.0
    %v7035 = vmax.f32 %v7027, 0.0
    %v7036 = vmax.f32 %v7028, 0.0
    %v7037 = vmax.f32 %v7029, 0.0
    %v7038 = vmax.f32 %v7030, 0.0
    %v7039 = vmax.f32 %v7031, 0.0
    %v7040 = vmax.f32 %v7032, 0.0
    %v7041 = vmax.f32 %v7033, 0.0
    %v7042 = vpack.c.bf16 %v3663, %v3661
    %v7043 = vpack.c.bf16 %v3664, %v3662
    %v7044 = vpack.c.bf16 %v3667, %v3665
    %v7045 = vpack.c.bf16 %v3668, %v3666
    %v7046 = vld [vmem:[%s35] sm:$0xff]
    %v7047 = vld [vmem:[%s35 + $0x8] sm:$0xff]
    %v7048 = vld [vmem:[%s35 + $0x10] sm:$0xff]
    %v7049 = vld [vmem:[%s35 + $0x18] sm:$0xff]
    %v7050 = vld [vmem:[%s35 + $0x20] sm:$0xff]
    %v7051 = vld [vmem:[%s35 + $0x28] sm:$0xff]
    %v7052 = vld [vmem:[%s35 + $0x30] sm:$0xff]
    %v7053 = vld [vmem:[%s35 + $0x38] sm:$0xff]
    %v7054 = vld [vmem:[%s35 + $0x40] sm:$0xff]
    %v7055 = vld [vmem:[%s35 + $0x48] sm:$0xff]
    %v7056 = vld [vmem:[%s35 + $0x50] sm:$0xff]
    %v7057 = vld [vmem:[%s35 + $0x58] sm:$0xff]
    %v7058 = vld [vmem:[%s35 + $0x60] sm:$0xff]
    %v7059 = vld [vmem:[%s35 + $0x68] sm:$0xff]
    %v7060 = vld [vmem:[%s35 + $0x70] sm:$0xff]
    %v7061 = vld [vmem:[%s35 + $0x78] sm:$0xff]
    %v7062 = vld [vmem:[%s35 + $0x80] sm:$0xff]
    %v7063 = vld [vmem:[%s35 + $0x88] sm:$0xff]
    %v7064 = vld [vmem:[%s35 + $0x90] sm:$0xff]
    %v7065 = vld [vmem:[%s35 + $0x98] sm:$0xff]
    %v7066 = vld [vmem:[%s35 + $0xa0] sm:$0xff]
    %v7067 = vld [vmem:[%s35 + $0xa8] sm:$0xff]
    %v7068 = vld [vmem:[%s35 + $0xb0] sm:$0xff]
    %v7069 = vld [vmem:[%s35 + $0xb8] sm:$0xff]
    %v7070 = vld [vmem:[%s35 + $0xc0] sm:$0xff]
    %v7071 = vld [vmem:[%s35 + $0xc8] sm:$0xff]
    %v7072 = vld [vmem:[%s35 + $0xd0] sm:$0xff]
    %v7073 = vld [vmem:[%s35 + $0xd8] sm:$0xff]
    %v7074 = vld [vmem:[%s35 + $0xe0] sm:$0xff]
    %v7075 = vld [vmem:[%s35 + $0xe8] sm:$0xff]
    %v7076 = vld [vmem:[%s35 + $0xf0] sm:$0xff]
    %v7077 = vld [vmem:[%s35 + $0xf8] sm:$0xff]
    %v7078 = vld [vmem:[%s35 + $0x100] sm:$0xff]
    %v7079 = vld [vmem:[%s35 + $0x108] sm:$0xff]
    %v7080 = vld [vmem:[%s35 + $0x110] sm:$0xff]
    %v7081 = vld [vmem:[%s35 + $0x118] sm:$0xff]
    %v7082 = vld [vmem:[%s35 + $0x120] sm:$0xff]
    %v7083 = vld [vmem:[%s35 + $0x128] sm:$0xff]
    %v7084 = vld [vmem:[%s35 + $0x130] sm:$0xff]
    %v7085 = vld [vmem:[%s35 + $0x138] sm:$0xff]
    %v7086 = vld [vmem:[%s35 + $0x140] sm:$0xff]
    %v7087 = vld [vmem:[%s35 + $0x148] sm:$0xff]
    %v7088 = vld [vmem:[%s35 + $0x150] sm:$0xff]
    %v7089 = vld [vmem:[%s35 + $0x158] sm:$0xff]
    %v7090 = vld [vmem:[%s35 + $0x160] sm:$0xff]
    %v7091 = vld [vmem:[%s35 + $0x168] sm:$0xff]
    %v7092 = vld [vmem:[%s35 + $0x170] sm:$0xff]
    %v7093 = vld [vmem:[%s35 + $0x178] sm:$0xff]
    %v7094 = vld [vmem:[%s35 + $0x180] sm:$0xff]
    %v7095 = vld [vmem:[%s35 + $0x188] sm:$0xff]
    %v7096 = vpack.c.bf16 %v7036, %v7034
    %v7097 = vpack.c.bf16 %v7037, %v7035
    %v7098 = vpack.c.bf16 %v7040, %v7038
    %v7099 = vpack.c.bf16 %v7041, %v7039
    %v7100 = vld [vmem:[#allocation12] sm:$0xff]
    %v7101 = vld [vmem:[#allocation12 + $0x8] sm:$0xff]
    %v7102 = vld [vmem:[#allocation12 + $0x10] sm:$0xff]
    %v7103 = vld [vmem:[#allocation12 + $0x18] sm:$0xff]
    %v7104 = vld [vmem:[#allocation12 + $0x20] sm:$0xff]
    %v7105 = vld [vmem:[#allocation12 + $0x28] sm:$0xff]
    %v7106 = vld [vmem:[#allocation12 + $0x30] sm:$0xff]
    %v7107 = vld [vmem:[#allocation12 + $0x38] sm:$0xff]
    %v7108 = vld [vmem:[#allocation12 + $0x40] sm:$0xff]
    %v7109 = vld [vmem:[#allocation12 + $0x48] sm:$0xff]
    %v7110 = vld [vmem:[#allocation12 + $0x50] sm:$0xff]
    %v7111 = vld [vmem:[#allocation12 + $0x58] sm:$0xff]
    %v7112 = vld [vmem:[#allocation12 + $0x60] sm:$0xff]
    %v7113 = vld [vmem:[#allocation12 + $0x68] sm:$0xff]
    %v7114 = vld [vmem:[#allocation12 + $0x70] sm:$0xff]
    %v7115 = vld [vmem:[#allocation12 + $0x78] sm:$0xff]
    %v7116 = vld [vmem:[#allocation12 + $0x80] sm:$0xff]
    %v7117 = vld [vmem:[#allocation12 + $0x88] sm:$0xff]
    %v7118 = vld [vmem:[#allocation12 + $0x90] sm:$0xff]
    %v7119 = vld [vmem:[#allocation12 + $0x98] sm:$0xff]
    %v7120 = vld [vmem:[#allocation12 + $0xa0] sm:$0xff]
    %v7121 = vld [vmem:[#allocation12 + $0xa8] sm:$0xff]
    %v7122 = vld [vmem:[#allocation12 + $0xb0] sm:$0xff]
    %v7123 = vld [vmem:[#allocation12 + $0xb8] sm:$0xff]
    %v7124 = vld [vmem:[#allocation12 + $0xc0] sm:$0xff]
    %v7125 = vld [vmem:[#allocation12 + $0xc8] sm:$0xff]
    %v7126 = vld [vmem:[#allocation12 + $0xd0] sm:$0xff]
    %v7127 = vld [vmem:[#allocation12 + $0xd8] sm:$0xff]
    %v7128 = vld [vmem:[#allocation12 + $0xe0] sm:$0xff]
    %v7129 = vld [vmem:[#allocation12 + $0xe8] sm:$0xff]
    %v7130 = vld [vmem:[#allocation12 + $0xf0] sm:$0xff]
    %v7131 = vld [vmem:[#allocation12 + $0xf8] sm:$0xff]
    %v7132 = vld [vmem:[#allocation12 + $0x100] sm:$0xff]
    %v7133 = vld [vmem:[#allocation12 + $0x108] sm:$0xff]
    %v7134 = vld [vmem:[#allocation12 + $0x110] sm:$0xff]
    %v7135 = vld [vmem:[#allocation12 + $0x118] sm:$0xff]
    %v7136 = vld [vmem:[#allocation12 + $0x120] sm:$0xff]
    %v7137 = vld [vmem:[#allocation12 + $0x128] sm:$0xff]
    %v7138 = vld [vmem:[#allocation12 + $0x130] sm:$0xff]
    %v7139 = vld [vmem:[#allocation12 + $0x138] sm:$0xff]
    %v7140 = vld [vmem:[#allocation12 + $0x140] sm:$0xff]
    %v7141 = vld [vmem:[#allocation12 + $0x148] sm:$0xff]
    %v7142 = vld [vmem:[#allocation12 + $0x150] sm:$0xff]
    %v7143 = vld [vmem:[#allocation12 + $0x158] sm:$0xff]
    %v7144 = vld [vmem:[#allocation12 + $0x160] sm:$0xff]
    %v7145 = vld [vmem:[#allocation12 + $0x168] sm:$0xff]
    %v7146 = vld [vmem:[#allocation12 + $0x170] sm:$0xff]
    %v7147 = vld [vmem:[#allocation12 + $0x178] sm:$0xff]
    %v7148 = vld [vmem:[#allocation12 + $0x180] sm:$0xff]
    %v7149 = vld [vmem:[#allocation12 + $0x188] sm:$0xff]
    %v7200 = vunpack.c.l.b16 %v7100
    %v7201 = vunpack.c.h.b16 %v7100
    %v7202 = vunpack.c.l.b16 %v7101
    %v7203 = vunpack.c.h.b16 %v7101
    %v7204 = vunpack.c.l.b16 %v7102
    %v7205 = vunpack.c.h.b16 %v7102
    %v7206 = vunpack.c.l.b16 %v7103
    %v7207 = vunpack.c.h.b16 %v7103
    %v7208 = vunpack.c.l.b16 %v7104
    %v7209 = vunpack.c.h.b16 %v7104
    %v7210 = vunpack.c.l.b16 %v7105
    %v7211 = vunpack.c.h.b16 %v7105
    %v7212 = vunpack.c.l.b16 %v7106
    %v7213 = vunpack.c.h.b16 %v7106
    %v7214 = vunpack.c.l.b16 %v7107
    %v7215 = vunpack.c.h.b16 %v7107
    %v7216 = vunpack.c.l.b16 %v7108
    %v7217 = vunpack.c.h.b16 %v7108
    %v7218 = vunpack.c.l.b16 %v7109
    %v7219 = vunpack.c.h.b16 %v7109
    %v7220 = vunpack.c.l.b16 %v7110
    %v7221 = vunpack.c.h.b16 %v7110
    %v7222 = vunpack.c.l.b16 %v7111
    %v7223 = vunpack.c.h.b16 %v7111
    %v7224 = vunpack.c.l.b16 %v7112
    %v7225 = vunpack.c.h.b16 %v7112
    %v7226 = vunpack.c.l.b16 %v7113
    %v7227 = vunpack.c.h.b16 %v7113
    %v7228 = vunpack.c.l.b16 %v7114
    %v7229 = vunpack.c.h.b16 %v7114
    %v7230 = vunpack.c.l.b16 %v7115
    %v7231 = vunpack.c.h.b16 %v7115
    %v7232 = vunpack.c.l.b16 %v7116
    %v7233 = vunpack.c.h.b16 %v7116
    %v7234 = vunpack.c.l.b16 %v7117
    %v7235 = vunpack.c.h.b16 %v7117
    %v7236 = vunpack.c.l.b16 %v7118
    %v7237 = vunpack.c.h.b16 %v7118
    %v7238 = vunpack.c.l.b16 %v7119
    %v7239 = vunpack.c.h.b16 %v7119
    %v7240 = vunpack.c.l.b16 %v7120
    %v7241 = vunpack.c.h.b16 %v7120
    %v7242 = vunpack.c.l.b16 %v7121
    %v7243 = vunpack.c.h.b16 %v7121
    %v7244 = vunpack.c.l.b16 %v7122
    %v7245 = vunpack.c.h.b16 %v7122
    %v7246 = vunpack.c.l.b16 %v7123
    %v7247 = vunpack.c.h.b16 %v7123
    %v7248 = vunpack.c.l.b16 %v7124
    %v7249 = vunpack.c.h.b16 %v7124
    %v7250 = vunpack.c.l.b16 %v7125
    %v7251 = vunpack.c.h.b16 %v7125
    %v7252 = vunpack.c.l.b16 %v7126
    %v7253 = vunpack.c.h.b16 %v7126
    %v7254 = vunpack.c.l.b16 %v7127
    %v7255 = vunpack.c.h.b16 %v7127
    %v7256 = vunpack.c.l.b16 %v7128
    %v7257 = vunpack.c.h.b16 %v7128
    %v7258 = vunpack.c.l.b16 %v7129
    %v7259 = vunpack.c.h.b16 %v7129
    %v7260 = vunpack.c.l.b16 %v7130
    %v7261 = vunpack.c.h.b16 %v7130
    %v7262 = vunpack.c.l.b16 %v7131
    %v7263 = vunpack.c.h.b16 %v7131
    %v7264 = vunpack.c.l.b16 %v7132
    %v7265 = vunpack.c.h.b16 %v7132
    %v7266 = vunpack.c.l.b16 %v7133
    %v7267 = vunpack.c.h.b16 %v7133
    %v7268 = vunpack.c.l.b16 %v7134
    %v7269 = vunpack.c.h.b16 %v7134
    %v7270 = vunpack.c.l.b16 %v7135
    %v7271 = vunpack.c.h.b16 %v7135
    %v7272 = vunpack.c.l.b16 %v7136
    %v7273 = vunpack.c.h.b16 %v7136
    %v7274 = vunpack.c.l.b16 %v7137
    %v7275 = vunpack.c.h.b16 %v7137
    %v7276 = vunpack.c.l.b16 %v7138
    %v7277 = vunpack.c.h.b16 %v7138
    %v7278 = vunpack.c.l.b16 %v7139
    %v7279 = vunpack.c.h.b16 %v7139
    %v7280 = vunpack.c.l.b16 %v7140
    %v7281 = vunpack.c.h.b16 %v7140
    %v7282 = vunpack.c.l.b16 %v7141
    %v7283 = vunpack.c.h.b16 %v7141
    %v7284 = vunpack.c.l.b16 %v7142
    %v7285 = vunpack.c.h.b16 %v7142
    %v7286 = vunpack.c.l.b16 %v7143
    %v7287 = vunpack.c.h.b16 %v7143
    %v7288 = vunpack.c.l.b16 %v7144
    %v7289 = vunpack.c.h.b16 %v7144
    %v7290 = vunpack.c.l.b16 %v7145
    %v7291 = vunpack.c.h.b16 %v7145
    %v7292 = vunpack.c.l.b16 %v7146
    %v7293 = vunpack.c.h.b16 %v7146
    %v7294 = vunpack.c.l.b16 %v7147
    %v7295 = vunpack.c.h.b16 %v7147
    %v7296 = vunpack.c.l.b16 %v7148
    %v7297 = vunpack.c.h.b16 %v7148
    %v7298 = vunpack.c.l.b16 %v7149
    %v7299 = vunpack.c.h.b16 %v7149
    %v7300 = vpack.c.b16 %v7204, %v7200
    %v7301 = vpack.c.b16 %v7205, %v7201
    %v7302 = vpack.c.b16 %v7206, %v7202
    %v7303 = vpack.c.b16 %v7207, %v7203
    %v7304 = vpack.c.b16 %v7212, %v7208
    %v7305 = vpack.c.b16 %v7213, %v7209
    %v7306 = vpack.c.b16 %v7214, %v7210
    %v7307 = vpack.c.b16 %v7215, %v7211
    %v7308 = vpack.c.b16 %v7220, %v7216
    %v7309 = vpack.c.b16 %v7221, %v7217
    %v7310 = vpack.c.b16 %v7222, %v7218
    %v7311 = vpack.c.b16 %v7223, %v7219
    %v7312 = vpack.c.b16 %v7228, %v7224
    %v7313 = vpack.c.b16 %v7229, %v7225
    %v7314 = vpack.c.b16 %v7230, %v7226
    %v7315 = vpack.c.b16 %v7231, %v7227
    %v7316 = vpack.c.b16 %v7236, %v7232
    %v7317 = vpack.c.b16 %v7237, %v7233
    %v7318 = vpack.c.b16 %v7238, %v7234
    %v7319 = vpack.c.b16 %v7239, %v7235
    %v7320 = vpack.c.b16 %v7244, %v7240
    %v7321 = vpack.c.b16 %v7245, %v7241
    %v7322 = vpack.c.b16 %v7246, %v7242
    %v7323 = vpack.c.b16 %v7247, %v7243
    %v7324 = vpack.c.b16 %v7252, %v7248
    %v7325 = vpack.c.b16 %v7253, %v7249
    %v7326 = vpack.c.b16 %v7254, %v7250
    %v7327 = vpack.c.b16 %v7255, %v7251
    %v7328 = vpack.c.b16 %v7260, %v7256
    %v7329 = vpack.c.b16 %v7261, %v7257
    %v7330 = vpack.c.b16 %v7262, %v7258
    %v7331 = vpack.c.b16 %v7263, %v7259
    %v7332 = vpack.c.b16 %v7268, %v7264
    %v7333 = vpack.c.b16 %v7269, %v7265
    %v7334 = vpack.c.b16 %v7270, %v7266
    %v7335 = vpack.c.b16 %v7271, %v7267
    %v7336 = vpack.c.b16 %v7276, %v7272
    %v7337 = vpack.c.b16 %v7277, %v7273
    %v7338 = vpack.c.b16 %v7278, %v7274
    %v7339 = vpack.c.b16 %v7279, %v7275
    %v7340 = vpack.c.b16 %v7284, %v7280
    %v7341 = vpack.c.b16 %v7285, %v7281
    %v7342 = vpack.c.b16 %v7286, %v7282
    %v7343 = vpack.c.b16 %v7287, %v7283
    %v7344 = vpack.c.b16 %v7292, %v7288
    %v7345 = vpack.c.b16 %v7293, %v7289
    %v7346 = vpack.c.b16 %v7294, %v7290
    %v7347 = vpack.c.b16 %v7295, %v7291
    %v7348 = vpack.c.b16 %v7296, %v7296
    %v7349 = vpack.c.b16 %v7297, %v7297
    %v7350 = vpack.c.b16 %v7298, %v7298
    %v7351 = vpack.c.b16 %v7299, %v7299
    %vm7400 = vcmask 588800
    %v7402 = vsel %vm7400, %v7097, 0
    %v7405 = vsel %vm7400, %v7099, 0
    %vm7407 = vcmask 1043456
    %v7409 = vsel %vm7407, %v7348, 0
    %v7412 = vsel %vm7407, %v7349, 0
    %v7415 = vsel %vm7407, %v7350, 0
    %v7418 = vsel %vm7407, %v7351, 0
    %7420 = vmatpush.bf16.msra.mxu0 %v7328
    %7421 = vmatpush.bf16.msra.mxu0 %v7324
    %7422 = vmatpush.bf16.msra.mxu0 %v7320
    %7423 = vmatpush.bf16.msra.mxu0 %v7316
    %7424 = vmatpush.bf16.msra.mxu0 %v7312
    %7425 = vmatpush.bf16.msra.mxu0 %v7308
    %7426 = vmatpush.bf16.msra.mxu0 %v7304
    %7427 = vmatpush.bf16.msra.mxu0 %v7300
    %7428 = vmatmul.bf16.gmra.mxu0 %v7096
    %v7429 = vpop.f32.mrf.mxu0
    %v7430 = vadd.f32 0.0, %v7429
    %v7431 = vpop.f32.mrf.mxu0
    %v7432 = vadd.f32 0.0, %v7431
    %7433 = vmatmul.bf16.gmra.mxu0 %v7098
    %v7434 = vpop.f32.mrf.mxu0
    %v7435 = vadd.f32 0.0, %v7434
    %v7436 = vpop.f32.mrf.mxu0
    %v7437 = vadd.f32 0.0, %v7436
    %7438 = vdwg.mxu0
    %7439 = vmatpush.bf16.msra.mxu0 0
    %7440 = vmatpush.bf16.msra.mxu0 0
    %7441 = vmatpush.bf16.msra.mxu0 0
    %7442 = vmatpush.bf16.msra.mxu0 %v7409
    %7443 = vmatpush.bf16.msra.mxu0 %v7344
    %7444 = vmatpush.bf16.msra.mxu0 %v7340
    %7445 = vmatpush.bf16.msra.mxu0 %v7336
    %7446 = vmatpush.bf16.msra.mxu0 %v7332
    %7447 = vmatmul.bf16.gmra.mxu0 %v7402
    %v7448 = vpop.f32.mrf.mxu0
    %v7449 = vadd.f32 %v7430, %v7448
    %v7450 = vpop.f32.mrf.mxu0
    %v7451 = vadd.f32 %v7432, %v7450
    %7452 = vmatmul.bf16.gmra.mxu0 %v7405
    %v7453 = vpop.f32.mrf.mxu0
    %v7454 = vadd.f32 %v7435, %v7453
    %v7455 = vpop.f32.mrf.mxu0
    %v7456 = vadd.f32 %v7437, %v7455
    %7457 = vdwg.mxu0
    %7458 = vmatpush.bf16.msra.mxu0 %v7329
    %7459 = vmatpush.bf16.msra.mxu0 %v7325
    %7460 = vmatpush.bf16.msra.mxu0 %v7321
    %7461 = vmatpush.bf16.msra.mxu0 %v7317
    %7462 = vmatpush.bf16.msra.mxu0 %v7313
    %7463 = vmatpush.bf16.msra.mxu0 %v7309
    %7464 = vmatpush.bf16.msra.mxu0 %v7305
    %7465 = vmatpush.bf16.msra.mxu0 %v7301
    %7466 = vmatmul.bf16.gmra.mxu0 %v7096
    %v7467 = vpop.f32.mrf.mxu0
    %v7468 = vadd.f32 0.0, %v7467
    %v7469 = vpop.f32.mrf.mxu0
    %v7470 = vadd.f32 0.0, %v7469
    %7471 = vmatmul.bf16.gmra.mxu0 %v7098
    %v7472 = vpop.f32.mrf.mxu0
    %v7473 = vadd.f32 0.0, %v7472
    %v7474 = vpop.f32.mrf.mxu0
    %v7475 = vadd.f32 0.0, %v7474
    %7476 = vdwg.mxu0
    %7477 = vmatpush.bf16.msra.mxu0 0
    %7478 = vmatpush.bf16.msra.mxu0 0
    %7479 = vmatpush.bf16.msra.mxu0 0
    %7480 = vmatpush.bf16.msra.mxu0 %v7412
    %7481 = vmatpush.bf16.msra.mxu0 %v7345
    %7482 = vmatpush.bf16.msra.mxu0 %v7341
    %7483 = vmatpush.bf16.msra.mxu0 %v7337
    %7484 = vmatpush.bf16.msra.mxu0 %v7333
    %7485 = vmatmul.bf16.gmra.mxu0 %v7402
    %v7486 = vpop.f32.mrf.mxu0
    %v7487 = vadd.f32 %v7468, %v7486
    %v7488 = vpop.f32.mrf.mxu0
    %v7489 = vadd.f32 %v7470, %v7488
    %7490 = vmatmul.bf16.gmra.mxu0 %v7405
    %v7491 = vpop.f32.mrf.mxu0
    %v7492 = vadd.f32 %v7473, %v7491
    %v7493 = vpop.f32.mrf.mxu0
    %v7494 = vadd.f32 %v7475, %v7493
    %7495 = vdwg.mxu0
    %7496 = vmatpush.bf16.msra.mxu0 %v7330
    %7497 = vmatpush.bf16.msra.mxu0 %v7326
    %7498 = vmatpush.bf16.msra.mxu0 %v7322
    %7499 = vmatpush.bf16.msra.mxu0 %v7318
    %7500 = vmatpush.bf16.msra.mxu0 %v7314
    %7501 = vmatpush.bf16.msra.mxu0 %v7310
    %7502 = vmatpush.bf16.msra.mxu0 %v7306
    %7503 = vmatpush.bf16.msra.mxu0 %v7302
    %7504 = vmatmul.bf16.gmra.mxu0 %v7096
    %v7505 = vpop.f32.mrf.mxu0
    %v7506 = vadd.f32 0.0, %v7505
    %v7507 = vpop.f32.mrf.mxu0
    %v7508 = vadd.f32 0.0, %v7507
    %7509 = vmatmul.bf16.gmra.mxu0 %v7098
    %v7510 = vpop.f32.mrf.mxu0
    %v7511 = vadd.f32 0.0, %v7510
    %v7512 = vpop.f32.mrf.mxu0
    %v7513 = vadd.f32 0.0, %v7512
    %7514 = vdwg.mxu0
    %7515 = vmatpush.bf16.msra.mxu0 0
    %7516 = vmatpush.bf16.msra.mxu0 0
    %7517 = vmatpush.bf16.msra.mxu0 0
    %7518 = vmatpush.bf16.msra.mxu0 %v7415
    %7519 = vmatpush.bf16.msra.mxu0 %v7346
    %7520 = vmatpush.bf16.msra.mxu0 %v7342
    %7521 = vmatpush.bf16.msra.mxu0 %v7338
    %7522 = vmatpush.bf16.msra.mxu0 %v7334
    %7523 = vmatmul.bf16.gmra.mxu0 %v7402
    %v7524 = vpop.f32.mrf.mxu0
    %v7525 = vadd.f32 %v7506, %v7524
    %v7526 = vpop.f32.mrf.mxu0
    %v7527 = vadd.f32 %v7508, %v7526
    %7528 = vmatmul.bf16.gmra.mxu0 %v7405
    %v7529 = vpop.f32.mrf.mxu0
    %v7530 = vadd.f32 %v7511, %v7529
    %v7531 = vpop.f32.mrf.mxu0
    %v7532 = vadd.f32 %v7513, %v7531
    %7533 = vdwg.mxu0
    %7534 = vmatpush.bf16.msra.mxu0 %v7331
    %7535 = vmatpush.bf16.msra.mxu0 %v7327
    %7536 = vmatpush.bf16.msra.mxu0 %v7323
    %7537 = vmatpush.bf16.msra.mxu0 %v7319
    %7538 = vmatpush.bf16.msra.mxu0 %v7315
    %7539 = vmatpush.bf16.msra.mxu0 %v7311
    %7540 = vmatpush.bf16.msra.mxu0 %v7307
    %7541 = vmatpush.bf16.msra.mxu0 %v7303
    %7542 = vmatmul.bf16.gmra.mxu0 %v7096
    %v7543 = vpop.f32.mrf.mxu0
    %v7544 = vadd.f32 0.0, %v7543
    %v7545 = vpop.f32.mrf.mxu0
    %v7546 = vadd.f32 0.0, %v7545
    %7547 = vmatmul.bf16.gmra.mxu0 %v7098
    %v7548 = vpop.f32.mrf.mxu0
    %v7549 = vadd.f32 0.0, %v7548
    %v7550 = vpop.f32.mrf.mxu0
    %v7551 = vadd.f32 0.0, %v7550
    %7552 = vdwg.mxu0
    %7553 = vmatpush.bf16.msra.mxu0 0
    %7554 = vmatpush.bf16.msra.mxu0 0
    %7555 = vmatpush.bf16.msra.mxu0 0
    %7556 = vmatpush.bf16.msra.mxu0 %v7418
    %7557 = vmatpush.bf16.msra.mxu0 %v7347
    %7558 = vmatpush.bf16.msra.mxu0 %v7343
    %7559 = vmatpush.bf16.msra.mxu0 %v7339
    %7560 = vmatpush.bf16.msra.mxu0 %v7335
    %7561 = vmatmul.bf16.gmra.mxu0 %v7402
    %v7562 = vpop.f32.mrf.mxu0
    %v7563 = vadd.f32 %v7544, %v7562
    %v7564 = vpop.f32.mrf.mxu0
    %v7565 = vadd.f32 %v7546, %v7564
    %7566 = vmatmul.bf16.gmra.mxu0 %v7405
    %v7567 = vpop.f32.mrf.mxu0
    %v7568 = vadd.f32 %v7549, %v7567
    %v7569 = vpop.f32.mrf.mxu0
    %v7570 = vadd.f32 %v7551, %v7569
    %7571 = vdwg.mxu0
    %v7622 = vunpack.c.l.b16 %v7046
    %v7623 = vunpack.c.h.b16 %v7046
    %v7624 = vunpack.c.l.b16 %v7047
    %v7625 = vunpack.c.h.b16 %v7047
    %v7626 = vunpack.c.l.b16 %v7048
    %v7627 = vunpack.c.h.b16 %v7048
    %v7628 = vunpack.c.l.b16 %v7049
    %v7629 = vunpack.c.h.b16 %v7049
    %v7630 = vunpack.c.l.b16 %v7050
    %v7631 = vunpack.c.h.b16 %v7050
    %v7632 = vunpack.c.l.b16 %v7051
    %v7633 = vunpack.c.h.b16 %v7051
    %v7634 = vunpack.c.l.b16 %v7052
    %v7635 = vunpack.c.h.b16 %v7052
    %v7636 = vunpack.c.l.b16 %v7053
    %v7637 = vunpack.c.h.b16 %v7053
    %v7638 = vunpack.c.l.b16 %v7054
    %v7639 = vunpack.c.h.b16 %v7054
    %v7640 = vunpack.c.l.b16 %v7055
    %v7641 = vunpack.c.h.b16 %v7055
    %v7642 = vunpack.c.l.b16 %v7056
    %v7643 = vunpack.c.h.b16 %v7056
    %v7644 = vunpack.c.l.b16 %v7057
    %v7645 = vunpack.c.h.b16 %v7057
    %v7646 = vunpack.c.l.b16 %v7058
    %v7647 = vunpack.c.h.b16 %v7058
    %v7648 = vunpack.c.l.b16 %v7059
    %v7649 = vunpack.c.h.b16 %v7059
    %v7650 = vunpack.c.l.b16 %v7060
    %v7651 = vunpack.c.h.b16 %v7060
    %v7652 = vunpack.c.l.b16 %v7061
    %v7653 = vunpack.c.h.b16 %v7061
    %v7654 = vunpack.c.l.b16 %v7062
    %v7655 = vunpack.c.h.b16 %v7062
    %v7656 = vunpack.c.l.b16 %v7063
    %v7657 = vunpack.c.h.b16 %v7063
    %v7658 = vunpack.c.l.b16 %v7064
    %v7659 = vunpack.c.h.b16 %v7064
    %v7660 = vunpack.c.l.b16 %v7065
    %v7661 = vunpack.c.h.b16 %v7065
    %v7662 = vunpack.c.l.b16 %v7066
    %v7663 = vunpack.c.h.b16 %v7066
    %v7664 = vunpack.c.l.b16 %v7067
    %v7665 = vunpack.c.h.b16 %v7067
    %v7666 = vunpack.c.l.b16 %v7068
    %v7667 = vunpack.c.h.b16 %v7068
    %v7668 = vunpack.c.l.b16 %v7069
    %v7669 = vunpack.c.h.b16 %v7069
    %v7670 = vunpack.c.l.b16 %v7070
    %v7671 = vunpack.c.h.b16 %v7070
    %v7672 = vunpack.c.l.b16 %v7071
    %v7673 = vunpack.c.h.b16 %v7071
    %v7674 = vunpack.c.l.b16 %v7072
    %v7675 = vunpack.c.h.b16 %v7072
    %v7676 = vunpack.c.l.b16 %v7073
    %v7677 = vunpack.c.h.b16 %v7073
    %v7678 = vunpack.c.l.b16 %v7074
    %v7679 = vunpack.c.h.b16 %v7074
    %v7680 = vunpack.c.l.b16 %v7075
    %v7681 = vunpack.c.h.b16 %v7075
    %v7682 = vunpack.c.l.b16 %v7076
    %v7683 = vunpack.c.h.b16 %v7076
    %v7684 = vunpack.c.l.b16 %v7077
    %v7685 = vunpack.c.h.b16 %v7077
    %v7686 = vunpack.c.l.b16 %v7078
    %v7687 = vunpack.c.h.b16 %v7078
    %v7688 = vunpack.c.l.b16 %v7079
    %v7689 = vunpack.c.h.b16 %v7079
    %v7690 = vunpack.c.l.b16 %v7080
    %v7691 = vunpack.c.h.b16 %v7080
    %v7692 = vunpack.c.l.b16 %v7081
    %v7693 = vunpack.c.h.b16 %v7081
    %v7694 = vunpack.c.l.b16 %v7082
    %v7695 = vunpack.c.h.b16 %v7082
    %v7696 = vunpack.c.l.b16 %v7083
    %v7697 = vunpack.c.h.b16 %v7083
    %v7698 = vunpack.c.l.b16 %v7084
    %v7699 = vunpack.c.h.b16 %v7084
    %v7700 = vunpack.c.l.b16 %v7085
    %v7701 = vunpack.c.h.b16 %v7085
    %v7702 = vunpack.c.l.b16 %v7086
    %v7703 = vunpack.c.h.b16 %v7086
    %v7704 = vunpack.c.l.b16 %v7087
    %v7705 = vunpack.c.h.b16 %v7087
    %v7706 = vunpack.c.l.b16 %v7088
    %v7707 = vunpack.c.h.b16 %v7088
    %v7708 = vunpack.c.l.b16 %v7089
    %v7709 = vunpack.c.h.b16 %v7089
    %v7710 = vunpack.c.l.b16 %v7090
    %v7711 = vunpack.c.h.b16 %v7090
    %v7712 = vunpack.c.l.b16 %v7091
    %v7713 = vunpack.c.h.b16 %v7091
    %v7714 = vunpack.c.l.b16 %v7092
    %v7715 = vunpack.c.h.b16 %v7092
    %v7716 = vunpack.c.l.b16 %v7093
    %v7717 = vunpack.c.h.b16 %v7093
    %v7718 = vunpack.c.l.b16 %v7094
    %v7719 = vunpack.c.h.b16 %v7094
    %v7720 = vunpack.c.l.b16 %v7095
    %v7721 = vunpack.c.h.b16 %v7095
    %v7722 = vpack.c.b16 %v7626, %v7622
    %v7723 = vpack.c.b16 %v7627, %v7623
    %v7724 = vpack.c.b16 %v7628, %v7624
    %v7725 = vpack.c.b16 %v7629, %v7625
    %v7726 = vpack.c.b16 %v7634, %v7630
    %v7727 = vpack.c.b16 %v7635, %v7631
    %v7728 = vpack.c.b16 %v7636, %v7632
    %v7729 = vpack.c.b16 %v7637, %v7633
    %v7730 = vpack.c.b16 %v7642, %v7638
    %v7731 = vpack.c.b16 %v7643, %v7639
    %v7732 = vpack.c.b16 %v7644, %v7640
    %v7733 = vpack.c.b16 %v7645, %v7641
    %v7734 = vpack.c.b16 %v7650, %v7646
    %v7735 = vpack.c.b16 %v7651, %v7647
    %v7736 = vpack.c.b16 %v7652, %v7648
    %v7737 = vpack.c.b16 %v7653, %v7649
    %v7738 = vpack.c.b16 %v7658, %v7654
    %v7739 = vpack.c.b16 %v7659, %v7655
    %v7740 = vpack.c.b16 %v7660, %v7656
    %v7741 = vpack.c.b16 %v7661, %v7657
    %v7742 = vpack.c.b16 %v7666, %v7662
    %v7743 = vpack.c.b16 %v7667, %v7663
    %v7744 = vpack.c.b16 %v7668, %v7664
    %v7745 = vpack.c.b16 %v7669, %v7665
    %v7746 = vpack.c.b16 %v7674, %v7670
    %v7747 = vpack.c.b16 %v7675, %v7671
    %v7748 = vpack.c.b16 %v7676, %v7672
    %v7749 = vpack.c.b16 %v7677, %v7673
    %v7750 = vpack.c.b16 %v7682, %v7678
    %v7751 = vpack.c.b16 %v7683, %v7679
    %v7752 = vpack.c.b16 %v7684, %v7680
    %v7753 = vpack.c.b16 %v7685, %v7681
    %v7754 = vpack.c.b16 %v7690, %v7686
    %v7755 = vpack.c.b16 %v7691, %v7687
    %v7756 = vpack.c.b16 %v7692, %v7688
    %v7757 = vpack.c.b16 %v7693, %v7689
    %v7758 = vpack.c.b16 %v7698, %v7694
    %v7759 = vpack.c.b16 %v7699, %v7695
    %v7760 = vpack.c.b16 %v7700, %v7696
    %v7761 = vpack.c.b16 %v7701, %v7697
    %v7762 = vpack.c.b16 %v7706, %v7702
    %v7763 = vpack.c.b16 %v7707, %v7703
    %v7764 = vpack.c.b16 %v7708, %v7704
    %v7765 = vpack.c.b16 %v7709, %v7705
    %v7766 = vpack.c.b16 %v7714, %v7710
    %v7767 = vpack.c.b16 %v7715, %v7711
    %v7768 = vpack.c.b16 %v7716, %v7712
    %v7769 = vpack.c.b16 %v7717, %v7713
    %v7770 = vpack.c.b16 %v7718, %v7718
    %v7771 = vpack.c.b16 %v7719, %v7719
    %v7772 = vpack.c.b16 %v7720, %v7720
    %v7773 = vpack.c.b16 %v7721, %v7721
    %v7823 = vsel %vm7400, %v7043, 0
    %v7826 = vsel %vm7400, %v7045, 0
    %v7829 = vsel %vm7407, %v7770, 0
    %v7832 = vsel %vm7407, %v7771, 0
    %v7835 = vsel %vm7407, %v7772, 0
    %v7838 = vsel %vm7407, %v7773, 0
    %7840 = vmatpush.bf16.msra.mxu0 %v7750
    %7841 = vmatpush.bf16.msra.mxu0 %v7746
    %7842 = vmatpush.bf16.msra.mxu0 %v7742
    %7843 = vmatpush.bf16.msra.mxu0 %v7738
    %7844 = vmatpush.bf16.msra.mxu0 %v7734
    %7845 = vmatpush.bf16.msra.mxu0 %v7730
    %7846 = vmatpush.bf16.msra.mxu0 %v7726
    %7847 = vmatpush.bf16.msra.mxu0 %v7722
    %7848 = vmatmul.bf16.gmra.mxu0 %v7042
    %v7849 = vpop.f32.mrf.mxu0
    %v7850 = vadd.f32 %v7449, %v7849
    %v7851 = vpop.f32.mrf.mxu0
    %v7852 = vadd.f32 %v7451, %v7851
    %7853 = vmatmul.bf16.gmra.mxu0 %v7044
    %v7854 = vpop.f32.mrf.mxu0
    %v7855 = vadd.f32 %v7454, %v7854
    %v7856 = vpop.f32.mrf.mxu0
    %v7857 = vadd.f32 %v7456, %v7856
    %7858 = vdwg.mxu0
    %7859 = vmatpush.bf16.msra.mxu0 0
    %7860 = vmatpush.bf16.msra.mxu0 0
    %7861 = vmatpush.bf16.msra.mxu0 0
    %7862 = vmatpush.bf16.msra.mxu0 %v7829
    %7863 = vmatpush.bf16.msra.mxu0 %v7766
    %7864 = vmatpush.bf16.msra.mxu0 %v7762
    %7865 = vmatpush.bf16.msra.mxu0 %v7758
    %7866 = vmatpush.bf16.msra.mxu0 %v7754
    %7867 = vmatmul.bf16.gmra.mxu0 %v7823
    %v7868 = vpop.f32.mrf.mxu0
    %v7869 = vadd.f32 %v7850, %v7868
    %v7870 = vpop.f32.mrf.mxu0
    %v7871 = vadd.f32 %v7852, %v7870
    %7872 = vmatmul.bf16.gmra.mxu0 %v7826
    %v7873 = vpop.f32.mrf.mxu0
    %v7874 = vadd.f32 %v7855, %v7873
    %v7875 = vpop.f32.mrf.mxu0
    %v7876 = vadd.f32 %v7857, %v7875
    %7877 = vdwg.mxu0
    %7878 = vmatpush.bf16.msra.mxu0 %v7751
    %7879 = vmatpush.bf16.msra.mxu0 %v7747
    %7880 = vmatpush.bf16.msra.mxu0 %v7743
    %7881 = vmatpush.bf16.msra.mxu0 %v7739
    %7882 = vmatpush.bf16.msra.mxu0 %v7735
    %7883 = vmatpush.bf16.msra.mxu0 %v7731
    %7884 = vmatpush.bf16.msra.mxu0 %v7727
    %7885 = vmatpush.bf16.msra.mxu0 %v7723
    %7886 = vmatmul.bf16.gmra.mxu0 %v7042
    %v7887 = vpop.f32.mrf.mxu0
    %v7888 = vadd.f32 %v7487, %v7887
    %v7889 = vpop.f32.mrf.mxu0
    %v7890 = vadd.f32 %v7489, %v7889
    %7891 = vmatmul.bf16.gmra.mxu0 %v7044
    %v7892 = vpop.f32.mrf.mxu0
    %v7893 = vadd.f32 %v7492, %v7892
    %v7894 = vpop.f32.mrf.mxu0
    %v7895 = vadd.f32 %v7494, %v7894
    %7896 = vdwg.mxu0
    %7897 = vmatpush.bf16.msra.mxu0 0
    %7898 = vmatpush.bf16.msra.mxu0 0
    %7899 = vmatpush.bf16.msra.mxu0 0
    %7900 = vmatpush.bf16.msra.mxu0 %v7832
    %7901 = vmatpush.bf16.msra.mxu0 %v7767
    %7902 = vmatpush.bf16.msra.mxu0 %v7763
    %7903 = vmatpush.bf16.msra.mxu0 %v7759
    %7904 = vmatpush.bf16.msra.mxu0 %v7755
    %7905 = vmatmul.bf16.gmra.mxu0 %v7823
    %v7906 = vpop.f32.mrf.mxu0
    %v7907 = vadd.f32 %v7888, %v7906
    %v7908 = vpop.f32.mrf.mxu0
    %v7909 = vadd.f32 %v7890, %v7908
    %7910 = vmatmul.bf16.gmra.mxu0 %v7826
    %v7911 = vpop.f32.mrf.mxu0
    %v7912 = vadd.f32 %v7893, %v7911
    %v7913 = vpop.f32.mrf.mxu0
    %v7914 = vadd.f32 %v7895, %v7913
    %7915 = vdwg.mxu0
    %7916 = vmatpush.bf16.msra.mxu0 %v7752
    %7917 = vmatpush.bf16.msra.mxu0 %v7748
    %7918 = vmatpush.bf16.msra.mxu0 %v7744
    %7919 = vmatpush.bf16.msra.mxu0 %v7740
    %7920 = vmatpush.bf16.msra.mxu0 %v7736
    %7921 = vmatpush.bf16.msra.mxu0 %v7732
    %7922 = vmatpush.bf16.msra.mxu0 %v7728
    %7923 = vmatpush.bf16.msra.mxu0 %v7724
    %7924 = vmatmul.bf16.gmra.mxu0 %v7042
    %v7925 = vpop.f32.mrf.mxu0
    %v7926 = vadd.f32 %v7525, %v7925
    %v7927 = vpop.f32.mrf.mxu0
    %v7928 = vadd.f32 %v7527, %v7927
    %7929 = vmatmul.bf16.gmra.mxu0 %v7044
    %v7930 = vpop.f32.mrf.mxu0
    %v7931 = vadd.f32 %v7530, %v7930
    %v7932 = vpop.f32.mrf.mxu0
    %v7933 = vadd.f32 %v7532, %v7932
    %7934 = vdwg.mxu0
    %7935 = vmatpush.bf16.msra.mxu0 0
    %7936 = vmatpush.bf16.msra.mxu0 0
    %7937 = vmatpush.bf16.msra.mxu0 0
    %7938 = vmatpush.bf16.msra.mxu0 %v7835
    %7939 = vmatpush.bf16.msra.mxu0 %v7768
    %7940 = vmatpush.bf16.msra.mxu0 %v7764
    %7941 = vmatpush.bf16.msra.mxu0 %v7760
    %7942 = vmatpush.bf16.msra.mxu0 %v7756
    %7943 = vmatmul.bf16.gmra.mxu0 %v7823
    %v7944 = vpop.f32.mrf.mxu0
    %v7945 = vadd.f32 %v7926, %v7944
    %v7946 = vpop.f32.mrf.mxu0
    %v7947 = vadd.f32 %v7928, %v7946
    %7948 = vmatmul.bf16.gmra.mxu0 %v7826
    %v7949 = vpop.f32.mrf.mxu0
    %v7950 = vadd.f32 %v7931, %v7949
    %v7951 = vpop.f32.mrf.mxu0
    %v7952 = vadd.f32 %v7933, %v7951
    %7953 = vdwg.mxu0
    %7954 = vmatpush.bf16.msra.mxu0 %v7753
    %7955 = vmatpush.bf16.msra.mxu0 %v7749
    %7956 = vmatpush.bf16.msra.mxu0 %v7745
    %7957 = vmatpush.bf16.msra.mxu0 %v7741
    %7958 = vmatpush.bf16.msra.mxu0 %v7737
    %7959 = vmatpush.bf16.msra.mxu0 %v7733
    %7960 = vmatpush.bf16.msra.mxu0 %v7729
    %7961 = vmatpush.bf16.msra.mxu0 %v7725
    %7962 = vmatmul.bf16.gmra.mxu0 %v7042
    %v7963 = vpop.f32.mrf.mxu0
    %v7964 = vadd.f32 %v7563, %v7963
    %v7965 = vpop.f32.mrf.mxu0
    %v7966 = vadd.f32 %v7565, %v7965
    %7967 = vmatmul.bf16.gmra.mxu0 %v7044
    %v7968 = vpop.f32.mrf.mxu0
    %v7969 = vadd.f32 %v7568, %v7968
    %v7970 = vpop.f32.mrf.mxu0
    %v7971 = vadd.f32 %v7570, %v7970
    %7972 = vdwg.mxu0
    %7973 = vmatpush.bf16.msra.mxu0 0
    %7974 = vmatpush.bf16.msra.mxu0 0
    %7975 = vmatpush.bf16.msra.mxu0 0
    %7976 = vmatpush.bf16.msra.mxu0 %v7838
    %7977 = vmatpush.bf16.msra.mxu0 %v7769
    %7978 = vmatpush.bf16.msra.mxu0 %v7765
    %7979 = vmatpush.bf16.msra.mxu0 %v7761
    %7980 = vmatpush.bf16.msra.mxu0 %v7757
    %7981 = vmatmul.bf16.gmra.mxu0 %v7823
    %v7982 = vpop.f32.mrf.mxu0
    %v7983 = vadd.f32 %v7964, %v7982
    %v7984 = vpop.f32.mrf.mxu0
    %v7985 = vadd.f32 %v7966, %v7984
    %7986 = vmatmul.bf16.gmra.mxu0 %v7826
    %v7987 = vpop.f32.mrf.mxu0
    %v7988 = vadd.f32 %v7969, %v7987
    %v7989 = vpop.f32.mrf.mxu0
    %v7990 = vadd.f32 %v7971, %v7989
    %7991 = vdwg.mxu0
    %v7992 = vld [vmem:[%s39] sm:$0xff]
    %v7993 = vld [vmem:[%s39 + $0x8] sm:$0xff]
    %v7994 = vld [vmem:[%s39 + $0x10] sm:$0xff]
    %v7995 = vld [vmem:[%s39 + $0x18] sm:$0xff]
    %v7996 = vld [vmem:[%s39 + $0x20] sm:$0xff]
    %v7997 = vld [vmem:[%s39 + $0x28] sm:$0xff]
    %v7998 = vld [vmem:[%s39 + $0x30] sm:$0xff]
    %v7999 = vld [vmem:[%s39 + $0x38] sm:$0xff]
    %v8000 = vld [vmem:[%s39 + $0x40] sm:$0xff]
    %v8001 = vld [vmem:[%s39 + $0x48] sm:$0xff]
    %v8002 = vld [vmem:[%s39 + $0x50] sm:$0xff]
    %v8003 = vld [vmem:[%s39 + $0x58] sm:$0xff]
    %v8004 = vld [vmem:[%s39 + $0x60] sm:$0xff]
    %v8005 = vld [vmem:[%s39 + $0x68] sm:$0xff]
    %v8006 = vld [vmem:[%s39 + $0x70] sm:$0xff]
    %v8007 = vld [vmem:[%s39 + $0x78] sm:$0xff]
    %v8008 = vld [vmem:[%s39 + $0x80] sm:$0xff]
    %v8009 = vld [vmem:[%s39 + $0x88] sm:$0xff]
    %v8010 = vld [vmem:[%s39 + $0x90] sm:$0xff]
    %v8011 = vld [vmem:[%s39 + $0x98] sm:$0xff]
    %v8012 = vld [vmem:[%s39 + $0xa0] sm:$0xff]
    %v8013 = vld [vmem:[%s39 + $0xa8] sm:$0xff]
    %v8014 = vld [vmem:[%s39 + $0xb0] sm:$0xff]
    %v8015 = vld [vmem:[%s39 + $0xb8] sm:$0xff]
    %v8016 = vld [vmem:[%s39 + $0xc0] sm:$0xff]
    %v8017 = vld [vmem:[%s39 + $0xc8] sm:$0xff]
    %v8018 = vld [vmem:[%s39 + $0xd0] sm:$0xff]
    %v8019 = vld [vmem:[%s39 + $0xd8] sm:$0xff]
    %v8020 = vld [vmem:[%s39 + $0xe0] sm:$0xff]
    %v8021 = vld [vmem:[%s39 + $0xe8] sm:$0xff]
    %v8022 = vld [vmem:[%s39 + $0xf0] sm:$0xff]
    %v8023 = vld [vmem:[%s39 + $0xf8] sm:$0xff]
    %v8056 = vunpack.c.l.b16 %v7992
    %v8057 = vunpack.c.h.b16 %v7992
    %v8058 = vunpack.c.l.b16 %v7993
    %v8059 = vunpack.c.h.b16 %v7993
    %v8060 = vunpack.c.l.b16 %v7994
    %v8061 = vunpack.c.h.b16 %v7994
    %v8062 = vunpack.c.l.b16 %v7995
    %v8063 = vunpack.c.h.b16 %v7995
    %v8064 = vunpack.c.l.b16 %v7996
    %v8065 = vunpack.c.h.b16 %v7996
    %v8066 = vunpack.c.l.b16 %v7997
    %v8067 = vunpack.c.h.b16 %v7997
    %v8068 = vunpack.c.l.b16 %v7998
    %v8069 = vunpack.c.h.b16 %v7998
    %v8070 = vunpack.c.l.b16 %v7999
    %v8071 = vunpack.c.h.b16 %v7999
    %v8072 = vunpack.c.l.b16 %v8000
    %v8073 = vunpack.c.h.b16 %v8000
    %v8074 = vunpack.c.l.b16 %v8001
    %v8075 = vunpack.c.h.b16 %v8001
    %v8076 = vunpack.c.l.b16 %v8002
    %v8077 = vunpack.c.h.b16 %v8002
    %v8078 = vunpack.c.l.b16 %v8003
    %v8079 = vunpack.c.h.b16 %v8003
    %v8080 = vunpack.c.l.b16 %v8004
    %v8081 = vunpack.c.h.b16 %v8004
    %v8082 = vunpack.c.l.b16 %v8005
    %v8083 = vunpack.c.h.b16 %v8005
    %v8084 = vunpack.c.l.b16 %v8006
    %v8085 = vunpack.c.h.b16 %v8006
    %v8086 = vunpack.c.l.b16 %v8007
    %v8087 = vunpack.c.h.b16 %v8007
    %v8088 = vunpack.c.l.b16 %v8008
    %v8089 = vunpack.c.h.b16 %v8008
    %v8090 = vunpack.c.l.b16 %v8009
    %v8091 = vunpack.c.h.b16 %v8009
    %v8092 = vunpack.c.l.b16 %v8010
    %v8093 = vunpack.c.h.b16 %v8010
    %v8094 = vunpack.c.l.b16 %v8011
    %v8095 = vunpack.c.h.b16 %v8011
    %v8096 = vunpack.c.l.b16 %v8012
    %v8097 = vunpack.c.h.b16 %v8012
    %v8098 = vunpack.c.l.b16 %v8013
    %v8099 = vunpack.c.h.b16 %v8013
    %v8100 = vunpack.c.l.b16 %v8014
    %v8101 = vunpack.c.h.b16 %v8014
    %v8102 = vunpack.c.l.b16 %v8015
    %v8103 = vunpack.c.h.b16 %v8015
    %v8104 = vunpack.c.l.b16 %v8016
    %v8105 = vunpack.c.h.b16 %v8016
    %v8106 = vunpack.c.l.b16 %v8017
    %v8107 = vunpack.c.h.b16 %v8017
    %v8108 = vunpack.c.l.b16 %v8018
    %v8109 = vunpack.c.h.b16 %v8018
    %v8110 = vunpack.c.l.b16 %v8019
    %v8111 = vunpack.c.h.b16 %v8019
    %v8112 = vunpack.c.l.b16 %v8020
    %v8113 = vunpack.c.h.b16 %v8020
    %v8114 = vunpack.c.l.b16 %v8021
    %v8115 = vunpack.c.h.b16 %v8021
    %v8116 = vunpack.c.l.b16 %v8022
    %v8117 = vunpack.c.h.b16 %v8022
    %v8118 = vunpack.c.l.b16 %v8023
    %v8119 = vunpack.c.h.b16 %v8023
    %v8120 = vpack.c.b16 %v8060, %v8056
    %v8121 = vpack.c.b16 %v8061, %v8057
    %v8122 = vpack.c.b16 %v8062, %v8058
    %v8123 = vpack.c.b16 %v8063, %v8059
    %v8124 = vpack.c.b16 %v8068, %v8064
    %v8125 = vpack.c.b16 %v8069, %v8065
    %v8126 = vpack.c.b16 %v8070, %v8066
    %v8127 = vpack.c.b16 %v8071, %v8067
    %v8128 = vpack.c.b16 %v8076, %v8072
    %v8129 = vpack.c.b16 %v8077, %v8073
    %v8130 = vpack.c.b16 %v8078, %v8074
    %v8131 = vpack.c.b16 %v8079, %v8075
    %v8132 = vpack.c.b16 %v8084, %v8080
    %v8133 = vpack.c.b16 %v8085, %v8081
    %v8134 = vpack.c.b16 %v8086, %v8082
    %v8135 = vpack.c.b16 %v8087, %v8083
    %v8136 = vpack.c.b16 %v8092, %v8088
    %v8137 = vpack.c.b16 %v8093, %v8089
    %v8138 = vpack.c.b16 %v8094, %v8090
    %v8139 = vpack.c.b16 %v8095, %v8091
    %v8140 = vpack.c.b16 %v8100, %v8096
    %v8141 = vpack.c.b16 %v8101, %v8097
    %v8142 = vpack.c.b16 %v8102, %v8098
    %v8143 = vpack.c.b16 %v8103, %v8099
    %v8144 = vpack.c.b16 %v8108, %v8104
    %v8145 = vpack.c.b16 %v8109, %v8105
    %v8146 = vpack.c.b16 %v8110, %v8106
    %v8147 = vpack.c.b16 %v8111, %v8107
    %v8148 = vpack.c.b16 %v8116, %v8112
    %v8149 = vpack.c.b16 %v8117, %v8113
    %v8150 = vpack.c.b16 %v8118, %v8114
    %v8151 = vpack.c.b16 %v8119, %v8115
    %8184 = vmatpush.bf16.msra.mxu0 %v8148
    %8185 = vmatpush.bf16.msra.mxu0 %v8144
    %8186 = vmatpush.bf16.msra.mxu0 %v8140
    %8187 = vmatpush.bf16.msra.mxu0 %v8136
    %8188 = vmatpush.bf16.msra.mxu0 %v8132
    %8189 = vmatpush.bf16.msra.mxu0 %v8128
    %8190 = vmatpush.bf16.msra.mxu0 %v8124
    %8191 = vmatpush.bf16.msra.mxu0 %v8120
    %8192 = vmatmul.bf16.gmra.mxu0 %v3517
    %v8193 = vpop.f32.mrf.mxu0
    %v8194 = vadd.f32 0.0, %v8193
    %v8195 = vpop.f32.mrf.mxu0
    %v8196 = vadd.f32 0.0, %v8195
    %8197 = vmatmul.bf16.gmra.mxu0 %v3518
    %v8198 = vpop.f32.mrf.mxu0
    %v8199 = vadd.f32 0.0, %v8198
    %v8200 = vpop.f32.mrf.mxu0
    %v8201 = vadd.f32 0.0, %v8200
    %8202 = vdwg.mxu0
    %8203 = vmatpush.bf16.msra.mxu0 %v8149
    %8204 = vmatpush.bf16.msra.mxu0 %v8145
    %8205 = vmatpush.bf16.msra.mxu0 %v8141
    %8206 = vmatpush.bf16.msra.mxu0 %v8137
    %8207 = vmatpush.bf16.msra.mxu0 %v8133
    %8208 = vmatpush.bf16.msra.mxu0 %v8129
    %8209 = vmatpush.bf16.msra.mxu0 %v8125
    %8210 = vmatpush.bf16.msra.mxu0 %v8121
    %8211 = vmatmul.bf16.gmra.mxu0 %v3517
    %v8212 = vpop.f32.mrf.mxu0
    %v8213 = vadd.f32 0.0, %v8212
    %v8214 = vpop.f32.mrf.mxu0
    %v8215 = vadd.f32 0.0, %v8214
    %8216 = vmatmul.bf16.gmra.mxu0 %v3518
    %v8217 = vpop.f32.mrf.mxu0
    %v8218 = vadd.f32 0.0, %v8217
    %v8219 = vpop.f32.mrf.mxu0
    %v8220 = vadd.f32 0.0, %v8219
    %8221 = vdwg.mxu0
    %8222 = vmatpush.bf16.msra.mxu0 %v8150
    %8223 = vmatpush.bf16.msra.mxu0 %v8146
    %8224 = vmatpush.bf16.msra.mxu0 %v8142
    %8225 = vmatpush.bf16.msra.mxu0 %v8138
    %8226 = vmatpush.bf16.msra.mxu0 %v8134
    %8227 = vmatpush.bf16.msra.mxu0 %v8130
    %8228 = vmatpush.bf16.msra.mxu0 %v8126
    %8229 = vmatpush.bf16.msra.mxu0 %v8122
    %8230 = vmatmul.bf16.gmra.mxu0 %v3517
    %v8231 = vpop.f32.mrf.mxu0
    %v8232 = vadd.f32 0.0, %v8231
    %v8233 = vpop.f32.mrf.mxu0
    %v8234 = vadd.f32 0.0, %v8233
    %8235 = vmatmul.bf16.gmra.mxu0 %v3518
    %v8236 = vpop.f32.mrf.mxu0
    %v8237 = vadd.f32 0.0, %v8236
    %v8238 = vpop.f32.mrf.mxu0
    %v8239 = vadd.f32 0.0, %v8238
    %8240 = vdwg.mxu0
    %8241 = vmatpush.bf16.msra.mxu0 %v8151
    %8242 = vmatpush.bf16.msra.mxu0 %v8147
    %8243 = vmatpush.bf16.msra.mxu0 %v8143
    %8244 = vmatpush.bf16.msra.mxu0 %v8139
    %8245 = vmatpush.bf16.msra.mxu0 %v8135
    %8246 = vmatpush.bf16.msra.mxu0 %v8131
    %8247 = vmatpush.bf16.msra.mxu0 %v8127
    %8248 = vmatpush.bf16.msra.mxu0 %v8123
    %8249 = vmatmul.bf16.gmra.mxu0 %v3517
    %v8250 = vpop.f32.mrf.mxu0
    %v8251 = vadd.f32 0.0, %v8250
    %v8252 = vpop.f32.mrf.mxu0
    %v8253 = vadd.f32 0.0, %v8252
    %8254 = vmatmul.bf16.gmra.mxu0 %v3518
    %v8255 = vpop.f32.mrf.mxu0
    %v8256 = vadd.f32 0.0, %v8255
    %v8257 = vpop.f32.mrf.mxu0
    %v8258 = vadd.f32 0.0, %v8257
    %8259 = vdwg.mxu0
    %v8260 = vadd.f32 %v7869, %v8194
    %v8261 = vadd.f32 %v7907, %v8213
    %v8262 = vadd.f32 %v7945, %v8232
    %v8263 = vadd.f32 %v7983, %v8251
    %v8264 = vadd.f32 %v7871, %v8196
    %v8265 = vadd.f32 %v7909, %v8215
    %v8266 = vadd.f32 %v7947, %v8234
    %v8267 = vadd.f32 %v7985, %v8253
    %v8268 = vadd.f32 %v7874, %v8199
    %v8269 = vadd.f32 %v7912, %v8218
    %v8270 = vadd.f32 %v7950, %v8237
    %v8271 = vadd.f32 %v7988, %v8256
    %v8272 = vadd.f32 %v7876, %v8201
    %v8273 = vadd.f32 %v7914, %v8220
    %v8274 = vadd.f32 %v7952, %v8239
    %v8275 = vadd.f32 %v7990, %v8258
    %v8276 = vld [vmem:[%s43] sm:$0xf]
    %v8278 = vperm.slane %v8276, 0
    %v8279 = vperm.slane %v8276, 1
    %v8280 = vperm.slane %v8276, 2
    %v8281 = vperm.slane %v8276, 3
    %v8286 = vadd.f32 %v8260, %v8278
    %v8287 = vadd.f32 %v8261, %v8279
    %v8288 = vadd.f32 %v8262, %v8280
    %v8289 = vadd.f32 %v8263, %v8281
    %v8290 = vadd.f32 %v8264, %v8278
    %v8291 = vadd.f32 %v8265, %v8279
    %v8292 = vadd.f32 %v8266, %v8280
    %v8293 = vadd.f32 %v8267, %v8281
    %v8294 = vadd.f32 %v8268, %v8278
    %v8295 = vadd.f32 %v8269, %v8279
    %v8296 = vadd.f32 %v8270, %v8280
    %v8297 = vadd.f32 %v8271, %v8281
    %v8298 = vadd.f32 %v8272, %v8278
    %v8299 = vadd.f32 %v8273, %v8279
    %v8300 = vadd.f32 %v8274, %v8280
    %v8301 = vadd.f32 %v8275, %v8281
    %8302 = vst [vmem:[#allocation2] sm:$0xff] %v8286
    %8303 = vst [vmem:[#allocation2 + $0x8] sm:$0xff] %v8287
    %8304 = vst [vmem:[#allocation2 + $0x10] sm:$0xff] %v8288
    %8305 = vst [vmem:[#allocation2 + $0x18] sm:$0xff] %v8289
    %8306 = vst [vmem:[#allocation2 + $0x20] sm:$0xff] %v8290
    %8307 = vst [vmem:[#allocation2 + $0x28] sm:$0xff] %v8291
    %8308 = vst [vmem:[#allocation2 + $0x30] sm:$0xff] %v8292
    %8309 = vst [vmem:[#allocation2 + $0x38] sm:$0xff] %v8293
    %8310 = vst [vmem:[#allocation2 + $0x40] sm:$0xff] %v8294
    %8311 = vst [vmem:[#allocation2 + $0x48] sm:$0xff] %v8295
    %8312 = vst [vmem:[#allocation2 + $0x50] sm:$0xff] %v8296
    %8313 = vst [vmem:[#allocation2 + $0x58] sm:$0xff] %v8297
    %8314 = vst [vmem:[#allocation2 + $0x60] sm:$0xff] %v8298
    %8315 = vst [vmem:[#allocation2 + $0x68] sm:$0xff] %v8299
    %8316 = vst [vmem:[#allocation2 + $0x70] sm:$0xff] %v8300
    %8317 = vst [vmem:[#allocation2 + $0x78] sm:$0xff] %v8301
    %v8318 = vld [vmem:[%s41] sm:$0xff]
    %v8319 = vld [vmem:[%s41 + $0x8] sm:$0xff]
    %v8320 = vld [vmem:[%s41 + $0x10] sm:$0xff]
    %v8321 = vld [vmem:[%s41 + $0x18] sm:$0xff]
    %v8322 = vld [vmem:[%s41 + $0x20] sm:$0xff]
    %v8323 = vld [vmem:[%s41 + $0x28] sm:$0xff]
    %v8324 = vld [vmem:[%s41 + $0x30] sm:$0xff]
    %v8325 = vld [vmem:[%s41 + $0x38] sm:$0xff]
    %v8326 = vld [vmem:[%s41 + $0x40] sm:$0xff]
    %v8327 = vld [vmem:[%s41 + $0x48] sm:$0xff]
    %v8328 = vld [vmem:[%s41 + $0x50] sm:$0xff]
    %v8329 = vld [vmem:[%s41 + $0x58] sm:$0xff]
    %v8330 = vld [vmem:[%s41 + $0x60] sm:$0xff]
    %v8331 = vld [vmem:[%s41 + $0x68] sm:$0xff]
    %v8332 = vld [vmem:[%s41 + $0x70] sm:$0xff]
    %v8333 = vld [vmem:[%s41 + $0x78] sm:$0xff]
    %v8334 = vld [vmem:[%s41 + $0x80] sm:$0xff]
    %v8335 = vld [vmem:[%s41 + $0x88] sm:$0xff]
    %v8336 = vld [vmem:[%s41 + $0x90] sm:$0xff]
    %v8337 = vld [vmem:[%s41 + $0x98] sm:$0xff]
    %v8338 = vld [vmem:[%s41 + $0xa0] sm:$0xff]
    %v8339 = vld [vmem:[%s41 + $0xa8] sm:$0xff]
    %v8340 = vld [vmem:[%s41 + $0xb0] sm:$0xff]
    %v8341 = vld [vmem:[%s41 + $0xb8] sm:$0xff]
    %v8342 = vld [vmem:[%s41 + $0xc0] sm:$0xff]
    %v8343 = vld [vmem:[%s41 + $0xc8] sm:$0xff]
    %v8344 = vld [vmem:[%s41 + $0xd0] sm:$0xff]
    %v8345 = vld [vmem:[%s41 + $0xd8] sm:$0xff]
    %v8346 = vld [vmem:[%s41 + $0xe0] sm:$0xff]
    %v8347 = vld [vmem:[%s41 + $0xe8] sm:$0xff]
    %v8348 = vld [vmem:[%s41 + $0xf0] sm:$0xff]
    %v8349 = vld [vmem:[%s41 + $0xf8] sm:$0xff]
    %v8350 = vld [vmem:[#allocation2] sm:$0xff]
    %v8351 = vld [vmem:[#allocation2 + $0x8] sm:$0xff]
    %v8352 = vld [vmem:[#allocation2 + $0x10] sm:$0xff]
    %v8353 = vld [vmem:[#allocation2 + $0x18] sm:$0xff]
    %v8386 = vunpack.c.l.b16 %v8318
    %v8387 = vunpack.c.h.b16 %v8318
    %v8388 = vunpack.c.l.b16 %v8319
    %v8389 = vunpack.c.h.b16 %v8319
    %v8390 = vunpack.c.l.b16 %v8320
    %v8391 = vunpack.c.h.b16 %v8320
    %v8392 = vunpack.c.l.b16 %v8321
    %v8393 = vunpack.c.h.b16 %v8321
    %v8394 = vunpack.c.l.b16 %v8322
    %v8395 = vunpack.c.h.b16 %v8322
    %v8396 = vunpack.c.l.b16 %v8323
    %v8397 = vunpack.c.h.b16 %v8323
    %v8398 = vunpack.c.l.b16 %v8324
    %v8399 = vunpack.c.h.b16 %v8324
    %v8400 = vunpack.c.l.b16 %v8325
    %v8401 = vunpack.c.h.b16 %v8325
    %v8402 = vunpack.c.l.b16 %v8326
    %v8403 = vunpack.c.h.b16 %v8326
    %v8404 = vunpack.c.l.b16 %v8327
    %v8405 = vunpack.c.h.b16 %v8327
    %v8406 = vunpack.c.l.b16 %v8328
    %v8407 = vunpack.c.h.b16 %v8328
    %v8408 = vunpack.c.l.b16 %v8329
    %v8409 = vunpack.c.h.b16 %v8329
    %v8410 = vunpack.c.l.b16 %v8330
    %v8411 = vunpack.c.h.b16 %v8330
    %v8412 = vunpack.c.l.b16 %v8331
    %v8413 = vunpack.c.h.b16 %v8331
    %v8414 = vunpack.c.l.b16 %v8332
    %v8415 = vunpack.c.h.b16 %v8332
    %v8416 = vunpack.c.l.b16 %v8333
    %v8417 = vunpack.c.h.b16 %v8333
    %v8418 = vunpack.c.l.b16 %v8334
    %v8419 = vunpack.c.h.b16 %v8334
    %v8420 = vunpack.c.l.b16 %v8335
    %v8421 = vunpack.c.h.b16 %v8335
    %v8422 = vunpack.c.l.b16 %v8336
    %v8423 = vunpack.c.h.b16 %v8336
    %v8424 = vunpack.c.l.b16 %v8337
    %v8425 = vunpack.c.h.b16 %v8337
    %v8426 = vunpack.c.l.b16 %v8338
    %v8427 = vunpack.c.h.b16 %v8338
    %v8428 = vunpack.c.l.b16 %v8339
    %v8429 = vunpack.c.h.b16 %v8339
    %v8430 = vunpack.c.l.b16 %v8340
    %v8431 = vunpack.c.h.b16 %v8340
    %v8432 = vunpack.c.l.b16 %v8341
    %v8433 = vunpack.c.h.b16 %v8341
    %v8434 = vunpack.c.l.b16 %v8342
    %v8435 = vunpack.c.h.b16 %v8342
    %v8436 = vunpack.c.l.b16 %v8343
    %v8437 = vunpack.c.h.b16 %v8343
    %v8438 = vunpack.c.l.b16 %v8344
    %v8439 = vunpack.c.h.b16 %v8344
    %v8440 = vunpack.c.l.b16 %v8345
    %v8441 = vunpack.c.h.b16 %v8345
    %v8442 = vunpack.c.l.b16 %v8346
    %v8443 = vunpack.c.h.b16 %v8346
    %v8444 = vunpack.c.l.b16 %v8347
    %v8445 = vunpack.c.h.b16 %v8347
    %v8446 = vunpack.c.l.b16 %v8348
    %v8447 = vunpack.c.h.b16 %v8348
    %v8448 = vunpack.c.l.b16 %v8349
    %v8449 = vunpack.c.h.b16 %v8349
    %v8450 = vpack.c.b16 %v8390, %v8386
    %v8451 = vpack.c.b16 %v8391, %v8387
    %v8452 = vpack.c.b16 %v8392, %v8388
    %v8453 = vpack.c.b16 %v8393, %v8389
    %v8454 = vpack.c.b16 %v8398, %v8394
    %v8455 = vpack.c.b16 %v8399, %v8395
    %v8456 = vpack.c.b16 %v8400, %v8396
    %v8457 = vpack.c.b16 %v8401, %v8397
    %v8458 = vpack.c.b16 %v8406, %v8402
    %v8459 = vpack.c.b16 %v8407, %v8403
    %v8460 = vpack.c.b16 %v8408, %v8404
    %v8461 = vpack.c.b16 %v8409, %v8405
    %v8462 = vpack.c.b16 %v8414, %v8410
    %v8463 = vpack.c.b16 %v8415, %v8411
    %v8464 = vpack.c.b16 %v8416, %v8412
    %v8465 = vpack.c.b16 %v8417, %v8413
    %v8466 = vpack.c.b16 %v8422, %v8418
    %v8467 = vpack.c.b16 %v8423, %v8419
    %v8468 = vpack.c.b16 %v8424, %v8420
    %v8469 = vpack.c.b16 %v8425, %v8421
    %v8470 = vpack.c.b16 %v8430, %v8426
    %v8471 = vpack.c.b16 %v8431, %v8427
    %v8472 = vpack.c.b16 %v8432, %v8428
    %v8473 = vpack.c.b16 %v8433, %v8429
    %v8474 = vpack.c.b16 %v8438, %v8434
    %v8475 = vpack.c.b16 %v8439, %v8435
    %v8476 = vpack.c.b16 %v8440, %v8436
    %v8477 = vpack.c.b16 %v8441, %v8437
    %v8478 = vpack.c.b16 %v8446, %v8442
    %v8479 = vpack.c.b16 %v8447, %v8443
    %v8480 = vpack.c.b16 %v8448, %v8444
    %v8481 = vpack.c.b16 %v8449, %v8445
    %8514 = vmatpush.bf16.msra.mxu0 %v8478
    %8515 = vmatpush.bf16.msra.mxu0 %v8474
    %8516 = vmatpush.bf16.msra.mxu0 %v8470
    %8517 = vmatpush.bf16.msra.mxu0 %v8466
    %8518 = vmatpush.bf16.msra.mxu0 %v8462
    %8519 = vmatpush.bf16.msra.mxu0 %v8458
    %8520 = vmatpush.bf16.msra.mxu0 %v8454
    %8521 = vmatpush.bf16.msra.mxu0 %v8450
    %8522 = vmatmul.bf16.gmra.mxu0 0
    %v8523 = vpop.f32.mrf.mxu0
    %v8524 = vadd.f32 0.0, %v8523
    %v8525 = vpop.f32.mrf.mxu0
    %8526 = vdwg.mxu0
    %8527 = vmatpush.bf16.msra.mxu0 %v8479
    %8528 = vmatpush.bf16.msra.mxu0 %v8475
    %8529 = vmatpush.bf16.msra.mxu0 %v8471
    %8530 = vmatpush.bf16.msra.mxu0 %v8467
    %8531 = vmatpush.bf16.msra.mxu0 %v8463
    %8532 = vmatpush.bf16.msra.mxu0 %v8459
    %8533 = vmatpush.bf16.msra.mxu0 %v8455
    %8534 = vmatpush.bf16.msra.mxu0 %v8451
    %8535 = vmatmul.bf16.gmra.mxu0 0
    %v8536 = vpop.f32.mrf.mxu0
    %v8537 = vadd.f32 0.0, %v8536
    %v8538 = vpop.f32.mrf.mxu0
    %8539 = vdwg.mxu0
    %8540 = vmatpush.bf16.msra.mxu0 %v8480
    %8541 = vmatpush.bf16.msra.mxu0 %v8476
    %8542 = vmatpush.bf16.msra.mxu0 %v8472
    %8543 = vmatpush.bf16.msra.mxu0 %v8468
    %8544 = vmatpush.bf16.msra.mxu0 %v8464
    %8545 = vmatpush.bf16.msra.mxu0 %v8460
    %8546 = vmatpush.bf16.msra.mxu0 %v8456
    %8547 = vmatpush.bf16.msra.mxu0 %v8452
    %8548 = vmatmul.bf16.gmra.mxu0 0
    %v8549 = vpop.f32.mrf.mxu0
    %v8550 = vadd.f32 0.0, %v8549
    %v8551 = vpop.f32.mrf.mxu0
    %8552 = vdwg.mxu0
    %8553 = vmatpush.bf16.msra.mxu0 %v8481
    %8554 = vmatpush.bf16.msra.mxu0 %v8477
    %8555 = vmatpush.bf16.msra.mxu0 %v8473
    %8556 = vmatpush.bf16.msra.mxu0 %v8469
    %8557 = vmatpush.bf16.msra.mxu0 %v8465
    %8558 = vmatpush.bf16.msra.mxu0 %v8461
    %8559 = vmatpush.bf16.msra.mxu0 %v8457
    %8560 = vmatpush.bf16.msra.mxu0 %v8453
    %8561 = vmatmul.bf16.gmra.mxu0 0
    %v8562 = vpop.f32.mrf.mxu0
    %v8563 = vadd.f32 0.0, %v8562
    %v8564 = vpop.f32.mrf.mxu0
    %8565 = vdwg.mxu0
    %v8566 = vadd.f32 %v8350, %v8524
    %v8567 = vadd.f32 %v8351, %v8537
    %v8568 = vadd.f32 %v8352, %v8550
    %v8569 = vadd.f32 %v8353, %v8563
    %v8570 = vxor.u32 %v8566, 2147483648
    %v8571 = vmul.f32 %v8570, 1.442695
    %v8572 = vpow.pop %v8571
    %v8573 = vadd.f32 %v8572, 1.0
    %v8574 = vrcp.pop %v8573
    %v8575 = vmul.f32 %v8573, %v8574
    %v8576 = vsub.f32 1.0, %v8575
    %v8577 = vmul.f32 %v8574, %v8576
    %v8578 = vadd.f32 %v8574, %v8577
    %vm8579 = vweird.f32 %v8573
    %vm8580 = vweird.f32 %v8574
    %vm8581 = vmor %vm8579, %vm8580
    %v8582 = vsel %vm8581, %v8574, %v8578
    %v8583 = vand.u32 2147483647, %v8573
    %vm8584 = vcmp.eq.f32.partialorder %v8583, 8.507059e+37
    %v8585 = vand.u32 %v8573, 2147483648
    %v8586 = vor.u32 1.1754944e-38, %v8585
    %v8587 = vsel %vm8584, %v8586, %v8582
    %v8588 = vmul.f32 1.0, %v8587
    %v8589 = vxor.u32 %v8567, 2147483648
    %v8590 = vmul.f32 %v8589, 1.442695
    %v8591 = vpow.pop %v8590
    %v8592 = vadd.f32 %v8591, 1.0
    %v8593 = vrcp.pop %v8592
    %v8594 = vmul.f32 %v8592, %v8593
    %v8595 = vsub.f32 1.0, %v8594
    %v8596 = vmul.f32 %v8593, %v8595
    %v8597 = vadd.f32 %v8593, %v8596
    %vm8598 = vweird.f32 %v8592
    %vm8599 = vweird.f32 %v8593
    %vm8600 = vmor %vm8598, %vm8599
    %v8601 = vsel %vm8600, %v8593, %v8597
    %v8602 = vand.u32 2147483647, %v8592
    %vm8603 = vcmp.eq.f32.partialorder %v8602, 8.507059e+37
    %v8604 = vand.u32 %v8592, 2147483648
    %v8605 = vor.u32 1.1754944e-38, %v8604
    %v8606 = vsel %vm8603, %v8605, %v8601
    %v8607 = vmul.f32 1.0, %v8606
    %v8608 = vtanh.pop %v8568
    %v8609 = vxor.u32 %v8569, 2147483648
    %v8610 = vmul.f32 %v8609, 1.442695
    %v8611 = vpow.pop %v8610
    %v8612 = vadd.f32 %v8611, 1.0
    %v8613 = vrcp.pop %v8612
    %v8614 = vmul.f32 %v8612, %v8613
    %v8615 = vsub.f32 1.0, %v8614
    %v8616 = vmul.f32 %v8613, %v8615
    %v8617 = vadd.f32 %v8613, %v8616
    %vm8618 = vweird.f32 %v8612
    %vm8619 = vweird.f32 %v8613
    %vm8620 = vmor %vm8618, %vm8619
    %v8621 = vsel %vm8620, %v8613, %v8617
    %v8622 = vand.u32 2147483647, %v8612
    %vm8623 = vcmp.eq.f32.partialorder %v8622, 8.507059e+37
    %v8624 = vand.u32 %v8612, 2147483648
    %v8625 = vor.u32 1.1754944e-38, %v8624
    %v8626 = vsel %vm8623, %v8625, %v8621
    %v8627 = vmul.f32 1.0, %v8626
    %v8628 = vmul.f32 %v8607, 0.0
    %v8629 = vmul.f32 %v8588, %v8608
    %v8630 = vadd.f32 %v8628, %v8629
    %v8631 = vtanh.pop %v8630
    %v8632 = vmul.f32 %v8627, %v8631
    %8633 = vst [vmem:[#allocation3] sm:$0xff] %v8632
    %v8634 = vld [vmem:[#allocation2 + $0x20] sm:$0xff]
    %v8635 = vld [vmem:[#allocation2 + $0x28] sm:$0xff]
    %v8636 = vld [vmem:[#allocation2 + $0x30] sm:$0xff]
    %v8637 = vld [vmem:[#allocation2 + $0x38] sm:$0xff]
    %v8638 = vpack.c.bf16 %v8632, %v8632
    %8639 = vmatpush.bf16.msra.mxu0 %v8478
    %8640 = vmatpush.bf16.msra.mxu0 %v8474
    %8641 = vmatpush.bf16.msra.mxu0 %v8470
    %8642 = vmatpush.bf16.msra.mxu0 %v8466
    %8643 = vmatpush.bf16.msra.mxu0 %v8462
    %8644 = vmatpush.bf16.msra.mxu0 %v8458
    %8645 = vmatpush.bf16.msra.mxu0 %v8454
    %8646 = vmatpush.bf16.msra.mxu0 %v8450
    %8647 = vmatmul.bf16.gmra.mxu0 %v8638
    %v8648 = vpop.f32.mrf.mxu0
    %v8649 = vadd.f32 0.0, %v8648
    %v8650 = vpop.f32.mrf.mxu0
    %8651 = vdwg.mxu0
    %8652 = vmatpush.bf16.msra.mxu0 %v8479
    %8653 = vmatpush.bf16.msra.mxu0 %v8475
    %8654 = vmatpush.bf16.msra.mxu0 %v8471
    %8655 = vmatpush.bf16.msra.mxu0 %v8467
    %8656 = vmatpush.bf16.msra.mxu0 %v8463
    %8657 = vmatpush.bf16.msra.mxu0 %v8459
    %8658 = vmatpush.bf16.msra.mxu0 %v8455
    %8659 = vmatpush.bf16.msra.mxu0 %v8451
    %8660 = vmatmul.bf16.gmra.mxu0 %v8638
    %v8661 = vpop.f32.mrf.mxu0
    %v8662 = vadd.f32 0.0, %v8661
    %v8663 = vpop.f32.mrf.mxu0
    %8664 = vdwg.mxu0
    %8665 = vmatpush.bf16.msra.mxu0 %v8480
    %8666 = vmatpush.bf16.msra.mxu0 %v8476
    %8667 = vmatpush.bf16.msra.mxu0 %v8472
    %8668 = vmatpush.bf16.msra.mxu0 %v8468
    %8669 = vmatpush.bf16.msra.mxu0 %v8464
    %8670 = vmatpush.bf16.msra.mxu0 %v8460
    %8671 = vmatpush.bf16.msra.mxu0 %v8456
    %8672 = vmatpush.bf16.msra.mxu0 %v8452
    %8673 = vmatmul.bf16.gmra.mxu0 %v8638
    %v8674 = vpop.f32.mrf.mxu0
    %v8675 = vadd.f32 0.0, %v8674
    %v8676 = vpop.f32.mrf.mxu0
    %8677 = vdwg.mxu0
    %8678 = vmatpush.bf16.msra.mxu0 %v8481
    %8679 = vmatpush.bf16.msra.mxu0 %v8477
    %8680 = vmatpush.bf16.msra.mxu0 %v8473
    %8681 = vmatpush.bf16.msra.mxu0 %v8469
    %8682 = vmatpush.bf16.msra.mxu0 %v8465
    %8683 = vmatpush.bf16.msra.mxu0 %v8461
    %8684 = vmatpush.bf16.msra.mxu0 %v8457
    %8685 = vmatpush.bf16.msra.mxu0 %v8453
    %8686 = vmatmul.bf16.gmra.mxu0 %v8638
    %v8687 = vpop.f32.mrf.mxu0
    %v8688 = vadd.f32 0.0, %v8687
    %v8689 = vpop.f32.mrf.mxu0
    %8690 = vdwg.mxu0
    %v8691 = vadd.f32 %v8634, %v8649
    %v8692 = vadd.f32 %v8635, %v8662
    %v8693 = vadd.f32 %v8636, %v8675
    %v8694 = vadd.f32 %v8637, %v8688
    %v8695 = vxor.u32 %v8691, 2147483648
    %v8696 = vmul.f32 %v8695, 1.442695
    %v8697 = vpow.pop %v8696
    %v8698 = vadd.f32 %v8697, 1.0
    %v8699 = vrcp.pop %v8698
    %v8700 = vmul.f32 %v8698, %v8699
    %v8701 = vsub.f32 1.0, %v8700
    %v8702 = vmul.f32 %v8699, %v8701
    %v8703 = vadd.f32 %v8699, %v8702
    %vm8704 = vweird.f32 %v8698
    %vm8705 = vweird.f32 %v8699
    %vm8706 = vmor %vm8704, %vm8705
    %v8707 = vsel %vm8706, %v8699, %v8703
    %v8708 = vand.u32 2147483647, %v8698
    %vm8709 = vcmp.eq.f32.partialorder %v8708, 8.507059e+37
    %v8710 = vand.u32 %v8698, 2147483648
    %v8711 = vor.u32 1.1754944e-38, %v8710
    %v8712 = vsel %vm8709, %v8711, %v8707
    %v8713 = vmul.f32 1.0, %v8712
    %v8714 = vxor.u32 %v8692, 2147483648
    %v8715 = vmul.f32 %v8714, 1.442695
    %v8716 = vpow.pop %v8715
    %v8717 = vadd.f32 %v8716, 1.0
    %v8718 = vrcp.pop %v8717
    %v8719 = vmul.f32 %v8717, %v8718
    %v8720 = vsub.f32 1.0, %v8719
    %v8721 = vmul.f32 %v8718, %v8720
    %v8722 = vadd.f32 %v8718, %v8721
    %vm8723 = vweird.f32 %v8717
    %vm8724 = vweird.f32 %v8718
    %vm8725 = vmor %vm8723, %vm8724
    %v8726 = vsel %vm8725, %v8718, %v8722
    %v8727 = vand.u32 2147483647, %v8717
    %vm8728 = vcmp.eq.f32.partialorder %v8727, 8.507059e+37
    %v8729 = vand.u32 %v8717, 2147483648
    %v8730 = vor.u32 1.1754944e-38, %v8729
    %v8731 = vsel %vm8728, %v8730, %v8726
    %v8732 = vmul.f32 1.0, %v8731
    %v8733 = vtanh.pop %v8693
    %v8734 = vxor.u32 %v8694, 2147483648
    %v8735 = vmul.f32 %v8734, 1.442695
    %v8736 = vpow.pop %v8735
    %v8737 = vadd.f32 %v8736, 1.0
    %v8738 = vrcp.pop %v8737
    %v8739 = vmul.f32 %v8737, %v8738
    %v8740 = vsub.f32 1.0, %v8739
    %v8741 = vmul.f32 %v8738, %v8740
    %v8742 = vadd.f32 %v8738, %v8741
    %vm8743 = vweird.f32 %v8737
    %vm8744 = vweird.f32 %v8738
    %vm8745 = vmor %vm8743, %vm8744
    %v8746 = vsel %vm8745, %v8738, %v8742
    %v8747 = vand.u32 2147483647, %v8737
    %vm8748 = vcmp.eq.f32.partialorder %v8747, 8.507059e+37
    %v8749 = vand.u32 %v8737, 2147483648
    %v8750 = vor.u32 1.1754944e-38, %v8749
    %v8751 = vsel %vm8748, %v8750, %v8746
    %v8752 = vmul.f32 1.0, %v8751
    %v8753 = vmul.f32 %v8732, %v8630
    %v8754 = vmul.f32 %v8713, %v8733
    %v8755 = vadd.f32 %v8753, %v8754
    %v8756 = vtanh.pop %v8755
    %v8757 = vmul.f32 %v8752, %v8756
    %8758 = vst [vmem:[#allocation3 + $0x8] sm:$0xff] %v8757
    %v8759 = vld [vmem:[#allocation2 + $0x40] sm:$0xff]
    %v8760 = vld [vmem:[#allocation2 + $0x48] sm:$0xff]
    %v8761 = vld [vmem:[#allocation2 + $0x50] sm:$0xff]
    %v8762 = vld [vmem:[#allocation2 + $0x58] sm:$0xff]
    %v8763 = vpack.c.bf16 %v8757, %v8757
    %8764 = vmatpush.bf16.msra.mxu0 %v8478
    %8765 = vmatpush.bf16.msra.mxu0 %v8474
    %8766 = vmatpush.bf16.msra.mxu0 %v8470
    %8767 = vmatpush.bf16.msra.mxu0 %v8466
    %8768 = vmatpush.bf16.msra.mxu0 %v8462
    %8769 = vmatpush.bf16.msra.mxu0 %v8458
    %8770 = vmatpush.bf16.msra.mxu0 %v8454
    %8771 = vmatpush.bf16.msra.mxu0 %v8450
    %8772 = vmatmul.bf16.gmra.mxu0 %v8763
    %v8773 = vpop.f32.mrf.mxu0
    %v8774 = vadd.f32 0.0, %v8773
    %v8775 = vpop.f32.mrf.mxu0
    %8776 = vdwg.mxu0
    %8777 = vmatpush.bf16.msra.mxu0 %v8479
    %8778 = vmatpush.bf16.msra.mxu0 %v8475
    %8779 = vmatpush.bf16.msra.mxu0 %v8471
    %8780 = vmatpush.bf16.msra.mxu0 %v8467
    %8781 = vmatpush.bf16.msra.mxu0 %v8463
    %8782 = vmatpush.bf16.msra.mxu0 %v8459
    %8783 = vmatpush.bf16.msra.mxu0 %v8455
    %8784 = vmatpush.bf16.msra.mxu0 %v8451
    %8785 = vmatmul.bf16.gmra.mxu0 %v8763
    %v8786 = vpop.f32.mrf.mxu0
    %v8787 = vadd.f32 0.0, %v8786
    %v8788 = vpop.f32.mrf.mxu0
    %8789 = vdwg.mxu0
    %8790 = vmatpush.bf16.msra.mxu0 %v8480
    %8791 = vmatpush.bf16.msra.mxu0 %v8476
    %8792 = vmatpush.bf16.msra.mxu0 %v8472
    %8793 = vmatpush.bf16.msra.mxu0 %v8468
    %8794 = vmatpush.bf16.msra.mxu0 %v8464
    %8795 = vmatpush.bf16.msra.mxu0 %v8460
    %8796 = vmatpush.bf16.msra.mxu0 %v8456
    %8797 = vmatpush.bf16.msra.mxu0 %v8452
    %8798 = vmatmul.bf16.gmra.mxu0 %v8763
    %v8799 = vpop.f32.mrf.mxu0
    %v8800 = vadd.f32 0.0, %v8799
    %v8801 = vpop.f32.mrf.mxu0
    %8802 = vdwg.mxu0
    %8803 = vmatpush.bf16.msra.mxu0 %v8481
    %8804 = vmatpush.bf16.msra.mxu0 %v8477
    %8805 = vmatpush.bf16.msra.mxu0 %v8473
    %8806 = vmatpush.bf16.msra.mxu0 %v8469
    %8807 = vmatpush.bf16.msra.mxu0 %v8465
    %8808 = vmatpush.bf16.msra.mxu0 %v8461
    %8809 = vmatpush.bf16.msra.mxu0 %v8457
    %8810 = vmatpush.bf16.msra.mxu0 %v8453
    %8811 = vmatmul.bf16.gmra.mxu0 %v8763
    %v8812 = vpop.f32.mrf.mxu0
    %v8813 = vadd.f32 0.0, %v8812
    %v8814 = vpop.f32.mrf.mxu0
    %8815 = vdwg.mxu0
    %v8816 = vadd.f32 %v8759, %v8774
    %v8817 = vadd.f32 %v8760, %v8787
    %v8818 = vadd.f32 %v8761, %v8800
    %v8819 = vadd.f32 %v8762, %v8813
    %v8820 = vxor.u32 %v8816, 2147483648
    %v8821 = vmul.f32 %v8820, 1.442695
    %v8822 = vpow.pop %v8821
    %v8823 = vadd.f32 %v8822, 1.0
    %v8824 = vrcp.pop %v8823
    %v8825 = vmul.f32 %v8823, %v8824
    %v8826 = vsub.f32 1.0, %v8825
    %v8827 = vmul.f32 %v8824, %v8826
    %v8828 = vadd.f32 %v8824, %v8827
    %vm8829 = vweird.f32 %v8823
    %vm8830 = vweird.f32 %v8824
    %vm8831 = vmor %vm8829, %vm8830
    %v8832 = vsel %vm8831, %v8824, %v8828
    %v8833 = vand.u32 2147483647, %v8823
    %vm8834 = vcmp.eq.f32.partialorder %v8833, 8.507059e+37
    %v8835 = vand.u32 %v8823, 2147483648
    %v8836 = vor.u32 1.1754944e-38, %v8835
    %v8837 = vsel %vm8834, %v8836, %v8832
    %v8838 = vmul.f32 1.0, %v8837
    %v8839 = vxor.u32 %v8817, 2147483648
    %v8840 = vmul.f32 %v8839, 1.442695
    %v8841 = vpow.pop %v8840
    %v8842 = vadd.f32 %v8841, 1.0
    %v8843 = vrcp.pop %v8842
    %v8844 = vmul.f32 %v8842, %v8843
    %v8845 = vsub.f32 1.0, %v8844
    %v8846 = vmul.f32 %v8843, %v8845
    %v8847 = vadd.f32 %v8843, %v8846
    %vm8848 = vweird.f32 %v8842
    %vm8849 = vweird.f32 %v8843
    %vm8850 = vmor %vm8848, %vm8849
    %v8851 = vsel %vm8850, %v8843, %v8847
    %v8852 = vand.u32 2147483647, %v8842
    %vm8853 = vcmp.eq.f32.partialorder %v8852, 8.507059e+37
    %v8854 = vand.u32 %v8842, 2147483648
    %v8855 = vor.u32 1.1754944e-38, %v8854
    %v8856 = vsel %vm8853, %v8855, %v8851
    %v8857 = vmul.f32 1.0, %v8856
    %v8858 = vtanh.pop %v8818
    %v8859 = vxor.u32 %v8819, 2147483648
    %v8860 = vmul.f32 %v8859, 1.442695
    %v8861 = vpow.pop %v8860
    %v8862 = vadd.f32 %v8861, 1.0
    %v8863 = vrcp.pop %v8862
    %v8864 = vmul.f32 %v8862, %v8863
    %v8865 = vsub.f32 1.0, %v8864
    %v8866 = vmul.f32 %v8863, %v8865
    %v8867 = vadd.f32 %v8863, %v8866
    %vm8868 = vweird.f32 %v8862
    %vm8869 = vweird.f32 %v8863
    %vm8870 = vmor %vm8868, %vm8869
    %v8871 = vsel %vm8870, %v8863, %v8867
    %v8872 = vand.u32 2147483647, %v8862
    %vm8873 = vcmp.eq.f32.partialorder %v8872, 8.507059e+37
    %v8874 = vand.u32 %v8862, 2147483648
    %v8875 = vor.u32 1.1754944e-38, %v8874
    %v8876 = vsel %vm8873, %v8875, %v8871
    %v8877 = vmul.f32 1.0, %v8876
    %v8878 = vmul.f32 %v8857, %v8755
    %v8879 = vmul.f32 %v8838, %v8858
    %v8880 = vadd.f32 %v8878, %v8879
    %v8881 = vtanh.pop %v8880
    %v8882 = vmul.f32 %v8877, %v8881
    %8883 = vst [vmem:[#allocation3 + $0x10] sm:$0xff] %v8882
    %v8884 = vld [vmem:[#allocation2 + $0x60] sm:$0xff]
    %v8885 = vld [vmem:[#allocation2 + $0x68] sm:$0xff]
    %v8886 = vld [vmem:[#allocation2 + $0x70] sm:$0xff]
    %v8887 = vld [vmem:[#allocation2 + $0x78] sm:$0xff]
    %v8888 = vpack.c.bf16 %v8882, %v8882
    %8889 = vmatpush.bf16.msra.mxu0 %v8478
    %8890 = vmatpush.bf16.msra.mxu0 %v8474
    %8891 = vmatpush.bf16.msra.mxu0 %v8470
    %8892 = vmatpush.bf16.msra.mxu0 %v8466
    %8893 = vmatpush.bf16.msra.mxu0 %v8462
    %8894 = vmatpush.bf16.msra.mxu0 %v8458
    %8895 = vmatpush.bf16.msra.mxu0 %v8454
    %8896 = vmatpush.bf16.msra.mxu0 %v8450
    %8897 = vmatmul.bf16.gmra.mxu0 %v8888
    %v8898 = vpop.f32.mrf.mxu0
    %v8899 = vadd.f32 0.0, %v8898
    %v8900 = vpop.f32.mrf.mxu0
    %8901 = vdwg.mxu0
    %8902 = vmatpush.bf16.msra.mxu0 %v8479
    %8903 = vmatpush.bf16.msra.mxu0 %v8475
    %8904 = vmatpush.bf16.msra.mxu0 %v8471
    %8905 = vmatpush.bf16.msra.mxu0 %v8467
    %8906 = vmatpush.bf16.msra.mxu0 %v8463
    %8907 = vmatpush.bf16.msra.mxu0 %v8459
    %8908 = vmatpush.bf16.msra.mxu0 %v8455
    %8909 = vmatpush.bf16.msra.mxu0 %v8451
    %8910 = vmatmul.bf16.gmra.mxu0 %v8888
    %v8911 = vpop.f32.mrf.mxu0
    %v8912 = vadd.f32 0.0, %v8911
    %v8913 = vpop.f32.mrf.mxu0
    %8914 = vdwg.mxu0
    %8915 = vmatpush.bf16.msra.mxu0 %v8480
    %8916 = vmatpush.bf16.msra.mxu0 %v8476
    %8917 = vmatpush.bf16.msra.mxu0 %v8472
    %8918 = vmatpush.bf16.msra.mxu0 %v8468
    %8919 = vmatpush.bf16.msra.mxu0 %v8464
    %8920 = vmatpush.bf16.msra.mxu0 %v8460
    %8921 = vmatpush.bf16.msra.mxu0 %v8456
    %8922 = vmatpush.bf16.msra.mxu0 %v8452
    %8923 = vmatmul.bf16.gmra.mxu0 %v8888
    %v8924 = vpop.f32.mrf.mxu0
    %v8925 = vadd.f32 0.0, %v8924
    %v8926 = vpop.f32.mrf.mxu0
    %8927 = vdwg.mxu0
    %8928 = vmatpush.bf16.msra.mxu0 %v8481
    %8929 = vmatpush.bf16.msra.mxu0 %v8477
    %8930 = vmatpush.bf16.msra.mxu0 %v8473
    %8931 = vmatpush.bf16.msra.mxu0 %v8469
    %8932 = vmatpush.bf16.msra.mxu0 %v8465
    %8933 = vmatpush.bf16.msra.mxu0 %v8461
    %8934 = vmatpush.bf16.msra.mxu0 %v8457
    %8935 = vmatpush.bf16.msra.mxu0 %v8453
    %8936 = vmatmul.bf16.gmra.mxu0 %v8888
    %v8937 = vpop.f32.mrf.mxu0
    %v8938 = vadd.f32 0.0, %v8937
    %v8939 = vpop.f32.mrf.mxu0
    %8940 = vdwg.mxu0
    %v8941 = vadd.f32 %v8884, %v8899
    %v8942 = vadd.f32 %v8885, %v8912
    %v8943 = vadd.f32 %v8886, %v8925
    %v8944 = vadd.f32 %v8887, %v8938
    %v8945 = vxor.u32 %v8941, 2147483648
    %v8946 = vmul.f32 %v8945, 1.442695
    %v8947 = vpow.pop %v8946
    %v8948 = vadd.f32 %v8947, 1.0
    %v8949 = vrcp.pop %v8948
    %v8950 = vmul.f32 %v8948, %v8949
    %v8951 = vsub.f32 1.0, %v8950
    %v8952 = vmul.f32 %v8949, %v8951
    %v8953 = vadd.f32 %v8949, %v8952
    %vm8954 = vweird.f32 %v8948
    %vm8955 = vweird.f32 %v8949
    %vm8956 = vmor %vm8954, %vm8955
    %v8957 = vsel %vm8956, %v8949, %v8953
    %v8958 = vand.u32 2147483647, %v8948
    %vm8959 = vcmp.eq.f32.partialorder %v8958, 8.507059e+37
    %v8960 = vand.u32 %v8948, 2147483648
    %v8961 = vor.u32 1.1754944e-38, %v8960
    %v8962 = vsel %vm8959, %v8961, %v8957
    %v8963 = vmul.f32 1.0, %v8962
    %v8964 = vxor.u32 %v8942, 2147483648
    %v8965 = vmul.f32 %v8964, 1.442695
    %v8966 = vpow.pop %v8965
    %v8967 = vadd.f32 %v8966, 1.0
    %v8968 = vrcp.pop %v8967
    %v8969 = vmul.f32 %v8967, %v8968
    %v8970 = vsub.f32 1.0, %v8969
    %v8971 = vmul.f32 %v8968, %v8970
    %v8972 = vadd.f32 %v8968, %v8971
    %vm8973 = vweird.f32 %v8967
    %vm8974 = vweird.f32 %v8968
    %vm8975 = vmor %vm8973, %vm8974
    %v8976 = vsel %vm8975, %v8968, %v8972
    %v8977 = vand.u32 2147483647, %v8967
    %vm8978 = vcmp.eq.f32.partialorder %v8977, 8.507059e+37
    %v8979 = vand.u32 %v8967, 2147483648
    %v8980 = vor.u32 1.1754944e-38, %v8979
    %v8981 = vsel %vm8978, %v8980, %v8976
    %v8982 = vmul.f32 1.0, %v8981
    %v8983 = vtanh.pop %v8943
    %v8984 = vxor.u32 %v8944, 2147483648
    %v8985 = vmul.f32 %v8984, 1.442695
    %v8986 = vpow.pop %v8985
    %v8987 = vadd.f32 %v8986, 1.0
    %v8988 = vrcp.pop %v8987
    %v8989 = vmul.f32 %v8987, %v8988
    %v8990 = vsub.f32 1.0, %v8989
    %v8991 = vmul.f32 %v8988, %v8990
    %v8992 = vadd.f32 %v8988, %v8991
    %vm8993 = vweird.f32 %v8987
    %vm8994 = vweird.f32 %v8988
    %vm8995 = vmor %vm8993, %vm8994
    %v8996 = vsel %vm8995, %v8988, %v8992
    %v8997 = vand.u32 2147483647, %v8987
    %vm8998 = vcmp.eq.f32.partialorder %v8997, 8.507059e+37
    %v8999 = vand.u32 %v8987, 2147483648
    %v9000 = vor.u32 1.1754944e-38, %v8999
    %v9001 = vsel %vm8998, %v9000, %v8996
    %v9002 = vmul.f32 1.0, %v9001
    %v9003 = vmul.f32 %v8982, %v8880
    %v9004 = vmul.f32 %v8963, %v8983
    %v9005 = vadd.f32 %v9003, %v9004
    %v9006 = vtanh.pop %v9005
    %v9007 = vmul.f32 %v9002, %v9006
    %9008 = vst [vmem:[#allocation3 + $0x18] sm:$0xff] %v9007
    %9009 = vst [vmem:[%s59] sm:$0xff] %v9007
    %s9010 = scalar_lea.vmem %s59, 8
    %9011 = vst [vmem:[%s9010] sm:$0xff] %v9005
    %v9012 = vld [vmem:[#allocation3] sm:$0xff]
    %v9013 = vld [vmem:[#allocation3 + $0x8] sm:$0xff]
    %v9014 = vld [vmem:[#allocation3 + $0x10] sm:$0xff]
    %v9015 = vld [vmem:[#allocation3 + $0x18] sm:$0xff]
    %v9016 = vpack.c.bf16 %v9013, %v9012
    %v9017 = vpack.c.bf16 %v9015, %v9014
    %v9018 = vld [vmem:[%s49] sm:$0xf]
    %v9019 = vld [vmem:[%s49 + $0x4] sm:$0xf]
    %v9020 = vld [vmem:[%s49 + $0x8] sm:$0xf]
    %v9021 = vld [vmem:[%s49 + $0xc] sm:$0xf]
    %v9022 = vld [vmem:[%s49 + $0x10] sm:$0xf]
    %v9023 = vld [vmem:[%s49 + $0x14] sm:$0xf]
    %v9024 = vld [vmem:[%s49 + $0x18] sm:$0xf]
    %v9025 = vld [vmem:[%s49 + $0x1c] sm:$0xf]
    %v9026 = vld [vmem:[%s49 + $0x20] sm:$0xf]
    %v9027 = vld [vmem:[%s49 + $0x24] sm:$0xf]
    %v9028 = vld [vmem:[%s49 + $0x28] sm:$0xf]
    %v9029 = vld [vmem:[%s49 + $0x2c] sm:$0xf]
    %v9030 = vld [vmem:[%s49 + $0x30] sm:$0xf]
    %v9031 = vld [vmem:[%s49 + $0x34] sm:$0xf]
    %v9032 = vld [vmem:[%s49 + $0x38] sm:$0xf]
    %v9033 = vld [vmem:[%s49 + $0x3c] sm:$0xf]
    %v9034 = vld [vmem:[#allocation15] sm:$0x1]
    %v9036 = vperm.slane %v9034, 0
    %v9054 = vunpack.c.l.b16 %v9018
    %v9055 = vunpack.c.l.b16 %v9019
    %v9056 = vunpack.c.l.b16 %v9020
    %v9057 = vunpack.c.l.b16 %v9021
    %v9058 = vunpack.c.l.b16 %v9022
    %v9059 = vunpack.c.l.b16 %v9023
    %v9060 = vunpack.c.l.b16 %v9024
    %v9061 = vunpack.c.l.b16 %v9025
    %v9062 = vunpack.c.l.b16 %v9026
    %v9063 = vunpack.c.l.b16 %v9027
    %v9064 = vunpack.c.l.b16 %v9028
    %v9065 = vunpack.c.l.b16 %v9029
    %v9066 = vunpack.c.l.b16 %v9030
    %v9067 = vunpack.c.l.b16 %v9031
    %v9068 = vunpack.c.l.b16 %v9032
    %v9069 = vunpack.c.l.b16 %v9033
    %v9070 = vpack.c.b16 %v9055, %v9054
    %v9071 = vpack.c.b16 %v9057, %v9056
    %v9072 = vpack.c.b16 %v9059, %v9058
    %v9073 = vpack.c.b16 %v9061, %v9060
    %v9074 = vpack.c.b16 %v9063, %v9062
    %v9075 = vpack.c.b16 %v9065, %v9064
    %v9076 = vpack.c.b16 %v9067, %v9066
    %v9077 = vpack.c.b16 %v9069, %v9068
    %9086 = vmatpush.bf16.msra.mxu0 %v9077
    %9087 = vmatpush.bf16.msra.mxu0 %v9076
    %9088 = vmatpush.bf16.msra.mxu0 %v9075
    %9089 = vmatpush.bf16.msra.mxu0 %v9074
    %9090 = vmatpush.bf16.msra.mxu0 %v9073
    %9091 = vmatpush.bf16.msra.mxu0 %v9072
    %9092 = vmatpush.bf16.msra.mxu0 %v9071
    %9093 = vmatpush.bf16.msra.mxu0 %v9070
    %9094 = vmatmul.bf16.gmra.mxu0 %v9016
    %v9095 = vpop.f32.mrf.mxu0
    %v9096 = vadd.f32 %v9036, %v9095
    %v9097 = vpop.f32.mrf.mxu0
    %v9098 = vadd.f32 %v9036, %v9097
    %9099 = vmatmul.bf16.gmra.mxu0 %v9017
    %v9100 = vpop.f32.mrf.mxu0
    %v9101 = vadd.f32 %v9036, %v9100
    %v9102 = vpop.f32.mrf.mxu0
    %v9103 = vadd.f32 %v9036, %v9102
    %9104 = vdwg.mxu0
    %v9105 = vmax.f32 %v9096, 0.0
    %v9106 = vmax.f32 %v9098, 0.0
    %v9107 = vmax.f32 %v9101, 0.0
    %v9108 = vmax.f32 %v9103, 0.0
    %v9109 = vld [vmem:[#allocation14] sm:$0xf]
    %v9110 = vld [vmem:[#allocation14 + $0x4] sm:$0xf]
    %v9111 = vld [vmem:[#allocation14 + $0x8] sm:$0xf]
    %v9112 = vld [vmem:[#allocation14 + $0xc] sm:$0xf]
    %v9113 = vld [vmem:[#allocation14 + $0x10] sm:$0xf]
    %v9114 = vld [vmem:[#allocation14 + $0x14] sm:$0xf]
    %v9115 = vld [vmem:[#allocation14 + $0x18] sm:$0xf]
    %v9116 = vld [vmem:[#allocation14 + $0x1c] sm:$0xf]
    %v9117 = vld [vmem:[#allocation14 + $0x20] sm:$0xf]
    %v9118 = vld [vmem:[#allocation14 + $0x24] sm:$0xf]
    %v9119 = vld [vmem:[#allocation14 + $0x28] sm:$0xf]
    %v9120 = vld [vmem:[#allocation14 + $0x2c] sm:$0xf]
    %v9121 = vld [vmem:[#allocation14 + $0x30] sm:$0xf]
    %v9122 = vld [vmem:[#allocation14 + $0x34] sm:$0xf]
    %v9123 = vld [vmem:[#allocation14 + $0x38] sm:$0xf]
    %v9124 = vld [vmem:[#allocation14 + $0x3c] sm:$0xf]
    %v9125 = vld [vmem:[#allocation14 + $0x40] sm:$0xf]
    %v9126 = vld [vmem:[#allocation14 + $0x44] sm:$0xf]
    %v9127 = vld [vmem:[#allocation14 + $0x48] sm:$0xf]
    %v9128 = vld [vmem:[#allocation14 + $0x4c] sm:$0xf]
    %v9129 = vld [vmem:[#allocation14 + $0x50] sm:$0xf]
    %v9130 = vld [vmem:[#allocation14 + $0x54] sm:$0xf]
    %v9131 = vld [vmem:[#allocation14 + $0x58] sm:$0xf]
    %v9132 = vld [vmem:[#allocation14 + $0x5c] sm:$0xf]
    %v9133 = vld [vmem:[#allocation14 + $0x60] sm:$0xf]
    %v9134 = vld [vmem:[#allocation14 + $0x64] sm:$0xf]
    %v9135 = vld [vmem:[#allocation14 + $0x68] sm:$0xf]
    %v9136 = vld [vmem:[#allocation14 + $0x6c] sm:$0xf]
    %v9137 = vld [vmem:[#allocation14 + $0x70] sm:$0xf]
    %v9138 = vld [vmem:[#allocation14 + $0x74] sm:$0xf]
    %v9139 = vld [vmem:[#allocation14 + $0x78] sm:$0xf]
    %v9140 = vld [vmem:[#allocation14 + $0x7c] sm:$0xf]
    %v9141 = vld [vmem:[#allocation14 + $0x80] sm:$0xf]
    %v9142 = vld [vmem:[#allocation14 + $0x84] sm:$0xf]
    %v9143 = vld [vmem:[#allocation14 + $0x88] sm:$0xf]
    %v9144 = vld [vmem:[#allocation14 + $0x8c] sm:$0xf]
    %v9145 = vld [vmem:[#allocation14 + $0x90] sm:$0xf]
    %v9146 = vld [vmem:[#allocation14 + $0x94] sm:$0xf]
    %v9147 = vld [vmem:[#allocation14 + $0x98] sm:$0xf]
    %v9148 = vld [vmem:[#allocation14 + $0x9c] sm:$0xf]
    %v9149 = vld [vmem:[#allocation14 + $0xa0] sm:$0xf]
    %v9150 = vld [vmem:[#allocation14 + $0xa4] sm:$0xf]
    %v9151 = vld [vmem:[#allocation14 + $0xa8] sm:$0xf]
    %v9152 = vld [vmem:[#allocation14 + $0xac] sm:$0xf]
    %v9153 = vld [vmem:[#allocation14 + $0xb0] sm:$0xf]
    %v9154 = vld [vmem:[#allocation14 + $0xb4] sm:$0xf]
    %v9155 = vld [vmem:[#allocation14 + $0xb8] sm:$0xf]
    %v9156 = vld [vmem:[#allocation14 + $0xbc] sm:$0xf]
    %v9157 = vld [vmem:[#allocation14 + $0xc0] sm:$0xf]
    %v9158 = vld [vmem:[#allocation14 + $0xc4] sm:$0xf]
    %v9159 = vld [vmem:[#allocation14 + $0xc8] sm:$0xf]
    %v9160 = vld [vmem:[#allocation14 + $0xcc] sm:$0xf]
    %v9161 = vld [vmem:[#allocation14 + $0xd0] sm:$0xf]
    %v9162 = vld [vmem:[#allocation14 + $0xd4] sm:$0xf]
    %v9163 = vld [vmem:[#allocation14 + $0xd8] sm:$0xf]
    %v9164 = vld [vmem:[#allocation14 + $0xdc] sm:$0xf]
    %v9165 = vld [vmem:[#allocation14 + $0xe0] sm:$0xf]
    %v9166 = vld [vmem:[#allocation14 + $0xe4] sm:$0xf]
    %v9167 = vld [vmem:[#allocation14 + $0xe8] sm:$0xf]
    %v9168 = vld [vmem:[#allocation14 + $0xec] sm:$0xf]
    %v9169 = vld [vmem:[#allocation14 + $0xf0] sm:$0xf]
    %v9170 = vld [vmem:[#allocation14 + $0xf4] sm:$0xf]
    %v9171 = vld [vmem:[#allocation14 + $0xf8] sm:$0xf]
    %v9172 = vld [vmem:[#allocation14 + $0xfc] sm:$0xf]
    %v9173 = vld [vmem:[#allocation14 + $0x100] sm:$0xf]
    %v9174 = vld [vmem:[#allocation14 + $0x104] sm:$0xf]
    %v9175 = vld [vmem:[#allocation14 + $0x108] sm:$0xf]
    %v9176 = vld [vmem:[#allocation14 + $0x10c] sm:$0xf]
    %v9177 = vld [vmem:[#allocation14 + $0x110] sm:$0xf]
    %v9178 = vld [vmem:[#allocation14 + $0x114] sm:$0xf]
    %v9179 = vld [vmem:[#allocation14 + $0x118] sm:$0xf]
    %v9180 = vld [vmem:[#allocation14 + $0x11c] sm:$0xf]
    %v9181 = vld [vmem:[#allocation14 + $0x120] sm:$0xf]
    %v9182 = vld [vmem:[#allocation14 + $0x124] sm:$0xf]
    %v9183 = vld [vmem:[#allocation14 + $0x128] sm:$0xf]
    %v9184 = vld [vmem:[#allocation14 + $0x12c] sm:$0xf]
    %v9185 = vld [vmem:[#allocation14 + $0x130] sm:$0xf]
    %v9186 = vld [vmem:[#allocation14 + $0x134] sm:$0xf]
    %v9187 = vld [vmem:[#allocation14 + $0x138] sm:$0xf]
    %v9188 = vld [vmem:[#allocation14 + $0x13c] sm:$0xf]
    %v9189 = vld [vmem:[#allocation14 + $0x140] sm:$0xf]
    %v9190 = vld [vmem:[#allocation14 + $0x144] sm:$0xf]
    %v9191 = vld [vmem:[#allocation14 + $0x148] sm:$0xf]
    %v9192 = vld [vmem:[#allocation14 + $0x14c] sm:$0xf]
    %v9193 = vld [vmem:[#allocation14 + $0x150] sm:$0xf]
    %v9194 = vld [vmem:[#allocation14 + $0x154] sm:$0xf]
    %v9195 = vld [vmem:[#allocation14 + $0x158] sm:$0xf]
    %v9196 = vld [vmem:[#allocation14 + $0x15c] sm:$0xf]
    %v9197 = vld [vmem:[#allocation14 + $0x160] sm:$0xf]
    %v9198 = vld [vmem:[#allocation14 + $0x164] sm:$0xf]
    %v9199 = vld [vmem:[#allocation14 + $0x168] sm:$0xf]
    %v9200 = vld [vmem:[#allocation14 + $0x16c] sm:$0xf]
    %v9201 = vld [vmem:[#allocation14 + $0x170] sm:$0xf]
    %v9202 = vld [vmem:[#allocation14 + $0x174] sm:$0xf]
    %v9203 = vld [vmem:[#allocation14 + $0x178] sm:$0xf]
    %v9204 = vld [vmem:[#allocation14 + $0x17c] sm:$0xf]
    %v9205 = vld [vmem:[%s47] sm:$0xf]
    %v9206 = vld [vmem:[%s47 + $0x4] sm:$0xf]
    %v9207 = vld [vmem:[%s47 + $0x8] sm:$0xf]
    %v9208 = vld [vmem:[%s47 + $0xc] sm:$0xf]
    %v9209 = vld [vmem:[%s47 + $0x10] sm:$0xf]
    %v9210 = vld [vmem:[%s47 + $0x14] sm:$0xf]
    %v9211 = vld [vmem:[%s47 + $0x18] sm:$0xf]
    %v9212 = vld [vmem:[%s47 + $0x1c] sm:$0xf]
    %v9213 = vld [vmem:[%s47 + $0x20] sm:$0xf]
    %v9214 = vld [vmem:[%s47 + $0x24] sm:$0xf]
    %v9215 = vld [vmem:[%s47 + $0x28] sm:$0xf]
    %v9216 = vld [vmem:[%s47 + $0x2c] sm:$0xf]
    %v9217 = vld [vmem:[%s47 + $0x30] sm:$0xf]
    %v9218 = vld [vmem:[%s47 + $0x34] sm:$0xf]
    %v9219 = vld [vmem:[%s47 + $0x38] sm:$0xf]
    %v9220 = vld [vmem:[%s47 + $0x3c] sm:$0xf]
    %v9237 = vunpack.c.l.b16 %v9205
    %v9238 = vunpack.c.l.b16 %v9206
    %v9239 = vunpack.c.l.b16 %v9207
    %v9240 = vunpack.c.l.b16 %v9208
    %v9241 = vunpack.c.l.b16 %v9209
    %v9242 = vunpack.c.l.b16 %v9210
    %v9243 = vunpack.c.l.b16 %v9211
    %v9244 = vunpack.c.l.b16 %v9212
    %v9245 = vunpack.c.l.b16 %v9213
    %v9246 = vunpack.c.l.b16 %v9214
    %v9247 = vunpack.c.l.b16 %v9215
    %v9248 = vunpack.c.l.b16 %v9216
    %v9249 = vunpack.c.l.b16 %v9217
    %v9250 = vunpack.c.l.b16 %v9218
    %v9251 = vunpack.c.l.b16 %v9219
    %v9252 = vunpack.c.l.b16 %v9220
    %v9253 = vpack.c.b16 %v9238, %v9237
    %v9254 = vpack.c.b16 %v9240, %v9239
    %v9255 = vpack.c.b16 %v9242, %v9241
    %v9256 = vpack.c.b16 %v9244, %v9243
    %v9257 = vpack.c.b16 %v9246, %v9245
    %v9258 = vpack.c.b16 %v9248, %v9247
    %v9259 = vpack.c.b16 %v9250, %v9249
    %v9260 = vpack.c.b16 %v9252, %v9251
    %9269 = vmatpush.bf16.msra.mxu0 %v9260
    %9270 = vmatpush.bf16.msra.mxu0 %v9259
    %9271 = vmatpush.bf16.msra.mxu0 %v9258
    %9272 = vmatpush.bf16.msra.mxu0 %v9257
    %9273 = vmatpush.bf16.msra.mxu0 %v9256
    %9274 = vmatpush.bf16.msra.mxu0 %v9255
    %9275 = vmatpush.bf16.msra.mxu0 %v9254
    %9276 = vmatpush.bf16.msra.mxu0 %v9253
    %9277 = vmatmul.bf16.gmra.mxu0 %v9016
    %v9278 = vpop.f32.mrf.mxu0
    %v9279 = vadd.f32 0.0, %v9278
    %v9280 = vpop.f32.mrf.mxu0
    %v9281 = vadd.f32 0.0, %v9280
    %9282 = vmatmul.bf16.gmra.mxu0 %v9017
    %v9283 = vpop.f32.mrf.mxu0
    %v9284 = vadd.f32 0.0, %v9283
    %v9285 = vpop.f32.mrf.mxu0
    %v9286 = vadd.f32 0.0, %v9285
    %9287 = vdwg.mxu0
    %v9384 = vunpack.c.l.b16 %v9109
    %v9385 = vunpack.c.l.b16 %v9110
    %v9386 = vunpack.c.l.b16 %v9111
    %v9387 = vunpack.c.l.b16 %v9112
    %v9388 = vunpack.c.l.b16 %v9113
    %v9389 = vunpack.c.l.b16 %v9114
    %v9390 = vunpack.c.l.b16 %v9115
    %v9391 = vunpack.c.l.b16 %v9116
    %v9392 = vunpack.c.l.b16 %v9117
    %v9393 = vunpack.c.l.b16 %v9118
    %v9394 = vunpack.c.l.b16 %v9119
    %v9395 = vunpack.c.l.b16 %v9120
    %v9396 = vunpack.c.l.b16 %v9121
    %v9397 = vunpack.c.l.b16 %v9122
    %v9398 = vunpack.c.l.b16 %v9123
    %v9399 = vunpack.c.l.b16 %v9124
    %v9400 = vunpack.c.l.b16 %v9125
    %v9401 = vunpack.c.l.b16 %v9126
    %v9402 = vunpack.c.l.b16 %v9127
    %v9403 = vunpack.c.l.b16 %v9128
    %v9404 = vunpack.c.l.b16 %v9129
    %v9405 = vunpack.c.l.b16 %v9130
    %v9406 = vunpack.c.l.b16 %v9131
    %v9407 = vunpack.c.l.b16 %v9132
    %v9408 = vunpack.c.l.b16 %v9133
    %v9409 = vunpack.c.l.b16 %v9134
    %v9410 = vunpack.c.l.b16 %v9135
    %v9411 = vunpack.c.l.b16 %v9136
    %v9412 = vunpack.c.l.b16 %v9137
    %v9413 = vunpack.c.l.b16 %v9138
    %v9414 = vunpack.c.l.b16 %v9139
    %v9415 = vunpack.c.l.b16 %v9140
    %v9416 = vunpack.c.l.b16 %v9141
    %v9417 = vunpack.c.l.b16 %v9142
    %v9418 = vunpack.c.l.b16 %v9143
    %v9419 = vunpack.c.l.b16 %v9144
    %v9420 = vunpack.c.l.b16 %v9145
    %v9421 = vunpack.c.l.b16 %v9146
    %v9422 = vunpack.c.l.b16 %v9147
    %v9423 = vunpack.c.l.b16 %v9148
    %v9424 = vunpack.c.l.b16 %v9149
    %v9425 = vunpack.c.l.b16 %v9150
    %v9426 = vunpack.c.l.b16 %v9151
    %v9427 = vunpack.c.l.b16 %v9152
    %v9428 = vunpack.c.l.b16 %v9153
    %v9429 = vunpack.c.l.b16 %v9154
    %v9430 = vunpack.c.l.b16 %v9155
    %v9431 = vunpack.c.l.b16 %v9156
    %v9432 = vunpack.c.l.b16 %v9157
    %v9433 = vunpack.c.l.b16 %v9158
    %v9434 = vunpack.c.l.b16 %v9159
    %v9435 = vunpack.c.l.b16 %v9160
    %v9436 = vunpack.c.l.b16 %v9161
    %v9437 = vunpack.c.l.b16 %v9162
    %v9438 = vunpack.c.l.b16 %v9163
    %v9439 = vunpack.c.l.b16 %v9164
    %v9440 = vunpack.c.l.b16 %v9165
    %v9441 = vunpack.c.l.b16 %v9166
    %v9442 = vunpack.c.l.b16 %v9167
    %v9443 = vunpack.c.l.b16 %v9168
    %v9444 = vunpack.c.l.b16 %v9169
    %v9445 = vunpack.c.l.b16 %v9170
    %v9446 = vunpack.c.l.b16 %v9171
    %v9447 = vunpack.c.l.b16 %v9172
    %v9448 = vunpack.c.l.b16 %v9173
    %v9449 = vunpack.c.l.b16 %v9174
    %v9450 = vunpack.c.l.b16 %v9175
    %v9451 = vunpack.c.l.b16 %v9176
    %v9452 = vunpack.c.l.b16 %v9177
    %v9453 = vunpack.c.l.b16 %v9178
    %v9454 = vunpack.c.l.b16 %v9179
    %v9455 = vunpack.c.l.b16 %v9180
    %v9456 = vunpack.c.l.b16 %v9181
    %v9457 = vunpack.c.l.b16 %v9182
    %v9458 = vunpack.c.l.b16 %v9183
    %v9459 = vunpack.c.l.b16 %v9184
    %v9460 = vunpack.c.l.b16 %v9185
    %v9461 = vunpack.c.l.b16 %v9186
    %v9462 = vunpack.c.l.b16 %v9187
    %v9463 = vunpack.c.l.b16 %v9188
    %v9464 = vunpack.c.l.b16 %v9189
    %v9465 = vunpack.c.l.b16 %v9190
    %v9466 = vunpack.c.l.b16 %v9191
    %v9467 = vunpack.c.l.b16 %v9192
    %v9468 = vunpack.c.l.b16 %v9193
    %v9469 = vunpack.c.l.b16 %v9194
    %v9470 = vunpack.c.l.b16 %v9195
    %v9471 = vunpack.c.l.b16 %v9196
    %v9472 = vunpack.c.l.b16 %v9197
    %v9473 = vunpack.c.l.b16 %v9198
    %v9474 = vunpack.c.l.b16 %v9199
    %v9475 = vunpack.c.l.b16 %v9200
    %v9476 = vunpack.c.l.b16 %v9201
    %v9477 = vunpack.c.l.b16 %v9202
    %v9478 = vunpack.c.l.b16 %v9203
    %v9479 = vunpack.c.l.b16 %v9204
    %v9480 = vpack.c.b16 %v9385, %v9384
    %v9481 = vpack.c.b16 %v9387, %v9386
    %v9482 = vpack.c.b16 %v9389, %v9388
    %v9483 = vpack.c.b16 %v9391, %v9390
    %v9484 = vpack.c.b16 %v9393, %v9392
    %v9485 = vpack.c.b16 %v9395, %v9394
    %v9486 = vpack.c.b16 %v9397, %v9396
    %v9487 = vpack.c.b16 %v9399, %v9398
    %v9488 = vpack.c.b16 %v9401, %v9400
    %v9489 = vpack.c.b16 %v9403, %v9402
    %v9490 = vpack.c.b16 %v9405, %v9404
    %v9491 = vpack.c.b16 %v9407, %v9406
    %v9492 = vpack.c.b16 %v9409, %v9408
    %v9493 = vpack.c.b16 %v9411, %v9410
    %v9494 = vpack.c.b16 %v9413, %v9412
    %v9495 = vpack.c.b16 %v9415, %v9414
    %v9496 = vpack.c.b16 %v9417, %v9416
    %v9497 = vpack.c.b16 %v9419, %v9418
    %v9498 = vpack.c.b16 %v9421, %v9420
    %v9499 = vpack.c.b16 %v9423, %v9422
    %v9500 = vpack.c.b16 %v9425, %v9424
    %v9501 = vpack.c.b16 %v9427, %v9426
    %v9502 = vpack.c.b16 %v9429, %v9428
    %v9503 = vpack.c.b16 %v9431, %v9430
    %v9504 = vpack.c.b16 %v9433, %v9432
    %v9505 = vpack.c.b16 %v9435, %v9434
    %v9506 = vpack.c.b16 %v9437, %v9436
    %v9507 = vpack.c.b16 %v9439, %v9438
    %v9508 = vpack.c.b16 %v9441, %v9440
    %v9509 = vpack.c.b16 %v9443, %v9442
    %v9510 = vpack.c.b16 %v9445, %v9444
    %v9511 = vpack.c.b16 %v9447, %v9446
    %v9512 = vpack.c.b16 %v9449, %v9448
    %v9513 = vpack.c.b16 %v9451, %v9450
    %v9514 = vpack.c.b16 %v9453, %v9452
    %v9515 = vpack.c.b16 %v9455, %v9454
    %v9516 = vpack.c.b16 %v9457, %v9456
    %v9517 = vpack.c.b16 %v9459, %v9458
    %v9518 = vpack.c.b16 %v9461, %v9460
    %v9519 = vpack.c.b16 %v9463, %v9462
    %v9520 = vpack.c.b16 %v9465, %v9464
    %v9521 = vpack.c.b16 %v9467, %v9466
    %v9522 = vpack.c.b16 %v9469, %v9468
    %v9523 = vpack.c.b16 %v9471, %v9470
    %v9524 = vpack.c.b16 %v9473, %v9472
    %v9525 = vpack.c.b16 %v9475, %v9474
    %v9526 = vpack.c.b16 %v9477, %v9476
    %v9527 = vpack.c.b16 %v9479, %v9478
    %9576 = vmatpush.bf16.msra.mxu0 %v9487
    %9577 = vmatpush.bf16.msra.mxu0 %v9486
    %9578 = vmatpush.bf16.msra.mxu0 %v9485
    %9579 = vmatpush.bf16.msra.mxu0 %v9484
    %9580 = vmatpush.bf16.msra.mxu0 %v9483
    %9581 = vmatpush.bf16.msra.mxu0 %v9482
    %9582 = vmatpush.bf16.msra.mxu0 %v9481
    %9583 = vmatpush.bf16.msra.mxu0 %v9480
    %9584 = vmatmul.bf16.gmra.mxu0 %v310
    %v9585 = vpop.f32.mrf.mxu0
    %v9586 = vadd.f32 %v9279, %v9585
    %v9587 = vpop.f32.mrf.mxu0
    %v9588 = vadd.f32 %v9281, %v9587
    %9589 = vmatmul.bf16.gmra.mxu0 %v311
    %v9590 = vpop.f32.mrf.mxu0
    %v9591 = vadd.f32 %v9284, %v9590
    %v9592 = vpop.f32.mrf.mxu0
    %v9593 = vadd.f32 %v9286, %v9592
    %9594 = vdwg.mxu0
    %9595 = vmatpush.bf16.msra.mxu0 %v9495
    %9596 = vmatpush.bf16.msra.mxu0 %v9494
    %9597 = vmatpush.bf16.msra.mxu0 %v9493
    %9598 = vmatpush.bf16.msra.mxu0 %v9492
    %9599 = vmatpush.bf16.msra.mxu0 %v9491
    %9600 = vmatpush.bf16.msra.mxu0 %v9490
    %9601 = vmatpush.bf16.msra.mxu0 %v9489
    %9602 = vmatpush.bf16.msra.mxu0 %v9488
    %9603 = vmatmul.bf16.gmra.mxu0 %v468
    %v9604 = vpop.f32.mrf.mxu0
    %v9605 = vadd.f32 %v9586, %v9604
    %v9606 = vpop.f32.mrf.mxu0
    %v9607 = vadd.f32 %v9588, %v9606
    %9608 = vmatmul.bf16.gmra.mxu0 %v469
    %v9609 = vpop.f32.mrf.mxu0
    %v9610 = vadd.f32 %v9591, %v9609
    %v9611 = vpop.f32.mrf.mxu0
    %v9612 = vadd.f32 %v9593, %v9611
    %9613 = vdwg.mxu0
    %9614 = vmatpush.bf16.msra.mxu0 %v9503
    %9615 = vmatpush.bf16.msra.mxu0 %v9502
    %9616 = vmatpush.bf16.msra.mxu0 %v9501
    %9617 = vmatpush.bf16.msra.mxu0 %v9500
    %9618 = vmatpush.bf16.msra.mxu0 %v9499
    %9619 = vmatpush.bf16.msra.mxu0 %v9498
    %9620 = vmatpush.bf16.msra.mxu0 %v9497
    %9621 = vmatpush.bf16.msra.mxu0 %v9496
    %9622 = vmatmul.bf16.gmra.mxu0 %v672
    %v9623 = vpop.f32.mrf.mxu0
    %v9624 = vadd.f32 %v9605, %v9623
    %v9625 = vpop.f32.mrf.mxu0
    %v9626 = vadd.f32 %v9607, %v9625
    %9627 = vmatmul.bf16.gmra.mxu0 %v673
    %v9628 = vpop.f32.mrf.mxu0
    %v9629 = vadd.f32 %v9610, %v9628
    %v9630 = vpop.f32.mrf.mxu0
    %v9631 = vadd.f32 %v9612, %v9630
    %9632 = vdwg.mxu0
    %9633 = vmatpush.bf16.msra.mxu0 %v9511
    %9634 = vmatpush.bf16.msra.mxu0 %v9510
    %9635 = vmatpush.bf16.msra.mxu0 %v9509
    %9636 = vmatpush.bf16.msra.mxu0 %v9508
    %9637 = vmatpush.bf16.msra.mxu0 %v9507
    %9638 = vmatpush.bf16.msra.mxu0 %v9506
    %9639 = vmatpush.bf16.msra.mxu0 %v9505
    %9640 = vmatpush.bf16.msra.mxu0 %v9504
    %9641 = vmatmul.bf16.gmra.mxu0 %v1437
    %v9642 = vpop.f32.mrf.mxu0
    %v9643 = vadd.f32 %v9624, %v9642
    %v9644 = vpop.f32.mrf.mxu0
    %v9645 = vadd.f32 %v9626, %v9644
    %9646 = vmatmul.bf16.gmra.mxu0 %v1438
    %v9647 = vpop.f32.mrf.mxu0
    %v9648 = vadd.f32 %v9629, %v9647
    %v9649 = vpop.f32.mrf.mxu0
    %v9650 = vadd.f32 %v9631, %v9649
    %9651 = vdwg.mxu0
    %9652 = vmatpush.bf16.msra.mxu0 %v9519
    %9653 = vmatpush.bf16.msra.mxu0 %v9518
    %9654 = vmatpush.bf16.msra.mxu0 %v9517
    %9655 = vmatpush.bf16.msra.mxu0 %v9516
    %9656 = vmatpush.bf16.msra.mxu0 %v9515
    %9657 = vmatpush.bf16.msra.mxu0 %v9514
    %9658 = vmatpush.bf16.msra.mxu0 %v9513
    %9659 = vmatpush.bf16.msra.mxu0 %v9512
    %9660 = vmatmul.bf16.gmra.mxu0 %v1935
    %v9661 = vpop.f32.mrf.mxu0
    %v9662 = vadd.f32 %v9643, %v9661
    %v9663 = vpop.f32.mrf.mxu0
    %v9664 = vadd.f32 %v9645, %v9663
    %9665 = vmatmul.bf16.gmra.mxu0 %v1936
    %v9666 = vpop.f32.mrf.mxu0
    %v9667 = vadd.f32 %v9648, %v9666
    %v9668 = vpop.f32.mrf.mxu0
    %v9669 = vadd.f32 %v9650, %v9668
    %9670 = vdwg.mxu0
    %9671 = vmatpush.bf16.msra.mxu0 %v9527
    %9672 = vmatpush.bf16.msra.mxu0 %v9526
    %9673 = vmatpush.bf16.msra.mxu0 %v9525
    %9674 = vmatpush.bf16.msra.mxu0 %v9524
    %9675 = vmatpush.bf16.msra.mxu0 %v9523
    %9676 = vmatpush.bf16.msra.mxu0 %v9522
    %9677 = vmatpush.bf16.msra.mxu0 %v9521
    %9678 = vmatpush.bf16.msra.mxu0 %v9520
    %9679 = vmatmul.bf16.gmra.mxu0 %v2429
    %v9680 = vpop.f32.mrf.mxu0
    %v9681 = vadd.f32 %v9662, %v9680
    %v9682 = vpop.f32.mrf.mxu0
    %v9683 = vadd.f32 %v9664, %v9682
    %9684 = vmatmul.bf16.gmra.mxu0 %v2430
    %v9685 = vpop.f32.mrf.mxu0
    %v9686 = vadd.f32 %v9667, %v9685
    %v9687 = vpop.f32.mrf.mxu0
    %v9688 = vadd.f32 %v9669, %v9687
    %9689 = vdwg.mxu0
    %v9690 = vpack.c.bf16 %v9106, %v9105
    %v9691 = vpack.c.bf16 %v9108, %v9107
    %v9692 = vld [vmem:[%s53] sm:$0xf]
    %v9693 = vld [vmem:[%s53 + $0x4] sm:$0xf]
    %v9694 = vld [vmem:[%s53 + $0x8] sm:$0xf]
    %v9695 = vld [vmem:[%s53 + $0xc] sm:$0xf]
    %v9696 = vld [vmem:[%s53 + $0x10] sm:$0xf]
    %v9697 = vld [vmem:[%s53 + $0x14] sm:$0xf]
    %v9698 = vld [vmem:[%s53 + $0x18] sm:$0xf]
    %v9699 = vld [vmem:[%s53 + $0x1c] sm:$0xf]
    %v9708 = vunpack.c.l.b16 %v9692
    %v9709 = vunpack.c.l.b16 %v9693
    %v9710 = vunpack.c.l.b16 %v9694
    %v9711 = vunpack.c.l.b16 %v9695
    %v9712 = vunpack.c.l.b16 %v9696
    %v9713 = vunpack.c.l.b16 %v9697
    %v9714 = vunpack.c.l.b16 %v9698
    %v9715 = vunpack.c.l.b16 %v9699
    %v9716 = vpack.c.b16 %v9709, %v9708
    %v9717 = vpack.c.b16 %v9711, %v9710
    %v9718 = vpack.c.b16 %v9713, %v9712
    %v9719 = vpack.c.b16 %v9715, %v9714
    %vm9724 = vcmask 523264
    %v9726 = vsel %vm9724, %v9690, 0
    %v9729 = vsel %vm9724, %v9691, 0
    %9731 = vmatpush.bf16.msra.mxu0 0
    %9732 = vmatpush.bf16.msra.mxu0 0
    %9733 = vmatpush.bf16.msra.mxu0 0
    %9734 = vmatpush.bf16.msra.mxu0 0
    %9735 = vmatpush.bf16.msra.mxu0 %v9719
    %9736 = vmatpush.bf16.msra.mxu0 %v9718
    %9737 = vmatpush.bf16.msra.mxu0 %v9717
    %9738 = vmatpush.bf16.msra.mxu0 %v9716
    %9739 = vmatmul.bf16.gmra.mxu0 %v9726
    %v9740 = vpop.f32.mrf.mxu0
    %v9741 = vadd.f32 0.0, %v9740
    %v9742 = vpop.f32.mrf.mxu0
    %v9743 = vadd.f32 0.0, %v9742
    %9744 = vmatmul.bf16.gmra.mxu0 %v9729
    %v9745 = vpop.f32.mrf.mxu0
    %v9746 = vadd.f32 0.0, %v9745
    %v9747 = vpop.f32.mrf.mxu0
    %v9748 = vadd.f32 0.0, %v9747
    %9749 = vdwg.mxu0
    %v9750 = vadd.f32 %v9681, %v9741
    %v9751 = vadd.f32 %v9683, %v9743
    %v9752 = vadd.f32 %v9686, %v9746
    %v9753 = vadd.f32 %v9688, %v9748
    %v9754 = vld [vmem:[#allocation17] sm:$0x1]
    %v9756 = vperm.slane %v9754, 0
    %v9758 = vadd.f32 %v9750, %v9756
    %v9759 = vadd.f32 %v9751, %v9756
    %v9760 = vadd.f32 %v9752, %v9756
    %v9761 = vadd.f32 %v9753, %v9756
    %v9762 = vlaneseq
    %v9763 = vand.u32 %v9762, 127
    %vm9764 = vcmp.lt.s32.totalorder %v9763, 14
    %v9765 = vmax.f32 %v9758, 0.0
    %v9766 = vmax.f32 %v9759, 0.0
    %v9767 = vmax.f32 %v9760, 0.0
    %v9768 = vmax.f32 %v9761, 0.0
    %v9769 = vunpack.c.l.bf16 %v258
    %v9770 = vunpack.c.l.bf16 %v265
    %v9771 = vunpack.c.l.bf16 %v272
    %v9772 = vunpack.c.l.bf16 %v279
    %v9773 = vmul.f32 %v9765, %v9769
    %v9774 = vmul.f32 %v9766, %v9770
    %v9775 = vmul.f32 %v9767, %v9771
    %v9776 = vmul.f32 %v9768, %v9772
    %v9777 = vsel %vm9764, %v9773, %v9758
    %v9778 = vsel %vm9764, %v9774, %v9759
    %v9779 = vsel %vm9764, %v9775, %v9760
    %v9780 = vsel %vm9764, %v9776, %v9761
    %9781 = vst [vmem:[%s57] sm:$0xff] %v9777
    %9782 = vst [vmem:[%s57 + $0x8] sm:$0xff] %v9778
    %9783 = vst [vmem:[%s57 + $0x10] sm:$0xff] %v9779
    %9784 = vst [vmem:[%s57 + $0x18] sm:$0xff] %v9780
    // Predicated region
    $region150: #{main_model_forward.1} parent=1 // pred_check
      _
    $region151: #{main_model_forward.1} parent=1 // pred_check_branch
      %9786 = sbr.rel (0) target = $region153
    $region152: #{main_model_forward.1} parent=1 // pred_region
      _
    $region153: #{main_model_forward.1} parent=1 // pred_fallthru
      _
    // Predicated region
    $region154: #{main_model_forward.1} parent=1 // pred_check
      _
    $region155: #{main_model_forward.1} parent=1 // pred_check_branch
      %9788 = sbr.rel (0) target = $region157
    $region156: #{main_model_forward.1} parent=1 // pred_region
      _
    $region157: #{main_model_forward.1} parent=1 // pred_fallthru
      _
    // Predicated region
    $region158: #{main_model_forward.1} parent=1 // pred_check
      _
    $region159: #{main_model_forward.1} parent=1 // pred_check_branch
      %9790 = sbr.rel (0) target = $region161
    $region160: #{main_model_forward.1} parent=1 // pred_region
      _
    $region161: #{main_model_forward.1} parent=1 // pred_fallthru
      _
    // Predicated region
    $region162: #{main_model_forward.1} parent=1 // pred_check
      _
    $region163: #{main_model_forward.1} parent=1 // pred_check_branch
      %9792 = sbr.rel (0) target = $region165
    $region164: #{main_model_forward.1} parent=1 // pred_region
      _
    $region165: #{main_model_forward.1} parent=1 // pred_fallthru
      _
    %9793 = vsyncpa [#allocation5], 1
    %9794 = vsyncpa [#allocation7], 1
    %9795 = vsyncpa [#allocation10], 1
    %9796 = vsyncpa [#allocation13], 1
    %9797 = vsyncpa [#allocation16], 1

</llo_original>
